<compile_context>
chip_gen: v7x
topology: tpu7x:2x2x1
jax: 0.10.0
libtpu: 0.0.40
codegen_flags: <defaults>
</compile_context>

<pallas_src>
import functools

import jax
import jax.numpy as jnp
from jax.experimental import pallas as pl
from jax.experimental.pallas import tpu as pltpu

BN_EPS = 1e-5
PART = 6
BLOCKS = [3, 4, 6, 3]            # ResNet-50 topology
# PCB_test forces layer3[0] and layer4[0] (conv2 + downsample) to stride (1, 1),
# so only layer2 downsamples spatially after the stem.
LAYER_STRIDES = [1, 2, 1, 1]

ACT_DTYPE = jnp.bfloat16
LANE = 128


# ---------------------------- helpers ----------------------------

def _round_up(x, m):
    return (x + m - 1) // m * m


def _pad_axis(a, axis, new_size):
    if a.shape[axis] == new_size:
        return a
    pads = [(0, 0)] * a.ndim
    pads[axis] = (0, new_size - a.shape[axis])
    return jnp.pad(a, pads)


def _choose_tm(M):
    """Row tile: multiple of 8 minimising round_up(M, tm), preferring larger tm."""
    best_tm, best_mp = 8, _round_up(M, 8)
    for tm in (512, 384, 256, 192, 128, 96, 64, 48, 32, 24, 16, 8):
        mp = _round_up(M, tm)
        if mp < best_mp or (mp == best_mp and tm > best_tm):
            best_tm, best_mp = tm, mp
    return best_tm, best_mp


def _largest_tile(n, cap):
    """Largest multiple of 128 that divides n (itself a 128-multiple) and is <= cap."""
    best = LANE
    t = LANE
    while t <= min(n, cap):
        if n % t == 0:
            best = t
        t += LANE
    return best


# ---------------------------- Pallas kernels ----------------------------

def _make_mm_bn_kernel(relu_mode, has_residual):
    """Tiled matmul with fused BN (scale/bias) + optional residual + ReLU epilogue.

    relu_mode: False | True | "mask" (per-column ReLU-mask operand follows bias)."""

    def kernel(*refs):
        x_ref, w_ref, s_ref, b_ref = refs[:4]
        pos = 4
        m_ref = None
        if relu_mode == "mask":
            m_ref = refs[pos]
            pos += 1
        r_ref = None
        if has_residual:
            r_ref = refs[pos]
            pos += 1
        o_ref, acc_ref = refs[pos], refs[pos + 1]

        k = pl.program_id(2)

        @pl.when(k == 0)
        def _():
            acc_ref[...] = jnp.zeros_like(acc_ref)

        acc_ref[...] += jnp.dot(x_ref[...], w_ref[...],
                                preferred_element_type=jnp.float32)

        @pl.when(k == pl.num_programs(2) - 1)
        def _():
            out = acc_ref[...] * s_ref[...] + b_ref[...]
            if has_residual:
                out = out + r_ref[...].astype(jnp.float32)
            if relu_mode is True:
                out = jnp.maximum(out, 0.0)
            elif relu_mode == "mask":
                out = jnp.where(m_ref[...] > 0.5, jnp.maximum(out, 0.0), out)
            o_ref[...] = out.astype(o_ref.dtype)

    return kernel


def _maxpool_3x3_kernel(xp_ref, o_ref):
    # xp_ref: (1, 4, Ho+1, Wo+1, C) phase-split (space-to-depth) padded image.
    # Every 3x3/stride-2 tap is a contiguous shift-by-0/1 slice of one phase plane.
    ho, wo = o_ref.shape[1], o_ref.shape[2]
    v = xp_ref[0]                               # (4, Ho+1, Wo+1, C)
    acc = None
    for kh in range(3):
        for kw in range(3):
            phase = 2 * (kh % 2) + (kw % 2)
            dh, dw = kh // 2, kw // 2
            tap = v[phase, dh:dh + ho, dw:dw + wo, :]
            acc = tap if acc is None else jnp.maximum(acc, tap)
    o_ref[0] = acc


def _mean_axis1_kernel(x_ref, o_ref):
    # x: (B*part, bin*W, C) -> mean over the pooled window, f32 accumulation.
    o_ref[...] = jnp.mean(x_ref[...].astype(jnp.float32), axis=1)


# ---------------------------- wrappers ----------------------------

def matmul_bn(x, w, scale, bias, *, relu=True, relu_mask=None, residual=None,
              out_dtype=ACT_DTYPE):
    """act((x @ w) * scale + bias [+ residual]) on the MXU, tiled + pipelined.

    `w`/`scale`/`bias` (and `relu_mask`) arrive channel-padded (last dim a 128
    multiple); the output keeps that channel padding (only row padding is sliced)."""
    M, K = x.shape
    Kp, Np = w.shape
    assert Kp % LANE == 0 and Np % LANE == 0 and Kp >= K

    x = x.astype(ACT_DTYPE)
    if K != Kp:                                   # only the 7x7 stem hits this
        x = _pad_axis(x, 1, Kp)

    tm, mp = _choose_tm(M)
    tn = _largest_tile(Np, 512)
    tk = _largest_tile(Kp, 1024)
    # v7x megacore: if the grid would be (1, 1, k), split M so both cores have work.
    if mp // tm == 1 and Np // tn == 1 and tm % 16 == 0 and tm >= 64:
        tm //= 2
    if mp != M:
        x = _pad_axis(x, 0, mp)

    args = [x, w,
            scale.reshape(1, Np).astype(jnp.float32),
            bias.reshape(1, Np).astype(jnp.float32)]
    in_specs = [
        pl.BlockSpec((tm, tk), lambda i, j, k: (i, k)),
        pl.BlockSpec((tk, tn), lambda i, j, k: (k, j)),
        pl.BlockSpec((1, tn), lambda i, j, k: (0, j)),
        pl.BlockSpec((1, tn), lambda i, j, k: (0, j)),
    ]
    relu_mode = "mask" if relu_mask is not None else bool(relu)
    if relu_mask is not None:
        args.append(relu_mask.reshape(1, Np).astype(jnp.float32))
        in_specs.append(pl.BlockSpec((1, tn), lambda i, j, k: (0, j)))
    if residual is not None:
        res = residual.astype(ACT_DTYPE)
        if mp != M:
            res = _pad_axis(res, 0, mp)
        args.append(res)
        in_specs.append(pl.BlockSpec((tm, tn), lambda i, j, k: (i, j)))

    out = pl.pallas_call(
        _make_mm_bn_kernel(relu_mode, residual is not None),
        out_shape=jax.ShapeDtypeStruct((mp, Np), out_dtype),
        grid_spec=pltpu.PrefetchScalarGridSpec(
            num_scalar_prefetch=0,
            grid=(mp // tm, Np // tn, Kp // tk),
            in_specs=in_specs,
            out_specs=pl.BlockSpec((tm, tn), lambda i, j, k: (i, j)),
            scratch_shapes=[pltpu.VMEM((tm, tn), jnp.float32)],
        ),
        compiler_params=pltpu.CompilerParams(
            dimension_semantics=("parallel", "parallel", "arbitrary"),
            vmem_limit_bytes=32 * 1024 * 1024,
        ),
    )(*args)

    if mp != M:
        out = out[:M]          # row padding only; channel padding stays resident
    return out


def conv_bn(x, w2d, scale, bias, *, ksize, stride=1, padding=0, relu=True,
            relu_mask=None, residual=None):
    """NHWC conv + folded BN (+ residual, ReLU) over channel-padded activations."""
    B, H, W, Cin = x.shape
    KH, KW = ksize
    Np = w2d.shape[1]
    Ho = (H + 2 * padding - KH) // stride + 1
    Wo = (W + 2 * padding - KW) // stride + 1

    if KH == 1 and KW == 1 and padding == 0:
        xs = x if stride == 1 else x[:, ::stride, ::stride, :]
        X = xs.reshape(B * Ho * Wo, Cin)
    else:
        # TODO(synk): fold the KH*KW taps into the matmul's K grid axis (per-tap
        # spatial offsets in the x BlockSpec) instead of materializing bf16 im2col
        # patches in HBM; only the 7x7 stem and the 3x3 conv2s hit this path.
        xp = (jnp.pad(x, ((0, 0), (padding, padding), (padding, padding), (0, 0)))
              if padding else x)
        cols = [xp[:, kh:kh + stride * Ho:stride, kw:kw + stride * Wo:stride, :]
                for kh in range(KH) for kw in range(KW)]
        X = jnp.concatenate(cols, axis=-1).reshape(B * Ho * Wo, KH * KW * Cin)

    res = None if residual is None else residual.reshape(B * Ho * Wo, Np)
    out = matmul_bn(X, w2d, scale, bias, relu=relu, relu_mask=relu_mask, residual=res)
    return out.reshape(B, Ho, Wo, Np)


def maxpool_3x3_s2_p1(x):
    """3x3 / stride-2 / pad-1 max pool; per-batch 9-way running max in VMEM.

    With channel-padded activations (C a multiple of 128) the output stores are
    lane-dense.  TODO(synk): move the space-to-depth phase split into the kernel
    (strided in-kernel slices) to drop the remaining XLA-side relayout."""
    B, H, W, C = x.shape
    Ho = (H - 1) // 2 + 1
    Wo = (W - 1) // 2 + 1
    Hp = 2 * (Ho + 1)
    Wp = 2 * (Wo + 1)
    xp = jnp.pad(x, ((0, 0), (1, Hp - H - 1), (1, Wp - W - 1), (0, 0)),
                 constant_values=-jnp.inf)
    xp = xp.reshape(B, Ho + 1, 2, Wo + 1, 2, C)
    xp = jnp.transpose(xp, (0, 2, 4, 1, 3, 5)).reshape(B, 4, Ho + 1, Wo + 1, C)

    return pl.pallas_call(
        _maxpool_3x3_kernel,
        out_shape=jax.ShapeDtypeStruct((B, Ho, Wo, C), x.dtype),
        grid_spec=pltpu.PrefetchScalarGridSpec(
            num_scalar_prefetch=0,
            grid=(B,),
            in_specs=[pl.BlockSpec((1, 4, Ho + 1, Wo + 1, C),
                                   lambda b: (b, 0, 0, 0, 0))],
            out_specs=pl.BlockSpec((1, Ho, Wo, C), lambda b: (b, 0, 0, 0)),
        ),
        compiler_params=pltpu.CompilerParams(dimension_semantics=("parallel",)),
    )(xp)


def adaptive_avgpool_part(x, part=PART):
    """AdaptiveAvgPool2d((part, 1)) with uniform bins (exact when H % part == 0)."""
    B, H, W, C = x.shape
    # TODO(synk): real AdaptiveAvgPool2d handles H % part != 0 with uneven bins.
    assert H % part == 0, "adaptive pool implemented for H divisible by `part`"
    binsz = H // part
    xr = x.reshape(B * part, binsz * W, C)
    out = pl.pallas_call(
        _mean_axis1_kernel,
        out_shape=jax.ShapeDtypeStruct((B * part, C), jnp.float32),
        in_specs=[pl.BlockSpec(memory_space=pltpu.MemorySpace.VMEM)],
        out_specs=pl.BlockSpec(memory_space=pltpu.MemorySpace.VMEM),
    )(xr)
    return out.reshape(B, part, C)


# ---------------------------- parameters ----------------------------

class _KeyGen:
    def __init__(self, seed):
        self.key = jax.random.PRNGKey(seed)

    def __call__(self):
        self.key, sub = jax.random.split(self.key)
        return sub


def _fold_bn(gamma, beta, mean, var):
    scale = gamma / jnp.sqrt(var + BN_EPS)
    bias = beta - mean * scale
    return scale, bias


def _init_conv_bn(kg, kh, kw, cin, cout, *, cin_rt=None):
    """Conv + eval-mode BN folded to matmul form, channel-padded once at build time.

    cin_rt = per-tap input channels as seen at runtime (i.e. the channel-padded width
    of the incoming activation; 3 for the raw-image stem)."""
    if cin_rt is None:
        cin_rt = _round_up(cin, LANE)
    cout_p = _round_up(cout, LANE)
    fan_in = kh * kw * cin
    w = jax.random.normal(kg(), (kh, kw, cin, cout), jnp.float32) / jnp.sqrt(float(fan_in))
    w = _pad_axis(_pad_axis(w, 2, cin_rt), 3, cout_p)
    w2d = w.reshape(kh * kw * cin_rt, cout_p)
    w2d = _pad_axis(w2d, 0, _round_up(kh * kw * cin_rt, LANE)).astype(ACT_DTYPE)

    gamma = 1.0 + 0.1 * jax.random.normal(kg(), (cout,), jnp.float32)
    beta = 0.05 * jax.random.normal(kg(), (cout,), jnp.float32)
    mean = 0.05 * jax.random.normal(kg(), (cout,), jnp.float32)
    var = 1.0 + 0.1 * jax.random.uniform(kg(), (cout,), jnp.float32)
    scale, bias = _fold_bn(gamma, beta, mean, var)
    return {"w": w2d,
            "scale": _pad_axis(scale, 0, cout_p),
            "bias": _pad_axis(bias, 0, cout_p)}


def make_params(seed=0, base=8):
    # TODO(synk): real PCB_test wraps a pretrained ResNet-50; here the same topology
    # is built with deterministically initialized small-width weights.
    kg = _KeyGen(seed)
    params = {"conv1": _init_conv_bn(kg, 7, 7, 3, base, cin_rt=3)}
    widths = [base, 2 * base, 4 * base, 8 * base]
    in_ch = base
    layers = []
    for li in range(4):
        width = widths[li]
        out_ch = width * 4
        layer = []
        for bi in range(BLOCKS[li]):
            s = LAYER_STRIDES[li] if bi == 0 else 1
            blk = {
                "conv1": _init_conv_bn(kg, 1, 1, in_ch, width),
                "conv2": _init_conv_bn(kg, 3, 3, width, width),
                "conv3": _init_conv_bn(kg, 1, 1, width, out_ch),
            }
            if bi == 0 and (s != 1 or in_ch != out_ch):
                blk["downsample"] = _init_conv_bn(kg, 1, 1, in_ch, out_ch)
            layer.append(blk)
            in_ch = out_ch
        layers.append(layer)
    params["layers"] = layers
    return params


# ---------------------------- forward ----------------------------

def _bottleneck(x, blk, stride):
    c1, c2, c3 = blk["conv1"], blk["conv2"], blk["conv3"]

    if "downsample" in blk and stride == 1:
        # conv1 (ReLU) and downsample (no ReLU) read the same x with the same stride:
        # run them as ONE matmul with weights concatenated along N; a per-column mask
        # applies ReLU to the conv1 columns only.
        d = blk["downsample"]
        split = c1["w"].shape[1]                      # padded width of conv1's output
        w_cat = jnp.concatenate([c1["w"], d["w"]], axis=1)
        s_cat = jnp.concatenate([c1["scale"], d["scale"]])
        b_cat = jnp.concatenate([c1["bias"], d["bias"]])
        mask = jnp.concatenate([jnp.ones((split,), jnp.float32),
                                jnp.zeros((d["w"].shape[1],), jnp.float32)])
        merged = conv_bn(x, w_cat, s_cat, b_cat, ksize=(1, 1), stride=1, padding=0,
                         relu=False, relu_mask=mask)
        out = merged[..., :split]
        identity = merged[..., split:]
    else:
        out = conv_bn(x, c1["w"], c1["scale"], c1["bias"], ksize=(1, 1),
                      stride=1, padding=0, relu=True)
        if "downsample" in blk:
            d = blk["downsample"]
            identity = conv_bn(x, d["w"], d["scale"], d["bias"], ksize=(1, 1),
                               stride=stride, padding=0, relu=False)
        else:
            identity = x

    out = conv_bn(out, c2["w"], c2["scale"], c2["bias"], ksize=(3, 3),
                  stride=stride, padding=1, relu=True)
    out = conv_bn(out, c3["w"], c3["scale"], c3["bias"], ksize=(1, 1),
                  stride=1, padding=0, relu=True, residual=identity)
    return out


@functools.partial(jax.jit, static_argnames=("out_channels",))
def pcb_test_forward(params, x_nchw, *, out_channels):
    x = jnp.transpose(x_nchw, (0, 2, 3, 1)).astype(ACT_DTYPE)   # NCHW -> NHWC, bf16
    c1 = params["conv1"]
    x = conv_bn(x, c1["w"], c1["scale"], c1["bias"], ksize=(7, 7),
                stride=2, padding=3, relu=True)
    x = maxpool_3x3_s2_p1(x)
    for li, layer in enumerate(params["layers"]):
        for bi, blk in enumerate(layer):
            s = LAYER_STRIDES[li] if bi == 0 else 1
            x = _bottleneck(x, blk, s)
    pooled = adaptive_avgpool_part(x, part=PART)        # (B, part, Cp), f32
    pooled = pooled[:, :, :out_channels]                # drop channel padding (once)
    y = jnp.transpose(pooled, (0, 2, 1))                # (B, C, part) == x.view(B, C, 6)
    return y


if __name__ == "__main__":
    base = 8  # ResNet-50 channel plan scaled down by 8x (64 -> 8)
    key = jax.random.PRNGKey(0)
    x = jax.random.normal(key, (2, 3, 48, 16), jnp.float32)  # NCHW, like PyTorch
    params = make_params(seed=0, base=base)
    y = pcb_test_forward(params, x, out_channels=base * 8 * 4)
    jax.block_until_ready(y)
    assert y.shape == (2, base * 8 * 4, PART), y.shape       # (B, C_out, 6)
    assert bool(jnp.all(jnp.isfinite(y)))
    print("KERNEL_OK")
</pallas_src>

<mosaic_0001>
module attributes {stable_mosaic.version = 11 : i64} {
  func.func @kernel(%arg0: i32, %arg1: i32, %arg2: i32, %arg3: memref<192x256xbf16, #tpu.memory_space<vmem>>, %arg4: memref<256x128xbf16, #tpu.memory_space<vmem>>, %arg5: memref<1x128xf32, #tpu.memory_space<vmem>>, %arg6: memref<1x128xf32, #tpu.memory_space<vmem>>, %arg7: memref<192x128xbf16, #tpu.memory_space<vmem>>, %arg8: memref<192x128xf32, #tpu.memory_space<vmem>>) attributes {dimension_semantics = [#tpu.dimension_semantics<parallel>, #tpu.dimension_semantics<parallel>, #tpu.dimension_semantics<arbitrary>], iteration_bounds = array<i64: 2, 1, 1>, scalar_prefetch = 0 : i64, scratch_operands = 1 : i64, tpu.core_type = #tpu.core_type<tc>, window_params = [{transform_indices = @transform_0, window_bounds = array<i64: 192, 256>}, {transform_indices = @transform_1, window_bounds = array<i64: 256, 128>}, {transform_indices = @transform_2, window_bounds = array<i64: 1, 128>}, {transform_indices = @transform_3, window_bounds = array<i64: 1, 128>}, {transform_indices = @transform_4, window_bounds = array<i64: 192, 128>}]} {
    %c0_i32 = arith.constant 0 : i32
    %0 = arith.cmpi eq, %arg2, %c0_i32 : i32
    %1 = arith.extui %0 : i1 to i32
    %c0_i32_0 = arith.constant 0 : i32
    %2 = arith.cmpi ne, %1, %c0_i32_0 : i32
    scf.if %2 {
      %cst_10 = arith.constant 0.000000e+00 : f32
      %12 = vector.broadcast %cst_10 : f32 to vector<192x128xf32>
      %c0_11 = arith.constant 0 : index
      %c0_12 = arith.constant 0 : index
      %13 = vector.load %arg8[%c0_11, %c0_12] : memref<192x128xf32, #tpu.memory_space<vmem>>, vector<192x128xf32>
      tpu.vector_store %arg8[%c0_11, %c0_12], %12 {strides = array<i32>} : memref<192x128xf32, #tpu.memory_space<vmem>>, vector<192x128xf32>,
    } else {
    }
    %c0 = arith.constant 0 : index
    %c0_1 = arith.constant 0 : index
    %3 = vector.load %arg8[%c0, %c0_1] : memref<192x128xf32, #tpu.memory_space<vmem>>, vector<192x128xf32>
    %c0_2 = arith.constant 0 : index
    %c0_3 = arith.constant 0 : index
    %4 = vector.load %arg3[%c0_2, %c0_3] : memref<192x256xbf16, #tpu.memory_space<vmem>>, vector<192x256xbf16>
    %c0_4 = arith.constant 0 : index
    %c0_5 = arith.constant 0 : index
    %5 = vector.load %arg4[%c0_4, %c0_5] : memref<256x128xbf16, #tpu.memory_space<vmem>>, vector<256x128xbf16>
    %cst = arith.constant dense<0.000000e+00> : vector<192x128xf32>
    %6 = tpu.matmul %4, %5, %cst {dimension_numbers = #tpu.dot_dimension_numbers<[1], [0], [0], [1], [0, 0, 1, 1], [], []>} : vector<192x256xbf16>, vector<256x128xbf16>, vector<192x128xf32> -> vector<192x128xf32>
    %7 = arith.addf %3, %6 : vector<192x128xf32>
    %c0_6 = arith.constant 0 : index
    %c0_7 = arith.constant 0 : index
    %8 = vector.load %arg8[%c0_6, %c0_7] : memref<192x128xf32, #tpu.memory_space<vmem>>, vector<192x128xf32>
    tpu.vector_store %arg8[%c0_6, %c0_7], %7 {strides = array<i32>} : memref<192x128xf32, #tpu.memory_space<vmem>>, vector<192x128xf32>,
    %c0_i32_8 = arith.constant 0 : i32
    %9 = arith.cmpi eq, %arg2, %c0_i32_8 : i32
    %10 = arith.extui %9 : i1 to i32
    %c0_i32_9 = arith.constant 0 : i32
    %11 = arith.cmpi ne, %10, %c0_i32_9 : i32
    scf.if %11 {
      %c0_10 = arith.constant 0 : index
      %c0_11 = arith.constant 0 : index
      %12 = vector.load %arg8[%c0_10, %c0_11] : memref<192x128xf32, #tpu.memory_space<vmem>>, vector<192x128xf32>
      %c0_12 = arith.constant 0 : index
      %c0_13 = arith.constant 0 : index
      %13 = vector.load %arg5[%c0_12, %c0_13] : memref<1x128xf32, #tpu.memory_space<vmem>>, vector<1x128xf32>
      %14 = vector.broadcast %13 : vector<1x128xf32> to vector<192x128xf32>
      %15 = arith.mulf %12, %14 : vector<192x128xf32>
      %c0_14 = arith.constant 0 : index
      %c0_15 = arith.constant 0 : index
      %16 = vector.load %arg6[%c0_14, %c0_15] : memref<1x128xf32, #tpu.memory_space<vmem>>, vector<1x128xf32>
      %17 = vector.broadcast %16 : vector<1x128xf32> to vector<192x128xf32>
      %18 = arith.addf %15, %17 : vector<192x128xf32>
      %cst_16 = arith.constant 0.000000e+00 : f32
      %19 = vector.broadcast %cst_16 : f32 to vector<192x128xf32>
      %20 = arith.maximumf %18, %19 : vector<192x128xf32>
      %21 = arith.truncf %20 : vector<192x128xf32> to vector<192x128xbf16>
      %c0_17 = arith.constant 0 : index
      %c0_18 = arith.constant 0 : index
      %22 = vector.load %arg7[%c0_17, %c0_18] : memref<192x128xbf16, #tpu.memory_space<vmem>>, vector<192x128xbf16>
      tpu.vector_store %arg7[%c0_17, %c0_18], %21 {strides = array<i32>} : memref<192x128xbf16, #tpu.memory_space<vmem>>, vector<192x128xbf16>,
    } else {
    }
    return
  }
  func.func @transform_0(%arg0: i32, %arg1: i32, %arg2: i32) -> (i32, i32) {
    %c0_i32 = arith.constant 0 : i32
    return %arg0, %arg2 : i32, i32
  }
  func.func @transform_1(%arg0: i32, %arg1: i32, %arg2: i32) -> (i32, i32) {
    %c0_i32 = arith.constant 0 : i32
    return %arg2, %arg1 : i32, i32
  }
  func.func @transform_2(%arg0: i32, %arg1: i32, %arg2: i32) -> (i32, i32) {
    %c0_i32 = arith.constant 0 : i32
    %c0_i32_0 = arith.constant 0 : i32
    return %c0_i32, %arg1 : i32, i32
  }
  func.func @transform_3(%arg0: i32, %arg1: i32, %arg2: i32) -> (i32, i32) {
    %c0_i32 = arith.constant 0 : i32
    %c0_i32_0 = arith.constant 0 : i32
    return %c0_i32, %arg1 : i32, i32
  }
  func.func @transform_4(%arg0: i32, %arg1: i32, %arg2: i32) -> (i32, i32) {
    %c0_i32 = arith.constant 0 : i32
    return %arg0, %arg1 : i32, i32
  }
}

module attributes {stable_mosaic.version = 11 : i64} {
  func.func @_maxpool_3x3_kernel(%arg0: i32, %arg1: memref<1x4x13x5x128xbf16, #tpu.memory_space<vmem>>, %arg2: memref<1x12x4x128xbf16, #tpu.memory_space<vmem>>) attributes {dimension_semantics = [#tpu.dimension_semantics<parallel>], iteration_bounds = array<i64: 2>, scalar_prefetch = 0 : i64, scratch_operands = 0 : i64, tpu.core_type = #tpu.core_type<tc>, window_params = [{transform_indices = @transform_0, window_bounds = array<i64: 1, 4, 13, 5, 128>}, {transform_indices = @transform_1, window_bounds = array<i64: 1, 12, 4, 128>}]} {
    %c0 = arith.constant 0 : index
    %c0_0 = arith.constant 0 : index
    %c0_1 = arith.constant 0 : index
    %c0_2 = arith.constant 0 : index
    %c0_3 = arith.constant 0 : index
    %0 = vector.load %arg1[%c0, %c0_0, %c0_1, %c0_2, %c0_3] : memref<1x4x13x5x128xbf16, #tpu.memory_space<vmem>>, vector<1x4x13x5x128xbf16>
    %1 = vector.shape_cast %0 : vector<1x4x13x5x128xbf16> to vector<4x13x5x128xbf16>
    %2 = vector.extract_strided_slice %1 {offsets = [0, 0, 0, 0], sizes = [1, 12, 4, 128], strides = [1, 1, 1, 1]} : vector<4x13x5x128xbf16> to vector<1x12x4x128xbf16>
    %3 = vector.shape_cast %2 : vector<1x12x4x128xbf16> to vector<12x4x128xbf16>
    %4 = vector.extract_strided_slice %1 {offsets = [1, 0, 0, 0], sizes = [1, 12, 4, 128], strides = [1, 1, 1, 1]} : vector<4x13x5x128xbf16> to vector<1x12x4x128xbf16>
    %5 = vector.shape_cast %4 : vector<1x12x4x128xbf16> to vector<12x4x128xbf16>
    %6 = arith.maximumf %3, %5 : vector<12x4x128xbf16>
    %7 = vector.extract_strided_slice %1 {offsets = [0, 0, 1, 0], sizes = [1, 12, 4, 128], strides = [1, 1, 1, 1]} : vector<4x13x5x128xbf16> to vector<1x12x4x128xbf16>
    %8 = vector.shape_cast %7 : vector<1x12x4x128xbf16> to vector<12x4x128xbf16>
    %9 = arith.maximumf %6, %8 : vector<12x4x128xbf16>
    %10 = vector.extract_strided_slice %1 {offsets = [2, 0, 0, 0], sizes = [1, 12, 4, 128], strides = [1, 1, 1, 1]} : vector<4x13x5x128xbf16> to vector<1x12x4x128xbf16>
    %11 = vector.shape_cast %10 : vector<1x12x4x128xbf16> to vector<12x4x128xbf16>
    %12 = arith.maximumf %9, %11 : vector<12x4x128xbf16>
    %13 = vector.extract_strided_slice %1 {offsets = [3, 0, 0, 0], sizes = [1, 12, 4, 128], strides = [1, 1, 1, 1]} : vector<4x13x5x128xbf16> to vector<1x12x4x128xbf16>
    %14 = vector.shape_cast %13 : vector<1x12x4x128xbf16> to vector<12x4x128xbf16>
    %15 = arith.maximumf %12, %14 : vector<12x4x128xbf16>
    %16 = vector.extract_strided_slice %1 {offsets = [2, 0, 1, 0], sizes = [1, 12, 4, 128], strides = [1, 1, 1, 1]} : vector<4x13x5x128xbf16> to vector<1x12x4x128xbf16>
    %17 = vector.shape_cast %16 : vector<1x12x4x128xbf16> to vector<12x4x128xbf16>
    %18 = arith.maximumf %15, %17 : vector<12x4x128xbf16>
    %19 = vector.extract_strided_slice %1 {offsets = [0, 1, 0, 0], sizes = [1, 12, 4, 128], strides = [1, 1, 1, 1]} : vector<4x13x5x128xbf16> to vector<1x12x4x128xbf16>
    %20 = vector.shape_cast %19 : vector<1x12x4x128xbf16> to vector<12x4x128xbf16>
    %21 = arith.maximumf %18, %20 : vector<12x4x128xbf16>
    %22 = vector.extract_strided_slice %1 {offsets = [1, 1, 0, 0], sizes = [1, 12, 4, 128], strides = [1, 1, 1, 1]} : vector<4x13x5x128xbf16> to vector<1x12x4x128xbf16>
    %23 = vector.shape_cast %22 : vector<1x12x4x128xbf16> to vector<12x4x128xbf16>
    %24 = arith.maximumf %21, %23 : vector<12x4x128xbf16>
    %25 = vector.extract_strided_slice %1 {offsets = [0, 1, 1, 0], sizes = [1, 12, 4, 128], strides = [1, 1, 1, 1]} : vector<4x13x5x128xbf16> to vector<1x12x4x128xbf16>
    %26 = vector.shape_cast %25 : vector<1x12x4x128xbf16> to vector<12x4x128xbf16>
    %27 = arith.maximumf %24, %26 : vector<12x4x128xbf16>
    %c0_4 = arith.constant 0 : index
    %c0_5 = arith.constant 0 : index
    %c0_6 = arith.constant 0 : index
    %c0_7 = arith.constant 0 : index
    %28 = vector.load %arg2[%c0_4, %c0_5, %c0_6, %c0_7] : memref<1x12x4x128xbf16, #tpu.memory_space<vmem>>, vector<1x12x4x128xbf16>
    %29 = vector.shape_cast %28 : vector<1x12x4x128xbf16> to vector<12x4x128xbf16>
    %30 = vector.shape_cast %27 : vector<12x4x128xbf16> to vector<1x12x4x128xbf16>
    tpu.vector_store %arg2[%c0_4, %c0_5, %c0_6, %c0_7], %30 {strides = array<i32>} : memref<1x12x4x128xbf16, #tpu.memory_space<vmem>>, vector<1x12x4x128xbf16>,
    return
  }
  func.func @transform_0(%arg0: i32) -> (i32, i32, i32, i32, i32) {
    %c0_i32 = arith.constant 0 : i32
    %c0_i32_0 = arith.constant 0 : i32
    %c0_i32_1 = arith.constant 0 : i32
    %c0_i32_2 = arith.constant 0 : i32
    %c0_i32_3 = arith.constant 0 : i32
    return %arg0, %c0_i32, %c0_i32_0, %c0_i32_1, %c0_i32_2 : i32, i32, i32, i32, i32
  }
  func.func @transform_1(%arg0: i32) -> (i32, i32, i32, i32) {
    %c0_i32 = arith.constant 0 : i32
    %c0_i32_0 = arith.constant 0 : i32
    %c0_i32_1 = arith.constant 0 : i32
    %c0_i32_2 = arith.constant 0 : i32
    return %arg0, %c0_i32, %c0_i32_0, %c0_i32_1 : i32, i32, i32, i32
  }
}

module attributes {stable_mosaic.version = 11 : i64} {
  func.func @kernel(%arg0: i32, %arg1: i32, %arg2: i32, %arg3: memref<48x128xbf16, #tpu.memory_space<vmem>>, %arg4: memref<128x256xbf16, #tpu.memory_space<vmem>>, %arg5: memref<1x256xf32, #tpu.memory_space<vmem>>, %arg6: memref<1x256xf32, #tpu.memory_space<vmem>>, %arg7: memref<1x256xf32, #tpu.memory_space<vmem>>, %arg8: memref<48x256xbf16, #tpu.memory_space<vmem>>, %arg9: memref<48x256xf32, #tpu.memory_space<vmem>>) attributes {dimension_semantics = [#tpu.dimension_semantics<parallel>, #tpu.dimension_semantics<parallel>, #tpu.dimension_semantics<arbitrary>], iteration_bounds = array<i64: 2, 1, 1>, scalar_prefetch = 0 : i64, scratch_operands = 1 : i64, tpu.core_type = #tpu.core_type<tc>, window_params = [{transform_indices = @transform_0, window_bounds = array<i64: 48, 128>}, {transform_indices = @transform_1, window_bounds = array<i64: 128, 256>}, {transform_indices = @transform_2, window_bounds = array<i64: 1, 256>}, {transform_indices = @transform_3, window_bounds = array<i64: 1, 256>}, {transform_indices = @transform_4, window_bounds = array<i64: 1, 256>}, {transform_indices = @transform_5, window_bounds = array<i64: 48, 256>}]} {
    %c0_i32 = arith.constant 0 : i32
    %0 = arith.cmpi eq, %arg2, %c0_i32 : i32
    %1 = arith.extui %0 : i1 to i32
    %c0_i32_0 = arith.constant 0 : i32
    %2 = arith.cmpi ne, %1, %c0_i32_0 : i32
    scf.if %2 {
      %cst_10 = arith.constant 0.000000e+00 : f32
      %12 = vector.broadcast %cst_10 : f32 to vector<48x256xf32>
      %c0_11 = arith.constant 0 : index
      %c0_12 = arith.constant 0 : index
      %13 = vector.load %arg9[%c0_11, %c0_12] : memref<48x256xf32, #tpu.memory_space<vmem>>, vector<48x256xf32>
      tpu.vector_store %arg9[%c0_11, %c0_12], %12 {strides = array<i32>} : memref<48x256xf32, #tpu.memory_space<vmem>>, vector<48x256xf32>,
    } else {
    }
    %c0 = arith.constant 0 : index
    %c0_1 = arith.constant 0 : index
    %3 = vector.load %arg9[%c0, %c0_1] : memref<48x256xf32, #tpu.memory_space<vmem>>, vector<48x256xf32>
    %c0_2 = arith.constant 0 : index
    %c0_3 = arith.constant 0 : index
    %4 = vector.load %arg3[%c0_2, %c0_3] : memref<48x128xbf16, #tpu.memory_space<vmem>>, vector<48x128xbf16>
    %c0_4 = arith.constant 0 : index
    %c0_5 = arith.constant 0 : index
    %5 = vector.load %arg4[%c0_4, %c0_5] : memref<128x256xbf16, #tpu.memory_space<vmem>>, vector<128x256xbf16>
    %cst = arith.constant dense<0.000000e+00> : vector<48x256xf32>
    %6 = tpu.matmul %4, %5, %cst {dimension_numbers = #tpu.dot_dimension_numbers<[1], [0], [0], [1], [0, 0, 1, 1], [], []>} : vector<48x128xbf16>, vector<128x256xbf16>, vector<48x256xf32> -> vector<48x256xf32>
    %7 = arith.addf %3, %6 : vector<48x256xf32>
    %c0_6 = arith.constant 0 : index
    %c0_7 = arith.constant 0 : index
    %8 = vector.load %arg9[%c0_6, %c0_7] : memref<48x256xf32, #tpu.memory_space<vmem>>, vector<48x256xf32>
    tpu.vector_store %arg9[%c0_6, %c0_7], %7 {strides = array<i32>} : memref<48x256xf32, #tpu.memory_space<vmem>>, vector<48x256xf32>,
    %c0_i32_8 = arith.constant 0 : i32
    %9 = arith.cmpi eq, %arg2, %c0_i32_8 : i32
    %10 = arith.extui %9 : i1 to i32
    %c0_i32_9 = arith.constant 0 : i32
    %11 = arith.cmpi ne, %10, %c0_i32_9 : i32
    scf.if %11 {
      %c0_10 = arith.constant 0 : index
      %c0_11 = arith.constant 0 : index
      %12 = vector.load %arg9[%c0_10, %c0_11] : memref<48x256xf32, #tpu.memory_space<vmem>>, vector<48x256xf32>
      %c0_12 = arith.constant 0 : index
      %c0_13 = arith.constant 0 : index
      %13 = vector.load %arg5[%c0_12, %c0_13] : memref<1x256xf32, #tpu.memory_space<vmem>>, vector<1x256xf32>
      %14 = vector.broadcast %13 : vector<1x256xf32> to vector<48x256xf32>
      %15 = arith.mulf %12, %14 : vector<48x256xf32>
      %c0_14 = arith.constant 0 : index
      %c0_15 = arith.constant 0 : index
      %16 = vector.load %arg6[%c0_14, %c0_15] : memref<1x256xf32, #tpu.memory_space<vmem>>, vector<1x256xf32>
      %17 = vector.broadcast %16 : vector<1x256xf32> to vector<48x256xf32>
      %18 = arith.addf %15, %17 : vector<48x256xf32>
      %c0_16 = arith.constant 0 : index
      %c0_17 = arith.constant 0 : index
      %19 = vector.load %arg7[%c0_16, %c0_17] : memref<1x256xf32, #tpu.memory_space<vmem>>, vector<1x256xf32>
      %cst_18 = arith.constant 5.000000e-01 : f32
      %20 = vector.broadcast %cst_18 : f32 to vector<1x256xf32>
      %21 = arith.cmpf ogt, %19, %20 : vector<1x256xf32>
      %cst_19 = arith.constant 0.000000e+00 : f32
      %22 = vector.broadcast %cst_19 : f32 to vector<48x256xf32>
      %23 = arith.maximumf %18, %22 : vector<48x256xf32>
      %24 = vector.shape_cast %21 : vector<1x256xi1> to vector<1x256xi1>
      %25 = vector.broadcast %24 : vector<1x256xi1> to vector<48x256xi1>
      %26 = arith.select %25, %23, %18 : vector<48x256xi1>, vector<48x256xf32>
      %27 = arith.truncf %26 : vector<48x256xf32> to vector<48x256xbf16>
      %c0_20 = arith.constant 0 : index
      %c0_21 = arith.constant 0 : index
      %28 = vector.load %arg8[%c0_20, %c0_21] : memref<48x256xbf16, #tpu.memory_space<vmem>>, vector<48x256xbf16>
      tpu.vector_store %arg8[%c0_20, %c0_21], %27 {strides = array<i32>} : memref<48x256xbf16, #tpu.memory_space<vmem>>, vector<48x256xbf16>,
    } else {
    }
    return
  }
  func.func @transform_0(%arg0: i32, %arg1: i32, %arg2: i32) -> (i32, i32) {
    %c0_i32 = arith.constant 0 : i32
    return %arg0, %arg2 : i32, i32
  }
  func.func @transform_1(%arg0: i32, %arg1: i32, %arg2: i32) -> (i32, i32) {
    %c0_i32 = arith.constant 0 : i32
    return %arg2, %arg1 : i32, i32
  }
  func.func @transform_2(%arg0: i32, %arg1: i32, %arg2: i32) -> (i32, i32) {
    %c0_i32 = arith.constant 0 : i32
    %c0_i32_0 = arith.constant 0 : i32
    return %c0_i32, %arg1 : i32, i32
  }
  func.func @transform_3(%arg0: i32, %arg1: i32, %arg2: i32) -> (i32, i32) {
    %c0_i32 = arith.constant 0 : i32
    %c0_i32_0 = arith.constant 0 : i32
    return %c0_i32, %arg1 : i32, i32
  }
  func.func @transform_4(%arg0: i32, %arg1: i32, %arg2: i32) -> (i32, i32) {
    %c0_i32 = arith.constant 0 : i32
    %c0_i32_0 = arith.constant 0 : i32
    return %c0_i32, %arg1 : i32, i32
  }
  func.func @transform_5(%arg0: i32, %arg1: i32, %arg2: i32) -> (i32, i32) {
    %c0_i32 = arith.constant 0 : i32
    return %arg0, %arg1 : i32, i32
  }
}

module attributes {stable_mosaic.version = 11 : i64} {
  func.func @kernel(%arg0: i32, %arg1: i32, %arg2: i32, %arg3: memref<48x384xbf16, #tpu.memory_space<vmem>>, %arg4: memref<384x128xbf16, #tpu.memory_space<vmem>>, %arg5: memref<1x128xf32, #tpu.memory_space<vmem>>, %arg6: memref<1x128xf32, #tpu.memory_space<vmem>>, %arg7: memref<48x128xbf16, #tpu.memory_space<vmem>>, %arg8: memref<48x128xf32, #tpu.memory_space<vmem>>) attributes {dimension_semantics = [#tpu.dimension_semantics<parallel>, #tpu.dimension_semantics<parallel>, #tpu.dimension_semantics<arbitrary>], iteration_bounds = array<i64: 2, 1, 3>, scalar_prefetch = 0 : i64, scratch_operands = 1 : i64, tpu.core_type = #tpu.core_type<tc>, window_params = [{transform_indices = @transform_0, window_bounds = array<i64: 48, 384>}, {transform_indices = @transform_1, window_bounds = array<i64: 384, 128>}, {transform_indices = @transform_2, window_bounds = array<i64: 1, 128>}, {transform_indices = @transform_3, window_bounds = array<i64: 1, 128>}, {transform_indices = @transform_4, window_bounds = array<i64: 48, 128>}]} {
    %c0_i32 = arith.constant 0 : i32
    %0 = arith.cmpi eq, %arg2, %c0_i32 : i32
    %1 = arith.extui %0 : i1 to i32
    %c0_i32_0 = arith.constant 0 : i32
    %2 = arith.cmpi ne, %1, %c0_i32_0 : i32
    scf.if %2 {
      %cst_9 = arith.constant 0.000000e+00 : f32
      %12 = vector.broadcast %cst_9 : f32 to vector<48x128xf32>
      %c0_10 = arith.constant 0 : index
      %c0_11 = arith.constant 0 : index
      %13 = vector.load %arg8[%c0_10, %c0_11] : memref<48x128xf32, #tpu.memory_space<vmem>>, vector<48x128xf32>
      tpu.vector_store %arg8[%c0_10, %c0_11], %12 {strides = array<i32>} : memref<48x128xf32, #tpu.memory_space<vmem>>, vector<48x128xf32>,
    } else {
    }
    %c0 = arith.constant 0 : index
    %c0_1 = arith.constant 0 : index
    %3 = vector.load %arg8[%c0, %c0_1] : memref<48x128xf32, #tpu.memory_space<vmem>>, vector<48x128xf32>
    %c0_2 = arith.constant 0 : index
    %c0_3 = arith.constant 0 : index
    %4 = vector.load %arg3[%c0_2, %c0_3] : memref<48x384xbf16, #tpu.memory_space<vmem>>, vector<48x384xbf16>
    %c0_4 = arith.constant 0 : index
    %c0_5 = arith.constant 0 : index
    %5 = vector.load %arg4[%c0_4, %c0_5] : memref<384x128xbf16, #tpu.memory_space<vmem>>, vector<384x128xbf16>
    %cst = arith.constant dense<0.000000e+00> : vector<48x128xf32>
    %6 = tpu.matmul %4, %5, %cst {dimension_numbers = #tpu.dot_dimension_numbers<[1], [0], [0], [1], [0, 0, 1, 1], [], []>} : vector<48x384xbf16>, vector<384x128xbf16>, vector<48x128xf32> -> vector<48x128xf32>
    %7 = arith.addf %3, %6 : vector<48x128xf32>
    %c0_6 = arith.constant 0 : index
    %c0_7 = arith.constant 0 : index
    %8 = vector.load %arg8[%c0_6, %c0_7] : memref<48x128xf32, #tpu.memory_space<vmem>>, vector<48x128xf32>
    tpu.vector_store %arg8[%c0_6, %c0_7], %7 {strides = array<i32>} : memref<48x128xf32, #tpu.memory_space<vmem>>, vector<48x128xf32>,
    %c2_i32 = arith.constant 2 : i32
    %9 = arith.cmpi eq, %arg2, %c2_i32 : i32
    %10 = arith.extui %9 : i1 to i32
    %c0_i32_8 = arith.constant 0 : i32
    %11 = arith.cmpi ne, %10, %c0_i32_8 : i32
    scf.if %11 {
      %c0_9 = arith.constant 0 : index
      %c0_10 = arith.constant 0 : index
      %12 = vector.load %arg8[%c0_9, %c0_10] : memref<48x128xf32, #tpu.memory_space<vmem>>, vector<48x128xf32>
      %c0_11 = arith.constant 0 : index
      %c0_12 = arith.constant 0 : index
      %13 = vector.load %arg5[%c0_11, %c0_12] : memref<1x128xf32, #tpu.memory_space<vmem>>, vector<1x128xf32>
      %14 = vector.broadcast %13 : vector<1x128xf32> to vector<48x128xf32>
      %15 = arith.mulf %12, %14 : vector<48x128xf32>
      %c0_13 = arith.constant 0 : index
      %c0_14 = arith.constant 0 : index
      %16 = vector.load %arg6[%c0_13, %c0_14] : memref<1x128xf32, #tpu.memory_space<vmem>>, vector<1x128xf32>
      %17 = vector.broadcast %16 : vector<1x128xf32> to vector<48x128xf32>
      %18 = arith.addf %15, %17 : vector<48x128xf32>
      %cst_15 = arith.constant 0.000000e+00 : f32
      %19 = vector.broadcast %cst_15 : f32 to vector<48x128xf32>
      %20 = arith.maximumf %18, %19 : vector<48x128xf32>
      %21 = arith.truncf %20 : vector<48x128xf32> to vector<48x128xbf16>
      %c0_16 = arith.constant 0 : index
      %c0_17 = arith.constant 0 : index
      %22 = vector.load %arg7[%c0_16, %c0_17] : memref<48x128xbf16, #tpu.memory_space<vmem>>, vector<48x128xbf16>
      tpu.vector_store %arg7[%c0_16, %c0_17], %21 {strides = array<i32>} : memref<48x128xbf16, #tpu.memory_space<vmem>>, vector<48x128xbf16>,
    } else {
    }
    return
  }
  func.func @transform_0(%arg0: i32, %arg1: i32, %arg2: i32) -> (i32, i32) {
    %c0_i32 = arith.constant 0 : i32
    return %arg0, %arg2 : i32, i32
  }
  func.func @transform_1(%arg0: i32, %arg1: i32, %arg2: i32) -> (i32, i32) {
    %c0_i32 = arith.constant 0 : i32
    return %arg2, %arg1 : i32, i32
  }
  func.func @transform_2(%arg0: i32, %arg1: i32, %arg2: i32) -> (i32, i32) {
    %c0_i32 = arith.constant 0 : i32
    %c0_i32_0 = arith.constant 0 : i32
    return %c0_i32, %arg1 : i32, i32
  }
  func.func @transform_3(%arg0: i32, %arg1: i32, %arg2: i32) -> (i32, i32) {
    %c0_i32 = arith.constant 0 : i32
    %c0_i32_0 = arith.constant 0 : i32
    return %c0_i32, %arg1 : i32, i32
  }
  func.func @transform_4(%arg0: i32, %arg1: i32, %arg2: i32) -> (i32, i32) {
    %c0_i32 = arith.constant 0 : i32
    return %arg0, %arg1 : i32, i32
  }
}

module attributes {stable_mosaic.version = 11 : i64} {
  func.func @kernel(%arg0: i32, %arg1: i32, %arg2: i32, %arg3: memref<48x128xbf16, #tpu.memory_space<vmem>>, %arg4: memref<128x128xbf16, #tpu.memory_space<vmem>>, %arg5: memref<1x128xf32, #tpu.memory_space<vmem>>, %arg6: memref<1x128xf32, #tpu.memory_space<vmem>>, %arg7: memref<48x128xbf16, #tpu.memory_space<vmem>>, %arg8: memref<48x128xbf16, #tpu.memory_space<vmem>>, %arg9: memref<48x128xf32, #tpu.memory_space<vmem>>) attributes {dimension_semantics = [#tpu.dimension_semantics<parallel>, #tpu.dimension_semantics<parallel>, #tpu.dimension_semantics<arbitrary>], iteration_bounds = array<i64: 2, 1, 1>, scalar_prefetch = 0 : i64, scratch_operands = 1 : i64, tpu.core_type = #tpu.core_type<tc>, window_params = [{transform_indices = @transform_0, window_bounds = array<i64: 48, 128>}, {transform_indices = @transform_1, window_bounds = array<i64: 128, 128>}, {transform_indices = @transform_2, window_bounds = array<i64: 1, 128>}, {transform_indices = @transform_3, window_bounds = array<i64: 1, 128>}, {transform_indices = @transform_4, window_bounds = array<i64: 48, 128>}, {transform_indices = @transform_5, window_bounds = array<i64: 48, 128>}]} {
    %c0_i32 = arith.constant 0 : i32
    %0 = arith.cmpi eq, %arg2, %c0_i32 : i32
    %1 = arith.extui %0 : i1 to i32
    %c0_i32_0 = arith.constant 0 : i32
    %2 = arith.cmpi ne, %1, %c0_i32_0 : i32
    scf.if %2 {
      %cst_10 = arith.constant 0.000000e+00 : f32
      %12 = vector.broadcast %cst_10 : f32 to vector<48x128xf32>
      %c0_11 = arith.constant 0 : index
      %c0_12 = arith.constant 0 : index
      %13 = vector.load %arg9[%c0_11, %c0_12] : memref<48x128xf32, #tpu.memory_space<vmem>>, vector<48x128xf32>
      tpu.vector_store %arg9[%c0_11, %c0_12], %12 {strides = array<i32>} : memref<48x128xf32, #tpu.memory_space<vmem>>, vector<48x128xf32>,
    } else {
    }
    %c0 = arith.constant 0 : index
    %c0_1 = arith.constant 0 : index
    %3 = vector.load %arg9[%c0, %c0_1] : memref<48x128xf32, #tpu.memory_space<vmem>>, vector<48x128xf32>
    %c0_2 = arith.constant 0 : index
    %c0_3 = arith.constant 0 : index
    %4 = vector.load %arg3[%c0_2, %c0_3] : memref<48x128xbf16, #tpu.memory_space<vmem>>, vector<48x128xbf16>
    %c0_4 = arith.constant 0 : index
    %c0_5 = arith.constant 0 : index
    %5 = vector.load %arg4[%c0_4, %c0_5] : memref<128x128xbf16, #tpu.memory_space<vmem>>, vector<128x128xbf16>
    %cst = arith.constant dense<0.000000e+00> : vector<48x128xf32>
    %6 = tpu.matmul %4, %5, %cst {dimension_numbers = #tpu.dot_dimension_numbers<[1], [0], [0], [1], [0, 0, 1, 1], [], []>} : vector<48x128xbf16>, vector<128x128xbf16>, vector<48x128xf32> -> vector<48x128xf32>
    %7 = arith.addf %3, %6 : vector<48x128xf32>
    %c0_6 = arith.constant 0 : index
    %c0_7 = arith.constant 0 : index
    %8 = vector.load %arg9[%c0_6, %c0_7] : memref<48x128xf32, #tpu.memory_space<vmem>>, vector<48x128xf32>
    tpu.vector_store %arg9[%c0_6, %c0_7], %7 {strides = array<i32>} : memref<48x128xf32, #tpu.memory_space<vmem>>, vector<48x128xf32>,
    %c0_i32_8 = arith.constant 0 : i32
    %9 = arith.cmpi eq, %arg2, %c0_i32_8 : i32
    %10 = arith.extui %9 : i1 to i32
    %c0_i32_9 = arith.constant 0 : i32
    %11 = arith.cmpi ne, %10, %c0_i32_9 : i32
    scf.if %11 {
      %c0_10 = arith.constant 0 : index
      %c0_11 = arith.constant 0 : index
      %12 = vector.load %arg9[%c0_10, %c0_11] : memref<48x128xf32, #tpu.memory_space<vmem>>, vector<48x128xf32>
      %c0_12 = arith.constant 0 : index
      %c0_13 = arith.constant 0 : index
      %13 = vector.load %arg5[%c0_12, %c0_13] : memref<1x128xf32, #tpu.memory_space<vmem>>, vector<1x128xf32>
      %14 = vector.broadcast %13 : vector<1x128xf32> to vector<48x128xf32>
      %15 = arith.mulf %12, %14 : vector<48x128xf32>
      %c0_14 = arith.constant 0 : index
      %c0_15 = arith.constant 0 : index
      %16 = vector.load %arg6[%c0_14, %c0_15] : memref<1x128xf32, #tpu.memory_space<vmem>>, vector<1x128xf32>
      %17 = vector.broadcast %16 : vector<1x128xf32> to vector<48x128xf32>
      %18 = arith.addf %15, %17 : vector<48x128xf32>
      %c0_16 = arith.constant 0 : index
      %c0_17 = arith.constant 0 : index
      %19 = vector.load %arg7[%c0_16, %c0_17] : memref<48x128xbf16, #tpu.memory_space<vmem>>, vector<48x128xbf16>
      %20 = arith.extf %19 : vector<48x128xbf16> to vector<48x128xf32>
      %21 = arith.addf %18, %20 : vector<48x128xf32>
      %cst_18 = arith.constant 0.000000e+00 : f32
      %22 = vector.broadcast %cst_18 : f32 to vector<48x128xf32>
      %23 = arith.maximumf %21, %22 : vector<48x128xf32>
      %24 = arith.truncf %23 : vector<48x128xf32> to vector<48x128xbf16>
      %c0_19 = arith.constant 0 : index
      %c0_20 = arith.constant 0 : index
      %25 = vector.load %arg8[%c0_19, %c0_20] : memref<48x128xbf16, #tpu.memory_space<vmem>>, vector<48x128xbf16>
      tpu.vector_store %arg8[%c0_19, %c0_20], %24 {strides = array<i32>} : memref<48x128xbf16, #tpu.memory_space<vmem>>, vector<48x128xbf16>,
    } else {
    }
    return
  }
  func.func @transform_0(%arg0: i32, %arg1: i32, %arg2: i32) -> (i32, i32) {
    %c0_i32 = arith.constant 0 : i32
    return %arg0, %arg2 : i32, i32
  }
  func.func @transform_1(%arg0: i32, %arg1: i32, %arg2: i32) -> (i32, i32) {
    %c0_i32 = arith.constant 0 : i32
    return %arg2, %arg1 : i32, i32
  }
  func.func @transform_2(%arg0: i32, %arg1: i32, %arg2: i32) -> (i32, i32) {
    %c0_i32 = arith.constant 0 : i32
    %c0_i32_0 = arith.constant 0 : i32
    return %c0_i32, %arg1 : i32, i32
  }
  func.func @transform_3(%arg0: i32, %arg1: i32, %arg2: i32) -> (i32, i32) {
    %c0_i32 = arith.constant 0 : i32
    %c0_i32_0 = arith.constant 0 : i32
    return %c0_i32, %arg1 : i32, i32
  }
  func.func @transform_4(%arg0: i32, %arg1: i32, %arg2: i32) -> (i32, i32) {
    %c0_i32 = arith.constant 0 : i32
    return %arg0, %arg1 : i32, i32
  }
  func.func @transform_5(%arg0: i32, %arg1: i32, %arg2: i32) -> (i32, i32) {
    %c0_i32 = arith.constant 0 : i32
    return %arg0, %arg1 : i32, i32
  }
}

module attributes {stable_mosaic.version = 11 : i64} {
  func.func @kernel(%arg0: i32, %arg1: i32, %arg2: i32, %arg3: memref<48x128xbf16, #tpu.memory_space<vmem>>, %arg4: memref<128x128xbf16, #tpu.memory_space<vmem>>, %arg5: memref<1x128xf32, #tpu.memory_space<vmem>>, %arg6: memref<1x128xf32, #tpu.memory_space<vmem>>, %arg7: memref<48x128xbf16, #tpu.memory_space<vmem>>, %arg8: memref<48x128xf32, #tpu.memory_space<vmem>>) attributes {dimension_semantics = [#tpu.dimension_semantics<parallel>, #tpu.dimension_semantics<parallel>, #tpu.dimension_semantics<arbitrary>], iteration_bounds = array<i64: 2, 1, 1>, scalar_prefetch = 0 : i64, scratch_operands = 1 : i64, tpu.core_type = #tpu.core_type<tc>, window_params = [{transform_indices = @transform_0, window_bounds = array<i64: 48, 128>}, {transform_indices = @transform_1, window_bounds = array<i64: 128, 128>}, {transform_indices = @transform_2, window_bounds = array<i64: 1, 128>}, {transform_indices = @transform_3, window_bounds = array<i64: 1, 128>}, {transform_indices = @transform_4, window_bounds = array<i64: 48, 128>}]} {
    %c0_i32 = arith.constant 0 : i32
    %0 = arith.cmpi eq, %arg2, %c0_i32 : i32
    %1 = arith.extui %0 : i1 to i32
    %c0_i32_0 = arith.constant 0 : i32
    %2 = arith.cmpi ne, %1, %c0_i32_0 : i32
    scf.if %2 {
      %cst_10 = arith.constant 0.000000e+00 : f32
      %12 = vector.broadcast %cst_10 : f32 to vector<48x128xf32>
      %c0_11 = arith.constant 0 : index
      %c0_12 = arith.constant 0 : index
      %13 = vector.load %arg8[%c0_11, %c0_12] : memref<48x128xf32, #tpu.memory_space<vmem>>, vector<48x128xf32>
      tpu.vector_store %arg8[%c0_11, %c0_12], %12 {strides = array<i32>} : memref<48x128xf32, #tpu.memory_space<vmem>>, vector<48x128xf32>,
    } else {
    }
    %c0 = arith.constant 0 : index
    %c0_1 = arith.constant 0 : index
    %3 = vector.load %arg8[%c0, %c0_1] : memref<48x128xf32, #tpu.memory_space<vmem>>, vector<48x128xf32>
    %c0_2 = arith.constant 0 : index
    %c0_3 = arith.constant 0 : index
    %4 = vector.load %arg3[%c0_2, %c0_3] : memref<48x128xbf16, #tpu.memory_space<vmem>>, vector<48x128xbf16>
    %c0_4 = arith.constant 0 : index
    %c0_5 = arith.constant 0 : index
    %5 = vector.load %arg4[%c0_4, %c0_5] : memref<128x128xbf16, #tpu.memory_space<vmem>>, vector<128x128xbf16>
    %cst = arith.constant dense<0.000000e+00> : vector<48x128xf32>
    %6 = tpu.matmul %4, %5, %cst {dimension_numbers = #tpu.dot_dimension_numbers<[1], [0], [0], [1], [0, 0, 1, 1], [], []>} : vector<48x128xbf16>, vector<128x128xbf16>, vector<48x128xf32> -> vector<48x128xf32>
    %7 = arith.addf %3, %6 : vector<48x128xf32>
    %c0_6 = arith.constant 0 : index
    %c0_7 = arith.constant 0 : index
    %8 = vector.load %arg8[%c0_6, %c0_7] : memref<48x128xf32, #tpu.memory_space<vmem>>, vector<48x128xf32>
    tpu.vector_store %arg8[%c0_6, %c0_7], %7 {strides = array<i32>} : memref<48x128xf32, #tpu.memory_space<vmem>>, vector<48x128xf32>,
    %c0_i32_8 = arith.constant 0 : i32
    %9 = arith.cmpi eq, %arg2, %c0_i32_8 : i32
    %10 = arith.extui %9 : i1 to i32
    %c0_i32_9 = arith.constant 0 : i32
    %11 = arith.cmpi ne, %10, %c0_i32_9 : i32
    scf.if %11 {
      %c0_10 = arith.constant 0 : index
      %c0_11 = arith.constant 0 : index
      %12 = vector.load %arg8[%c0_10, %c0_11] : memref<48x128xf32, #tpu.memory_space<vmem>>, vector<48x128xf32>
      %c0_12 = arith.constant 0 : index
      %c0_13 = arith.constant 0 : index
      %13 = vector.load %arg5[%c0_12, %c0_13] : memref<1x128xf32, #tpu.memory_space<vmem>>, vector<1x128xf32>
      %14 = vector.broadcast %13 : vector<1x128xf32> to vector<48x128xf32>
      %15 = arith.mulf %12, %14 : vector<48x128xf32>
      %c0_14 = arith.constant 0 : index
      %c0_15 = arith.constant 0 : index
      %16 = vector.load %arg6[%c0_14, %c0_15] : memref<1x128xf32, #tpu.memory_space<vmem>>, vector<1x128xf32>
      %17 = vector.broadcast %16 : vector<1x128xf32> to vector<48x128xf32>
      %18 = arith.addf %15, %17 : vector<48x128xf32>
      %cst_16 = arith.constant 0.000000e+00 : f32
      %19 = vector.broadcast %cst_16 : f32 to vector<48x128xf32>
      %20 = arith.maximumf %18, %19 : vector<48x128xf32>
      %21 = arith.truncf %20 : vector<48x128xf32> to vector<48x128xbf16>
      %c0_17 = arith.constant 0 : index
      %c0_18 = arith.constant 0 : index
      %22 = vector.load %arg7[%c0_17, %c0_18] : memref<48x128xbf16, #tpu.memory_space<vmem>>, vector<48x128xbf16>
      tpu.vector_store %arg7[%c0_17, %c0_18], %21 {strides = array<i32>} : memref<48x128xbf16, #tpu.memory_space<vmem>>, vector<48x128xbf16>,
    } else {
    }
    return
  }
  func.func @transform_0(%arg0: i32, %arg1: i32, %arg2: i32) -> (i32, i32) {
    %c0_i32 = arith.constant 0 : i32
    return %arg0, %arg2 : i32, i32
  }
  func.func @transform_1(%arg0: i32, %arg1: i32, %arg2: i32) -> (i32, i32) {
    %c0_i32 = arith.constant 0 : i32
    return %arg2, %arg1 : i32, i32
  }
  func.func @transform_2(%arg0: i32, %arg1: i32, %arg2: i32) -> (i32, i32) {
    %c0_i32 = arith.constant 0 : i32
    %c0_i32_0 = arith.constant 0 : i32
    return %c0_i32, %arg1 : i32, i32
  }
  func.func @transform_3(%arg0: i32, %arg1: i32, %arg2: i32) -> (i32, i32) {
    %c0_i32 = arith.constant 0 : i32
    %c0_i32_0 = arith.constant 0 : i32
    return %c0_i32, %arg1 : i32, i32
  }
  func.func @transform_4(%arg0: i32, %arg1: i32, %arg2: i32) -> (i32, i32) {
    %c0_i32 = arith.constant 0 : i32
    return %arg0, %arg1 : i32, i32
  }
}

module attributes {stable_mosaic.version = 11 : i64} {
  func.func @kernel(%arg0: i32, %arg1: i32, %arg2: i32, %arg3: memref<24x128xbf16, #tpu.memory_space<vmem>>, %arg4: memref<128x128xbf16, #tpu.memory_space<vmem>>, %arg5: memref<1x128xf32, #tpu.memory_space<vmem>>, %arg6: memref<1x128xf32, #tpu.memory_space<vmem>>, %arg7: memref<24x128xbf16, #tpu.memory_space<vmem>>, %arg8: memref<24x128xf32, #tpu.memory_space<vmem>>) attributes {dimension_semantics = [#tpu.dimension_semantics<parallel>, #tpu.dimension_semantics<parallel>, #tpu.dimension_semantics<arbitrary>], iteration_bounds = array<i64: 1, 1, 1>, scalar_prefetch = 0 : i64, scratch_operands = 1 : i64, tpu.core_type = #tpu.core_type<tc>, window_params = [{transform_indices = @transform_0, window_bounds = array<i64: 24, 128>}, {transform_indices = @transform_1, window_bounds = array<i64: 128, 128>}, {transform_indices = @transform_2, window_bounds = array<i64: 1, 128>}, {transform_indices = @transform_3, window_bounds = array<i64: 1, 128>}, {transform_indices = @transform_4, window_bounds = array<i64: 24, 128>}]} {
    %c0_i32 = arith.constant 0 : i32
    %0 = arith.cmpi eq, %arg2, %c0_i32 : i32
    %1 = arith.extui %0 : i1 to i32
    %c0_i32_0 = arith.constant 0 : i32
    %2 = arith.cmpi ne, %1, %c0_i32_0 : i32
    scf.if %2 {
      %cst_10 = arith.constant 0.000000e+00 : f32
      %12 = vector.broadcast %cst_10 : f32 to vector<24x128xf32>
      %c0_11 = arith.constant 0 : index
      %c0_12 = arith.constant 0 : index
      %13 = vector.load %arg8[%c0_11, %c0_12] : memref<24x128xf32, #tpu.memory_space<vmem>>, vector<24x128xf32>
      tpu.vector_store %arg8[%c0_11, %c0_12], %12 {strides = array<i32>} : memref<24x128xf32, #tpu.memory_space<vmem>>, vector<24x128xf32>,
    } else {
    }
    %c0 = arith.constant 0 : index
    %c0_1 = arith.constant 0 : index
    %3 = vector.load %arg8[%c0, %c0_1] : memref<24x128xf32, #tpu.memory_space<vmem>>, vector<24x128xf32>
    %c0_2 = arith.constant 0 : index
    %c0_3 = arith.constant 0 : index
    %4 = vector.load %arg3[%c0_2, %c0_3] : memref<24x128xbf16, #tpu.memory_space<vmem>>, vector<24x128xbf16>
    %c0_4 = arith.constant 0 : index
    %c0_5 = arith.constant 0 : index
    %5 = vector.load %arg4[%c0_4, %c0_5] : memref<128x128xbf16, #tpu.memory_space<vmem>>, vector<128x128xbf16>
    %cst = arith.constant dense<0.000000e+00> : vector<24x128xf32>
    %6 = tpu.matmul %4, %5, %cst {dimension_numbers = #tpu.dot_dimension_numbers<[1], [0], [0], [1], [0, 0, 1, 1], [], []>} : vector<24x128xbf16>, vector<128x128xbf16>, vector<24x128xf32> -> vector<24x128xf32>
    %7 = arith.addf %3, %6 : vector<24x128xf32>
    %c0_6 = arith.constant 0 : index
    %c0_7 = arith.constant 0 : index
    %8 = vector.load %arg8[%c0_6, %c0_7] : memref<24x128xf32, #tpu.memory_space<vmem>>, vector<24x128xf32>
    tpu.vector_store %arg8[%c0_6, %c0_7], %7 {strides = array<i32>} : memref<24x128xf32, #tpu.memory_space<vmem>>, vector<24x128xf32>,
    %c0_i32_8 = arith.constant 0 : i32
    %9 = arith.cmpi eq, %arg2, %c0_i32_8 : i32
    %10 = arith.extui %9 : i1 to i32
    %c0_i32_9 = arith.constant 0 : i32
    %11 = arith.cmpi ne, %10, %c0_i32_9 : i32
    scf.if %11 {
      %c0_10 = arith.constant 0 : index
      %c0_11 = arith.constant 0 : index
      %12 = vector.load %arg8[%c0_10, %c0_11] : memref<24x128xf32, #tpu.memory_space<vmem>>, vector<24x128xf32>
      %c0_12 = arith.constant 0 : index
      %c0_13 = arith.constant 0 : index
      %13 = vector.load %arg5[%c0_12, %c0_13] : memref<1x128xf32, #tpu.memory_space<vmem>>, vector<1x128xf32>
      %14 = vector.broadcast %13 : vector<1x128xf32> to vector<24x128xf32>
      %15 = arith.mulf %12, %14 : vector<24x128xf32>
      %c0_14 = arith.constant 0 : index
      %c0_15 = arith.constant 0 : index
      %16 = vector.load %arg6[%c0_14, %c0_15] : memref<1x128xf32, #tpu.memory_space<vmem>>, vector<1x128xf32>
      %17 = vector.broadcast %16 : vector<1x128xf32> to vector<24x128xf32>
      %18 = arith.addf %15, %17 : vector<24x128xf32>
      %19 = arith.truncf %18 : vector<24x128xf32> to vector<24x128xbf16>
      %c0_16 = arith.constant 0 : index
      %c0_17 = arith.constant 0 : index
      %20 = vector.load %arg7[%c0_16, %c0_17] : memref<24x128xbf16, #tpu.memory_space<vmem>>, vector<24x128xbf16>
      tpu.vector_store %arg7[%c0_16, %c0_17], %19 {strides = array<i32>} : memref<24x128xbf16, #tpu.memory_space<vmem>>, vector<24x128xbf16>,
    } else {
    }
    return
  }
  func.func @transform_0(%arg0: i32, %arg1: i32, %arg2: i32) -> (i32, i32) {
    %c0_i32 = arith.constant 0 : i32
    return %arg0, %arg2 : i32, i32
  }
  func.func @transform_1(%arg0: i32, %arg1: i32, %arg2: i32) -> (i32, i32) {
    %c0_i32 = arith.constant 0 : i32
    return %arg2, %arg1 : i32, i32
  }
  func.func @transform_2(%arg0: i32, %arg1: i32, %arg2: i32) -> (i32, i32) {
    %c0_i32 = arith.constant 0 : i32
    %c0_i32_0 = arith.constant 0 : i32
    return %c0_i32, %arg1 : i32, i32
  }
  func.func @transform_3(%arg0: i32, %arg1: i32, %arg2: i32) -> (i32, i32) {
    %c0_i32 = arith.constant 0 : i32
    %c0_i32_0 = arith.constant 0 : i32
    return %c0_i32, %arg1 : i32, i32
  }
  func.func @transform_4(%arg0: i32, %arg1: i32, %arg2: i32) -> (i32, i32) {
    %c0_i32 = arith.constant 0 : i32
    return %arg0, %arg1 : i32, i32
  }
}

module attributes {stable_mosaic.version = 11 : i64} {
  func.func @kernel(%arg0: i32, %arg1: i32, %arg2: i32, %arg3: memref<24x384xbf16, #tpu.memory_space<vmem>>, %arg4: memref<384x128xbf16, #tpu.memory_space<vmem>>, %arg5: memref<1x128xf32, #tpu.memory_space<vmem>>, %arg6: memref<1x128xf32, #tpu.memory_space<vmem>>, %arg7: memref<24x128xbf16, #tpu.memory_space<vmem>>, %arg8: memref<24x128xf32, #tpu.memory_space<vmem>>) attributes {dimension_semantics = [#tpu.dimension_semantics<parallel>, #tpu.dimension_semantics<parallel>, #tpu.dimension_semantics<arbitrary>], iteration_bounds = array<i64: 1, 1, 3>, scalar_prefetch = 0 : i64, scratch_operands = 1 : i64, tpu.core_type = #tpu.core_type<tc>, window_params = [{transform_indices = @transform_0, window_bounds = array<i64: 24, 384>}, {transform_indices = @transform_1, window_bounds = array<i64: 384, 128>}, {transform_indices = @transform_2, window_bounds = array<i64: 1, 128>}, {transform_indices = @transform_3, window_bounds = array<i64: 1, 128>}, {transform_indices = @transform_4, window_bounds = array<i64: 24, 128>}]} {
    %c0_i32 = arith.constant 0 : i32
    %0 = arith.cmpi eq, %arg2, %c0_i32 : i32
    %1 = arith.extui %0 : i1 to i32
    %c0_i32_0 = arith.constant 0 : i32
    %2 = arith.cmpi ne, %1, %c0_i32_0 : i32
    scf.if %2 {
      %cst_9 = arith.constant 0.000000e+00 : f32
      %12 = vector.broadcast %cst_9 : f32 to vector<24x128xf32>
      %c0_10 = arith.constant 0 : index
      %c0_11 = arith.constant 0 : index
      %13 = vector.load %arg8[%c0_10, %c0_11] : memref<24x128xf32, #tpu.memory_space<vmem>>, vector<24x128xf32>
      tpu.vector_store %arg8[%c0_10, %c0_11], %12 {strides = array<i32>} : memref<24x128xf32, #tpu.memory_space<vmem>>, vector<24x128xf32>,
    } else {
    }
    %c0 = arith.constant 0 : index
    %c0_1 = arith.constant 0 : index
    %3 = vector.load %arg8[%c0, %c0_1] : memref<24x128xf32, #tpu.memory_space<vmem>>, vector<24x128xf32>
    %c0_2 = arith.constant 0 : index
    %c0_3 = arith.constant 0 : index
    %4 = vector.load %arg3[%c0_2, %c0_3] : memref<24x384xbf16, #tpu.memory_space<vmem>>, vector<24x384xbf16>
    %c0_4 = arith.constant 0 : index
    %c0_5 = arith.constant 0 : index
    %5 = vector.load %arg4[%c0_4, %c0_5] : memref<384x128xbf16, #tpu.memory_space<vmem>>, vector<384x128xbf16>
    %cst = arith.constant dense<0.000000e+00> : vector<24x128xf32>
    %6 = tpu.matmul %4, %5, %cst {dimension_numbers = #tpu.dot_dimension_numbers<[1], [0], [0], [1], [0, 0, 1, 1], [], []>} : vector<24x384xbf16>, vector<384x128xbf16>, vector<24x128xf32> -> vector<24x128xf32>
    %7 = arith.addf %3, %6 : vector<24x128xf32>
    %c0_6 = arith.constant 0 : index
    %c0_7 = arith.constant 0 : index
    %8 = vector.load %arg8[%c0_6, %c0_7] : memref<24x128xf32, #tpu.memory_space<vmem>>, vector<24x128xf32>
    tpu.vector_store %arg8[%c0_6, %c0_7], %7 {strides = array<i32>} : memref<24x128xf32, #tpu.memory_space<vmem>>, vector<24x128xf32>,
    %c2_i32 = arith.constant 2 : i32
    %9 = arith.cmpi eq, %arg2, %c2_i32 : i32
    %10 = arith.extui %9 : i1 to i32
    %c0_i32_8 = arith.constant 0 : i32
    %11 = arith.cmpi ne, %10, %c0_i32_8 : i32
    scf.if %11 {
      %c0_9 = arith.constant 0 : index
      %c0_10 = arith.constant 0 : index
      %12 = vector.load %arg8[%c0_9, %c0_10] : memref<24x128xf32, #tpu.memory_space<vmem>>, vector<24x128xf32>
      %c0_11 = arith.constant 0 : index
      %c0_12 = arith.constant 0 : index
      %13 = vector.load %arg5[%c0_11, %c0_12] : memref<1x128xf32, #tpu.memory_space<vmem>>, vector<1x128xf32>
      %14 = vector.broadcast %13 : vector<1x128xf32> to vector<24x128xf32>
      %15 = arith.mulf %12, %14 : vector<24x128xf32>
      %c0_13 = arith.constant 0 : index
      %c0_14 = arith.constant 0 : index
      %16 = vector.load %arg6[%c0_13, %c0_14] : memref<1x128xf32, #tpu.memory_space<vmem>>, vector<1x128xf32>
      %17 = vector.broadcast %16 : vector<1x128xf32> to vector<24x128xf32>
      %18 = arith.addf %15, %17 : vector<24x128xf32>
      %cst_15 = arith.constant 0.000000e+00 : f32
      %19 = vector.broadcast %cst_15 : f32 to vector<24x128xf32>
      %20 = arith.maximumf %18, %19 : vector<24x128xf32>
      %21 = arith.truncf %20 : vector<24x128xf32> to vector<24x128xbf16>
      %c0_16 = arith.constant 0 : index
      %c0_17 = arith.constant 0 : index
      %22 = vector.load %arg7[%c0_16, %c0_17] : memref<24x128xbf16, #tpu.memory_space<vmem>>, vector<24x128xbf16>
      tpu.vector_store %arg7[%c0_16, %c0_17], %21 {strides = array<i32>} : memref<24x128xbf16, #tpu.memory_space<vmem>>, vector<24x128xbf16>,
    } else {
    }
    return
  }
  func.func @transform_0(%arg0: i32, %arg1: i32, %arg2: i32) -> (i32, i32) {
    %c0_i32 = arith.constant 0 : i32
    return %arg0, %arg2 : i32, i32
  }
  func.func @transform_1(%arg0: i32, %arg1: i32, %arg2: i32) -> (i32, i32) {
    %c0_i32 = arith.constant 0 : i32
    return %arg2, %arg1 : i32, i32
  }
  func.func @transform_2(%arg0: i32, %arg1: i32, %arg2: i32) -> (i32, i32) {
    %c0_i32 = arith.constant 0 : i32
    %c0_i32_0 = arith.constant 0 : i32
    return %c0_i32, %arg1 : i32, i32
  }
  func.func @transform_3(%arg0: i32, %arg1: i32, %arg2: i32) -> (i32, i32) {
    %c0_i32 = arith.constant 0 : i32
    %c0_i32_0 = arith.constant 0 : i32
    return %c0_i32, %arg1 : i32, i32
  }
  func.func @transform_4(%arg0: i32, %arg1: i32, %arg2: i32) -> (i32, i32) {
    %c0_i32 = arith.constant 0 : i32
    return %arg0, %arg1 : i32, i32
  }
}

module attributes {stable_mosaic.version = 11 : i64} {
  func.func @kernel(%arg0: i32, %arg1: i32, %arg2: i32, %arg3: memref<24x128xbf16, #tpu.memory_space<vmem>>, %arg4: memref<128x128xbf16, #tpu.memory_space<vmem>>, %arg5: memref<1x128xf32, #tpu.memory_space<vmem>>, %arg6: memref<1x128xf32, #tpu.memory_space<vmem>>, %arg7: memref<24x128xbf16, #tpu.memory_space<vmem>>, %arg8: memref<24x128xbf16, #tpu.memory_space<vmem>>, %arg9: memref<24x128xf32, #tpu.memory_space<vmem>>) attributes {dimension_semantics = [#tpu.dimension_semantics<parallel>, #tpu.dimension_semantics<parallel>, #tpu.dimension_semantics<arbitrary>], iteration_bounds = array<i64: 1, 1, 1>, scalar_prefetch = 0 : i64, scratch_operands = 1 : i64, tpu.core_type = #tpu.core_type<tc>, window_params = [{transform_indices = @transform_0, window_bounds = array<i64: 24, 128>}, {transform_indices = @transform_1, window_bounds = array<i64: 128, 128>}, {transform_indices = @transform_2, window_bounds = array<i64: 1, 128>}, {transform_indices = @transform_3, window_bounds = array<i64: 1, 128>}, {transform_indices = @transform_4, window_bounds = array<i64: 24, 128>}, {transform_indices = @transform_5, window_bounds = array<i64: 24, 128>}]} {
    %c0_i32 = arith.constant 0 : i32
    %0 = arith.cmpi eq, %arg2, %c0_i32 : i32
    %1 = arith.extui %0 : i1 to i32
    %c0_i32_0 = arith.constant 0 : i32
    %2 = arith.cmpi ne, %1, %c0_i32_0 : i32
    scf.if %2 {
      %cst_10 = arith.constant 0.000000e+00 : f32
      %12 = vector.broadcast %cst_10 : f32 to vector<24x128xf32>
      %c0_11 = arith.constant 0 : index
      %c0_12 = arith.constant 0 : index
      %13 = vector.load %arg9[%c0_11, %c0_12] : memref<24x128xf32, #tpu.memory_space<vmem>>, vector<24x128xf32>
      tpu.vector_store %arg9[%c0_11, %c0_12], %12 {strides = array<i32>} : memref<24x128xf32, #tpu.memory_space<vmem>>, vector<24x128xf32>,
    } else {
    }
    %c0 = arith.constant 0 : index
    %c0_1 = arith.constant 0 : index
    %3 = vector.load %arg9[%c0, %c0_1] : memref<24x128xf32, #tpu.memory_space<vmem>>, vector<24x128xf32>
    %c0_2 = arith.constant 0 : index
    %c0_3 = arith.constant 0 : index
    %4 = vector.load %arg3[%c0_2, %c0_3] : memref<24x128xbf16, #tpu.memory_space<vmem>>, vector<24x128xbf16>
    %c0_4 = arith.constant 0 : index
    %c0_5 = arith.constant 0 : index
    %5 = vector.load %arg4[%c0_4, %c0_5] : memref<128x128xbf16, #tpu.memory_space<vmem>>, vector<128x128xbf16>
    %cst = arith.constant dense<0.000000e+00> : vector<24x128xf32>
    %6 = tpu.matmul %4, %5, %cst {dimension_numbers = #tpu.dot_dimension_numbers<[1], [0], [0], [1], [0, 0, 1, 1], [], []>} : vector<24x128xbf16>, vector<128x128xbf16>, vector<24x128xf32> -> vector<24x128xf32>
    %7 = arith.addf %3, %6 : vector<24x128xf32>
    %c0_6 = arith.constant 0 : index
    %c0_7 = arith.constant 0 : index
    %8 = vector.load %arg9[%c0_6, %c0_7] : memref<24x128xf32, #tpu.memory_space<vmem>>, vector<24x128xf32>
    tpu.vector_store %arg9[%c0_6, %c0_7], %7 {strides = array<i32>} : memref<24x128xf32, #tpu.memory_space<vmem>>, vector<24x128xf32>,
    %c0_i32_8 = arith.constant 0 : i32
    %9 = arith.cmpi eq, %arg2, %c0_i32_8 : i32
    %10 = arith.extui %9 : i1 to i32
    %c0_i32_9 = arith.constant 0 : i32
    %11 = arith.cmpi ne, %10, %c0_i32_9 : i32
    scf.if %11 {
      %c0_10 = arith.constant 0 : index
      %c0_11 = arith.constant 0 : index
      %12 = vector.load %arg9[%c0_10, %c0_11] : memref<24x128xf32, #tpu.memory_space<vmem>>, vector<24x128xf32>
      %c0_12 = arith.constant 0 : index
      %c0_13 = arith.constant 0 : index
      %13 = vector.load %arg5[%c0_12, %c0_13] : memref<1x128xf32, #tpu.memory_space<vmem>>, vector<1x128xf32>
      %14 = vector.broadcast %13 : vector<1x128xf32> to vector<24x128xf32>
      %15 = arith.mulf %12, %14 : vector<24x128xf32>
      %c0_14 = arith.constant 0 : index
      %c0_15 = arith.constant 0 : index
      %16 = vector.load %arg6[%c0_14, %c0_15] : memref<1x128xf32, #tpu.memory_space<vmem>>, vector<1x128xf32>
      %17 = vector.broadcast %16 : vector<1x128xf32> to vector<24x128xf32>
      %18 = arith.addf %15, %17 : vector<24x128xf32>
      %c0_16 = arith.constant 0 : index
      %c0_17 = arith.constant 0 : index
      %19 = vector.load %arg7[%c0_16, %c0_17] : memref<24x128xbf16, #tpu.memory_space<vmem>>, vector<24x128xbf16>
      %20 = arith.extf %19 : vector<24x128xbf16> to vector<24x128xf32>
      %21 = arith.addf %18, %20 : vector<24x128xf32>
      %cst_18 = arith.constant 0.000000e+00 : f32
      %22 = vector.broadcast %cst_18 : f32 to vector<24x128xf32>
      %23 = arith.maximumf %21, %22 : vector<24x128xf32>
      %24 = arith.truncf %23 : vector<24x128xf32> to vector<24x128xbf16>
      %c0_19 = arith.constant 0 : index
      %c0_20 = arith.constant 0 : index
      %25 = vector.load %arg8[%c0_19, %c0_20] : memref<24x128xbf16, #tpu.memory_space<vmem>>, vector<24x128xbf16>
      tpu.vector_store %arg8[%c0_19, %c0_20], %24 {strides = array<i32>} : memref<24x128xbf16, #tpu.memory_space<vmem>>, vector<24x128xbf16>,
    } else {
    }
    return
  }
  func.func @transform_0(%arg0: i32, %arg1: i32, %arg2: i32) -> (i32, i32) {
    %c0_i32 = arith.constant 0 : i32
    return %arg0, %arg2 : i32, i32
  }
  func.func @transform_1(%arg0: i32, %arg1: i32, %arg2: i32) -> (i32, i32) {
    %c0_i32 = arith.constant 0 : i32
    return %arg2, %arg1 : i32, i32
  }
  func.func @transform_2(%arg0: i32, %arg1: i32, %arg2: i32) -> (i32, i32) {
    %c0_i32 = arith.constant 0 : i32
    %c0_i32_0 = arith.constant 0 : i32
    return %c0_i32, %arg1 : i32, i32
  }
  func.func @transform_3(%arg0: i32, %arg1: i32, %arg2: i32) -> (i32, i32) {
    %c0_i32 = arith.constant 0 : i32
    %c0_i32_0 = arith.constant 0 : i32
    return %c0_i32, %arg1 : i32, i32
  }
  func.func @transform_4(%arg0: i32, %arg1: i32, %arg2: i32) -> (i32, i32) {
    %c0_i32 = arith.constant 0 : i32
    return %arg0, %arg1 : i32, i32
  }
  func.func @transform_5(%arg0: i32, %arg1: i32, %arg2: i32) -> (i32, i32) {
    %c0_i32 = arith.constant 0 : i32
    return %arg0, %arg1 : i32, i32
  }
}

module attributes {stable_mosaic.version = 11 : i64} {
  func.func @kernel(%arg0: i32, %arg1: i32, %arg2: i32, %arg3: memref<24x128xbf16, #tpu.memory_space<vmem>>, %arg4: memref<128x128xbf16, #tpu.memory_space<vmem>>, %arg5: memref<1x128xf32, #tpu.memory_space<vmem>>, %arg6: memref<1x128xf32, #tpu.memory_space<vmem>>, %arg7: memref<24x128xbf16, #tpu.memory_space<vmem>>, %arg8: memref<24x128xf32, #tpu.memory_space<vmem>>) attributes {dimension_semantics = [#tpu.dimension_semantics<parallel>, #tpu.dimension_semantics<parallel>, #tpu.dimension_semantics<arbitrary>], iteration_bounds = array<i64: 1, 1, 1>, scalar_prefetch = 0 : i64, scratch_operands = 1 : i64, tpu.core_type = #tpu.core_type<tc>, window_params = [{transform_indices = @transform_0, window_bounds = array<i64: 24, 128>}, {transform_indices = @transform_1, window_bounds = array<i64: 128, 128>}, {transform_indices = @transform_2, window_bounds = array<i64: 1, 128>}, {transform_indices = @transform_3, window_bounds = array<i64: 1, 128>}, {transform_indices = @transform_4, window_bounds = array<i64: 24, 128>}]} {
    %c0_i32 = arith.constant 0 : i32
    %0 = arith.cmpi eq, %arg2, %c0_i32 : i32
    %1 = arith.extui %0 : i1 to i32
    %c0_i32_0 = arith.constant 0 : i32
    %2 = arith.cmpi ne, %1, %c0_i32_0 : i32
    scf.if %2 {
      %cst_10 = arith.constant 0.000000e+00 : f32
      %12 = vector.broadcast %cst_10 : f32 to vector<24x128xf32>
      %c0_11 = arith.constant 0 : index
      %c0_12 = arith.constant 0 : index
      %13 = vector.load %arg8[%c0_11, %c0_12] : memref<24x128xf32, #tpu.memory_space<vmem>>, vector<24x128xf32>
      tpu.vector_store %arg8[%c0_11, %c0_12], %12 {strides = array<i32>} : memref<24x128xf32, #tpu.memory_space<vmem>>, vector<24x128xf32>,
    } else {
    }
    %c0 = arith.constant 0 : index
    %c0_1 = arith.constant 0 : index
    %3 = vector.load %arg8[%c0, %c0_1] : memref<24x128xf32, #tpu.memory_space<vmem>>, vector<24x128xf32>
    %c0_2 = arith.constant 0 : index
    %c0_3 = arith.constant 0 : index
    %4 = vector.load %arg3[%c0_2, %c0_3] : memref<24x128xbf16, #tpu.memory_space<vmem>>, vector<24x128xbf16>
    %c0_4 = arith.constant 0 : index
    %c0_5 = arith.constant 0 : index
    %5 = vector.load %arg4[%c0_4, %c0_5] : memref<128x128xbf16, #tpu.memory_space<vmem>>, vector<128x128xbf16>
    %cst = arith.constant dense<0.000000e+00> : vector<24x128xf32>
    %6 = tpu.matmul %4, %5, %cst {dimension_numbers = #tpu.dot_dimension_numbers<[1], [0], [0], [1], [0, 0, 1, 1], [], []>} : vector<24x128xbf16>, vector<128x128xbf16>, vector<24x128xf32> -> vector<24x128xf32>
    %7 = arith.addf %3, %6 : vector<24x128xf32>
    %c0_6 = arith.constant 0 : index
    %c0_7 = arith.constant 0 : index
    %8 = vector.load %arg8[%c0_6, %c0_7] : memref<24x128xf32, #tpu.memory_space<vmem>>, vector<24x128xf32>
    tpu.vector_store %arg8[%c0_6, %c0_7], %7 {strides = array<i32>} : memref<24x128xf32, #tpu.memory_space<vmem>>, vector<24x128xf32>,
    %c0_i32_8 = arith.constant 0 : i32
    %9 = arith.cmpi eq, %arg2, %c0_i32_8 : i32
    %10 = arith.extui %9 : i1 to i32
    %c0_i32_9 = arith.constant 0 : i32
    %11 = arith.cmpi ne, %10, %c0_i32_9 : i32
    scf.if %11 {
      %c0_10 = arith.constant 0 : index
      %c0_11 = arith.constant 0 : index
      %12 = vector.load %arg8[%c0_10, %c0_11] : memref<24x128xf32, #tpu.memory_space<vmem>>, vector<24x128xf32>
      %c0_12 = arith.constant 0 : index
      %c0_13 = arith.constant 0 : index
      %13 = vector.load %arg5[%c0_12, %c0_13] : memref<1x128xf32, #tpu.memory_space<vmem>>, vector<1x128xf32>
      %14 = vector.broadcast %13 : vector<1x128xf32> to vector<24x128xf32>
      %15 = arith.mulf %12, %14 : vector<24x128xf32>
      %c0_14 = arith.constant 0 : index
      %c0_15 = arith.constant 0 : index
      %16 = vector.load %arg6[%c0_14, %c0_15] : memref<1x128xf32, #tpu.memory_space<vmem>>, vector<1x128xf32>
      %17 = vector.broadcast %16 : vector<1x128xf32> to vector<24x128xf32>
      %18 = arith.addf %15, %17 : vector<24x128xf32>
      %cst_16 = arith.constant 0.000000e+00 : f32
      %19 = vector.broadcast %cst_16 : f32 to vector<24x128xf32>
      %20 = arith.maximumf %18, %19 : vector<24x128xf32>
      %21 = arith.truncf %20 : vector<24x128xf32> to vector<24x128xbf16>
      %c0_17 = arith.constant 0 : index
      %c0_18 = arith.constant 0 : index
      %22 = vector.load %arg7[%c0_17, %c0_18] : memref<24x128xbf16, #tpu.memory_space<vmem>>, vector<24x128xbf16>
      tpu.vector_store %arg7[%c0_17, %c0_18], %21 {strides = array<i32>} : memref<24x128xbf16, #tpu.memory_space<vmem>>, vector<24x128xbf16>,
    } else {
    }
    return
  }
  func.func @transform_0(%arg0: i32, %arg1: i32, %arg2: i32) -> (i32, i32) {
    %c0_i32 = arith.constant 0 : i32
    return %arg0, %arg2 : i32, i32
  }
  func.func @transform_1(%arg0: i32, %arg1: i32, %arg2: i32) -> (i32, i32) {
    %c0_i32 = arith.constant 0 : i32
    return %arg2, %arg1 : i32, i32
  }
  func.func @transform_2(%arg0: i32, %arg1: i32, %arg2: i32) -> (i32, i32) {
    %c0_i32 = arith.constant 0 : i32
    %c0_i32_0 = arith.constant 0 : i32
    return %c0_i32, %arg1 : i32, i32
  }
  func.func @transform_3(%arg0: i32, %arg1: i32, %arg2: i32) -> (i32, i32) {
    %c0_i32 = arith.constant 0 : i32
    %c0_i32_0 = arith.constant 0 : i32
    return %c0_i32, %arg1 : i32, i32
  }
  func.func @transform_4(%arg0: i32, %arg1: i32, %arg2: i32) -> (i32, i32) {
    %c0_i32 = arith.constant 0 : i32
    return %arg0, %arg1 : i32, i32
  }
}

module attributes {stable_mosaic.version = 11 : i64} {
  func.func @kernel(%arg0: i32, %arg1: i32, %arg2: i32, %arg3: memref<24x128xbf16, #tpu.memory_space<vmem>>, %arg4: memref<128x256xbf16, #tpu.memory_space<vmem>>, %arg5: memref<1x256xf32, #tpu.memory_space<vmem>>, %arg6: memref<1x256xf32, #tpu.memory_space<vmem>>, %arg7: memref<1x256xf32, #tpu.memory_space<vmem>>, %arg8: memref<24x256xbf16, #tpu.memory_space<vmem>>, %arg9: memref<24x256xf32, #tpu.memory_space<vmem>>) attributes {dimension_semantics = [#tpu.dimension_semantics<parallel>, #tpu.dimension_semantics<parallel>, #tpu.dimension_semantics<arbitrary>], iteration_bounds = array<i64: 1, 1, 1>, scalar_prefetch = 0 : i64, scratch_operands = 1 : i64, tpu.core_type = #tpu.core_type<tc>, window_params = [{transform_indices = @transform_0, window_bounds = array<i64: 24, 128>}, {transform_indices = @transform_1, window_bounds = array<i64: 128, 256>}, {transform_indices = @transform_2, window_bounds = array<i64: 1, 256>}, {transform_indices = @transform_3, window_bounds = array<i64: 1, 256>}, {transform_indices = @transform_4, window_bounds = array<i64: 1, 256>}, {transform_indices = @transform_5, window_bounds = array<i64: 24, 256>}]} {
    %c0_i32 = arith.constant 0 : i32
    %0 = arith.cmpi eq, %arg2, %c0_i32 : i32
    %1 = arith.extui %0 : i1 to i32
    %c0_i32_0 = arith.constant 0 : i32
    %2 = arith.cmpi ne, %1, %c0_i32_0 : i32
    scf.if %2 {
      %cst_10 = arith.constant 0.000000e+00 : f32
      %12 = vector.broadcast %cst_10 : f32 to vector<24x256xf32>
      %c0_11 = arith.constant 0 : index
      %c0_12 = arith.constant 0 : index
      %13 = vector.load %arg9[%c0_11, %c0_12] : memref<24x256xf32, #tpu.memory_space<vmem>>, vector<24x256xf32>
      tpu.vector_store %arg9[%c0_11, %c0_12], %12 {strides = array<i32>} : memref<24x256xf32, #tpu.memory_space<vmem>>, vector<24x256xf32>,
    } else {
    }
    %c0 = arith.constant 0 : index
    %c0_1 = arith.constant 0 : index
    %3 = vector.load %arg9[%c0, %c0_1] : memref<24x256xf32, #tpu.memory_space<vmem>>, vector<24x256xf32>
    %c0_2 = arith.constant 0 : index
    %c0_3 = arith.constant 0 : index
    %4 = vector.load %arg3[%c0_2, %c0_3] : memref<24x128xbf16, #tpu.memory_space<vmem>>, vector<24x128xbf16>
    %c0_4 = arith.constant 0 : index
    %c0_5 = arith.constant 0 : index
    %5 = vector.load %arg4[%c0_4, %c0_5] : memref<128x256xbf16, #tpu.memory_space<vmem>>, vector<128x256xbf16>
    %cst = arith.constant dense<0.000000e+00> : vector<24x256xf32>
    %6 = tpu.matmul %4, %5, %cst {dimension_numbers = #tpu.dot_dimension_numbers<[1], [0], [0], [1], [0, 0, 1, 1], [], []>} : vector<24x128xbf16>, vector<128x256xbf16>, vector<24x256xf32> -> vector<24x256xf32>
    %7 = arith.addf %3, %6 : vector<24x256xf32>
    %c0_6 = arith.constant 0 : index
    %c0_7 = arith.constant 0 : index
    %8 = vector.load %arg9[%c0_6, %c0_7] : memref<24x256xf32, #tpu.memory_space<vmem>>, vector<24x256xf32>
    tpu.vector_store %arg9[%c0_6, %c0_7], %7 {strides = array<i32>} : memref<24x256xf32, #tpu.memory_space<vmem>>, vector<24x256xf32>,
    %c0_i32_8 = arith.constant 0 : i32
    %9 = arith.cmpi eq, %arg2, %c0_i32_8 : i32
    %10 = arith.extui %9 : i1 to i32
    %c0_i32_9 = arith.constant 0 : i32
    %11 = arith.cmpi ne, %10, %c0_i32_9 : i32
    scf.if %11 {
      %c0_10 = arith.constant 0 : index
      %c0_11 = arith.constant 0 : index
      %12 = vector.load %arg9[%c0_10, %c0_11] : memref<24x256xf32, #tpu.memory_space<vmem>>, vector<24x256xf32>
      %c0_12 = arith.constant 0 : index
      %c0_13 = arith.constant 0 : index
      %13 = vector.load %arg5[%c0_12, %c0_13] : memref<1x256xf32, #tpu.memory_space<vmem>>, vector<1x256xf32>
      %14 = vector.broadcast %13 : vector<1x256xf32> to vector<24x256xf32>
      %15 = arith.mulf %12, %14 : vector<24x256xf32>
      %c0_14 = arith.constant 0 : index
      %c0_15 = arith.constant 0 : index
      %16 = vector.load %arg6[%c0_14, %c0_15] : memref<1x256xf32, #tpu.memory_space<vmem>>, vector<1x256xf32>
      %17 = vector.broadcast %16 : vector<1x256xf32> to vector<24x256xf32>
      %18 = arith.addf %15, %17 : vector<24x256xf32>
      %c0_16 = arith.constant 0 : index
      %c0_17 = arith.constant 0 : index
      %19 = vector.load %arg7[%c0_16, %c0_17] : memref<1x256xf32, #tpu.memory_space<vmem>>, vector<1x256xf32>
      %cst_18 = arith.constant 5.000000e-01 : f32
      %20 = vector.broadcast %cst_18 : f32 to vector<1x256xf32>
      %21 = arith.cmpf ogt, %19, %20 : vector<1x256xf32>
      %cst_19 = arith.constant 0.000000e+00 : f32
      %22 = vector.broadcast %cst_19 : f32 to vector<24x256xf32>
      %23 = arith.maximumf %18, %22 : vector<24x256xf32>
      %24 = vector.shape_cast %21 : vector<1x256xi1> to vector<1x256xi1>
      %25 = vector.broadcast %24 : vector<1x256xi1> to vector<24x256xi1>
      %26 = arith.select %25, %23, %18 : vector<24x256xi1>, vector<24x256xf32>
      %27 = arith.truncf %26 : vector<24x256xf32> to vector<24x256xbf16>
      %c0_20 = arith.constant 0 : index
      %c0_21 = arith.constant 0 : index
      %28 = vector.load %arg8[%c0_20, %c0_21] : memref<24x256xbf16, #tpu.memory_space<vmem>>, vector<24x256xbf16>
      tpu.vector_store %arg8[%c0_20, %c0_21], %27 {strides = array<i32>} : memref<24x256xbf16, #tpu.memory_space<vmem>>, vector<24x256xbf16>,
    } else {
    }
    return
  }
  func.func @transform_0(%arg0: i32, %arg1: i32, %arg2: i32) -> (i32, i32) {
    %c0_i32 = arith.constant 0 : i32
    return %arg0, %arg2 : i32, i32
  }
  func.func @transform_1(%arg0: i32, %arg1: i32, %arg2: i32) -> (i32, i32) {
    %c0_i32 = arith.constant 0 : i32
    return %arg2, %arg1 : i32, i32
  }
  func.func @transform_2(%arg0: i32, %arg1: i32, %arg2: i32) -> (i32, i32) {
    %c0_i32 = arith.constant 0 : i32
    %c0_i32_0 = arith.constant 0 : i32
    return %c0_i32, %arg1 : i32, i32
  }
  func.func @transform_3(%arg0: i32, %arg1: i32, %arg2: i32) -> (i32, i32) {
    %c0_i32 = arith.constant 0 : i32
    %c0_i32_0 = arith.constant 0 : i32
    return %c0_i32, %arg1 : i32, i32
  }
  func.func @transform_4(%arg0: i32, %arg1: i32, %arg2: i32) -> (i32, i32) {
    %c0_i32 = arith.constant 0 : i32
    %c0_i32_0 = arith.constant 0 : i32
    return %c0_i32, %arg1 : i32, i32
  }
  func.func @transform_5(%arg0: i32, %arg1: i32, %arg2: i32) -> (i32, i32) {
    %c0_i32 = arith.constant 0 : i32
    return %arg0, %arg1 : i32, i32
  }
}

module attributes {stable_mosaic.version = 11 : i64} {
  func.func @kernel(%arg0: i32, %arg1: i32, %arg2: i32, %arg3: memref<24x128xbf16, #tpu.memory_space<vmem>>, %arg4: memref<128x384xbf16, #tpu.memory_space<vmem>>, %arg5: memref<1x384xf32, #tpu.memory_space<vmem>>, %arg6: memref<1x384xf32, #tpu.memory_space<vmem>>, %arg7: memref<1x384xf32, #tpu.memory_space<vmem>>, %arg8: memref<24x384xbf16, #tpu.memory_space<vmem>>, %arg9: memref<24x384xf32, #tpu.memory_space<vmem>>) attributes {dimension_semantics = [#tpu.dimension_semantics<parallel>, #tpu.dimension_semantics<parallel>, #tpu.dimension_semantics<arbitrary>], iteration_bounds = array<i64: 1, 1, 1>, scalar_prefetch = 0 : i64, scratch_operands = 1 : i64, tpu.core_type = #tpu.core_type<tc>, window_params = [{transform_indices = @transform_0, window_bounds = array<i64: 24, 128>}, {transform_indices = @transform_1, window_bounds = array<i64: 128, 384>}, {transform_indices = @transform_2, window_bounds = array<i64: 1, 384>}, {transform_indices = @transform_3, window_bounds = array<i64: 1, 384>}, {transform_indices = @transform_4, window_bounds = array<i64: 1, 384>}, {transform_indices = @transform_5, window_bounds = array<i64: 24, 384>}]} {
    %c0_i32 = arith.constant 0 : i32
    %0 = arith.cmpi eq, %arg2, %c0_i32 : i32
    %1 = arith.extui %0 : i1 to i32
    %c0_i32_0 = arith.constant 0 : i32
    %2 = arith.cmpi ne, %1, %c0_i32_0 : i32
    scf.if %2 {
      %cst_10 = arith.constant 0.000000e+00 : f32
      %12 = vector.broadcast %cst_10 : f32 to vector<24x384xf32>
      %c0_11 = arith.constant 0 : index
      %c0_12 = arith.constant 0 : index
      %13 = vector.load %arg9[%c0_11, %c0_12] : memref<24x384xf32, #tpu.memory_space<vmem>>, vector<24x384xf32>
      tpu.vector_store %arg9[%c0_11, %c0_12], %12 {strides = array<i32>} : memref<24x384xf32, #tpu.memory_space<vmem>>, vector<24x384xf32>,
    } else {
    }
    %c0 = arith.constant 0 : index
    %c0_1 = arith.constant 0 : index
    %3 = vector.load %arg9[%c0, %c0_1] : memref<24x384xf32, #tpu.memory_space<vmem>>, vector<24x384xf32>
    %c0_2 = arith.constant 0 : index
    %c0_3 = arith.constant 0 : index
    %4 = vector.load %arg3[%c0_2, %c0_3] : memref<24x128xbf16, #tpu.memory_space<vmem>>, vector<24x128xbf16>
    %c0_4 = arith.constant 0 : index
    %c0_5 = arith.constant 0 : index
    %5 = vector.load %arg4[%c0_4, %c0_5] : memref<128x384xbf16, #tpu.memory_space<vmem>>, vector<128x384xbf16>
    %cst = arith.constant dense<0.000000e+00> : vector<24x384xf32>
    %6 = tpu.matmul %4, %5, %cst {dimension_numbers = #tpu.dot_dimension_numbers<[1], [0], [0], [1], [0, 0, 1, 1], [], []>} : vector<24x128xbf16>, vector<128x384xbf16>, vector<24x384xf32> -> vector<24x384xf32>
    %7 = arith.addf %3, %6 : vector<24x384xf32>
    %c0_6 = arith.constant 0 : index
    %c0_7 = arith.constant 0 : index
    %8 = vector.load %arg9[%c0_6, %c0_7] : memref<24x384xf32, #tpu.memory_space<vmem>>, vector<24x384xf32>
    tpu.vector_store %arg9[%c0_6, %c0_7], %7 {strides = array<i32>} : memref<24x384xf32, #tpu.memory_space<vmem>>, vector<24x384xf32>,
    %c0_i32_8 = arith.constant 0 : i32
    %9 = arith.cmpi eq, %arg2, %c0_i32_8 : i32
    %10 = arith.extui %9 : i1 to i32
    %c0_i32_9 = arith.constant 0 : i32
    %11 = arith.cmpi ne, %10, %c0_i32_9 : i32
    scf.if %11 {
      %c0_10 = arith.constant 0 : index
      %c0_11 = arith.constant 0 : index
      %12 = vector.load %arg9[%c0_10, %c0_11] : memref<24x384xf32, #tpu.memory_space<vmem>>, vector<24x384xf32>
      %c0_12 = arith.constant 0 : index
      %c0_13 = arith.constant 0 : index
      %13 = vector.load %arg5[%c0_12, %c0_13] : memref<1x384xf32, #tpu.memory_space<vmem>>, vector<1x384xf32>
      %14 = vector.broadcast %13 : vector<1x384xf32> to vector<24x384xf32>
      %15 = arith.mulf %12, %14 : vector<24x384xf32>
      %c0_14 = arith.constant 0 : index
      %c0_15 = arith.constant 0 : index
      %16 = vector.load %arg6[%c0_14, %c0_15] : memref<1x384xf32, #tpu.memory_space<vmem>>, vector<1x384xf32>
      %17 = vector.broadcast %16 : vector<1x384xf32> to vector<24x384xf32>
      %18 = arith.addf %15, %17 : vector<24x384xf32>
      %c0_16 = arith.constant 0 : index
      %c0_17 = arith.constant 0 : index
      %19 = vector.load %arg7[%c0_16, %c0_17] : memref<1x384xf32, #tpu.memory_space<vmem>>, vector<1x384xf32>
      %cst_18 = arith.constant 5.000000e-01 : f32
      %20 = vector.broadcast %cst_18 : f32 to vector<1x384xf32>
      %21 = arith.cmpf ogt, %19, %20 : vector<1x384xf32>
      %cst_19 = arith.constant 0.000000e+00 : f32
      %22 = vector.broadcast %cst_19 : f32 to vector<24x384xf32>
      %23 = arith.maximumf %18, %22 : vector<24x384xf32>
      %24 = vector.shape_cast %21 : vector<1x384xi1> to vector<1x384xi1>
      %25 = vector.broadcast %24 : vector<1x384xi1> to vector<24x384xi1>
      %26 = arith.select %25, %23, %18 : vector<24x384xi1>, vector<24x384xf32>
      %27 = arith.truncf %26 : vector<24x384xf32> to vector<24x384xbf16>
      %c0_20 = arith.constant 0 : index
      %c0_21 = arith.constant 0 : index
      %28 = vector.load %arg8[%c0_20, %c0_21] : memref<24x384xbf16, #tpu.memory_space<vmem>>, vector<24x384xbf16>
      tpu.vector_store %arg8[%c0_20, %c0_21], %27 {strides = array<i32>} : memref<24x384xbf16, #tpu.memory_space<vmem>>, vector<24x384xbf16>,
    } else {
    }
    return
  }
  func.func @transform_0(%arg0: i32, %arg1: i32, %arg2: i32) -> (i32, i32) {
    %c0_i32 = arith.constant 0 : i32
    return %arg0, %arg2 : i32, i32
  }
  func.func @transform_1(%arg0: i32, %arg1: i32, %arg2: i32) -> (i32, i32) {
    %c0_i32 = arith.constant 0 : i32
    return %arg2, %arg1 : i32, i32
  }
  func.func @transform_2(%arg0: i32, %arg1: i32, %arg2: i32) -> (i32, i32) {
    %c0_i32 = arith.constant 0 : i32
    %c0_i32_0 = arith.constant 0 : i32
    return %c0_i32, %arg1 : i32, i32
  }
  func.func @transform_3(%arg0: i32, %arg1: i32, %arg2: i32) -> (i32, i32) {
    %c0_i32 = arith.constant 0 : i32
    %c0_i32_0 = arith.constant 0 : i32
    return %c0_i32, %arg1 : i32, i32
  }
  func.func @transform_4(%arg0: i32, %arg1: i32, %arg2: i32) -> (i32, i32) {
    %c0_i32 = arith.constant 0 : i32
    %c0_i32_0 = arith.constant 0 : i32
    return %c0_i32, %arg1 : i32, i32
  }
  func.func @transform_5(%arg0: i32, %arg1: i32, %arg2: i32) -> (i32, i32) {
    %c0_i32 = arith.constant 0 : i32
    return %arg0, %arg1 : i32, i32
  }
}

module attributes {stable_mosaic.version = 11 : i64} {
  func.func @kernel(%arg0: i32, %arg1: i32, %arg2: i32, %arg3: memref<24x128xbf16, #tpu.memory_space<vmem>>, %arg4: memref<128x256xbf16, #tpu.memory_space<vmem>>, %arg5: memref<1x256xf32, #tpu.memory_space<vmem>>, %arg6: memref<1x256xf32, #tpu.memory_space<vmem>>, %arg7: memref<24x256xbf16, #tpu.memory_space<vmem>>, %arg8: memref<24x256xbf16, #tpu.memory_space<vmem>>, %arg9: memref<24x256xf32, #tpu.memory_space<vmem>>) attributes {dimension_semantics = [#tpu.dimension_semantics<parallel>, #tpu.dimension_semantics<parallel>, #tpu.dimension_semantics<arbitrary>], iteration_bounds = array<i64: 1, 1, 1>, scalar_prefetch = 0 : i64, scratch_operands = 1 : i64, tpu.core_type = #tpu.core_type<tc>, window_params = [{transform_indices = @transform_0, window_bounds = array<i64: 24, 128>}, {transform_indices = @transform_1, window_bounds = array<i64: 128, 256>}, {transform_indices = @transform_2, window_bounds = array<i64: 1, 256>}, {transform_indices = @transform_3, window_bounds = array<i64: 1, 256>}, {transform_indices = @transform_4, window_bounds = array<i64: 24, 256>}, {transform_indices = @transform_5, window_bounds = array<i64: 24, 256>}]} {
    %c0_i32 = arith.constant 0 : i32
    %0 = arith.cmpi eq, %arg2, %c0_i32 : i32
    %1 = arith.extui %0 : i1 to i32
    %c0_i32_0 = arith.constant 0 : i32
    %2 = arith.cmpi ne, %1, %c0_i32_0 : i32
    scf.if %2 {
      %cst_10 = arith.constant 0.000000e+00 : f32
      %12 = vector.broadcast %cst_10 : f32 to vector<24x256xf32>
      %c0_11 = arith.constant 0 : index
      %c0_12 = arith.constant 0 : index
      %13 = vector.load %arg9[%c0_11, %c0_12] : memref<24x256xf32, #tpu.memory_space<vmem>>, vector<24x256xf32>
      tpu.vector_store %arg9[%c0_11, %c0_12], %12 {strides = array<i32>} : memref<24x256xf32, #tpu.memory_space<vmem>>, vector<24x256xf32>,
    } else {
    }
    %c0 = arith.constant 0 : index
    %c0_1 = arith.constant 0 : index
    %3 = vector.load %arg9[%c0, %c0_1] : memref<24x256xf32, #tpu.memory_space<vmem>>, vector<24x256xf32>
    %c0_2 = arith.constant 0 : index
    %c0_3 = arith.constant 0 : index
    %4 = vector.load %arg3[%c0_2, %c0_3] : memref<24x128xbf16, #tpu.memory_space<vmem>>, vector<24x128xbf16>
    %c0_4 = arith.constant 0 : index
    %c0_5 = arith.constant 0 : index
    %5 = vector.load %arg4[%c0_4, %c0_5] : memref<128x256xbf16, #tpu.memory_space<vmem>>, vector<128x256xbf16>
    %cst = arith.constant dense<0.000000e+00> : vector<24x256xf32>
    %6 = tpu.matmul %4, %5, %cst {dimension_numbers = #tpu.dot_dimension_numbers<[1], [0], [0], [1], [0, 0, 1, 1], [], []>} : vector<24x128xbf16>, vector<128x256xbf16>, vector<24x256xf32> -> vector<24x256xf32>
    %7 = arith.addf %3, %6 : vector<24x256xf32>
    %c0_6 = arith.constant 0 : index
    %c0_7 = arith.constant 0 : index
    %8 = vector.load %arg9[%c0_6, %c0_7] : memref<24x256xf32, #tpu.memory_space<vmem>>, vector<24x256xf32>
    tpu.vector_store %arg9[%c0_6, %c0_7], %7 {strides = array<i32>} : memref<24x256xf32, #tpu.memory_space<vmem>>, vector<24x256xf32>,
    %c0_i32_8 = arith.constant 0 : i32
    %9 = arith.cmpi eq, %arg2, %c0_i32_8 : i32
    %10 = arith.extui %9 : i1 to i32
    %c0_i32_9 = arith.constant 0 : i32
    %11 = arith.cmpi ne, %10, %c0_i32_9 : i32
    scf.if %11 {
      %c0_10 = arith.constant 0 : index
      %c0_11 = arith.constant 0 : index
      %12 = vector.load %arg9[%c0_10, %c0_11] : memref<24x256xf32, #tpu.memory_space<vmem>>, vector<24x256xf32>
      %c0_12 = arith.constant 0 : index
      %c0_13 = arith.constant 0 : index
      %13 = vector.load %arg5[%c0_12, %c0_13] : memref<1x256xf32, #tpu.memory_space<vmem>>, vector<1x256xf32>
      %14 = vector.broadcast %13 : vector<1x256xf32> to vector<24x256xf32>
      %15 = arith.mulf %12, %14 : vector<24x256xf32>
      %c0_14 = arith.constant 0 : index
      %c0_15 = arith.constant 0 : index
      %16 = vector.load %arg6[%c0_14, %c0_15] : memref<1x256xf32, #tpu.memory_space<vmem>>, vector<1x256xf32>
      %17 = vector.broadcast %16 : vector<1x256xf32> to vector<24x256xf32>
      %18 = arith.addf %15, %17 : vector<24x256xf32>
      %c0_16 = arith.constant 0 : index
      %c0_17 = arith.constant 0 : index
      %19 = vector.load %arg7[%c0_16, %c0_17] : memref<24x256xbf16, #tpu.memory_space<vmem>>, vector<24x256xbf16>
      %20 = arith.extf %19 : vector<24x256xbf16> to vector<24x256xf32>
      %21 = arith.addf %18, %20 : vector<24x256xf32>
      %cst_18 = arith.constant 0.000000e+00 : f32
      %22 = vector.broadcast %cst_18 : f32 to vector<24x256xf32>
      %23 = arith.maximumf %21, %22 : vector<24x256xf32>
      %24 = arith.truncf %23 : vector<24x256xf32> to vector<24x256xbf16>
      %c0_19 = arith.constant 0 : index
      %c0_20 = arith.constant 0 : index
      %25 = vector.load %arg8[%c0_19, %c0_20] : memref<24x256xbf16, #tpu.memory_space<vmem>>, vector<24x256xbf16>
      tpu.vector_store %arg8[%c0_19, %c0_20], %24 {strides = array<i32>} : memref<24x256xbf16, #tpu.memory_space<vmem>>, vector<24x256xbf16>,
    } else {
    }
    return
  }
  func.func @transform_0(%arg0: i32, %arg1: i32, %arg2: i32) -> (i32, i32) {
    %c0_i32 = arith.constant 0 : i32
    return %arg0, %arg2 : i32, i32
  }
  func.func @transform_1(%arg0: i32, %arg1: i32, %arg2: i32) -> (i32, i32) {
    %c0_i32 = arith.constant 0 : i32
    return %arg2, %arg1 : i32, i32
  }
  func.func @transform_2(%arg0: i32, %arg1: i32, %arg2: i32) -> (i32, i32) {
    %c0_i32 = arith.constant 0 : i32
    %c0_i32_0 = arith.constant 0 : i32
    return %c0_i32, %arg1 : i32, i32
  }
  func.func @transform_3(%arg0: i32, %arg1: i32, %arg2: i32) -> (i32, i32) {
    %c0_i32 = arith.constant 0 : i32
    %c0_i32_0 = arith.constant 0 : i32
    return %c0_i32, %arg1 : i32, i32
  }
  func.func @transform_4(%arg0: i32, %arg1: i32, %arg2: i32) -> (i32, i32) {
    %c0_i32 = arith.constant 0 : i32
    return %arg0, %arg1 : i32, i32
  }
  func.func @transform_5(%arg0: i32, %arg1: i32, %arg2: i32) -> (i32, i32) {
    %c0_i32 = arith.constant 0 : i32
    return %arg0, %arg1 : i32, i32
  }
}

module attributes {stable_mosaic.version = 11 : i64} {
  func.func @kernel(%arg0: i32, %arg1: i32, %arg2: i32, %arg3: memref<24x256xbf16, #tpu.memory_space<vmem>>, %arg4: memref<256x128xbf16, #tpu.memory_space<vmem>>, %arg5: memref<1x128xf32, #tpu.memory_space<vmem>>, %arg6: memref<1x128xf32, #tpu.memory_space<vmem>>, %arg7: memref<24x128xbf16, #tpu.memory_space<vmem>>, %arg8: memref<24x128xf32, #tpu.memory_space<vmem>>) attributes {dimension_semantics = [#tpu.dimension_semantics<parallel>, #tpu.dimension_semantics<parallel>, #tpu.dimension_semantics<arbitrary>], iteration_bounds = array<i64: 1, 1, 1>, scalar_prefetch = 0 : i64, scratch_operands = 1 : i64, tpu.core_type = #tpu.core_type<tc>, window_params = [{transform_indices = @transform_0, window_bounds = array<i64: 24, 256>}, {transform_indices = @transform_1, window_bounds = array<i64: 256, 128>}, {transform_indices = @transform_2, window_bounds = array<i64: 1, 128>}, {transform_indices = @transform_3, window_bounds = array<i64: 1, 128>}, {transform_indices = @transform_4, window_bounds = array<i64: 24, 128>}]} {
    %c0_i32 = arith.constant 0 : i32
    %0 = arith.cmpi eq, %arg2, %c0_i32 : i32
    %1 = arith.extui %0 : i1 to i32
    %c0_i32_0 = arith.constant 0 : i32
    %2 = arith.cmpi ne, %1, %c0_i32_0 : i32
    scf.if %2 {
      %cst_10 = arith.constant 0.000000e+00 : f32
      %12 = vector.broadcast %cst_10 : f32 to vector<24x128xf32>
      %c0_11 = arith.constant 0 : index
      %c0_12 = arith.constant 0 : index
      %13 = vector.load %arg8[%c0_11, %c0_12] : memref<24x128xf32, #tpu.memory_space<vmem>>, vector<24x128xf32>
      tpu.vector_store %arg8[%c0_11, %c0_12], %12 {strides = array<i32>} : memref<24x128xf32, #tpu.memory_space<vmem>>, vector<24x128xf32>,
    } else {
    }
    %c0 = arith.constant 0 : index
    %c0_1 = arith.constant 0 : index
    %3 = vector.load %arg8[%c0, %c0_1] : memref<24x128xf32, #tpu.memory_space<vmem>>, vector<24x128xf32>
    %c0_2 = arith.constant 0 : index
    %c0_3 = arith.constant 0 : index
    %4 = vector.load %arg3[%c0_2, %c0_3] : memref<24x256xbf16, #tpu.memory_space<vmem>>, vector<24x256xbf16>
    %c0_4 = arith.constant 0 : index
    %c0_5 = arith.constant 0 : index
    %5 = vector.load %arg4[%c0_4, %c0_5] : memref<256x128xbf16, #tpu.memory_space<vmem>>, vector<256x128xbf16>
    %cst = arith.constant dense<0.000000e+00> : vector<24x128xf32>
    %6 = tpu.matmul %4, %5, %cst {dimension_numbers = #tpu.dot_dimension_numbers<[1], [0], [0], [1], [0, 0, 1, 1], [], []>} : vector<24x256xbf16>, vector<256x128xbf16>, vector<24x128xf32> -> vector<24x128xf32>
    %7 = arith.addf %3, %6 : vector<24x128xf32>
    %c0_6 = arith.constant 0 : index
    %c0_7 = arith.constant 0 : index
    %8 = vector.load %arg8[%c0_6, %c0_7] : memref<24x128xf32, #tpu.memory_space<vmem>>, vector<24x128xf32>
    tpu.vector_store %arg8[%c0_6, %c0_7], %7 {strides = array<i32>} : memref<24x128xf32, #tpu.memory_space<vmem>>, vector<24x128xf32>,
    %c0_i32_8 = arith.constant 0 : i32
    %9 = arith.cmpi eq, %arg2, %c0_i32_8 : i32
    %10 = arith.extui %9 : i1 to i32
    %c0_i32_9 = arith.constant 0 : i32
    %11 = arith.cmpi ne, %10, %c0_i32_9 : i32
    scf.if %11 {
      %c0_10 = arith.constant 0 : index
      %c0_11 = arith.constant 0 : index
      %12 = vector.load %arg8[%c0_10, %c0_11] : memref<24x128xf32, #tpu.memory_space<vmem>>, vector<24x128xf32>
      %c0_12 = arith.constant 0 : index
      %c0_13 = arith.constant 0 : index
      %13 = vector.load %arg5[%c0_12, %c0_13] : memref<1x128xf32, #tpu.memory_space<vmem>>, vector<1x128xf32>
      %14 = vector.broadcast %13 : vector<1x128xf32> to vector<24x128xf32>
      %15 = arith.mulf %12, %14 : vector<24x128xf32>
      %c0_14 = arith.constant 0 : index
      %c0_15 = arith.constant 0 : index
      %16 = vector.load %arg6[%c0_14, %c0_15] : memref<1x128xf32, #tpu.memory_space<vmem>>, vector<1x128xf32>
      %17 = vector.broadcast %16 : vector<1x128xf32> to vector<24x128xf32>
      %18 = arith.addf %15, %17 : vector<24x128xf32>
      %cst_16 = arith.constant 0.000000e+00 : f32
      %19 = vector.broadcast %cst_16 : f32 to vector<24x128xf32>
      %20 = arith.maximumf %18, %19 : vector<24x128xf32>
      %21 = arith.truncf %20 : vector<24x128xf32> to vector<24x128xbf16>
      %c0_17 = arith.constant 0 : index
      %c0_18 = arith.constant 0 : index
      %22 = vector.load %arg7[%c0_17, %c0_18] : memref<24x128xbf16, #tpu.memory_space<vmem>>, vector<24x128xbf16>
      tpu.vector_store %arg7[%c0_17, %c0_18], %21 {strides = array<i32>} : memref<24x128xbf16, #tpu.memory_space<vmem>>, vector<24x128xbf16>,
    } else {
    }
    return
  }
  func.func @transform_0(%arg0: i32, %arg1: i32, %arg2: i32) -> (i32, i32) {
    %c0_i32 = arith.constant 0 : i32
    return %arg0, %arg2 : i32, i32
  }
  func.func @transform_1(%arg0: i32, %arg1: i32, %arg2: i32) -> (i32, i32) {
    %c0_i32 = arith.constant 0 : i32
    return %arg2, %arg1 : i32, i32
  }
  func.func @transform_2(%arg0: i32, %arg1: i32, %arg2: i32) -> (i32, i32) {
    %c0_i32 = arith.constant 0 : i32
    %c0_i32_0 = arith.constant 0 : i32
    return %c0_i32, %arg1 : i32, i32
  }
  func.func @transform_3(%arg0: i32, %arg1: i32, %arg2: i32) -> (i32, i32) {
    %c0_i32 = arith.constant 0 : i32
    %c0_i32_0 = arith.constant 0 : i32
    return %c0_i32, %arg1 : i32, i32
  }
  func.func @transform_4(%arg0: i32, %arg1: i32, %arg2: i32) -> (i32, i32) {
    %c0_i32 = arith.constant 0 : i32
    return %arg0, %arg1 : i32, i32
  }
}

module attributes {stable_mosaic.version = 11 : i64} {
  func.func @_mean_axis1_kernel(%arg0: memref<12x2x256xbf16, #tpu.memory_space<vmem>>, %arg1: memref<12x256xf32, #tpu.memory_space<vmem>>) attributes {dimension_semantics = [], scalar_prefetch = 0 : i64, scratch_operands = 0 : i64, tpu.core_type = #tpu.core_type<tc>} {
    %c0 = arith.constant 0 : index
    %c0_0 = arith.constant 0 : index
    %c0_1 = arith.constant 0 : index
    %0 = vector.load %arg0[%c0, %c0_0, %c0_1] : memref<12x2x256xbf16, #tpu.memory_space<vmem>>, vector<12x2x256xbf16>
    %1 = arith.extf %0 : vector<12x2x256xbf16> to vector<12x2x256xf32>
    %cst = arith.constant dense<0.000000e+00> : vector<12x256xf32>
    %2 = vector.multi_reduction <add>, %1, %cst [1] : vector<12x2x256xf32> to vector<12x256xf32>
    %cst_2 = arith.constant 2.000000e+00 : f32
    %3 = vector.broadcast %cst_2 : f32 to vector<12x256xf32>
    %4 = arith.divf %2, %3 : vector<12x256xf32>
    %c0_3 = arith.constant 0 : index
    %c0_4 = arith.constant 0 : index
    %5 = vector.load %arg1[%c0_3, %c0_4] : memref<12x256xf32, #tpu.memory_space<vmem>>, vector<12x256xf32>
    tpu.vector_store %arg1[%c0_3, %c0_4], %4 {strides = array<i32>} : memref<12x256xf32, #tpu.memory_space<vmem>>, vector<12x256xf32>,
    return
  }
}

</mosaic_0001>

<llo_original>
// kernel: pcb_test_forward.52
$region0: #{pcb_test_forward.52}
  #allocation0 [shape = 'u32[]', space=smem, size = 0x4, offset = 0x4, fixed_abs, tag = 'smem constant byte address 0x4 - core index']
  #allocation1 [shape = 'u32[144,128]{1,0:T(1,128)}', space=vmem, size = 0x12000, scoped, tag = 'internal scratch']
  #allocation2 [shape = 'f32[192,128]{1,0:T(8,128)}', space=vmem, size = 0x18000, scoped, tag = 'scratch operand']
  %s0 = inlined_call_operand.vmem [shape: bf16[384,256], index: 0, kind: input, shape index: {}]
  %s1 = inlined_call_operand.vmem [shape: bf16[256,128], index: 1, kind: input, shape index: {}]
  %s2 = inlined_call_operand.vmem [shape: f32[1,128], index: 2, kind: input, shape index: {}]
  %s3 = inlined_call_operand.vmem [shape: f32[1,128], index: 3, kind: input, shape index: {}]
  %s4 = inlined_call_operand.vmem [shape: bf16[384,128], index: 4, kind: output, shape index: {}]
  %s5 = sld [smem:[#allocation0]]
  $region57: #{pcb_test_forward.52} parent=0
    _
  %s7 = ssub.s32 1, %s5
  %s8 = scalar_select 0, %s7, %s5
  loop: start=0, step=1, limit=4
  $region2: #{pcb_test_forward.52} parent=0 // loop_pre_header
    _
  $region3: #{pcb_test_forward.52} parent=0 // loop_header
    %s10 = sphi 0, %s14
    %p11 = scmp.ge.s32.totalorder %s10, 4
    %s17 = sphi 0, %s36
    %s18 = sphi 0, %s32
    %s19 = sphi 0, %s28
    %s20 = sphi 0, %s17
    %s21 = sphi 0, %s18
    %s22 = sphi 0, %s19
    %s23 = sphi 0, %s20
    %s24 = sphi 0, %s21
    %s25 = sphi 0, %s22
    %s41 = sphi 0, %s43
    %s44 = sphi 0, %s41
    %s45 = sphi 0, %s44
    %s61 = sphi 0, %s45
    %s69 = sphi 0, %s71
    %s72 = sphi 0, %s69
    %s73 = sphi 0, %s72
    %s89 = sphi 0, %s73
    %s95 = sphi 0, %s97
    %s98 = sphi 0, %s95
    %s99 = sphi 0, %s98
    %s115 = sphi 0, %s99
    %s121 = sphi 0, %s123
    %s124 = sphi 0, %s121
    %s125 = sphi 0, %s124
    %s141 = sphi 0, %s125
    %s149 = sphi 0, %s151
    %s152 = sphi 0, %s149
    %s153 = sphi 0, %s152
    %s169 = sphi 0, %s153
  $region4: #{pcb_test_forward.52} parent=0 // loop_header_branch
    %13 = sbr.rel (%p11) target = $region8
  $region5: #{pcb_test_forward.52} parent=0 // loop_body
    %s15 = ssub.s32 %s10, 1
    %s16 = ssub.s32 %s10, 2
    %s26 = sadd.s32 1, %s19
    %p27 = scmp.ge.s32.totalorder %s26, 1
    %s28 = scalar_select %p27, 0, %s26
    %s29 = sadd.s32 1, %s18
    %s30 = scalar_select %p27, %s29, %s18
    %p31 = scmp.ge.s32.totalorder %s30, 1
    %s32 = scalar_select %p31, 0, %s30
    %s33 = sadd.s32 1, %s17
    %s34 = scalar_select %p31, %s33, %s17
    %p35 = scmp.ge.s32.totalorder %s34, 2
    %s36 = scalar_select %p35, 0, %s34
    %s37 = ssub.s32 %s17, %s36
    %s38 = ssub.s32 %s19, %s28
    %s39 = sor.u32 %s37, %s38
    %p40 = scmp.eq.s32.totalorder %s39, 0
    %s42 = sadd.s32 %s41, 1
    %s43 = scalar_select %p40, %s41, %s42
    %p46 = pneg %p40
    %p47 = scmp.eq.s32.totalorder %s10, 1
    %p48 = por %p46, %p47
    %p49 = scmp.ne.s32.totalorder %s41, %s44
    %p50 = scmp.eq.s32.totalorder %s10, 0
    %p51 = por %p49, %p50
    %p52 = scmp.ne.s32.totalorder %s41, %s44
    %p53 = scmp.eq.s32.totalorder %s15, 1
    %p54 = por %p52, %p53
    %p55 = scmp.ne.s32.totalorder %s44, %s45
    %p56 = scmp.eq.s32.totalorder %s15, 0
    %p57 = por %p55, %p56
    %p58 = scmp.ne.s32.totalorder %s44, %s45
    %p59 = scmp.eq.s32.totalorder %s16, 1
    %p60 = por %p58, %p59
    %p62 = scmp.ne.s32.totalorder %s45, %s61
    %p63 = scmp.eq.s32.totalorder %s16, 0
    %p64 = por %p62, %p63
    %s65 = ssub.s32 %s19, %s28
    %s66 = ssub.s32 %s18, %s32
    %s67 = sor.u32 %s65, %s66
    %p68 = scmp.eq.s32.totalorder %s67, 0
    %s70 = sadd.s32 %s69, 1
    %s71 = scalar_select %p68, %s69, %s70
    %p74 = pneg %p68
    %p75 = scmp.eq.s32.totalorder %s10, 1
    %p76 = por %p74, %p75
    %p77 = scmp.ne.s32.totalorder %s69, %s72
    %p78 = scmp.eq.s32.totalorder %s10, 0
    %p79 = por %p77, %p78
    %p80 = scmp.ne.s32.totalorder %s69, %s72
    %p81 = scmp.eq.s32.totalorder %s15, 1
    %p82 = por %p80, %p81
    %p83 = scmp.ne.s32.totalorder %s72, %s73
    %p84 = scmp.eq.s32.totalorder %s15, 0
    %p85 = por %p83, %p84
    %p86 = scmp.ne.s32.totalorder %s72, %s73
    %p87 = scmp.eq.s32.totalorder %s16, 1
    %p88 = por %p86, %p87
    %p90 = scmp.ne.s32.totalorder %s73, %s89
    %p91 = scmp.eq.s32.totalorder %s16, 0
    %p92 = por %p90, %p91
    %s93 = ssub.s32 %s18, %s32
    %p94 = scmp.eq.s32.totalorder %s93, 0
    %s96 = sadd.s32 %s95, 1
    %s97 = scalar_select %p94, %s95, %s96
    %p100 = pneg %p94
    %p101 = scmp.eq.s32.totalorder %s10, 1
    %p102 = por %p100, %p101
    %p103 = scmp.ne.s32.totalorder %s95, %s98
    %p104 = scmp.eq.s32.totalorder %s10, 0
    %p105 = por %p103, %p104
    %p106 = scmp.ne.s32.totalorder %s95, %s98
    %p107 = scmp.eq.s32.totalorder %s15, 1
    %p108 = por %p106, %p107
    %p109 = scmp.ne.s32.totalorder %s98, %s99
    %p110 = scmp.eq.s32.totalorder %s15, 0
    %p111 = por %p109, %p110
    %p112 = scmp.ne.s32.totalorder %s98, %s99
    %p113 = scmp.eq.s32.totalorder %s16, 1
    %p114 = por %p112, %p113
    %p116 = scmp.ne.s32.totalorder %s99, %s115
    %p117 = scmp.eq.s32.totalorder %s16, 0
    %p118 = por %p116, %p117
    %s119 = ssub.s32 %s18, %s32
    %p120 = scmp.eq.s32.totalorder %s119, 0
    %s122 = sadd.s32 %s121, 1
    %s123 = scalar_select %p120, %s121, %s122
    %p126 = pneg %p120
    %p127 = scmp.eq.s32.totalorder %s10, 1
    %p128 = por %p126, %p127
    %p129 = scmp.ne.s32.totalorder %s121, %s124
    %p130 = scmp.eq.s32.totalorder %s10, 0
    %p131 = por %p129, %p130
    %p132 = scmp.ne.s32.totalorder %s121, %s124
    %p133 = scmp.eq.s32.totalorder %s15, 1
    %p134 = por %p132, %p133
    %p135 = scmp.ne.s32.totalorder %s124, %s125
    %p136 = scmp.eq.s32.totalorder %s15, 0
    %p137 = por %p135, %p136
    %p138 = scmp.ne.s32.totalorder %s124, %s125
    %p139 = scmp.eq.s32.totalorder %s16, 1
    %p140 = por %p138, %p139
    %p142 = scmp.ne.s32.totalorder %s125, %s141
    %p143 = scmp.eq.s32.totalorder %s16, 0
    %p144 = por %p142, %p143
    %s145 = ssub.s32 %s17, %s36
    %s146 = ssub.s32 %s18, %s32
    %s147 = sor.u32 %s145, %s146
    %p148 = scmp.eq.s32.totalorder %s147, 0
    %s150 = sadd.s32 %s149, 1
    %s151 = scalar_select %p148, %s149, %s150
    %p154 = pneg %p148
    %p155 = scmp.eq.s32.totalorder %s10, 1
    %p156 = por %p154, %p155
    %p157 = scmp.ne.s32.totalorder %s149, %s152
    %p158 = scmp.eq.s32.totalorder %s10, 0
    %p159 = por %p157, %p158
    %p160 = scmp.ne.s32.totalorder %s149, %s152
    %p161 = scmp.eq.s32.totalorder %s15, 1
    %p162 = por %p160, %p161
    %p163 = scmp.ne.s32.totalorder %s152, %s153
    %p164 = scmp.eq.s32.totalorder %s15, 0
    %p165 = por %p163, %p164
    %p166 = scmp.ne.s32.totalorder %s152, %s153
    %p167 = scmp.eq.s32.totalorder %s16, 1
    %p168 = por %p166, %p167
    %p170 = scmp.ne.s32.totalorder %s153, %s169
    %p171 = scmp.eq.s32.totalorder %s16, 0
    %p172 = por %p170, %p171
    %p173 = scmp.le.s32.totalorder 1, %s10
    %p174 = scmp.lt.s32.totalorder %s10, 3
    %p175 = pnand %p173, %p174
    %p176 = pneg %p175
    // Predicated region
    $region9: #{pcb_test_forward.52} parent=5 // pred_check
      _
    $region10: #{pcb_test_forward.52} parent=5 // pred_check_branch
      %178 = sbr.rel (%p175) target = $region12
    $region11: #{pcb_test_forward.52} parent=5 // pred_region
      %s179 = ssub.s32 %s10, 1
      // Predicated region
      $region13: #{pcb_test_forward.52} parent=11 // pred_check
        %p180 = pneg %p85
      $region14: #{pcb_test_forward.52} parent=11 // pred_check_branch
        %182 = sbr.rel (%p180) target = $region16
      $region15: #{pcb_test_forward.52} parent=11 // pred_region
        %s183 = smul.u32 32, %s22
        %p184 = scmp.lt.s32.totalorder %s183, 31
        %s185 = scalar_select %p184, %s183, 31
        %p186 = scmp.lt.s32.totalorder %s21, 0
        %s187 = scalar_select %p186, %s21, 0
        %s188 = sadd.s32 %s187, %s185
        %s189 = smul.addr %s188, 4
        %s190 = scalar_lea.vmem %s1, %s189
        %s191 = smul.u32 32, %s22
      $region16: #{pcb_test_forward.52} parent=11 // pred_fallthru
        _
      // Predicated region
      $region17: #{pcb_test_forward.52} parent=11 // pred_check
        %p192 = pneg %p111
      $region18: #{pcb_test_forward.52} parent=11 // pred_check_branch
        %194 = sbr.rel (%p192) target = $region20
      $region19: #{pcb_test_forward.52} parent=11 // pred_region
        %p195 = scmp.lt.s32.totalorder %s21, 0
        %s196 = scalar_select %p195, %s21, 0
        %s197 = scalar_lea.vmem %s2, %s196
      $region20: #{pcb_test_forward.52} parent=11 // pred_fallthru
        _
      // Predicated region
      $region21: #{pcb_test_forward.52} parent=11 // pred_check
        %p198 = pneg %p137
      $region22: #{pcb_test_forward.52} parent=11 // pred_check_branch
        %200 = sbr.rel (%p198) target = $region24
      $region23: #{pcb_test_forward.52} parent=11 // pred_region
        %p201 = scmp.lt.s32.totalorder %s21, 0
        %s202 = scalar_select %p201, %s21, 0
        %s203 = scalar_lea.vmem %s3, %s202
      $region24: #{pcb_test_forward.52} parent=11 // pred_fallthru
        _
    $region12: #{pcb_test_forward.52} parent=5 // pred_fallthru
      _
    %p204 = scmp.lt.s32.totalorder %s10, 2
    // Predicated region
    $region25: #{pcb_test_forward.52} parent=5 // pred_check
      %p205 = pneg %p204
    $region26: #{pcb_test_forward.52} parent=5 // pred_check_branch
      %207 = sbr.rel (%p205) target = $region28
    $region27: #{pcb_test_forward.52} parent=5 // pred_region
      // Predicated region
      $region29: #{pcb_test_forward.52} parent=27 // pred_check
        %p208 = pneg %p51
      $region30: #{pcb_test_forward.52} parent=27 // pred_check_branch
        %210 = sbr.rel (%p208) target = $region32
      $region31: #{pcb_test_forward.52} parent=27 // pred_region
        %s211 = smul.u32 24, %s17
        %s212 = smul.u32 2, %s19
        %p213 = scmp.lt.s32.totalorder %s211, 47
        %s214 = scalar_select %p213, %s211, 47
        %p215 = scmp.lt.s32.totalorder %s212, 1
        %s216 = scalar_select %p215, %s212, 1
        %s217 = smul.addr %s214, 2
        %s218 = sadd.s32 %s216, %s217
        %s219 = smul.addr %s218, 4
        %s220 = scalar_lea.vmem %s0, %s219
        %s221 = smul.u32 24, %s17
        %s222 = smul.u32 2, %s19
      $region32: #{pcb_test_forward.52} parent=27 // pred_fallthru
        _
    $region28: #{pcb_test_forward.52} parent=5 // pred_fallthru
      _
    %p223 = scmp.le.s32.totalorder 1, %s10
    %p224 = scmp.lt.s32.totalorder %s10, 3
    %p225 = pnand %p223, %p224
    %p226 = pneg %p225
    // Predicated region
    $region33: #{pcb_test_forward.52} parent=5 // pred_check
      _
    $region34: #{pcb_test_forward.52} parent=5 // pred_check_branch
      %228 = sbr.rel (%p225) target = $region36
    $region35: #{pcb_test_forward.52} parent=5 // pred_region
      %s229 = ssub.s32 %s10, 1
      %s230 = smul.u32 24, %s20
      %s231 = smul.u32 2, %s22
      %p232 = scmp.lt.s32.totalorder %s230, 47
      %s233 = scalar_select %p232, %s230, 47
      %p234 = scmp.lt.s32.totalorder %s231, 1
      %s235 = scalar_select %p234, %s231, 1
      %s236 = smul.addr %s233, 2
      %s237 = sadd.s32 %s235, %s236
      %s238 = smul.addr %s237, 4
      %s239 = scalar_lea.vmem %s0, %s238
      %p240 = pneg %p57
      %p241 = pneg %p54
      %s242 = smul.u32 32, %s22
      %p243 = scmp.lt.s32.totalorder %s242, 31
      %s244 = scalar_select %p243, %s242, 31
      %p245 = scmp.lt.s32.totalorder %s21, 0
      %s246 = scalar_select %p245, %s21, 0
      %s247 = sadd.s32 %s246, %s244
      %s248 = smul.addr %s247, 4
      %s249 = scalar_lea.vmem %s1, %s248
      %p250 = pneg %p85
      %p251 = pneg %p82
      %p252 = scmp.lt.s32.totalorder %s21, 0
      %s253 = scalar_select %p252, %s21, 0
      %s254 = scalar_lea.vmem %s2, %s253
      %p255 = pneg %p111
      %p256 = pneg %p108
      %p257 = scmp.lt.s32.totalorder %s21, 0
      %s258 = scalar_select %p257, %s21, 0
      %s259 = scalar_lea.vmem %s3, %s258
      %p260 = pneg %p137
      %p261 = pneg %p134
      %p262 = pneg %p165
      %p263 = pneg %p162
      %s264 = smul.u32 24, %s20
      %p265 = scmp.lt.s32.totalorder %s264, 47
      %s266 = scalar_select %p265, %s264, 47
      %p267 = scmp.lt.s32.totalorder %s21, 0
      %s268 = scalar_select %p267, %s21, 0
      %s269 = sadd.s32 %s268, %s266
      %s270 = smul.addr %s269, 4
      %s271 = scalar_lea.vmem %s4, %s270
      %s272 = smul.u32 24, %s20
      %s273 = smul.u32 2, %s22
      %p274 = scmp.lt.s32.totalorder %s272, 47
      %s275 = scalar_select %p274, %s272, 47
      %p276 = scmp.lt.s32.totalorder %s273, 1
      %s277 = scalar_select %p276, %s273, 1
      %s278 = smul.addr %s275, 2
      %s279 = sadd.s32 %s277, %s278
      %s280 = smul.addr %s279, 4
      %s281 = scalar_lea.vmem %s0, %s280
      %s282 = smul.u32 24, %s20
      %s283 = smul.u32 2, %s22
      %s284 = smul.u32 32, %s22
      %p285 = scmp.lt.s32.totalorder %s284, 31
      %s286 = scalar_select %p285, %s284, 31
      %p287 = scmp.lt.s32.totalorder %s21, 0
      %s288 = scalar_select %p287, %s21, 0
      %s289 = sadd.s32 %s288, %s286
      %s290 = smul.addr %s289, 4
      %s291 = scalar_lea.vmem %s1, %s290
      %s292 = smul.u32 32, %s22
      %p293 = scmp.lt.s32.totalorder %s21, 0
      %s294 = scalar_select %p293, %s21, 0
      %s295 = scalar_lea.vmem %s2, %s294
      %p296 = scmp.lt.s32.totalorder %s21, 0
      %s297 = scalar_select %p296, %s21, 0
      %s298 = scalar_lea.vmem %s3, %s297
      %s299 = smul.u32 24, %s20
      %p300 = scmp.lt.s32.totalorder %s299, 47
      %s301 = scalar_select %p300, %s299, 47
      %p302 = scmp.lt.s32.totalorder %s21, 0
      %s303 = scalar_select %p302, %s21, 0
      %s304 = sadd.s32 %s303, %s301
      %s305 = smul.addr %s304, 4
      %s306 = scalar_lea.vmem %s4, %s305
      %s307 = smul.u32 24, %s20
      %p309 = scmp.eq.s32.totalorder %s22, 0
      // Predicated region
      $region37: #{pcb_test_forward.52} parent=35 // pred_check
        %p310 = pneg %p309
      $region38: #{pcb_test_forward.52} parent=35 // pred_check_branch
        %312 = sbr.rel (%p310) target = $region40
      $region39: #{pcb_test_forward.52} parent=35 // pred_region
        %313 = vst [vmem:[#allocation2] sm:$0xff] 0.0
        %314 = vst [vmem:[#allocation2 + $0x8] sm:$0xff] 0.0
        %315 = vst [vmem:[#allocation2 + $0x10] sm:$0xff] 0.0
        %316 = vst [vmem:[#allocation2 + $0x18] sm:$0xff] 0.0
        %317 = vst [vmem:[#allocation2 + $0x20] sm:$0xff] 0.0
        %318 = vst [vmem:[#allocation2 + $0x28] sm:$0xff] 0.0
        %319 = vst [vmem:[#allocation2 + $0x30] sm:$0xff] 0.0
        %320 = vst [vmem:[#allocation2 + $0x38] sm:$0xff] 0.0
        %321 = vst [vmem:[#allocation2 + $0x40] sm:$0xff] 0.0
        %322 = vst [vmem:[#allocation2 + $0x48] sm:$0xff] 0.0
        %323 = vst [vmem:[#allocation2 + $0x50] sm:$0xff] 0.0
        %324 = vst [vmem:[#allocation2 + $0x58] sm:$0xff] 0.0
        %325 = vst [vmem:[#allocation2 + $0x60] sm:$0xff] 0.0
        %326 = vst [vmem:[#allocation2 + $0x68] sm:$0xff] 0.0
        %327 = vst [vmem:[#allocation2 + $0x70] sm:$0xff] 0.0
        %328 = vst [vmem:[#allocation2 + $0x78] sm:$0xff] 0.0
        %329 = vst [vmem:[#allocation2 + $0x80] sm:$0xff] 0.0
        %330 = vst [vmem:[#allocation2 + $0x88] sm:$0xff] 0.0
        %331 = vst [vmem:[#allocation2 + $0x90] sm:$0xff] 0.0
        %332 = vst [vmem:[#allocation2 + $0x98] sm:$0xff] 0.0
        %333 = vst [vmem:[#allocation2 + $0xa0] sm:$0xff] 0.0
        %334 = vst [vmem:[#allocation2 + $0xa8] sm:$0xff] 0.0
        %335 = vst [vmem:[#allocation2 + $0xb0] sm:$0xff] 0.0
        %336 = vst [vmem:[#allocation2 + $0xb8] sm:$0xff] 0.0
      $region40: #{pcb_test_forward.52} parent=35 // pred_fallthru
        _
      %v337 = vld [vmem:[#allocation2] sm:$0xff]
      %v338 = vld [vmem:[#allocation2 + $0x8] sm:$0xff]
      %v339 = vld [vmem:[#allocation2 + $0x10] sm:$0xff]
      %v340 = vld [vmem:[#allocation2 + $0x18] sm:$0xff]
      %v341 = vld [vmem:[#allocation2 + $0x20] sm:$0xff]
      %v342 = vld [vmem:[#allocation2 + $0x28] sm:$0xff]
      %v343 = vld [vmem:[#allocation2 + $0x30] sm:$0xff]
      %v344 = vld [vmem:[#allocation2 + $0x38] sm:$0xff]
      %v345 = vld [vmem:[#allocation2 + $0x40] sm:$0xff]
      %v346 = vld [vmem:[#allocation2 + $0x48] sm:$0xff]
      %v347 = vld [vmem:[#allocation2 + $0x50] sm:$0xff]
      %v348 = vld [vmem:[#allocation2 + $0x58] sm:$0xff]
      %v349 = vld [vmem:[#allocation2 + $0x60] sm:$0xff]
      %v350 = vld [vmem:[#allocation2 + $0x68] sm:$0xff]
      %v351 = vld [vmem:[#allocation2 + $0x70] sm:$0xff]
      %v352 = vld [vmem:[#allocation2 + $0x78] sm:$0xff]
      %v353 = vld [vmem:[#allocation2 + $0x80] sm:$0xff]
      %v354 = vld [vmem:[#allocation2 + $0x88] sm:$0xff]
      %v355 = vld [vmem:[#allocation2 + $0x90] sm:$0xff]
      %v356 = vld [vmem:[#allocation2 + $0x98] sm:$0xff]
      %v357 = vld [vmem:[#allocation2 + $0xa0] sm:$0xff]
      %v358 = vld [vmem:[#allocation2 + $0xa8] sm:$0xff]
      %v359 = vld [vmem:[#allocation2 + $0xb0] sm:$0xff]
      %v360 = vld [vmem:[#allocation2 + $0xb8] sm:$0xff]
      %v361 = vld [vmem:[%s281] sm:$0xff]
      %v362 = vld [vmem:[%s281 + $0x8] sm:$0xff]
      %v363 = vld [vmem:[%s281 + $0x10] sm:$0xff]
      %v364 = vld [vmem:[%s281 + $0x18] sm:$0xff]
      %v365 = vld [vmem:[%s281 + $0x20] sm:$0xff]
      %v366 = vld [vmem:[%s281 + $0x28] sm:$0xff]
      %v367 = vld [vmem:[%s281 + $0x30] sm:$0xff]
      %v368 = vld [vmem:[%s281 + $0x38] sm:$0xff]
      %v369 = vld [vmem:[%s281 + $0x40] sm:$0xff]
      %v370 = vld [vmem:[%s281 + $0x48] sm:$0xff]
      %v371 = vld [vmem:[%s281 + $0x50] sm:$0xff]
      %v372 = vld [vmem:[%s281 + $0x58] sm:$0xff]
      %v373 = vld [vmem:[%s281 + $0x60] sm:$0xff]
      %v374 = vld [vmem:[%s281 + $0x68] sm:$0xff]
      %v375 = vld [vmem:[%s281 + $0x70] sm:$0xff]
      %v376 = vld [vmem:[%s281 + $0x78] sm:$0xff]
      %v377 = vld [vmem:[%s281 + $0x80] sm:$0xff]
      %v378 = vld [vmem:[%s281 + $0x88] sm:$0xff]
      %v379 = vld [vmem:[%s281 + $0x90] sm:$0xff]
      %v380 = vld [vmem:[%s281 + $0x98] sm:$0xff]
      %v381 = vld [vmem:[%s281 + $0xa0] sm:$0xff]
      %v382 = vld [vmem:[%s281 + $0xa8] sm:$0xff]
      %v383 = vld [vmem:[%s281 + $0xb0] sm:$0xff]
      %v384 = vld [vmem:[%s281 + $0xb8] sm:$0xff]
      %v385 = vld [vmem:[%s291] sm:$0xf]
      %v386 = vld [vmem:[%s291 + $0x4] sm:$0xf]
      %v387 = vld [vmem:[%s291 + $0x8] sm:$0xf]
      %v388 = vld [vmem:[%s291 + $0xc] sm:$0xf]
      %v389 = vld [vmem:[%s291 + $0x10] sm:$0xf]
      %v390 = vld [vmem:[%s291 + $0x14] sm:$0xf]
      %v391 = vld [vmem:[%s291 + $0x18] sm:$0xf]
      %v392 = vld [vmem:[%s291 + $0x1c] sm:$0xf]
      %v393 = vld [vmem:[%s291 + $0x20] sm:$0xf]
      %v394 = vld [vmem:[%s291 + $0x24] sm:$0xf]
      %v395 = vld [vmem:[%s291 + $0x28] sm:$0xf]
      %v396 = vld [vmem:[%s291 + $0x2c] sm:$0xf]
      %v397 = vld [vmem:[%s291 + $0x30] sm:$0xf]
      %v398 = vld [vmem:[%s291 + $0x34] sm:$0xf]
      %v399 = vld [vmem:[%s291 + $0x38] sm:$0xf]
      %v400 = vld [vmem:[%s291 + $0x3c] sm:$0xf]
      %v401 = vld [vmem:[%s291 + $0x40] sm:$0xf]
      %v402 = vld [vmem:[%s291 + $0x44] sm:$0xf]
      %v403 = vld [vmem:[%s291 + $0x48] sm:$0xf]
      %v404 = vld [vmem:[%s291 + $0x4c] sm:$0xf]
      %v405 = vld [vmem:[%s291 + $0x50] sm:$0xf]
      %v406 = vld [vmem:[%s291 + $0x54] sm:$0xf]
      %v407 = vld [vmem:[%s291 + $0x58] sm:$0xf]
      %v408 = vld [vmem:[%s291 + $0x5c] sm:$0xf]
      %v409 = vld [vmem:[%s291 + $0x60] sm:$0xf]
      %v410 = vld [vmem:[%s291 + $0x64] sm:$0xf]
      %v411 = vld [vmem:[%s291 + $0x68] sm:$0xf]
      %v412 = vld [vmem:[%s291 + $0x6c] sm:$0xf]
      %v413 = vld [vmem:[%s291 + $0x70] sm:$0xf]
      %v414 = vld [vmem:[%s291 + $0x74] sm:$0xf]
      %v415 = vld [vmem:[%s291 + $0x78] sm:$0xf]
      %v416 = vld [vmem:[%s291 + $0x7c] sm:$0xf]
      %v441 = vunpack.c.l.b16 %v361
      %v442 = vunpack.c.h.b16 %v361
      %v443 = vunpack.c.l.b16 %v362
      %v444 = vunpack.c.h.b16 %v362
      %v445 = vunpack.c.l.b16 %v363
      %v446 = vunpack.c.h.b16 %v363
      %v447 = vunpack.c.l.b16 %v364
      %v448 = vunpack.c.h.b16 %v364
      %v449 = vunpack.c.l.b16 %v365
      %v450 = vunpack.c.h.b16 %v365
      %v451 = vunpack.c.l.b16 %v366
      %v452 = vunpack.c.h.b16 %v366
      %v453 = vunpack.c.l.b16 %v367
      %v454 = vunpack.c.h.b16 %v367
      %v455 = vunpack.c.l.b16 %v368
      %v456 = vunpack.c.h.b16 %v368
      %v457 = vunpack.c.l.b16 %v369
      %v458 = vunpack.c.h.b16 %v369
      %v459 = vunpack.c.l.b16 %v370
      %v460 = vunpack.c.h.b16 %v370
      %v461 = vunpack.c.l.b16 %v371
      %v462 = vunpack.c.h.b16 %v371
      %v463 = vunpack.c.l.b16 %v372
      %v464 = vunpack.c.h.b16 %v372
      %v465 = vunpack.c.l.b16 %v373
      %v466 = vunpack.c.h.b16 %v373
      %v467 = vunpack.c.l.b16 %v374
      %v468 = vunpack.c.h.b16 %v374
      %v469 = vunpack.c.l.b16 %v375
      %v470 = vunpack.c.h.b16 %v375
      %v471 = vunpack.c.l.b16 %v376
      %v472 = vunpack.c.h.b16 %v376
      %v473 = vunpack.c.l.b16 %v377
      %v474 = vunpack.c.h.b16 %v377
      %v475 = vunpack.c.l.b16 %v378
      %v476 = vunpack.c.h.b16 %v378
      %v477 = vunpack.c.l.b16 %v379
      %v478 = vunpack.c.h.b16 %v379
      %v479 = vunpack.c.l.b16 %v380
      %v480 = vunpack.c.h.b16 %v380
      %v481 = vunpack.c.l.b16 %v381
      %v482 = vunpack.c.h.b16 %v381
      %v483 = vunpack.c.l.b16 %v382
      %v484 = vunpack.c.h.b16 %v382
      %v485 = vunpack.c.l.b16 %v383
      %v486 = vunpack.c.h.b16 %v383
      %v487 = vunpack.c.l.b16 %v384
      %v488 = vunpack.c.h.b16 %v384
      %v489 = vpack.c.b16 %v443, %v441
      %v490 = vpack.c.b16 %v444, %v442
      %v491 = vpack.c.b16 %v447, %v445
      %v492 = vpack.c.b16 %v448, %v446
      %v493 = vpack.c.b16 %v451, %v449
      %v494 = vpack.c.b16 %v452, %v450
      %v495 = vpack.c.b16 %v455, %v453
      %v496 = vpack.c.b16 %v456, %v454
      %v497 = vpack.c.b16 %v459, %v457
      %v498 = vpack.c.b16 %v460, %v458
      %v499 = vpack.c.b16 %v463, %v461
      %v500 = vpack.c.b16 %v464, %v462
      %v501 = vpack.c.b16 %v467, %v465
      %v502 = vpack.c.b16 %v468, %v466
      %v503 = vpack.c.b16 %v471, %v469
      %v504 = vpack.c.b16 %v472, %v470
      %v505 = vpack.c.b16 %v475, %v473
      %v506 = vpack.c.b16 %v476, %v474
      %v507 = vpack.c.b16 %v479, %v477
      %v508 = vpack.c.b16 %v480, %v478
      %v509 = vpack.c.b16 %v483, %v481
      %v510 = vpack.c.b16 %v484, %v482
      %v511 = vpack.c.b16 %v487, %v485
      %v512 = vpack.c.b16 %v488, %v486
      %v569 = vunpack.c.l.b16 %v385
      %v570 = vunpack.c.l.b16 %v386
      %v571 = vunpack.c.l.b16 %v387
      %v572 = vunpack.c.l.b16 %v388
      %v573 = vunpack.c.l.b16 %v389
      %v574 = vunpack.c.l.b16 %v390
      %v575 = vunpack.c.l.b16 %v391
      %v576 = vunpack.c.l.b16 %v392
      %v577 = vunpack.c.l.b16 %v393
      %v578 = vunpack.c.l.b16 %v394
      %v579 = vunpack.c.l.b16 %v395
      %v580 = vunpack.c.l.b16 %v396
      %v581 = vunpack.c.l.b16 %v397
      %v582 = vunpack.c.l.b16 %v398
      %v583 = vunpack.c.l.b16 %v399
      %v584 = vunpack.c.l.b16 %v400
      %v585 = vunpack.c.l.b16 %v401
      %v586 = vunpack.c.l.b16 %v402
      %v587 = vunpack.c.l.b16 %v403
      %v588 = vunpack.c.l.b16 %v404
      %v589 = vunpack.c.l.b16 %v405
      %v590 = vunpack.c.l.b16 %v406
      %v591 = vunpack.c.l.b16 %v407
      %v592 = vunpack.c.l.b16 %v408
      %v593 = vunpack.c.l.b16 %v409
      %v594 = vunpack.c.l.b16 %v410
      %v595 = vunpack.c.l.b16 %v411
      %v596 = vunpack.c.l.b16 %v412
      %v597 = vunpack.c.l.b16 %v413
      %v598 = vunpack.c.l.b16 %v414
      %v599 = vunpack.c.l.b16 %v415
      %v600 = vunpack.c.l.b16 %v416
      %v601 = vpack.c.b16 %v570, %v569
      %v602 = vpack.c.b16 %v572, %v571
      %v603 = vpack.c.b16 %v574, %v573
      %v604 = vpack.c.b16 %v576, %v575
      %v605 = vpack.c.b16 %v578, %v577
      %v606 = vpack.c.b16 %v580, %v579
      %v607 = vpack.c.b16 %v582, %v581
      %v608 = vpack.c.b16 %v584, %v583
      %v609 = vpack.c.b16 %v586, %v585
      %v610 = vpack.c.b16 %v588, %v587
      %v611 = vpack.c.b16 %v590, %v589
      %v612 = vpack.c.b16 %v592, %v591
      %v613 = vpack.c.b16 %v594, %v593
      %v614 = vpack.c.b16 %v596, %v595
      %v615 = vpack.c.b16 %v598, %v597
      %v616 = vpack.c.b16 %v600, %v599
      %633 = vmatprep.subr.bf16.mxu0 0
      %634 = vmatpush1.bf16.msra.mxu0 %v601
      %635 = vmatprep.subr.bf16.mxu0 0
      %636 = vmatpush1.bf16.msra.mxu0 %v602
      %637 = vmatprep.subr.bf16.mxu0 0
      %638 = vmatpush1.bf16.msra.mxu0 %v603
      %639 = vmatprep.subr.bf16.mxu0 0
      %640 = vmatpush1.bf16.msra.mxu0 %v604
      %641 = vmatprep.subr.bf16.mxu0 0
      %642 = vmatpush1.bf16.msra.mxu0 %v605
      %643 = vmatprep.subr.bf16.mxu0 0
      %644 = vmatpush1.bf16.msra.mxu0 %v606
      %645 = vmatprep.subr.bf16.mxu0 0
      %646 = vmatpush1.bf16.msra.mxu0 %v607
      %647 = vmatprep.subr.bf16.mxu0 0
      %648 = vmatpush1.bf16.msra.mxu0 %v608
      %649 = vmatprep.subr.bf16.mxu0 0
      %650 = vmatpush1.bf16.msra.mxu0 %v609
      %651 = vmatprep.subr.bf16.mxu0 0
      %652 = vmatpush1.bf16.msra.mxu0 %v610
      %653 = vmatprep.subr.bf16.mxu0 0
      %654 = vmatpush1.bf16.msra.mxu0 %v611
      %655 = vmatprep.subr.bf16.mxu0 0
      %656 = vmatpush1.bf16.msra.mxu0 %v612
      %657 = vmatprep.subr.bf16.mxu0 0
      %658 = vmatpush1.bf16.msra.mxu0 %v613
      %659 = vmatprep.subr.bf16.mxu0 0
      %660 = vmatpush1.bf16.msra.mxu0 %v614
      %661 = vmatprep.subr.bf16.mxu0 0
      %662 = vmatpush1.bf16.msra.mxu0 %v615
      %663 = vmatprep.subr.bf16.mxu0 0
      %664 = vmatpush1.bf16.msra.mxu0 %v616
      %665 = vmatprep.mubr.bf16.mxu0 %v490
      %666 = vmatmul.mubr.bf16.gmra.mrb[0].mxu0 %v489
      %v667 = vpop.f32.mrb[0].mxu0
      %v668 = vadd.f32 0.0, %v667
      %v669 = vpop.f32.mrb[0].mxu0
      %v670 = vpop.f32.mrb[0].mxu0
      %v671 = vadd.f32 0.0, %v670
      %v672 = vpop.f32.mrb[0].mxu0
      %673 = vmatprep.mubr.bf16.mxu0 %v492
      %674 = vmatmul.mubr.bf16.gmra.mrb[0].mxu0 %v491
      %v675 = vpop.f32.mrb[0].mxu0
      %v676 = vadd.f32 0.0, %v675
      %v677 = vpop.f32.mrb[0].mxu0
      %v678 = vpop.f32.mrb[0].mxu0
      %v679 = vadd.f32 0.0, %v678
      %v680 = vpop.f32.mrb[0].mxu0
      %681 = vmatprep.mubr.bf16.mxu0 %v494
      %682 = vmatmul.mubr.bf16.gmra.mrb[0].mxu0 %v493
      %v683 = vpop.f32.mrb[0].mxu0
      %v684 = vadd.f32 0.0, %v683
      %v685 = vpop.f32.mrb[0].mxu0
      %v686 = vpop.f32.mrb[0].mxu0
      %v687 = vadd.f32 0.0, %v686
      %v688 = vpop.f32.mrb[0].mxu0
      %689 = vmatprep.mubr.bf16.mxu0 %v496
      %690 = vmatmul.mubr.bf16.gmra.mrb[0].mxu0 %v495
      %v691 = vpop.f32.mrb[0].mxu0
      %v692 = vadd.f32 0.0, %v691
      %v693 = vpop.f32.mrb[0].mxu0
      %v694 = vpop.f32.mrb[0].mxu0
      %v695 = vadd.f32 0.0, %v694
      %v696 = vpop.f32.mrb[0].mxu0
      %697 = vmatprep.mubr.bf16.mxu0 %v498
      %698 = vmatmul.mubr.bf16.gmra.mrb[0].mxu0 %v497
      %v699 = vpop.f32.mrb[0].mxu0
      %v700 = vadd.f32 0.0, %v699
      %v701 = vpop.f32.mrb[0].mxu0
      %v702 = vpop.f32.mrb[0].mxu0
      %v703 = vadd.f32 0.0, %v702
      %v704 = vpop.f32.mrb[0].mxu0
      %705 = vmatprep.mubr.bf16.mxu0 %v500
      %706 = vmatmul.mubr.bf16.gmra.mrb[0].mxu0 %v499
      %v707 = vpop.f32.mrb[0].mxu0
      %v708 = vadd.f32 0.0, %v707
      %v709 = vpop.f32.mrb[0].mxu0
      %v710 = vpop.f32.mrb[0].mxu0
      %v711 = vadd.f32 0.0, %v710
      %v712 = vpop.f32.mrb[0].mxu0
      %713 = vmatprep.mubr.bf16.mxu0 %v502
      %714 = vmatmul.mubr.bf16.gmra.mrb[0].mxu0 %v501
      %v715 = vpop.f32.mrb[0].mxu0
      %v716 = vadd.f32 0.0, %v715
      %v717 = vpop.f32.mrb[0].mxu0
      %v718 = vpop.f32.mrb[0].mxu0
      %v719 = vadd.f32 0.0, %v718
      %v720 = vpop.f32.mrb[0].mxu0
      %721 = vmatprep.mubr.bf16.mxu0 %v504
      %722 = vmatmul.mubr.bf16.gmra.mrb[0].mxu0 %v503
      %v723 = vpop.f32.mrb[0].mxu0
      %v724 = vadd.f32 0.0, %v723
      %v725 = vpop.f32.mrb[0].mxu0
      %v726 = vpop.f32.mrb[0].mxu0
      %v727 = vadd.f32 0.0, %v726
      %v728 = vpop.f32.mrb[0].mxu0
      %729 = vmatprep.mubr.bf16.mxu0 %v506
      %730 = vmatmul.mubr.bf16.gmra.mrb[0].mxu0 %v505
      %v731 = vpop.f32.mrb[0].mxu0
      %v732 = vadd.f32 0.0, %v731
      %v733 = vpop.f32.mrb[0].mxu0
      %v734 = vpop.f32.mrb[0].mxu0
      %v735 = vadd.f32 0.0, %v734
      %v736 = vpop.f32.mrb[0].mxu0
      %737 = vmatprep.mubr.bf16.mxu0 %v508
      %738 = vmatmul.mubr.bf16.gmra.mrb[0].mxu0 %v507
      %v739 = vpop.f32.mrb[0].mxu0
      %v740 = vadd.f32 0.0, %v739
      %v741 = vpop.f32.mrb[0].mxu0
      %v742 = vpop.f32.mrb[0].mxu0
      %v743 = vadd.f32 0.0, %v742
      %v744 = vpop.f32.mrb[0].mxu0
      %745 = vmatprep.mubr.bf16.mxu0 %v510
      %746 = vmatmul.mubr.bf16.gmra.mrb[0].mxu0 %v509
      %v747 = vpop.f32.mrb[0].mxu0
      %v748 = vadd.f32 0.0, %v747
      %v749 = vpop.f32.mrb[0].mxu0
      %v750 = vpop.f32.mrb[0].mxu0
      %v751 = vadd.f32 0.0, %v750
      %v752 = vpop.f32.mrb[0].mxu0
      %753 = vmatprep.mubr.bf16.mxu0 %v512
      %754 = vmatmul.mubr.bf16.gmra.mrb[0].mxu0 %v511
      %v755 = vpop.f32.mrb[0].mxu0
      %v756 = vadd.f32 0.0, %v755
      %v757 = vpop.f32.mrb[0].mxu0
      %v758 = vpop.f32.mrb[0].mxu0
      %v759 = vadd.f32 0.0, %v758
      %v760 = vpop.f32.mrb[0].mxu0
      %761 = vdwg.mxu0
      %v762 = vadd.f32 %v337, %v668
      %v763 = vadd.f32 %v338, %v671
      %v764 = vadd.f32 %v339, %v676
      %v765 = vadd.f32 %v340, %v679
      %v766 = vadd.f32 %v341, %v684
      %v767 = vadd.f32 %v342, %v687
      %v768 = vadd.f32 %v343, %v692
      %v769 = vadd.f32 %v344, %v695
      %v770 = vadd.f32 %v345, %v700
      %v771 = vadd.f32 %v346, %v703
      %v772 = vadd.f32 %v347, %v708
      %v773 = vadd.f32 %v348, %v711
      %v774 = vadd.f32 %v349, %v716
      %v775 = vadd.f32 %v350, %v719
      %v776 = vadd.f32 %v351, %v724
      %v777 = vadd.f32 %v352, %v727
      %v778 = vadd.f32 %v353, %v732
      %v779 = vadd.f32 %v354, %v735
      %v780 = vadd.f32 %v355, %v740
      %v781 = vadd.f32 %v356, %v743
      %v782 = vadd.f32 %v357, %v748
      %v783 = vadd.f32 %v358, %v751
      %v784 = vadd.f32 %v359, %v756
      %v785 = vadd.f32 %v360, %v759
      %786 = vst [vmem:[#allocation2] sm:$0xff] %v762
      %787 = vst [vmem:[#allocation2 + $0x8] sm:$0xff] %v763
      %788 = vst [vmem:[#allocation2 + $0x10] sm:$0xff] %v764
      %789 = vst [vmem:[#allocation2 + $0x18] sm:$0xff] %v765
      %790 = vst [vmem:[#allocation2 + $0x20] sm:$0xff] %v766
      %791 = vst [vmem:[#allocation2 + $0x28] sm:$0xff] %v767
      %792 = vst [vmem:[#allocation2 + $0x30] sm:$0xff] %v768
      %793 = vst [vmem:[#allocation2 + $0x38] sm:$0xff] %v769
      %794 = vst [vmem:[#allocation2 + $0x40] sm:$0xff] %v770
      %795 = vst [vmem:[#allocation2 + $0x48] sm:$0xff] %v771
      %796 = vst [vmem:[#allocation2 + $0x50] sm:$0xff] %v772
      %797 = vst [vmem:[#allocation2 + $0x58] sm:$0xff] %v773
      %798 = vst [vmem:[#allocation2 + $0x60] sm:$0xff] %v774
      %799 = vst [vmem:[#allocation2 + $0x68] sm:$0xff] %v775
      %800 = vst [vmem:[#allocation2 + $0x70] sm:$0xff] %v776
      %801 = vst [vmem:[#allocation2 + $0x78] sm:$0xff] %v777
      %802 = vst [vmem:[#allocation2 + $0x80] sm:$0xff] %v778
      %803 = vst [vmem:[#allocation2 + $0x88] sm:$0xff] %v779
      %804 = vst [vmem:[#allocation2 + $0x90] sm:$0xff] %v780
      %805 = vst [vmem:[#allocation2 + $0x98] sm:$0xff] %v781
      %806 = vst [vmem:[#allocation2 + $0xa0] sm:$0xff] %v782
      %807 = vst [vmem:[#allocation2 + $0xa8] sm:$0xff] %v783
      %808 = vst [vmem:[#allocation2 + $0xb0] sm:$0xff] %v784
      %809 = vst [vmem:[#allocation2 + $0xb8] sm:$0xff] %v785
      // Predicated region
      $region41: #{pcb_test_forward.52} parent=35 // pred_check
        %p810 = pneg %p309
      $region42: #{pcb_test_forward.52} parent=35 // pred_check_branch
        %812 = sbr.rel (%p810) target = $region44
      $region43: #{pcb_test_forward.52} parent=35 // pred_region
        %v813 = vld [vmem:[#allocation2] sm:$0xff]
        %v814 = vld [vmem:[#allocation2 + $0x8] sm:$0xff]
        %v815 = vld [vmem:[#allocation2 + $0x10] sm:$0xff]
        %v816 = vld [vmem:[#allocation2 + $0x18] sm:$0xff]
        %v817 = vld [vmem:[#allocation2 + $0x20] sm:$0xff]
        %v818 = vld [vmem:[#allocation2 + $0x28] sm:$0xff]
        %v819 = vld [vmem:[#allocation2 + $0x30] sm:$0xff]
        %v820 = vld [vmem:[#allocation2 + $0x38] sm:$0xff]
        %v821 = vld [vmem:[#allocation2 + $0x40] sm:$0xff]
        %v822 = vld [vmem:[#allocation2 + $0x48] sm:$0xff]
        %v823 = vld [vmem:[#allocation2 + $0x50] sm:$0xff]
        %v824 = vld [vmem:[#allocation2 + $0x58] sm:$0xff]
        %v825 = vld [vmem:[#allocation2 + $0x60] sm:$0xff]
        %v826 = vld [vmem:[#allocation2 + $0x68] sm:$0xff]
        %v827 = vld [vmem:[#allocation2 + $0x70] sm:$0xff]
        %v828 = vld [vmem:[#allocation2 + $0x78] sm:$0xff]
        %v829 = vld [vmem:[#allocation2 + $0x80] sm:$0xff]
        %v830 = vld [vmem:[#allocation2 + $0x88] sm:$0xff]
        %v831 = vld [vmem:[#allocation2 + $0x90] sm:$0xff]
        %v832 = vld [vmem:[#allocation2 + $0x98] sm:$0xff]
        %v833 = vld [vmem:[#allocation2 + $0xa0] sm:$0xff]
        %v834 = vld [vmem:[#allocation2 + $0xa8] sm:$0xff]
        %v835 = vld [vmem:[#allocation2 + $0xb0] sm:$0xff]
        %v836 = vld [vmem:[#allocation2 + $0xb8] sm:$0xff]
        %v837 = vld [vmem:[%s295] sm:$0x1]
        %v839 = vlaneseq
        %v840 = vshrl.u32 %v839, 7
        %v841 = vsub.s32 0, %v840
        %v842 = vrot.slane %v837, %v841
        %v844 = vmul.f32 %v813, %v842
        %v845 = vmul.f32 %v814, %v842
        %v846 = vmul.f32 %v815, %v842
        %v847 = vmul.f32 %v816, %v842
        %v848 = vmul.f32 %v817, %v842
        %v849 = vmul.f32 %v818, %v842
        %v850 = vmul.f32 %v819, %v842
        %v851 = vmul.f32 %v820, %v842
        %v852 = vmul.f32 %v821, %v842
        %v853 = vmul.f32 %v822, %v842
        %v854 = vmul.f32 %v823, %v842
        %v855 = vmul.f32 %v824, %v842
        %v856 = vmul.f32 %v825, %v842
        %v857 = vmul.f32 %v826, %v842
        %v858 = vmul.f32 %v827, %v842
        %v859 = vmul.f32 %v828, %v842
        %v860 = vmul.f32 %v829, %v842
        %v861 = vmul.f32 %v830, %v842
        %v862 = vmul.f32 %v831, %v842
        %v863 = vmul.f32 %v832, %v842
        %v864 = vmul.f32 %v833, %v842
        %v865 = vmul.f32 %v834, %v842
        %v866 = vmul.f32 %v835, %v842
        %v867 = vmul.f32 %v836, %v842
        %v868 = vld [vmem:[%s298] sm:$0x1]
        %v870 = vlaneseq
        %v871 = vshrl.u32 %v870, 7
        %v872 = vsub.s32 0, %v871
        %v873 = vrot.slane %v868, %v872
        %v875 = vadd.f32 %v844, %v873
        %v876 = vadd.f32 %v845, %v873
        %v877 = vadd.f32 %v846, %v873
        %v878 = vadd.f32 %v847, %v873
        %v879 = vadd.f32 %v848, %v873
        %v880 = vadd.f32 %v849, %v873
        %v881 = vadd.f32 %v850, %v873
        %v882 = vadd.f32 %v851, %v873
        %v883 = vadd.f32 %v852, %v873
        %v884 = vadd.f32 %v853, %v873
        %v885 = vadd.f32 %v854, %v873
        %v886 = vadd.f32 %v855, %v873
        %v887 = vadd.f32 %v856, %v873
        %v888 = vadd.f32 %v857, %v873
        %v889 = vadd.f32 %v858, %v873
        %v890 = vadd.f32 %v859, %v873
        %v891 = vadd.f32 %v860, %v873
        %v892 = vadd.f32 %v861, %v873
        %v893 = vadd.f32 %v862, %v873
        %v894 = vadd.f32 %v863, %v873
        %v895 = vadd.f32 %v864, %v873
        %v896 = vadd.f32 %v865, %v873
        %v897 = vadd.f32 %v866, %v873
        %v898 = vadd.f32 %v867, %v873
        %v899 = vmax.f32 %v875, 0.0
        %v900 = vmax.f32 %v876, 0.0
        %v901 = vmax.f32 %v877, 0.0
        %v902 = vmax.f32 %v878, 0.0
        %v903 = vmax.f32 %v879, 0.0
        %v904 = vmax.f32 %v880, 0.0
        %v905 = vmax.f32 %v881, 0.0
        %v906 = vmax.f32 %v882, 0.0
        %v907 = vmax.f32 %v883, 0.0
        %v908 = vmax.f32 %v884, 0.0
        %v909 = vmax.f32 %v885, 0.0
        %v910 = vmax.f32 %v886, 0.0
        %v911 = vmax.f32 %v887, 0.0
        %v912 = vmax.f32 %v888, 0.0
        %v913 = vmax.f32 %v889, 0.0
        %v914 = vmax.f32 %v890, 0.0
        %v915 = vmax.f32 %v891, 0.0
        %v916 = vmax.f32 %v892, 0.0
        %v917 = vmax.f32 %v893, 0.0
        %v918 = vmax.f32 %v894, 0.0
        %v919 = vmax.f32 %v895, 0.0
        %v920 = vmax.f32 %v896, 0.0
        %v921 = vmax.f32 %v897, 0.0
        %v922 = vmax.f32 %v898, 0.0
        %v923 = vpack.c.bf16 %v900, %v899
        %v924 = vpack.c.bf16 %v902, %v901
        %v925 = vpack.c.bf16 %v904, %v903
        %v926 = vpack.c.bf16 %v906, %v905
        %v927 = vpack.c.bf16 %v908, %v907
        %v928 = vpack.c.bf16 %v910, %v909
        %v929 = vpack.c.bf16 %v912, %v911
        %v930 = vpack.c.bf16 %v914, %v913
        %v931 = vpack.c.bf16 %v916, %v915
        %v932 = vpack.c.bf16 %v918, %v917
        %v933 = vpack.c.bf16 %v920, %v919
        %v934 = vpack.c.bf16 %v922, %v921
        %v947 = vunpack.c.l.b16 %v923
        %v948 = vunpack.c.h.b16 %v923
        %v949 = vunpack.c.l.b16 %v924
        %v950 = vunpack.c.h.b16 %v924
        %v951 = vunpack.c.l.b16 %v925
        %v952 = vunpack.c.h.b16 %v925
        %v953 = vunpack.c.l.b16 %v926
        %v954 = vunpack.c.h.b16 %v926
        %v955 = vunpack.c.l.b16 %v927
        %v956 = vunpack.c.h.b16 %v927
        %v957 = vunpack.c.l.b16 %v928
        %v958 = vunpack.c.h.b16 %v928
        %v959 = vunpack.c.l.b16 %v929
        %v960 = vunpack.c.h.b16 %v929
        %v961 = vunpack.c.l.b16 %v930
        %v962 = vunpack.c.h.b16 %v930
        %v963 = vunpack.c.l.b16 %v931
        %v964 = vunpack.c.h.b16 %v931
        %v965 = vunpack.c.l.b16 %v932
        %v966 = vunpack.c.h.b16 %v932
        %v967 = vunpack.c.l.b16 %v933
        %v968 = vunpack.c.h.b16 %v933
        %v969 = vunpack.c.l.b16 %v934
        %v970 = vunpack.c.h.b16 %v934
        %v971 = vpack.c.b16 %v947, %v947
        %v972 = vpack.c.b16 %v948, %v948
        %v973 = vpack.c.b16 %v949, %v949
        %v974 = vpack.c.b16 %v950, %v950
        %v975 = vpack.c.b16 %v951, %v951
        %v976 = vpack.c.b16 %v952, %v952
        %v977 = vpack.c.b16 %v953, %v953
        %v978 = vpack.c.b16 %v954, %v954
        %v979 = vpack.c.b16 %v955, %v955
        %v980 = vpack.c.b16 %v956, %v956
        %v981 = vpack.c.b16 %v957, %v957
        %v982 = vpack.c.b16 %v958, %v958
        %v983 = vpack.c.b16 %v959, %v959
        %v984 = vpack.c.b16 %v960, %v960
        %v985 = vpack.c.b16 %v961, %v961
        %v986 = vpack.c.b16 %v962, %v962
        %v987 = vpack.c.b16 %v963, %v963
        %v988 = vpack.c.b16 %v964, %v964
        %v989 = vpack.c.b16 %v965, %v965
        %v990 = vpack.c.b16 %v966, %v966
        %v991 = vpack.c.b16 %v967, %v967
        %v992 = vpack.c.b16 %v968, %v968
        %v993 = vpack.c.b16 %v969, %v969
        %v994 = vpack.c.b16 %v970, %v970
        %1019 = vst [vmem:[%s306] sm:$0xf] %v971
        %1020 = vst [vmem:[%s306 + $0x4] sm:$0xf] %v972
        %1021 = vst [vmem:[%s306 + $0x8] sm:$0xf] %v973
        %1022 = vst [vmem:[%s306 + $0xc] sm:$0xf] %v974
        %1023 = vst [vmem:[%s306 + $0x10] sm:$0xf] %v975
        %1024 = vst [vmem:[%s306 + $0x14] sm:$0xf] %v976
        %1025 = vst [vmem:[%s306 + $0x18] sm:$0xf] %v977
        %1026 = vst [vmem:[%s306 + $0x1c] sm:$0xf] %v978
        %1027 = vst [vmem:[%s306 + $0x20] sm:$0xf] %v979
        %1028 = vst [vmem:[%s306 + $0x24] sm:$0xf] %v980
        %1029 = vst [vmem:[%s306 + $0x28] sm:$0xf] %v981
        %1030 = vst [vmem:[%s306 + $0x2c] sm:$0xf] %v982
        %1031 = vst [vmem:[%s306 + $0x30] sm:$0xf] %v983
        %1032 = vst [vmem:[%s306 + $0x34] sm:$0xf] %v984
        %1033 = vst [vmem:[%s306 + $0x38] sm:$0xf] %v985
        %1034 = vst [vmem:[%s306 + $0x3c] sm:$0xf] %v986
        %1035 = vst [vmem:[%s306 + $0x40] sm:$0xf] %v987
        %1036 = vst [vmem:[%s306 + $0x44] sm:$0xf] %v988
        %1037 = vst [vmem:[%s306 + $0x48] sm:$0xf] %v989
        %1038 = vst [vmem:[%s306 + $0x4c] sm:$0xf] %v990
        %1039 = vst [vmem:[%s306 + $0x50] sm:$0xf] %v991
        %1040 = vst [vmem:[%s306 + $0x54] sm:$0xf] %v992
        %1041 = vst [vmem:[%s306 + $0x58] sm:$0xf] %v993
        %1042 = vst [vmem:[%s306 + $0x5c] sm:$0xf] %v994
      $region44: #{pcb_test_forward.52} parent=35 // pred_fallthru
        _
      %s1043 = smul.u32 24, %s20
      %p1044 = scmp.lt.s32.totalorder %s1043, 47
      %s1045 = scalar_select %p1044, %s1043, 47
      %p1046 = scmp.lt.s32.totalorder %s21, 0
      %s1047 = scalar_select %p1046, %s21, 0
      %s1048 = sadd.s32 %s1047, %s1045
      %s1049 = smul.addr %s1048, 4
      %s1050 = scalar_lea.vmem %s4, %s1049
      // Predicated region
      $region45: #{pcb_test_forward.52} parent=35 // pred_check
        %p1051 = pneg %p162
      $region46: #{pcb_test_forward.52} parent=35 // pred_check_branch
        %1053 = sbr.rel (%p1051) target = $region48
      $region47: #{pcb_test_forward.52} parent=35 // pred_region
        %s1054 = smul.u32 24, %s20
      $region48: #{pcb_test_forward.52} parent=35 // pred_fallthru
        _
    $region36: #{pcb_test_forward.52} parent=5 // pred_fallthru
      _
    %p1055 = scmp.le.s32.totalorder 2, %s10
    // Predicated region
    $region49: #{pcb_test_forward.52} parent=5 // pred_check
      %p1056 = pneg %p1055
    $region50: #{pcb_test_forward.52} parent=5 // pred_check_branch
      %1058 = sbr.rel (%p1056) target = $region52
    $region51: #{pcb_test_forward.52} parent=5 // pred_region
      %s1059 = ssub.s32 %s10, 2
      // Predicated region
      $region53: #{pcb_test_forward.52} parent=51 // pred_check
        %p1060 = pneg %p168
      $region54: #{pcb_test_forward.52} parent=51 // pred_check_branch
        %1062 = sbr.rel (%p1060) target = $region56
      $region55: #{pcb_test_forward.52} parent=51 // pred_region
        %s1063 = smul.u32 24, %s23
        %p1064 = scmp.lt.s32.totalorder %s1063, 47
        %s1065 = scalar_select %p1064, %s1063, 47
        %p1066 = scmp.lt.s32.totalorder %s24, 0
        %s1067 = scalar_select %p1066, %s24, 0
        %s1068 = sadd.s32 %s1067, %s1065
        %s1069 = smul.addr %s1068, 4
        %s1070 = scalar_lea.vmem %s4, %s1069
      $region56: #{pcb_test_forward.52} parent=51 // pred_fallthru
        _
    $region52: #{pcb_test_forward.52} parent=5 // pred_fallthru
      _
  $region6: #{pcb_test_forward.52} parent=0 // loop_footer
    %s14 = sadd.s32 1, %s10
  $region7: #{pcb_test_forward.52} parent=0 // loop_footer_branch
    %9 = sbr.rel target = $region3
  $region8: #{pcb_test_forward.52} parent=0 // loop_exit
    _

// kernel: pcb_test_forward.53
$region0: #{pcb_test_forward.53}
  #allocation0 [shape = 'u32[]', space=smem, size = 0x4, offset = 0x4, fixed_abs, tag = 'smem constant byte address 0x4 - core index']
  #allocation1 [shape = 'u32[144,128]{1,0:T(1,128)}', space=vmem, size = 0x12000, scoped, tag = 'internal scratch']
  %s0 = inlined_call_operand.vmem [shape: bf16[2,4,13,5,128], index: 0, kind: input, shape index: {}]
  %s1 = inlined_call_operand.vmem [shape: bf16[2,12,4,128], index: 1, kind: output, shape index: {}]
  %s2 = sld [smem:[#allocation0]]
  $region37: #{pcb_test_forward.53} parent=0
    _
  %s4 = ssub.s32 1, %s2
  %s5 = scalar_select 0, %s4, %s2
  loop: start=0, step=1, limit=4
  $region2: #{pcb_test_forward.53} parent=0 // loop_pre_header
    _
  $region3: #{pcb_test_forward.53} parent=0 // loop_header
    %s7 = sphi 0, %s11
    %p8 = scmp.ge.s32.totalorder %s7, 4
    %s17 = sphi 0, %s19
    %s20 = sphi 0, %s17
    %s21 = sphi 0, %s20
    %s37 = sphi 0, %s21
    %s43 = sphi 0, %s45
    %s46 = sphi 0, %s43
    %s47 = sphi 0, %s46
    %s63 = sphi 0, %s47
  $region4: #{pcb_test_forward.53} parent=0 // loop_header_branch
    %10 = sbr.rel (%p8) target = $region8
  $region5: #{pcb_test_forward.53} parent=0 // loop_body
    %s12 = ssub.s32 %s7, 1
    %s13 = ssub.s32 %s7, 2
    %s14 = sadd.s32 %s7, 1
    %s15 = ssub.s32 %s7, %s14
    %p16 = scmp.eq.s32.totalorder %s15, 0
    %s18 = sadd.s32 %s17, 1
    %s19 = scalar_select %p16, %s17, %s18
    %p22 = pneg %p16
    %p23 = scmp.eq.s32.totalorder %s7, 1
    %p24 = por %p22, %p23
    %p25 = scmp.ne.s32.totalorder %s17, %s20
    %p26 = scmp.eq.s32.totalorder %s7, 0
    %p27 = por %p25, %p26
    %p28 = scmp.ne.s32.totalorder %s17, %s20
    %p29 = scmp.eq.s32.totalorder %s12, 1
    %p30 = por %p28, %p29
    %p31 = scmp.ne.s32.totalorder %s20, %s21
    %p32 = scmp.eq.s32.totalorder %s12, 0
    %p33 = por %p31, %p32
    %p34 = scmp.ne.s32.totalorder %s20, %s21
    %p35 = scmp.eq.s32.totalorder %s13, 1
    %p36 = por %p34, %p35
    %p38 = scmp.ne.s32.totalorder %s21, %s37
    %p39 = scmp.eq.s32.totalorder %s13, 0
    %p40 = por %p38, %p39
    %s41 = ssub.s32 %s7, %s14
    %p42 = scmp.eq.s32.totalorder %s41, 0
    %s44 = sadd.s32 %s43, 1
    %s45 = scalar_select %p42, %s43, %s44
    %p48 = pneg %p42
    %p49 = scmp.eq.s32.totalorder %s7, 1
    %p50 = por %p48, %p49
    %p51 = scmp.ne.s32.totalorder %s43, %s46
    %p52 = scmp.eq.s32.totalorder %s7, 0
    %p53 = por %p51, %p52
    %p54 = scmp.ne.s32.totalorder %s43, %s46
    %p55 = scmp.eq.s32.totalorder %s12, 1
    %p56 = por %p54, %p55
    %p57 = scmp.ne.s32.totalorder %s46, %s47
    %p58 = scmp.eq.s32.totalorder %s12, 0
    %p59 = por %p57, %p58
    %p60 = scmp.ne.s32.totalorder %s46, %s47
    %p61 = scmp.eq.s32.totalorder %s13, 1
    %p62 = por %p60, %p61
    %p64 = scmp.ne.s32.totalorder %s47, %s63
    %p65 = scmp.eq.s32.totalorder %s13, 0
    %p66 = por %p64, %p65
    %p67 = scmp.le.s32.totalorder 1, %s7
    %p68 = scmp.lt.s32.totalorder %s7, 3
    %p69 = pnand %p67, %p68
    %p70 = pneg %p69
    // Predicated region
    $region9: #{pcb_test_forward.53} parent=5 // pred_check
      _
    $region10: #{pcb_test_forward.53} parent=5 // pred_check_branch
      %72 = sbr.rel (%p69) target = $region12
    $region11: #{pcb_test_forward.53} parent=5 // pred_region
      %s73 = ssub.s32 %s7, 1
    $region12: #{pcb_test_forward.53} parent=5 // pred_fallthru
      _
    %p74 = scmp.lt.s32.totalorder %s7, 2
    // Predicated region
    $region13: #{pcb_test_forward.53} parent=5 // pred_check
      %p75 = pneg %p74
    $region14: #{pcb_test_forward.53} parent=5 // pred_check_branch
      %77 = sbr.rel (%p75) target = $region16
    $region15: #{pcb_test_forward.53} parent=5 // pred_region
      // Predicated region
      $region17: #{pcb_test_forward.53} parent=15 // pred_check
        %p78 = pneg %p27
      $region18: #{pcb_test_forward.53} parent=15 // pred_check_branch
        %80 = sbr.rel (%p78) target = $region20
      $region19: #{pcb_test_forward.53} parent=15 // pred_region
        %p81 = scmp.lt.s32.totalorder %s7, 1
        %s82 = scalar_select %p81, %s7, 1
        %s83 = smul.addr %s82, 52
        %s84 = smul.addr %s83, 4
        %s85 = scalar_lea.vmem %s0, %s84
      $region20: #{pcb_test_forward.53} parent=15 // pred_fallthru
        _
    $region16: #{pcb_test_forward.53} parent=5 // pred_fallthru
      _
    %p86 = scmp.le.s32.totalorder 1, %s7
    %p87 = scmp.lt.s32.totalorder %s7, 3
    %p88 = pnand %p86, %p87
    %p89 = pneg %p88
    // Predicated region
    $region21: #{pcb_test_forward.53} parent=5 // pred_check
      _
    $region22: #{pcb_test_forward.53} parent=5 // pred_check_branch
      %91 = sbr.rel (%p88) target = $region24
    $region23: #{pcb_test_forward.53} parent=5 // pred_region
      %s92 = ssub.s32 %s7, 1
      %p93 = scmp.lt.s32.totalorder %s12, 1
      %s94 = scalar_select %p93, %s12, 1
      %s95 = smul.addr %s94, 52
      %s96 = smul.addr %s95, 4
      %s97 = scalar_lea.vmem %s0, %s96
      %p98 = pneg %p33
      %p99 = pneg %p30
      %p100 = pneg %p59
      %p101 = pneg %p56
      %p102 = scmp.lt.s32.totalorder %s12, 1
      %s103 = scalar_select %p102, %s12, 1
      %s104 = smul.addr %s103, 12
      %s105 = smul.addr %s104, 2
      %s106 = scalar_lea.vmem %s1, %s105
      %p107 = scmp.lt.s32.totalorder %s12, 1
      %s108 = scalar_select %p107, %s12, 1
      %s109 = smul.addr %s108, 52
      %s110 = smul.addr %s109, 4
      %s111 = scalar_lea.vmem %s0, %s110
      %p112 = scmp.lt.s32.totalorder %s12, 1
      %s113 = scalar_select %p112, %s12, 1
      %s114 = smul.addr %s113, 12
      %s115 = smul.addr %s114, 2
      %s116 = scalar_lea.vmem %s1, %s115
      %v117 = vld [vmem:[%s111] sm:$0x7]
      %v118 = vld [vmem:[%s111 + $0x4] sm:$0x7]
      %v119 = vld [vmem:[%s111 + $0x8] sm:$0x7]
      %v120 = vld [vmem:[%s111 + $0xc] sm:$0x7]
      %v121 = vld [vmem:[%s111 + $0x10] sm:$0x7]
      %v122 = vld [vmem:[%s111 + $0x14] sm:$0x7]
      %v123 = vld [vmem:[%s111 + $0x18] sm:$0x7]
      %v124 = vld [vmem:[%s111 + $0x1c] sm:$0x7]
      %v125 = vld [vmem:[%s111 + $0x20] sm:$0x7]
      %v126 = vld [vmem:[%s111 + $0x24] sm:$0x7]
      %v127 = vld [vmem:[%s111 + $0x28] sm:$0x7]
      %v128 = vld [vmem:[%s111 + $0x2c] sm:$0x7]
      %v129 = vld [vmem:[%s111 + $0x30] sm:$0x7]
      %v130 = vld [vmem:[%s111 + $0x34] sm:$0x7]
      %v131 = vld [vmem:[%s111 + $0x38] sm:$0x7]
      %v132 = vld [vmem:[%s111 + $0x3c] sm:$0x7]
      %v133 = vld [vmem:[%s111 + $0x40] sm:$0x7]
      %v134 = vld [vmem:[%s111 + $0x44] sm:$0x7]
      %v135 = vld [vmem:[%s111 + $0x48] sm:$0x7]
      %v136 = vld [vmem:[%s111 + $0x4c] sm:$0x7]
      %v137 = vld [vmem:[%s111 + $0x50] sm:$0x7]
      %v138 = vld [vmem:[%s111 + $0x54] sm:$0x7]
      %v139 = vld [vmem:[%s111 + $0x58] sm:$0x7]
      %v140 = vld [vmem:[%s111 + $0x5c] sm:$0x7]
      %v141 = vld [vmem:[%s111 + $0x60] sm:$0x7]
      %v142 = vld [vmem:[%s111 + $0x64] sm:$0x7]
      %v143 = vld [vmem:[%s111 + $0x68] sm:$0x7]
      %v144 = vld [vmem:[%s111 + $0x6c] sm:$0x7]
      %v145 = vld [vmem:[%s111 + $0x70] sm:$0x7]
      %v146 = vld [vmem:[%s111 + $0x74] sm:$0x7]
      %v147 = vld [vmem:[%s111 + $0x78] sm:$0x7]
      %v148 = vld [vmem:[%s111 + $0x7c] sm:$0x7]
      %v149 = vld [vmem:[%s111 + $0x80] sm:$0x7]
      %v150 = vld [vmem:[%s111 + $0x84] sm:$0x7]
      %v151 = vld [vmem:[%s111 + $0x88] sm:$0x7]
      %v152 = vld [vmem:[%s111 + $0x8c] sm:$0x7]
      %v153 = vld [vmem:[%s111 + $0x90] sm:$0x7]
      %v154 = vld [vmem:[%s111 + $0x94] sm:$0x7]
      %v155 = vld [vmem:[%s111 + $0x9c] sm:$0x7]
      %v156 = vld [vmem:[%s111 + $0xa0] sm:$0x7]
      %v157 = vld [vmem:[%s111 + $0xa4] sm:$0x7]
      %v158 = vld [vmem:[%s111 + $0xa8] sm:$0x7]
      %v159 = vld [vmem:[%s111 + $0xac] sm:$0x7]
      %v160 = vld [vmem:[%s111 + $0xb0] sm:$0x7]
      %v161 = vld [vmem:[%s111 + $0xb4] sm:$0x7]
      %v162 = vld [vmem:[%s111 + $0xb8] sm:$0x7]
      %v163 = vld [vmem:[%s111 + $0xbc] sm:$0x7]
      %v164 = vld [vmem:[%s111 + $0xc0] sm:$0x7]
      %v165 = vld [vmem:[%s111 + $0xc4] sm:$0x7]
      %v166 = vld [vmem:[%s111 + $0xc8] sm:$0x7]
      %v167 = vmax.bf16 %v117, %v130
      %v168 = vmax.bf16 %v118, %v131
      %v169 = vmax.bf16 %v119, %v132
      %v170 = vmax.bf16 %v120, %v133
      %v171 = vmax.bf16 %v121, %v134
      %v172 = vmax.bf16 %v122, %v135
      %v173 = vmax.bf16 %v123, %v136
      %v174 = vmax.bf16 %v124, %v137
      %v175 = vmax.bf16 %v125, %v138
      %v176 = vmax.bf16 %v126, %v139
      %v177 = vmax.bf16 %v127, %v140
      %v178 = vmax.bf16 %v128, %v141
      %v180 = vshrl.u32 %v117, 16
      %v182 = vrot.slane %v180, 4
      %v183 = vshll.u32 %v117, 16
      %v185 = vrot.slane %v183, 5
      %v186 = vor.u32 %v182, %v185
      %v187 = vrot.slane %v186, 4
      %v189 = vshrl.u32 %v118, 16
      %v191 = vrot.slane %v189, 4
      %v192 = vshll.u32 %v118, 16
      %v194 = vrot.slane %v192, 5
      %v195 = vor.u32 %v191, %v194
      %v196 = vrot.slane %v195, 4
      %v198 = vshrl.u32 %v119, 16
      %v200 = vrot.slane %v198, 4
      %v201 = vshll.u32 %v119, 16
      %v203 = vrot.slane %v201, 5
      %v204 = vor.u32 %v200, %v203
      %v205 = vrot.slane %v204, 4
      %v207 = vshrl.u32 %v120, 16
      %v209 = vrot.slane %v207, 4
      %v210 = vshll.u32 %v120, 16
      %v212 = vrot.slane %v210, 5
      %v213 = vor.u32 %v209, %v212
      %v214 = vrot.slane %v213, 4
      %v216 = vshrl.u32 %v121, 16
      %v218 = vrot.slane %v216, 4
      %v219 = vshll.u32 %v121, 16
      %v221 = vrot.slane %v219, 5
      %v222 = vor.u32 %v218, %v221
      %v223 = vrot.slane %v222, 4
      %v225 = vshrl.u32 %v122, 16
      %v227 = vrot.slane %v225, 4
      %v228 = vshll.u32 %v122, 16
      %v230 = vrot.slane %v228, 5
      %v231 = vor.u32 %v227, %v230
      %v232 = vrot.slane %v231, 4
      %v234 = vshrl.u32 %v123, 16
      %v236 = vrot.slane %v234, 4
      %v237 = vshll.u32 %v123, 16
      %v239 = vrot.slane %v237, 5
      %v240 = vor.u32 %v236, %v239
      %v241 = vrot.slane %v240, 4
      %v243 = vshrl.u32 %v124, 16
      %v245 = vrot.slane %v243, 4
      %v246 = vshll.u32 %v124, 16
      %v248 = vrot.slane %v246, 5
      %v249 = vor.u32 %v245, %v248
      %v250 = vrot.slane %v249, 4
      %v252 = vshrl.u32 %v125, 16
      %v254 = vrot.slane %v252, 4
      %v255 = vshll.u32 %v125, 16
      %v257 = vrot.slane %v255, 5
      %v258 = vor.u32 %v254, %v257
      %v259 = vrot.slane %v258, 4
      %v261 = vshrl.u32 %v126, 16
      %v263 = vrot.slane %v261, 4
      %v264 = vshll.u32 %v126, 16
      %v266 = vrot.slane %v264, 5
      %v267 = vor.u32 %v263, %v266
      %v268 = vrot.slane %v267, 4
      %v270 = vshrl.u32 %v127, 16
      %v272 = vrot.slane %v270, 4
      %v273 = vshll.u32 %v127, 16
      %v275 = vrot.slane %v273, 5
      %v276 = vor.u32 %v272, %v275
      %v277 = vrot.slane %v276, 4
      %v279 = vshrl.u32 %v128, 16
      %v281 = vrot.slane %v279, 4
      %v282 = vshll.u32 %v128, 16
      %v284 = vrot.slane %v282, 5
      %v285 = vor.u32 %v281, %v284
      %v286 = vrot.slane %v285, 4
      %v299 = vmax.bf16 %v167, %v187
      %v300 = vmax.bf16 %v168, %v196
      %v301 = vmax.bf16 %v169, %v205
      %v302 = vmax.bf16 %v170, %v214
      %v303 = vmax.bf16 %v171, %v223
      %v304 = vmax.bf16 %v172, %v232
      %v305 = vmax.bf16 %v173, %v241
      %v306 = vmax.bf16 %v174, %v250
      %v307 = vmax.bf16 %v175, %v259
      %v308 = vmax.bf16 %v176, %v268
      %v309 = vmax.bf16 %v177, %v277
      %v310 = vmax.bf16 %v178, %v286
      %v311 = vmax.bf16 %v299, %v143
      %v312 = vmax.bf16 %v300, %v144
      %v313 = vmax.bf16 %v301, %v145
      %v314 = vmax.bf16 %v302, %v146
      %v315 = vmax.bf16 %v303, %v147
      %v316 = vmax.bf16 %v304, %v148
      %v317 = vmax.bf16 %v305, %v149
      %v318 = vmax.bf16 %v306, %v150
      %v319 = vmax.bf16 %v307, %v151
      %v320 = vmax.bf16 %v308, %v152
      %v321 = vmax.bf16 %v309, %v153
      %v322 = vmax.bf16 %v310, %v154
      %v323 = vmax.bf16 %v311, %v155
      %v324 = vmax.bf16 %v312, %v156
      %v325 = vmax.bf16 %v313, %v157
      %v326 = vmax.bf16 %v314, %v158
      %v327 = vmax.bf16 %v315, %v159
      %v328 = vmax.bf16 %v316, %v160
      %v329 = vmax.bf16 %v317, %v161
      %v330 = vmax.bf16 %v318, %v162
      %v331 = vmax.bf16 %v319, %v163
      %v332 = vmax.bf16 %v320, %v164
      %v333 = vmax.bf16 %v321, %v165
      %v334 = vmax.bf16 %v322, %v166
      %v336 = vshrl.u32 %v143, 16
      %v338 = vrot.slane %v336, 4
      %v339 = vshll.u32 %v143, 16
      %v341 = vrot.slane %v339, 5
      %v342 = vor.u32 %v338, %v341
      %v343 = vrot.slane %v342, 4
      %v345 = vshrl.u32 %v144, 16
      %v347 = vrot.slane %v345, 4
      %v348 = vshll.u32 %v144, 16
      %v350 = vrot.slane %v348, 5
      %v351 = vor.u32 %v347, %v350
      %v352 = vrot.slane %v351, 4
      %v354 = vshrl.u32 %v145, 16
      %v356 = vrot.slane %v354, 4
      %v357 = vshll.u32 %v145, 16
      %v359 = vrot.slane %v357, 5
      %v360 = vor.u32 %v356, %v359
      %v361 = vrot.slane %v360, 4
      %v363 = vshrl.u32 %v146, 16
      %v365 = vrot.slane %v363, 4
      %v366 = vshll.u32 %v146, 16
      %v368 = vrot.slane %v366, 5
      %v369 = vor.u32 %v365, %v368
      %v370 = vrot.slane %v369, 4
      %v372 = vshrl.u32 %v147, 16
      %v374 = vrot.slane %v372, 4
      %v375 = vshll.u32 %v147, 16
      %v377 = vrot.slane %v375, 5
      %v378 = vor.u32 %v374, %v377
      %v379 = vrot.slane %v378, 4
      %v381 = vshrl.u32 %v148, 16
      %v383 = vrot.slane %v381, 4
      %v384 = vshll.u32 %v148, 16
      %v386 = vrot.slane %v384, 5
      %v387 = vor.u32 %v383, %v386
      %v388 = vrot.slane %v387, 4
      %v390 = vshrl.u32 %v149, 16
      %v392 = vrot.slane %v390, 4
      %v393 = vshll.u32 %v149, 16
      %v395 = vrot.slane %v393, 5
      %v396 = vor.u32 %v392, %v395
      %v397 = vrot.slane %v396, 4
      %v399 = vshrl.u32 %v150, 16
      %v401 = vrot.slane %v399, 4
      %v402 = vshll.u32 %v150, 16
      %v404 = vrot.slane %v402, 5
      %v405 = vor.u32 %v401, %v404
      %v406 = vrot.slane %v405, 4
      %v408 = vshrl.u32 %v151, 16
      %v410 = vrot.slane %v408, 4
      %v411 = vshll.u32 %v151, 16
      %v413 = vrot.slane %v411, 5
      %v414 = vor.u32 %v410, %v413
      %v415 = vrot.slane %v414, 4
      %v417 = vshrl.u32 %v152, 16
      %v419 = vrot.slane %v417, 4
      %v420 = vshll.u32 %v152, 16
      %v422 = vrot.slane %v420, 5
      %v423 = vor.u32 %v419, %v422
      %v424 = vrot.slane %v423, 4
      %v426 = vshrl.u32 %v153, 16
      %v428 = vrot.slane %v426, 4
      %v429 = vshll.u32 %v153, 16
      %v431 = vrot.slane %v429, 5
      %v432 = vor.u32 %v428, %v431
      %v433 = vrot.slane %v432, 4
      %v435 = vshrl.u32 %v154, 16
      %v437 = vrot.slane %v435, 4
      %v438 = vshll.u32 %v154, 16
      %v440 = vrot.slane %v438, 5
      %v441 = vor.u32 %v437, %v440
      %v442 = vrot.slane %v441, 4
      %v455 = vmax.bf16 %v323, %v343
      %v456 = vmax.bf16 %v324, %v352
      %v457 = vmax.bf16 %v325, %v361
      %v458 = vmax.bf16 %v326, %v370
      %v459 = vmax.bf16 %v327, %v379
      %v460 = vmax.bf16 %v328, %v388
      %v461 = vmax.bf16 %v329, %v397
      %v462 = vmax.bf16 %v330, %v406
      %v463 = vmax.bf16 %v331, %v415
      %v464 = vmax.bf16 %v332, %v424
      %v465 = vmax.bf16 %v333, %v433
      %v466 = vmax.bf16 %v334, %v442
      %v467 = vmax.bf16 %v455, %v118
      %v468 = vmax.bf16 %v456, %v119
      %v469 = vmax.bf16 %v457, %v120
      %v470 = vmax.bf16 %v458, %v121
      %v471 = vmax.bf16 %v459, %v122
      %v472 = vmax.bf16 %v460, %v123
      %v473 = vmax.bf16 %v461, %v124
      %v474 = vmax.bf16 %v462, %v125
      %v475 = vmax.bf16 %v463, %v126
      %v476 = vmax.bf16 %v464, %v127
      %v477 = vmax.bf16 %v465, %v128
      %v478 = vmax.bf16 %v466, %v129
      %v479 = vmax.bf16 %v467, %v131
      %v480 = vmax.bf16 %v468, %v132
      %v481 = vmax.bf16 %v469, %v133
      %v482 = vmax.bf16 %v470, %v134
      %v483 = vmax.bf16 %v471, %v135
      %v484 = vmax.bf16 %v472, %v136
      %v485 = vmax.bf16 %v473, %v137
      %v486 = vmax.bf16 %v474, %v138
      %v487 = vmax.bf16 %v475, %v139
      %v488 = vmax.bf16 %v476, %v140
      %v489 = vmax.bf16 %v477, %v141
      %v490 = vmax.bf16 %v478, %v142
      %v492 = vshrl.u32 %v129, 16
      %v494 = vrot.slane %v492, 4
      %v495 = vshll.u32 %v129, 16
      %v497 = vrot.slane %v495, 5
      %v498 = vor.u32 %v494, %v497
      %v499 = vrot.slane %v498, 4
      %v501 = vmax.bf16 %v479, %v196
      %v502 = vmax.bf16 %v480, %v205
      %v503 = vmax.bf16 %v481, %v214
      %v504 = vmax.bf16 %v482, %v223
      %v505 = vmax.bf16 %v483, %v232
      %v506 = vmax.bf16 %v484, %v241
      %v507 = vmax.bf16 %v485, %v250
      %v508 = vmax.bf16 %v486, %v259
      %v509 = vmax.bf16 %v487, %v268
      %v510 = vmax.bf16 %v488, %v277
      %v511 = vmax.bf16 %v489, %v286
      %v512 = vmax.bf16 %v490, %v499
      %513 = vst [vmem:[%s116] sm:$0x3] %v501
      %514 = vst [vmem:[%s116 + $0x2] sm:$0x3] %v502
      %515 = vst [vmem:[%s116 + $0x4] sm:$0x3] %v503
      %516 = vst [vmem:[%s116 + $0x6] sm:$0x3] %v504
      %517 = vst [vmem:[%s116 + $0x8] sm:$0x3] %v505
      %518 = vst [vmem:[%s116 + $0xa] sm:$0x3] %v506
      %519 = vst [vmem:[%s116 + $0xc] sm:$0x3] %v507
      %520 = vst [vmem:[%s116 + $0xe] sm:$0x3] %v508
      %521 = vst [vmem:[%s116 + $0x10] sm:$0x3] %v509
      %522 = vst [vmem:[%s116 + $0x12] sm:$0x3] %v510
      %523 = vst [vmem:[%s116 + $0x14] sm:$0x3] %v511
      %524 = vst [vmem:[%s116 + $0x16] sm:$0x3] %v512
      %p525 = scmp.lt.s32.totalorder %s12, 1
      %s526 = scalar_select %p525, %s12, 1
      %s527 = smul.addr %s526, 12
      %s528 = smul.addr %s527, 2
      %s529 = scalar_lea.vmem %s1, %s528
      // Predicated region
      $region25: #{pcb_test_forward.53} parent=23 // pred_check
        %p530 = pneg %p56
      $region26: #{pcb_test_forward.53} parent=23 // pred_check_branch
        %532 = sbr.rel (%p530) target = $region28
      $region27: #{pcb_test_forward.53} parent=23 // pred_region
        _
      $region28: #{pcb_test_forward.53} parent=23 // pred_fallthru
        _
    $region24: #{pcb_test_forward.53} parent=5 // pred_fallthru
      _
    %p533 = scmp.le.s32.totalorder 2, %s7
    // Predicated region
    $region29: #{pcb_test_forward.53} parent=5 // pred_check
      %p534 = pneg %p533
    $region30: #{pcb_test_forward.53} parent=5 // pred_check_branch
      %536 = sbr.rel (%p534) target = $region32
    $region31: #{pcb_test_forward.53} parent=5 // pred_region
      %s537 = ssub.s32 %s7, 2
      // Predicated region
      $region33: #{pcb_test_forward.53} parent=31 // pred_check
        %p538 = pneg %p62
      $region34: #{pcb_test_forward.53} parent=31 // pred_check_branch
        %540 = sbr.rel (%p538) target = $region36
      $region35: #{pcb_test_forward.53} parent=31 // pred_region
        %p541 = scmp.lt.s32.totalorder %s13, 1
        %s542 = scalar_select %p541, %s13, 1
        %s543 = smul.addr %s542, 12
        %s544 = smul.addr %s543, 2
        %s545 = scalar_lea.vmem %s1, %s544
      $region36: #{pcb_test_forward.53} parent=31 // pred_fallthru
        _
    $region32: #{pcb_test_forward.53} parent=5 // pred_fallthru
      _
  $region6: #{pcb_test_forward.53} parent=0 // loop_footer
    %s11 = sadd.s32 1, %s7
  $region7: #{pcb_test_forward.53} parent=0 // loop_footer_branch
    %6 = sbr.rel target = $region3
  $region8: #{pcb_test_forward.53} parent=0 // loop_exit
    _

// kernel: pcb_test_forward.54
$region0: #{pcb_test_forward.54}
  #allocation0 [shape = 'u32[]', space=smem, size = 0x4, offset = 0x4, fixed_abs, tag = 'smem constant byte address 0x4 - core index']
  #allocation1 [shape = 'u32[144,128]{1,0:T(1,128)}', space=vmem, size = 0x12000, scoped, tag = 'internal scratch']
  #allocation2 [shape = 'f32[48,256]{1,0:T(8,128)}', space=vmem, size = 0xc000, scoped, tag = 'scratch operand']
  %s0 = inlined_call_operand.vmem [shape: bf16[96,128], index: 0, kind: input, shape index: {}]
  %s1 = inlined_call_operand.vmem [shape: bf16[128,256], index: 1, kind: input, shape index: {}]
  %s2 = inlined_call_operand.vmem [shape: f32[1,256], index: 2, kind: input, shape index: {}]
  %s3 = inlined_call_operand.vmem [shape: f32[1,256], index: 3, kind: input, shape index: {}]
  %s4 = inlined_call_operand.vmem [shape: f32[1,256], index: 4, kind: input, shape index: {}]
  %s5 = inlined_call_operand.vmem [shape: bf16[96,256], index: 5, kind: output, shape index: {}]
  %s6 = sld [smem:[#allocation0]]
  $region61: #{pcb_test_forward.54} parent=0
    _
  %s8 = ssub.s32 1, %s6
  %s9 = scalar_select 0, %s8, %s6
  loop: start=0, step=1, limit=4
  $region2: #{pcb_test_forward.54} parent=0 // loop_pre_header
    _
  $region3: #{pcb_test_forward.54} parent=0 // loop_header
    %s11 = sphi 0, %s15
    %p12 = scmp.ge.s32.totalorder %s11, 4
    %s18 = sphi 0, %s37
    %s19 = sphi 0, %s33
    %s20 = sphi 0, %s29
    %s21 = sphi 0, %s18
    %s22 = sphi 0, %s19
    %s23 = sphi 0, %s20
    %s24 = sphi 0, %s21
    %s25 = sphi 0, %s22
    %s26 = sphi 0, %s23
    %s42 = sphi 0, %s44
    %s45 = sphi 0, %s42
    %s46 = sphi 0, %s45
    %s62 = sphi 0, %s46
    %s70 = sphi 0, %s72
    %s73 = sphi 0, %s70
    %s74 = sphi 0, %s73
    %s90 = sphi 0, %s74
    %s96 = sphi 0, %s98
    %s99 = sphi 0, %s96
    %s100 = sphi 0, %s99
    %s116 = sphi 0, %s100
    %s122 = sphi 0, %s124
    %s125 = sphi 0, %s122
    %s126 = sphi 0, %s125
    %s142 = sphi 0, %s126
    %s148 = sphi 0, %s150
    %s151 = sphi 0, %s148
    %s152 = sphi 0, %s151
    %s168 = sphi 0, %s152
    %s176 = sphi 0, %s178
    %s179 = sphi 0, %s176
    %s180 = sphi 0, %s179
    %s196 = sphi 0, %s180
  $region4: #{pcb_test_forward.54} parent=0 // loop_header_branch
    %14 = sbr.rel (%p12) target = $region8
  $region5: #{pcb_test_forward.54} parent=0 // loop_body
    %s16 = ssub.s32 %s11, 1
    %s17 = ssub.s32 %s11, 2
    %s27 = sadd.s32 1, %s20
    %p28 = scmp.ge.s32.totalorder %s27, 1
    %s29 = scalar_select %p28, 0, %s27
    %s30 = sadd.s32 1, %s19
    %s31 = scalar_select %p28, %s30, %s19
    %p32 = scmp.ge.s32.totalorder %s31, 1
    %s33 = scalar_select %p32, 0, %s31
    %s34 = sadd.s32 1, %s18
    %s35 = scalar_select %p32, %s34, %s18
    %p36 = scmp.ge.s32.totalorder %s35, 2
    %s37 = scalar_select %p36, 0, %s35
    %s38 = ssub.s32 %s18, %s37
    %s39 = ssub.s32 %s20, %s29
    %s40 = sor.u32 %s38, %s39
    %p41 = scmp.eq.s32.totalorder %s40, 0
    %s43 = sadd.s32 %s42, 1
    %s44 = scalar_select %p41, %s42, %s43
    %p47 = pneg %p41
    %p48 = scmp.eq.s32.totalorder %s11, 1
    %p49 = por %p47, %p48
    %p50 = scmp.ne.s32.totalorder %s42, %s45
    %p51 = scmp.eq.s32.totalorder %s11, 0
    %p52 = por %p50, %p51
    %p53 = scmp.ne.s32.totalorder %s42, %s45
    %p54 = scmp.eq.s32.totalorder %s16, 1
    %p55 = por %p53, %p54
    %p56 = scmp.ne.s32.totalorder %s45, %s46
    %p57 = scmp.eq.s32.totalorder %s16, 0
    %p58 = por %p56, %p57
    %p59 = scmp.ne.s32.totalorder %s45, %s46
    %p60 = scmp.eq.s32.totalorder %s17, 1
    %p61 = por %p59, %p60
    %p63 = scmp.ne.s32.totalorder %s46, %s62
    %p64 = scmp.eq.s32.totalorder %s17, 0
    %p65 = por %p63, %p64
    %s66 = ssub.s32 %s20, %s29
    %s67 = ssub.s32 %s19, %s33
    %s68 = sor.u32 %s66, %s67
    %p69 = scmp.eq.s32.totalorder %s68, 0
    %s71 = sadd.s32 %s70, 1
    %s72 = scalar_select %p69, %s70, %s71
    %p75 = pneg %p69
    %p76 = scmp.eq.s32.totalorder %s11, 1
    %p77 = por %p75, %p76
    %p78 = scmp.ne.s32.totalorder %s70, %s73
    %p79 = scmp.eq.s32.totalorder %s11, 0
    %p80 = por %p78, %p79
    %p81 = scmp.ne.s32.totalorder %s70, %s73
    %p82 = scmp.eq.s32.totalorder %s16, 1
    %p83 = por %p81, %p82
    %p84 = scmp.ne.s32.totalorder %s73, %s74
    %p85 = scmp.eq.s32.totalorder %s16, 0
    %p86 = por %p84, %p85
    %p87 = scmp.ne.s32.totalorder %s73, %s74
    %p88 = scmp.eq.s32.totalorder %s17, 1
    %p89 = por %p87, %p88
    %p91 = scmp.ne.s32.totalorder %s74, %s90
    %p92 = scmp.eq.s32.totalorder %s17, 0
    %p93 = por %p91, %p92
    %s94 = ssub.s32 %s19, %s33
    %p95 = scmp.eq.s32.totalorder %s94, 0
    %s97 = sadd.s32 %s96, 1
    %s98 = scalar_select %p95, %s96, %s97
    %p101 = pneg %p95
    %p102 = scmp.eq.s32.totalorder %s11, 1
    %p103 = por %p101, %p102
    %p104 = scmp.ne.s32.totalorder %s96, %s99
    %p105 = scmp.eq.s32.totalorder %s11, 0
    %p106 = por %p104, %p105
    %p107 = scmp.ne.s32.totalorder %s96, %s99
    %p108 = scmp.eq.s32.totalorder %s16, 1
    %p109 = por %p107, %p108
    %p110 = scmp.ne.s32.totalorder %s99, %s100
    %p111 = scmp.eq.s32.totalorder %s16, 0
    %p112 = por %p110, %p111
    %p113 = scmp.ne.s32.totalorder %s99, %s100
    %p114 = scmp.eq.s32.totalorder %s17, 1
    %p115 = por %p113, %p114
    %p117 = scmp.ne.s32.totalorder %s100, %s116
    %p118 = scmp.eq.s32.totalorder %s17, 0
    %p119 = por %p117, %p118
    %s120 = ssub.s32 %s19, %s33
    %p121 = scmp.eq.s32.totalorder %s120, 0
    %s123 = sadd.s32 %s122, 1
    %s124 = scalar_select %p121, %s122, %s123
    %p127 = pneg %p121
    %p128 = scmp.eq.s32.totalorder %s11, 1
    %p129 = por %p127, %p128
    %p130 = scmp.ne.s32.totalorder %s122, %s125
    %p131 = scmp.eq.s32.totalorder %s11, 0
    %p132 = por %p130, %p131
    %p133 = scmp.ne.s32.totalorder %s122, %s125
    %p134 = scmp.eq.s32.totalorder %s16, 1
    %p135 = por %p133, %p134
    %p136 = scmp.ne.s32.totalorder %s125, %s126
    %p137 = scmp.eq.s32.totalorder %s16, 0
    %p138 = por %p136, %p137
    %p139 = scmp.ne.s32.totalorder %s125, %s126
    %p140 = scmp.eq.s32.totalorder %s17, 1
    %p141 = por %p139, %p140
    %p143 = scmp.ne.s32.totalorder %s126, %s142
    %p144 = scmp.eq.s32.totalorder %s17, 0
    %p145 = por %p143, %p144
    %s146 = ssub.s32 %s19, %s33
    %p147 = scmp.eq.s32.totalorder %s146, 0
    %s149 = sadd.s32 %s148, 1
    %s150 = scalar_select %p147, %s148, %s149
    %p153 = pneg %p147
    %p154 = scmp.eq.s32.totalorder %s11, 1
    %p155 = por %p153, %p154
    %p156 = scmp.ne.s32.totalorder %s148, %s151
    %p157 = scmp.eq.s32.totalorder %s11, 0
    %p158 = por %p156, %p157
    %p159 = scmp.ne.s32.totalorder %s148, %s151
    %p160 = scmp.eq.s32.totalorder %s16, 1
    %p161 = por %p159, %p160
    %p162 = scmp.ne.s32.totalorder %s151, %s152
    %p163 = scmp.eq.s32.totalorder %s16, 0
    %p164 = por %p162, %p163
    %p165 = scmp.ne.s32.totalorder %s151, %s152
    %p166 = scmp.eq.s32.totalorder %s17, 1
    %p167 = por %p165, %p166
    %p169 = scmp.ne.s32.totalorder %s152, %s168
    %p170 = scmp.eq.s32.totalorder %s17, 0
    %p171 = por %p169, %p170
    %s172 = ssub.s32 %s18, %s37
    %s173 = ssub.s32 %s19, %s33
    %s174 = sor.u32 %s172, %s173
    %p175 = scmp.eq.s32.totalorder %s174, 0
    %s177 = sadd.s32 %s176, 1
    %s178 = scalar_select %p175, %s176, %s177
    %p181 = pneg %p175
    %p182 = scmp.eq.s32.totalorder %s11, 1
    %p183 = por %p181, %p182
    %p184 = scmp.ne.s32.totalorder %s176, %s179
    %p185 = scmp.eq.s32.totalorder %s11, 0
    %p186 = por %p184, %p185
    %p187 = scmp.ne.s32.totalorder %s176, %s179
    %p188 = scmp.eq.s32.totalorder %s16, 1
    %p189 = por %p187, %p188
    %p190 = scmp.ne.s32.totalorder %s179, %s180
    %p191 = scmp.eq.s32.totalorder %s16, 0
    %p192 = por %p190, %p191
    %p193 = scmp.ne.s32.totalorder %s179, %s180
    %p194 = scmp.eq.s32.totalorder %s17, 1
    %p195 = por %p193, %p194
    %p197 = scmp.ne.s32.totalorder %s180, %s196
    %p198 = scmp.eq.s32.totalorder %s17, 0
    %p199 = por %p197, %p198
    %p200 = scmp.le.s32.totalorder 1, %s11
    %p201 = scmp.lt.s32.totalorder %s11, 3
    %p202 = pnand %p200, %p201
    %p203 = pneg %p202
    // Predicated region
    $region9: #{pcb_test_forward.54} parent=5 // pred_check
      _
    $region10: #{pcb_test_forward.54} parent=5 // pred_check_branch
      %205 = sbr.rel (%p202) target = $region12
    $region11: #{pcb_test_forward.54} parent=5 // pred_region
      %s206 = ssub.s32 %s11, 1
      // Predicated region
      $region13: #{pcb_test_forward.54} parent=11 // pred_check
        %p207 = pneg %p86
      $region14: #{pcb_test_forward.54} parent=11 // pred_check_branch
        %209 = sbr.rel (%p207) target = $region16
      $region15: #{pcb_test_forward.54} parent=11 // pred_region
        %s210 = smul.u32 16, %s23
        %s211 = smul.u32 2, %s22
        %p212 = scmp.lt.s32.totalorder %s210, 15
        %s213 = scalar_select %p212, %s210, 15
        %p214 = scmp.lt.s32.totalorder %s211, 1
        %s215 = scalar_select %p214, %s211, 1
        %s216 = smul.addr %s213, 2
        %s217 = sadd.s32 %s215, %s216
        %s218 = smul.addr %s217, 4
        %s219 = scalar_lea.vmem %s1, %s218
        %s220 = smul.u32 16, %s23
        %s221 = smul.u32 2, %s22
      $region16: #{pcb_test_forward.54} parent=11 // pred_fallthru
        _
      // Predicated region
      $region17: #{pcb_test_forward.54} parent=11 // pred_check
        %p222 = pneg %p112
      $region18: #{pcb_test_forward.54} parent=11 // pred_check_branch
        %224 = sbr.rel (%p222) target = $region20
      $region19: #{pcb_test_forward.54} parent=11 // pred_region
        %s225 = smul.u32 2, %s22
        %p226 = scmp.lt.s32.totalorder %s225, 1
        %s227 = scalar_select %p226, %s225, 1
        %s228 = scalar_lea.vmem %s2, %s227
        %s229 = smul.u32 2, %s22
      $region20: #{pcb_test_forward.54} parent=11 // pred_fallthru
        _
      // Predicated region
      $region21: #{pcb_test_forward.54} parent=11 // pred_check
        %p230 = pneg %p138
      $region22: #{pcb_test_forward.54} parent=11 // pred_check_branch
        %232 = sbr.rel (%p230) target = $region24
      $region23: #{pcb_test_forward.54} parent=11 // pred_region
        %s233 = smul.u32 2, %s22
        %p234 = scmp.lt.s32.totalorder %s233, 1
        %s235 = scalar_select %p234, %s233, 1
        %s236 = scalar_lea.vmem %s3, %s235
        %s237 = smul.u32 2, %s22
      $region24: #{pcb_test_forward.54} parent=11 // pred_fallthru
        _
      // Predicated region
      $region25: #{pcb_test_forward.54} parent=11 // pred_check
        %p238 = pneg %p164
      $region26: #{pcb_test_forward.54} parent=11 // pred_check_branch
        %240 = sbr.rel (%p238) target = $region28
      $region27: #{pcb_test_forward.54} parent=11 // pred_region
        %s241 = smul.u32 2, %s22
        %p242 = scmp.lt.s32.totalorder %s241, 1
        %s243 = scalar_select %p242, %s241, 1
        %s244 = scalar_lea.vmem %s4, %s243
        %s245 = smul.u32 2, %s22
      $region28: #{pcb_test_forward.54} parent=11 // pred_fallthru
        _
    $region12: #{pcb_test_forward.54} parent=5 // pred_fallthru
      _
    %p246 = scmp.lt.s32.totalorder %s11, 2
    // Predicated region
    $region29: #{pcb_test_forward.54} parent=5 // pred_check
      %p247 = pneg %p246
    $region30: #{pcb_test_forward.54} parent=5 // pred_check_branch
      %249 = sbr.rel (%p247) target = $region32
    $region31: #{pcb_test_forward.54} parent=5 // pred_region
      // Predicated region
      $region33: #{pcb_test_forward.54} parent=31 // pred_check
        %p250 = pneg %p52
      $region34: #{pcb_test_forward.54} parent=31 // pred_check_branch
        %252 = sbr.rel (%p250) target = $region36
      $region35: #{pcb_test_forward.54} parent=31 // pred_region
        %s253 = smul.u32 6, %s18
        %p254 = scmp.lt.s32.totalorder %s253, 11
        %s255 = scalar_select %p254, %s253, 11
        %p256 = scmp.lt.s32.totalorder %s20, 0
        %s257 = scalar_select %p256, %s20, 0
        %s258 = sadd.s32 %s257, %s255
        %s259 = smul.addr %s258, 4
        %s260 = scalar_lea.vmem %s0, %s259
        %s261 = smul.u32 6, %s18
      $region36: #{pcb_test_forward.54} parent=31 // pred_fallthru
        _
    $region32: #{pcb_test_forward.54} parent=5 // pred_fallthru
      _
    %p262 = scmp.le.s32.totalorder 1, %s11
    %p263 = scmp.lt.s32.totalorder %s11, 3
    %p264 = pnand %p262, %p263
    %p265 = pneg %p264
    // Predicated region
    $region37: #{pcb_test_forward.54} parent=5 // pred_check
      _
    $region38: #{pcb_test_forward.54} parent=5 // pred_check_branch
      %267 = sbr.rel (%p264) target = $region40
    $region39: #{pcb_test_forward.54} parent=5 // pred_region
      %s268 = ssub.s32 %s11, 1
      %s269 = smul.u32 6, %s21
      %p270 = scmp.lt.s32.totalorder %s269, 11
      %s271 = scalar_select %p270, %s269, 11
      %p272 = scmp.lt.s32.totalorder %s23, 0
      %s273 = scalar_select %p272, %s23, 0
      %s274 = sadd.s32 %s273, %s271
      %s275 = smul.addr %s274, 4
      %s276 = scalar_lea.vmem %s0, %s275
      %p277 = pneg %p58
      %p278 = pneg %p55
      %s279 = smul.u32 16, %s23
      %s280 = smul.u32 2, %s22
      %p281 = scmp.lt.s32.totalorder %s279, 15
      %s282 = scalar_select %p281, %s279, 15
      %p283 = scmp.lt.s32.totalorder %s280, 1
      %s284 = scalar_select %p283, %s280, 1
      %s285 = smul.addr %s282, 2
      %s286 = sadd.s32 %s284, %s285
      %s287 = smul.addr %s286, 4
      %s288 = scalar_lea.vmem %s1, %s287
      %p289 = pneg %p86
      %p290 = pneg %p83
      %s291 = smul.u32 2, %s22
      %p292 = scmp.lt.s32.totalorder %s291, 1
      %s293 = scalar_select %p292, %s291, 1
      %s294 = scalar_lea.vmem %s2, %s293
      %p295 = pneg %p112
      %p296 = pneg %p109
      %s297 = smul.u32 2, %s22
      %p298 = scmp.lt.s32.totalorder %s297, 1
      %s299 = scalar_select %p298, %s297, 1
      %s300 = scalar_lea.vmem %s3, %s299
      %p301 = pneg %p138
      %p302 = pneg %p135
      %s303 = smul.u32 2, %s22
      %p304 = scmp.lt.s32.totalorder %s303, 1
      %s305 = scalar_select %p304, %s303, 1
      %s306 = scalar_lea.vmem %s4, %s305
      %p307 = pneg %p164
      %p308 = pneg %p161
      %p309 = pneg %p192
      %p310 = pneg %p189
      %s311 = smul.u32 6, %s21
      %s312 = smul.u32 2, %s22
      %p313 = scmp.lt.s32.totalorder %s311, 11
      %s314 = scalar_select %p313, %s311, 11
      %p315 = scmp.lt.s32.totalorder %s312, 1
      %s316 = scalar_select %p315, %s312, 1
      %s317 = smul.addr %s314, 2
      %s318 = sadd.s32 %s316, %s317
      %s319 = smul.addr %s318, 4
      %s320 = scalar_lea.vmem %s5, %s319
      %s321 = smul.u32 6, %s21
      %p322 = scmp.lt.s32.totalorder %s321, 11
      %s323 = scalar_select %p322, %s321, 11
      %p324 = scmp.lt.s32.totalorder %s23, 0
      %s325 = scalar_select %p324, %s23, 0
      %s326 = sadd.s32 %s325, %s323
      %s327 = smul.addr %s326, 4
      %s328 = scalar_lea.vmem %s0, %s327
      %s329 = smul.u32 6, %s21
      %s330 = smul.u32 16, %s23
      %s331 = smul.u32 2, %s22
      %p332 = scmp.lt.s32.totalorder %s330, 15
      %s333 = scalar_select %p332, %s330, 15
      %p334 = scmp.lt.s32.totalorder %s331, 1
      %s335 = scalar_select %p334, %s331, 1
      %s336 = smul.addr %s333, 2
      %s337 = sadd.s32 %s335, %s336
      %s338 = smul.addr %s337, 4
      %s339 = scalar_lea.vmem %s1, %s338
      %s340 = smul.u32 16, %s23
      %s341 = smul.u32 2, %s22
      %s342 = smul.u32 2, %s22
      %p343 = scmp.lt.s32.totalorder %s342, 1
      %s344 = scalar_select %p343, %s342, 1
      %s345 = scalar_lea.vmem %s2, %s344
      %s346 = smul.u32 2, %s22
      %s347 = smul.u32 2, %s22
      %p348 = scmp.lt.s32.totalorder %s347, 1
      %s349 = scalar_select %p348, %s347, 1
      %s350 = scalar_lea.vmem %s3, %s349
      %s351 = smul.u32 2, %s22
      %s352 = smul.u32 2, %s22
      %p353 = scmp.lt.s32.totalorder %s352, 1
      %s354 = scalar_select %p353, %s352, 1
      %s355 = scalar_lea.vmem %s4, %s354
      %s356 = smul.u32 2, %s22
      %s357 = smul.u32 6, %s21
      %s358 = smul.u32 2, %s22
      %p359 = scmp.lt.s32.totalorder %s357, 11
      %s360 = scalar_select %p359, %s357, 11
      %p361 = scmp.lt.s32.totalorder %s358, 1
      %s362 = scalar_select %p361, %s358, 1
      %s363 = smul.addr %s360, 2
      %s364 = sadd.s32 %s362, %s363
      %s365 = smul.addr %s364, 4
      %s366 = scalar_lea.vmem %s5, %s365
      %s367 = smul.u32 6, %s21
      %s368 = smul.u32 2, %s22
      %p370 = scmp.eq.s32.totalorder %s23, 0
      // Predicated region
      $region41: #{pcb_test_forward.54} parent=39 // pred_check
        %p371 = pneg %p370
      $region42: #{pcb_test_forward.54} parent=39 // pred_check_branch
        %373 = sbr.rel (%p371) target = $region44
      $region43: #{pcb_test_forward.54} parent=39 // pred_region
        %374 = vst [vmem:[#allocation2] sm:$0xff] 0.0
        %375 = vst [vmem:[#allocation2 + $0x8] sm:$0xff] 0.0
        %376 = vst [vmem:[#allocation2 + $0x10] sm:$0xff] 0.0
        %377 = vst [vmem:[#allocation2 + $0x18] sm:$0xff] 0.0
        %378 = vst [vmem:[#allocation2 + $0x20] sm:$0xff] 0.0
        %379 = vst [vmem:[#allocation2 + $0x28] sm:$0xff] 0.0
        %380 = vst [vmem:[#allocation2 + $0x30] sm:$0xff] 0.0
        %381 = vst [vmem:[#allocation2 + $0x38] sm:$0xff] 0.0
        %382 = vst [vmem:[#allocation2 + $0x40] sm:$0xff] 0.0
        %383 = vst [vmem:[#allocation2 + $0x48] sm:$0xff] 0.0
        %384 = vst [vmem:[#allocation2 + $0x50] sm:$0xff] 0.0
        %385 = vst [vmem:[#allocation2 + $0x58] sm:$0xff] 0.0
      $region44: #{pcb_test_forward.54} parent=39 // pred_fallthru
        _
      %v386 = vld [vmem:[#allocation2] sm:$0xff]
      %v387 = vld [vmem:[#allocation2 + $0x8] sm:$0xff]
      %v388 = vld [vmem:[#allocation2 + $0x10] sm:$0xff]
      %v389 = vld [vmem:[#allocation2 + $0x18] sm:$0xff]
      %v390 = vld [vmem:[#allocation2 + $0x20] sm:$0xff]
      %v391 = vld [vmem:[#allocation2 + $0x28] sm:$0xff]
      %v392 = vld [vmem:[#allocation2 + $0x30] sm:$0xff]
      %v393 = vld [vmem:[#allocation2 + $0x38] sm:$0xff]
      %v394 = vld [vmem:[#allocation2 + $0x40] sm:$0xff]
      %v395 = vld [vmem:[#allocation2 + $0x48] sm:$0xff]
      %v396 = vld [vmem:[#allocation2 + $0x50] sm:$0xff]
      %v397 = vld [vmem:[#allocation2 + $0x58] sm:$0xff]
      %v398 = vld [vmem:[%s328] sm:$0xf]
      %v399 = vld [vmem:[%s328 + $0x4] sm:$0xf]
      %v400 = vld [vmem:[%s328 + $0x8] sm:$0xf]
      %v401 = vld [vmem:[%s328 + $0xc] sm:$0xf]
      %v402 = vld [vmem:[%s328 + $0x10] sm:$0xf]
      %v403 = vld [vmem:[%s328 + $0x14] sm:$0xf]
      %v404 = vld [vmem:[%s339] sm:$0xff]
      %v405 = vld [vmem:[%s339 + $0x8] sm:$0xff]
      %v406 = vld [vmem:[%s339 + $0x10] sm:$0xff]
      %v407 = vld [vmem:[%s339 + $0x18] sm:$0xff]
      %v408 = vld [vmem:[%s339 + $0x20] sm:$0xff]
      %v409 = vld [vmem:[%s339 + $0x28] sm:$0xff]
      %v410 = vld [vmem:[%s339 + $0x30] sm:$0xff]
      %v411 = vld [vmem:[%s339 + $0x38] sm:$0xff]
      %v412 = vld [vmem:[%s339 + $0x40] sm:$0xff]
      %v413 = vld [vmem:[%s339 + $0x48] sm:$0xff]
      %v414 = vld [vmem:[%s339 + $0x50] sm:$0xff]
      %v415 = vld [vmem:[%s339 + $0x58] sm:$0xff]
      %v416 = vld [vmem:[%s339 + $0x60] sm:$0xff]
      %v417 = vld [vmem:[%s339 + $0x68] sm:$0xff]
      %v418 = vld [vmem:[%s339 + $0x70] sm:$0xff]
      %v419 = vld [vmem:[%s339 + $0x78] sm:$0xff]
      %v426 = vunpack.c.l.b16 %v398
      %v427 = vunpack.c.l.b16 %v399
      %v428 = vunpack.c.l.b16 %v400
      %v429 = vunpack.c.l.b16 %v401
      %v430 = vunpack.c.l.b16 %v402
      %v431 = vunpack.c.l.b16 %v403
      %v432 = vpack.c.b16 %v427, %v426
      %v433 = vpack.c.b16 %v429, %v428
      %v434 = vpack.c.b16 %v431, %v430
      %v454 = vunpack.c.l.b16 %v404
      %v455 = vunpack.c.h.b16 %v404
      %v456 = vunpack.c.l.b16 %v405
      %v457 = vunpack.c.h.b16 %v405
      %v458 = vunpack.c.l.b16 %v406
      %v459 = vunpack.c.h.b16 %v406
      %v460 = vunpack.c.l.b16 %v407
      %v461 = vunpack.c.h.b16 %v407
      %v462 = vunpack.c.l.b16 %v408
      %v463 = vunpack.c.h.b16 %v408
      %v464 = vunpack.c.l.b16 %v409
      %v465 = vunpack.c.h.b16 %v409
      %v466 = vunpack.c.l.b16 %v410
      %v467 = vunpack.c.h.b16 %v410
      %v468 = vunpack.c.l.b16 %v411
      %v469 = vunpack.c.h.b16 %v411
      %v470 = vunpack.c.l.b16 %v412
      %v471 = vunpack.c.h.b16 %v412
      %v472 = vunpack.c.l.b16 %v413
      %v473 = vunpack.c.h.b16 %v413
      %v474 = vunpack.c.l.b16 %v414
      %v475 = vunpack.c.h.b16 %v414
      %v476 = vunpack.c.l.b16 %v415
      %v477 = vunpack.c.h.b16 %v415
      %v478 = vunpack.c.l.b16 %v416
      %v479 = vunpack.c.h.b16 %v416
      %v480 = vunpack.c.l.b16 %v417
      %v481 = vunpack.c.h.b16 %v417
      %v482 = vunpack.c.l.b16 %v418
      %v483 = vunpack.c.h.b16 %v418
      %v484 = vunpack.c.l.b16 %v419
      %v485 = vunpack.c.h.b16 %v419
      %v486 = vpack.c.b16 %v456, %v454
      %v487 = vpack.c.b16 %v457, %v455
      %v488 = vpack.c.b16 %v460, %v458
      %v489 = vpack.c.b16 %v461, %v459
      %v490 = vpack.c.b16 %v464, %v462
      %v491 = vpack.c.b16 %v465, %v463
      %v492 = vpack.c.b16 %v468, %v466
      %v493 = vpack.c.b16 %v469, %v467
      %v494 = vpack.c.b16 %v472, %v470
      %v495 = vpack.c.b16 %v473, %v471
      %v496 = vpack.c.b16 %v476, %v474
      %v497 = vpack.c.b16 %v477, %v475
      %v498 = vpack.c.b16 %v480, %v478
      %v499 = vpack.c.b16 %v481, %v479
      %v500 = vpack.c.b16 %v484, %v482
      %v501 = vpack.c.b16 %v485, %v483
      %518 = vmatprep.subr.bf16.mxu0 %v487
      %519 = vmatpush1.bf16.msra.mxu0 %v486
      %520 = vmatprep.subr.bf16.mxu0 %v489
      %521 = vmatpush1.bf16.msra.mxu0 %v488
      %522 = vmatprep.subr.bf16.mxu0 %v491
      %523 = vmatpush1.bf16.msra.mxu0 %v490
      %524 = vmatprep.subr.bf16.mxu0 %v493
      %525 = vmatpush1.bf16.msra.mxu0 %v492
      %526 = vmatprep.subr.bf16.mxu0 %v495
      %527 = vmatpush1.bf16.msra.mxu0 %v494
      %528 = vmatprep.subr.bf16.mxu0 %v497
      %529 = vmatpush1.bf16.msra.mxu0 %v496
      %530 = vmatprep.subr.bf16.mxu0 %v499
      %531 = vmatpush1.bf16.msra.mxu0 %v498
      %532 = vmatprep.subr.bf16.mxu0 %v501
      %533 = vmatpush1.bf16.msra.mxu0 %v500
      %534 = vmatprep.subr.bf16.mxu0 0
      %535 = vmatpush1.bf16.msra.mxu0 0
      %536 = vmatprep.subr.bf16.mxu0 0
      %537 = vmatpush1.bf16.msra.mxu0 0
      %538 = vmatprep.subr.bf16.mxu0 0
      %539 = vmatpush1.bf16.msra.mxu0 0
      %540 = vmatprep.subr.bf16.mxu0 0
      %541 = vmatpush1.bf16.msra.mxu0 0
      %542 = vmatprep.subr.bf16.mxu0 0
      %543 = vmatpush1.bf16.msra.mxu0 0
      %544 = vmatprep.subr.bf16.mxu0 0
      %545 = vmatpush1.bf16.msra.mxu0 0
      %546 = vmatprep.subr.bf16.mxu0 0
      %547 = vmatpush1.bf16.msra.mxu0 0
      %548 = vmatprep.subr.bf16.mxu0 0
      %549 = vmatpush1.bf16.msra.mxu0 0
      %550 = vmatprep.mubr.bf16.mxu0 0
      %551 = vmatmul.mubr.bf16.gmra.mrb[0].mxu0 %v432
      %v552 = vpop.f32.mrb[0].mxu0
      %v553 = vadd.f32 0.0, %v552
      %v554 = vpop.f32.mrb[0].mxu0
      %v555 = vadd.f32 0.0, %v554
      %v556 = vpop.f32.mrb[0].mxu0
      %v557 = vadd.f32 0.0, %v556
      %v558 = vpop.f32.mrb[0].mxu0
      %v559 = vadd.f32 0.0, %v558
      %560 = vmatprep.mubr.bf16.mxu0 0
      %561 = vmatmul.mubr.bf16.gmra.mrb[0].mxu0 %v433
      %v562 = vpop.f32.mrb[0].mxu0
      %v563 = vadd.f32 0.0, %v562
      %v564 = vpop.f32.mrb[0].mxu0
      %v565 = vadd.f32 0.0, %v564
      %v566 = vpop.f32.mrb[0].mxu0
      %v567 = vadd.f32 0.0, %v566
      %v568 = vpop.f32.mrb[0].mxu0
      %v569 = vadd.f32 0.0, %v568
      %570 = vmatprep.mubr.bf16.mxu0 0
      %571 = vmatmul.mubr.bf16.gmra.mrb[0].mxu0 %v434
      %v572 = vpop.f32.mrb[0].mxu0
      %v573 = vadd.f32 0.0, %v572
      %v574 = vpop.f32.mrb[0].mxu0
      %v575 = vadd.f32 0.0, %v574
      %v576 = vpop.f32.mrb[0].mxu0
      %v577 = vadd.f32 0.0, %v576
      %v578 = vpop.f32.mrb[0].mxu0
      %v579 = vadd.f32 0.0, %v578
      %580 = vdwg.mxu0
      %v581 = vadd.f32 %v386, %v553
      %v582 = vadd.f32 %v387, %v555
      %v583 = vadd.f32 %v388, %v557
      %v584 = vadd.f32 %v389, %v559
      %v585 = vadd.f32 %v390, %v563
      %v586 = vadd.f32 %v391, %v565
      %v587 = vadd.f32 %v392, %v567
      %v588 = vadd.f32 %v393, %v569
      %v589 = vadd.f32 %v394, %v573
      %v590 = vadd.f32 %v395, %v575
      %v591 = vadd.f32 %v396, %v577
      %v592 = vadd.f32 %v397, %v579
      %593 = vst [vmem:[#allocation2] sm:$0xff] %v581
      %594 = vst [vmem:[#allocation2 + $0x8] sm:$0xff] %v582
      %595 = vst [vmem:[#allocation2 + $0x10] sm:$0xff] %v583
      %596 = vst [vmem:[#allocation2 + $0x18] sm:$0xff] %v584
      %597 = vst [vmem:[#allocation2 + $0x20] sm:$0xff] %v585
      %598 = vst [vmem:[#allocation2 + $0x28] sm:$0xff] %v586
      %599 = vst [vmem:[#allocation2 + $0x30] sm:$0xff] %v587
      %600 = vst [vmem:[#allocation2 + $0x38] sm:$0xff] %v588
      %601 = vst [vmem:[#allocation2 + $0x40] sm:$0xff] %v589
      %602 = vst [vmem:[#allocation2 + $0x48] sm:$0xff] %v590
      %603 = vst [vmem:[#allocation2 + $0x50] sm:$0xff] %v591
      %604 = vst [vmem:[#allocation2 + $0x58] sm:$0xff] %v592
      // Predicated region
      $region45: #{pcb_test_forward.54} parent=39 // pred_check
        %p605 = pneg %p370
      $region46: #{pcb_test_forward.54} parent=39 // pred_check_branch
        %607 = sbr.rel (%p605) target = $region48
      $region47: #{pcb_test_forward.54} parent=39 // pred_region
        %v608 = vld [vmem:[#allocation2] sm:$0xff]
        %v609 = vld [vmem:[#allocation2 + $0x8] sm:$0xff]
        %v610 = vld [vmem:[#allocation2 + $0x10] sm:$0xff]
        %v611 = vld [vmem:[#allocation2 + $0x18] sm:$0xff]
        %v612 = vld [vmem:[#allocation2 + $0x20] sm:$0xff]
        %v613 = vld [vmem:[#allocation2 + $0x28] sm:$0xff]
        %v614 = vld [vmem:[#allocation2 + $0x30] sm:$0xff]
        %v615 = vld [vmem:[#allocation2 + $0x38] sm:$0xff]
        %v616 = vld [vmem:[#allocation2 + $0x40] sm:$0xff]
        %v617 = vld [vmem:[#allocation2 + $0x48] sm:$0xff]
        %v618 = vld [vmem:[#allocation2 + $0x50] sm:$0xff]
        %v619 = vld [vmem:[#allocation2 + $0x58] sm:$0xff]
        %v620 = vld [vmem:[%s345] sm:$0x3]
        %v622 = vlaneseq
        %v623 = vshrl.u32 %v622, 7
        %v624 = vsub.s32 0, %v623
        %v625 = vrot.slane %v620, %v624
        %v626 = vlaneseq
        %v627 = vshrl.u32 %v626, 7
        %v628 = vsub.s32 1, %v627
        %v629 = vrot.slane %v620, %v628
        %v632 = vmul.f32 %v608, %v625
        %v633 = vmul.f32 %v609, %v629
        %v634 = vmul.f32 %v610, %v625
        %v635 = vmul.f32 %v611, %v629
        %v636 = vmul.f32 %v612, %v625
        %v637 = vmul.f32 %v613, %v629
        %v638 = vmul.f32 %v614, %v625
        %v639 = vmul.f32 %v615, %v629
        %v640 = vmul.f32 %v616, %v625
        %v641 = vmul.f32 %v617, %v629
        %v642 = vmul.f32 %v618, %v625
        %v643 = vmul.f32 %v619, %v629
        %v644 = vld [vmem:[%s350] sm:$0x3]
        %v646 = vlaneseq
        %v647 = vshrl.u32 %v646, 7
        %v648 = vsub.s32 0, %v647
        %v649 = vrot.slane %v644, %v648
        %v650 = vlaneseq
        %v651 = vshrl.u32 %v650, 7
        %v652 = vsub.s32 1, %v651
        %v653 = vrot.slane %v644, %v652
        %v656 = vadd.f32 %v632, %v649
        %v657 = vadd.f32 %v633, %v653
        %v658 = vadd.f32 %v634, %v649
        %v659 = vadd.f32 %v635, %v653
        %v660 = vadd.f32 %v636, %v649
        %v661 = vadd.f32 %v637, %v653
        %v662 = vadd.f32 %v638, %v649
        %v663 = vadd.f32 %v639, %v653
        %v664 = vadd.f32 %v640, %v649
        %v665 = vadd.f32 %v641, %v653
        %v666 = vadd.f32 %v642, %v649
        %v667 = vadd.f32 %v643, %v653
        %v668 = vld [vmem:[%s355] sm:$0x3]
        %vm669 = vcmp.gt.f32.partialorder %v668, 0.5
        %v670 = vmax.f32 %v656, 0.0
        %v671 = vmax.f32 %v657, 0.0
        %v672 = vmax.f32 %v658, 0.0
        %v673 = vmax.f32 %v659, 0.0
        %v674 = vmax.f32 %v660, 0.0
        %v675 = vmax.f32 %v661, 0.0
        %v676 = vmax.f32 %v662, 0.0
        %v677 = vmax.f32 %v663, 0.0
        %v678 = vmax.f32 %v664, 0.0
        %v679 = vmax.f32 %v665, 0.0
        %v680 = vmax.f32 %v666, 0.0
        %v681 = vmax.f32 %v667, 0.0
        %v682 = vsel %vm669, 1, 0
        %v683 = vlaneseq
        %v684 = vshrl.u32 %v683, 7
        %v685 = vsub.s32 0, %v684
        %v686 = vrot.slane %v682, %v685
        %v687 = vlaneseq
        %v688 = vshrl.u32 %v687, 7
        %v689 = vsub.s32 1, %v688
        %v690 = vrot.slane %v682, %v689
        %vm691 = vcmp.eq.s32.totalorder %v686, 1
        %vm692 = vcmp.eq.s32.totalorder %v690, 1
        %v693 = vsel %vm691, %v670, %v656
        %v694 = vsel %vm692, %v671, %v657
        %v695 = vsel %vm691, %v672, %v658
        %v696 = vsel %vm692, %v673, %v659
        %v697 = vsel %vm691, %v674, %v660
        %v698 = vsel %vm692, %v675, %v661
        %v699 = vsel %vm691, %v676, %v662
        %v700 = vsel %vm692, %v677, %v663
        %v701 = vsel %vm691, %v678, %v664
        %v702 = vsel %vm692, %v679, %v665
        %v703 = vsel %vm691, %v680, %v666
        %v704 = vsel %vm692, %v681, %v667
        %v705 = vpack.c.bf16 %v695, %v693
        %v706 = vpack.c.bf16 %v696, %v694
        %v707 = vpack.c.bf16 %v699, %v697
        %v708 = vpack.c.bf16 %v700, %v698
        %v709 = vpack.c.bf16 %v703, %v701
        %v710 = vpack.c.bf16 %v704, %v702
        %v717 = vunpack.c.l.b16 %v705
        %v718 = vunpack.c.l.b16 %v706
        %v719 = vunpack.c.h.b16 %v705
        %v720 = vunpack.c.h.b16 %v706
        %v721 = vunpack.c.l.b16 %v707
        %v722 = vunpack.c.l.b16 %v708
        %v723 = vunpack.c.h.b16 %v707
        %v724 = vunpack.c.h.b16 %v708
        %v725 = vunpack.c.l.b16 %v709
        %v726 = vunpack.c.l.b16 %v710
        %v727 = vunpack.c.h.b16 %v709
        %v728 = vunpack.c.h.b16 %v710
        %v729 = vpack.c.b16 %v718, %v717
        %v730 = vpack.c.b16 %v720, %v719
        %v731 = vpack.c.b16 %v722, %v721
        %v732 = vpack.c.b16 %v724, %v723
        %v733 = vpack.c.b16 %v726, %v725
        %v734 = vpack.c.b16 %v728, %v727
        %741 = vst [vmem:[%s366] sm:$0xff] %v729
        %742 = vst [vmem:[%s366 + $0x8] sm:$0xff] %v730
        %743 = vst [vmem:[%s366 + $0x10] sm:$0xff] %v731
        %744 = vst [vmem:[%s366 + $0x18] sm:$0xff] %v732
        %745 = vst [vmem:[%s366 + $0x20] sm:$0xff] %v733
        %746 = vst [vmem:[%s366 + $0x28] sm:$0xff] %v734
      $region48: #{pcb_test_forward.54} parent=39 // pred_fallthru
        _
      %s747 = smul.u32 6, %s21
      %s748 = smul.u32 2, %s22
      %p749 = scmp.lt.s32.totalorder %s747, 11
      %s750 = scalar_select %p749, %s747, 11
      %p751 = scmp.lt.s32.totalorder %s748, 1
      %s752 = scalar_select %p751, %s748, 1
      %s753 = smul.addr %s750, 2
      %s754 = sadd.s32 %s752, %s753
      %s755 = smul.addr %s754, 4
      %s756 = scalar_lea.vmem %s5, %s755
      // Predicated region
      $region49: #{pcb_test_forward.54} parent=39 // pred_check
        %p757 = pneg %p189
      $region50: #{pcb_test_forward.54} parent=39 // pred_check_branch
        %759 = sbr.rel (%p757) target = $region52
      $region51: #{pcb_test_forward.54} parent=39 // pred_region
        %s760 = smul.u32 6, %s21
        %s761 = smul.u32 2, %s22
      $region52: #{pcb_test_forward.54} parent=39 // pred_fallthru
        _
    $region40: #{pcb_test_forward.54} parent=5 // pred_fallthru
      _
    %p762 = scmp.le.s32.totalorder 2, %s11
    // Predicated region
    $region53: #{pcb_test_forward.54} parent=5 // pred_check
      %p763 = pneg %p762
    $region54: #{pcb_test_forward.54} parent=5 // pred_check_branch
      %765 = sbr.rel (%p763) target = $region56
    $region55: #{pcb_test_forward.54} parent=5 // pred_region
      %s766 = ssub.s32 %s11, 2
      // Predicated region
      $region57: #{pcb_test_forward.54} parent=55 // pred_check
        %p767 = pneg %p195
      $region58: #{pcb_test_forward.54} parent=55 // pred_check_branch
        %769 = sbr.rel (%p767) target = $region60
      $region59: #{pcb_test_forward.54} parent=55 // pred_region
        %s770 = smul.u32 6, %s24
        %s771 = smul.u32 2, %s25
        %p772 = scmp.lt.s32.totalorder %s770, 11
        %s773 = scalar_select %p772, %s770, 11
        %p774 = scmp.lt.s32.totalorder %s771, 1
        %s775 = scalar_select %p774, %s771, 1
        %s776 = smul.addr %s773, 2
        %s777 = sadd.s32 %s775, %s776
        %s778 = smul.addr %s777, 4
        %s779 = scalar_lea.vmem %s5, %s778
      $region60: #{pcb_test_forward.54} parent=55 // pred_fallthru
        _
    $region56: #{pcb_test_forward.54} parent=5 // pred_fallthru
      _
  $region6: #{pcb_test_forward.54} parent=0 // loop_footer
    %s15 = sadd.s32 1, %s11
  $region7: #{pcb_test_forward.54} parent=0 // loop_footer_branch
    %10 = sbr.rel target = $region3
  $region8: #{pcb_test_forward.54} parent=0 // loop_exit
    _

// kernel: pcb_test_forward.56
$region0: #{pcb_test_forward.56}
  #allocation0 [shape = 'u32[]', space=smem, size = 0x4, offset = 0x4, fixed_abs, tag = 'smem constant byte address 0x4 - core index']
  #allocation1 [shape = 'u32[144,128]{1,0:T(1,128)}', space=vmem, size = 0x12000, scoped, tag = 'internal scratch']
  #allocation2 [shape = 'f32[48,128]{1,0:T(8,128)}', space=vmem, size = 0x6000, scoped, tag = 'scratch operand']
  %s0 = inlined_call_operand.vmem [shape: bf16[96,128], index: 0, kind: input, shape index: {}]
  %s1 = inlined_call_operand.vmem [shape: bf16[128,128], index: 1, kind: input, shape index: {}]
  %s2 = inlined_call_operand.vmem [shape: f32[1,128], index: 2, kind: input, shape index: {}]
  %s3 = inlined_call_operand.vmem [shape: f32[1,128], index: 3, kind: input, shape index: {}]
  %s4 = inlined_call_operand.vmem [shape: bf16[96,128], index: 4, kind: input, shape index: {}]
  %s5 = inlined_call_operand.vmem [shape: bf16[96,128], index: 5, kind: output, shape index: {}]
  %s6 = sld [smem:[#allocation0]]
  $region61: #{pcb_test_forward.56} parent=0
    _
  %s8 = ssub.s32 1, %s6
  %s9 = scalar_select 0, %s8, %s6
  loop: start=0, step=1, limit=4
  $region2: #{pcb_test_forward.56} parent=0 // loop_pre_header
    _
  $region3: #{pcb_test_forward.56} parent=0 // loop_header
    %s11 = sphi 0, %s15
    %p12 = scmp.ge.s32.totalorder %s11, 4
    %s18 = sphi 0, %s37
    %s19 = sphi 0, %s33
    %s20 = sphi 0, %s29
    %s21 = sphi 0, %s18
    %s22 = sphi 0, %s19
    %s23 = sphi 0, %s20
    %s24 = sphi 0, %s21
    %s25 = sphi 0, %s22
    %s26 = sphi 0, %s23
    %s42 = sphi 0, %s44
    %s45 = sphi 0, %s42
    %s46 = sphi 0, %s45
    %s62 = sphi 0, %s46
    %s70 = sphi 0, %s72
    %s73 = sphi 0, %s70
    %s74 = sphi 0, %s73
    %s90 = sphi 0, %s74
    %s96 = sphi 0, %s98
    %s99 = sphi 0, %s96
    %s100 = sphi 0, %s99
    %s116 = sphi 0, %s100
    %s122 = sphi 0, %s124
    %s125 = sphi 0, %s122
    %s126 = sphi 0, %s125
    %s142 = sphi 0, %s126
    %s150 = sphi 0, %s152
    %s153 = sphi 0, %s150
    %s154 = sphi 0, %s153
    %s170 = sphi 0, %s154
    %s178 = sphi 0, %s180
    %s181 = sphi 0, %s178
    %s182 = sphi 0, %s181
    %s198 = sphi 0, %s182
  $region4: #{pcb_test_forward.56} parent=0 // loop_header_branch
    %14 = sbr.rel (%p12) target = $region8
  $region5: #{pcb_test_forward.56} parent=0 // loop_body
    %s16 = ssub.s32 %s11, 1
    %s17 = ssub.s32 %s11, 2
    %s27 = sadd.s32 1, %s20
    %p28 = scmp.ge.s32.totalorder %s27, 1
    %s29 = scalar_select %p28, 0, %s27
    %s30 = sadd.s32 1, %s19
    %s31 = scalar_select %p28, %s30, %s19
    %p32 = scmp.ge.s32.totalorder %s31, 1
    %s33 = scalar_select %p32, 0, %s31
    %s34 = sadd.s32 1, %s18
    %s35 = scalar_select %p32, %s34, %s18
    %p36 = scmp.ge.s32.totalorder %s35, 2
    %s37 = scalar_select %p36, 0, %s35
    %s38 = ssub.s32 %s18, %s37
    %s39 = ssub.s32 %s20, %s29
    %s40 = sor.u32 %s38, %s39
    %p41 = scmp.eq.s32.totalorder %s40, 0
    %s43 = sadd.s32 %s42, 1
    %s44 = scalar_select %p41, %s42, %s43
    %p47 = pneg %p41
    %p48 = scmp.eq.s32.totalorder %s11, 1
    %p49 = por %p47, %p48
    %p50 = scmp.ne.s32.totalorder %s42, %s45
    %p51 = scmp.eq.s32.totalorder %s11, 0
    %p52 = por %p50, %p51
    %p53 = scmp.ne.s32.totalorder %s42, %s45
    %p54 = scmp.eq.s32.totalorder %s16, 1
    %p55 = por %p53, %p54
    %p56 = scmp.ne.s32.totalorder %s45, %s46
    %p57 = scmp.eq.s32.totalorder %s16, 0
    %p58 = por %p56, %p57
    %p59 = scmp.ne.s32.totalorder %s45, %s46
    %p60 = scmp.eq.s32.totalorder %s17, 1
    %p61 = por %p59, %p60
    %p63 = scmp.ne.s32.totalorder %s46, %s62
    %p64 = scmp.eq.s32.totalorder %s17, 0
    %p65 = por %p63, %p64
    %s66 = ssub.s32 %s20, %s29
    %s67 = ssub.s32 %s19, %s33
    %s68 = sor.u32 %s66, %s67
    %p69 = scmp.eq.s32.totalorder %s68, 0
    %s71 = sadd.s32 %s70, 1
    %s72 = scalar_select %p69, %s70, %s71
    %p75 = pneg %p69
    %p76 = scmp.eq.s32.totalorder %s11, 1
    %p77 = por %p75, %p76
    %p78 = scmp.ne.s32.totalorder %s70, %s73
    %p79 = scmp.eq.s32.totalorder %s11, 0
    %p80 = por %p78, %p79
    %p81 = scmp.ne.s32.totalorder %s70, %s73
    %p82 = scmp.eq.s32.totalorder %s16, 1
    %p83 = por %p81, %p82
    %p84 = scmp.ne.s32.totalorder %s73, %s74
    %p85 = scmp.eq.s32.totalorder %s16, 0
    %p86 = por %p84, %p85
    %p87 = scmp.ne.s32.totalorder %s73, %s74
    %p88 = scmp.eq.s32.totalorder %s17, 1
    %p89 = por %p87, %p88
    %p91 = scmp.ne.s32.totalorder %s74, %s90
    %p92 = scmp.eq.s32.totalorder %s17, 0
    %p93 = por %p91, %p92
    %s94 = ssub.s32 %s19, %s33
    %p95 = scmp.eq.s32.totalorder %s94, 0
    %s97 = sadd.s32 %s96, 1
    %s98 = scalar_select %p95, %s96, %s97
    %p101 = pneg %p95
    %p102 = scmp.eq.s32.totalorder %s11, 1
    %p103 = por %p101, %p102
    %p104 = scmp.ne.s32.totalorder %s96, %s99
    %p105 = scmp.eq.s32.totalorder %s11, 0
    %p106 = por %p104, %p105
    %p107 = scmp.ne.s32.totalorder %s96, %s99
    %p108 = scmp.eq.s32.totalorder %s16, 1
    %p109 = por %p107, %p108
    %p110 = scmp.ne.s32.totalorder %s99, %s100
    %p111 = scmp.eq.s32.totalorder %s16, 0
    %p112 = por %p110, %p111
    %p113 = scmp.ne.s32.totalorder %s99, %s100
    %p114 = scmp.eq.s32.totalorder %s17, 1
    %p115 = por %p113, %p114
    %p117 = scmp.ne.s32.totalorder %s100, %s116
    %p118 = scmp.eq.s32.totalorder %s17, 0
    %p119 = por %p117, %p118
    %s120 = ssub.s32 %s19, %s33
    %p121 = scmp.eq.s32.totalorder %s120, 0
    %s123 = sadd.s32 %s122, 1
    %s124 = scalar_select %p121, %s122, %s123
    %p127 = pneg %p121
    %p128 = scmp.eq.s32.totalorder %s11, 1
    %p129 = por %p127, %p128
    %p130 = scmp.ne.s32.totalorder %s122, %s125
    %p131 = scmp.eq.s32.totalorder %s11, 0
    %p132 = por %p130, %p131
    %p133 = scmp.ne.s32.totalorder %s122, %s125
    %p134 = scmp.eq.s32.totalorder %s16, 1
    %p135 = por %p133, %p134
    %p136 = scmp.ne.s32.totalorder %s125, %s126
    %p137 = scmp.eq.s32.totalorder %s16, 0
    %p138 = por %p136, %p137
    %p139 = scmp.ne.s32.totalorder %s125, %s126
    %p140 = scmp.eq.s32.totalorder %s17, 1
    %p141 = por %p139, %p140
    %p143 = scmp.ne.s32.totalorder %s126, %s142
    %p144 = scmp.eq.s32.totalorder %s17, 0
    %p145 = por %p143, %p144
    %s146 = ssub.s32 %s18, %s37
    %s147 = ssub.s32 %s19, %s33
    %s148 = sor.u32 %s146, %s147
    %p149 = scmp.eq.s32.totalorder %s148, 0
    %s151 = sadd.s32 %s150, 1
    %s152 = scalar_select %p149, %s150, %s151
    %p155 = pneg %p149
    %p156 = scmp.eq.s32.totalorder %s11, 1
    %p157 = por %p155, %p156
    %p158 = scmp.ne.s32.totalorder %s150, %s153
    %p159 = scmp.eq.s32.totalorder %s11, 0
    %p160 = por %p158, %p159
    %p161 = scmp.ne.s32.totalorder %s150, %s153
    %p162 = scmp.eq.s32.totalorder %s16, 1
    %p163 = por %p161, %p162
    %p164 = scmp.ne.s32.totalorder %s153, %s154
    %p165 = scmp.eq.s32.totalorder %s16, 0
    %p166 = por %p164, %p165
    %p167 = scmp.ne.s32.totalorder %s153, %s154
    %p168 = scmp.eq.s32.totalorder %s17, 1
    %p169 = por %p167, %p168
    %p171 = scmp.ne.s32.totalorder %s154, %s170
    %p172 = scmp.eq.s32.totalorder %s17, 0
    %p173 = por %p171, %p172
    %s174 = ssub.s32 %s18, %s37
    %s175 = ssub.s32 %s19, %s33
    %s176 = sor.u32 %s174, %s175
    %p177 = scmp.eq.s32.totalorder %s176, 0
    %s179 = sadd.s32 %s178, 1
    %s180 = scalar_select %p177, %s178, %s179
    %p183 = pneg %p177
    %p184 = scmp.eq.s32.totalorder %s11, 1
    %p185 = por %p183, %p184
    %p186 = scmp.ne.s32.totalorder %s178, %s181
    %p187 = scmp.eq.s32.totalorder %s11, 0
    %p188 = por %p186, %p187
    %p189 = scmp.ne.s32.totalorder %s178, %s181
    %p190 = scmp.eq.s32.totalorder %s16, 1
    %p191 = por %p189, %p190
    %p192 = scmp.ne.s32.totalorder %s181, %s182
    %p193 = scmp.eq.s32.totalorder %s16, 0
    %p194 = por %p192, %p193
    %p195 = scmp.ne.s32.totalorder %s181, %s182
    %p196 = scmp.eq.s32.totalorder %s17, 1
    %p197 = por %p195, %p196
    %p199 = scmp.ne.s32.totalorder %s182, %s198
    %p200 = scmp.eq.s32.totalorder %s17, 0
    %p201 = por %p199, %p200
    %p202 = scmp.le.s32.totalorder 1, %s11
    %p203 = scmp.lt.s32.totalorder %s11, 3
    %p204 = pnand %p202, %p203
    %p205 = pneg %p204
    // Predicated region
    $region9: #{pcb_test_forward.56} parent=5 // pred_check
      _
    $region10: #{pcb_test_forward.56} parent=5 // pred_check_branch
      %207 = sbr.rel (%p204) target = $region12
    $region11: #{pcb_test_forward.56} parent=5 // pred_region
      %s208 = ssub.s32 %s11, 1
      // Predicated region
      $region13: #{pcb_test_forward.56} parent=11 // pred_check
        %p209 = pneg %p86
      $region14: #{pcb_test_forward.56} parent=11 // pred_check_branch
        %211 = sbr.rel (%p209) target = $region16
      $region15: #{pcb_test_forward.56} parent=11 // pred_region
        %s212 = smul.u32 16, %s23
        %p213 = scmp.lt.s32.totalorder %s212, 15
        %s214 = scalar_select %p213, %s212, 15
        %p215 = scmp.lt.s32.totalorder %s22, 0
        %s216 = scalar_select %p215, %s22, 0
        %s217 = sadd.s32 %s216, %s214
        %s218 = smul.addr %s217, 4
        %s219 = scalar_lea.vmem %s1, %s218
        %s220 = smul.u32 16, %s23
      $region16: #{pcb_test_forward.56} parent=11 // pred_fallthru
        _
      // Predicated region
      $region17: #{pcb_test_forward.56} parent=11 // pred_check
        %p221 = pneg %p112
      $region18: #{pcb_test_forward.56} parent=11 // pred_check_branch
        %223 = sbr.rel (%p221) target = $region20
      $region19: #{pcb_test_forward.56} parent=11 // pred_region
        %p224 = scmp.lt.s32.totalorder %s22, 0
        %s225 = scalar_select %p224, %s22, 0
        %s226 = scalar_lea.vmem %s2, %s225
      $region20: #{pcb_test_forward.56} parent=11 // pred_fallthru
        _
      // Predicated region
      $region21: #{pcb_test_forward.56} parent=11 // pred_check
        %p227 = pneg %p138
      $region22: #{pcb_test_forward.56} parent=11 // pred_check_branch
        %229 = sbr.rel (%p227) target = $region24
      $region23: #{pcb_test_forward.56} parent=11 // pred_region
        %p230 = scmp.lt.s32.totalorder %s22, 0
        %s231 = scalar_select %p230, %s22, 0
        %s232 = scalar_lea.vmem %s3, %s231
      $region24: #{pcb_test_forward.56} parent=11 // pred_fallthru
        _
    $region12: #{pcb_test_forward.56} parent=5 // pred_fallthru
      _
    %p233 = scmp.lt.s32.totalorder %s11, 2
    // Predicated region
    $region25: #{pcb_test_forward.56} parent=5 // pred_check
      %p234 = pneg %p233
    $region26: #{pcb_test_forward.56} parent=5 // pred_check_branch
      %236 = sbr.rel (%p234) target = $region28
    $region27: #{pcb_test_forward.56} parent=5 // pred_region
      // Predicated region
      $region29: #{pcb_test_forward.56} parent=27 // pred_check
        %p237 = pneg %p52
      $region30: #{pcb_test_forward.56} parent=27 // pred_check_branch
        %239 = sbr.rel (%p237) target = $region32
      $region31: #{pcb_test_forward.56} parent=27 // pred_region
        %s240 = smul.u32 6, %s18
        %p241 = scmp.lt.s32.totalorder %s240, 11
        %s242 = scalar_select %p241, %s240, 11
        %p243 = scmp.lt.s32.totalorder %s20, 0
        %s244 = scalar_select %p243, %s20, 0
        %s245 = sadd.s32 %s244, %s242
        %s246 = smul.addr %s245, 4
        %s247 = scalar_lea.vmem %s0, %s246
        %s248 = smul.u32 6, %s18
      $region32: #{pcb_test_forward.56} parent=27 // pred_fallthru
        _
      // Predicated region
      $region33: #{pcb_test_forward.56} parent=27 // pred_check
        %p249 = pneg %p160
      $region34: #{pcb_test_forward.56} parent=27 // pred_check_branch
        %251 = sbr.rel (%p249) target = $region36
      $region35: #{pcb_test_forward.56} parent=27 // pred_region
        %s252 = smul.u32 6, %s18
        %p253 = scmp.lt.s32.totalorder %s252, 11
        %s254 = scalar_select %p253, %s252, 11
        %p255 = scmp.lt.s32.totalorder %s19, 0
        %s256 = scalar_select %p255, %s19, 0
        %s257 = sadd.s32 %s256, %s254
        %s258 = smul.addr %s257, 4
        %s259 = scalar_lea.vmem %s4, %s258
        %s260 = smul.u32 6, %s18
      $region36: #{pcb_test_forward.56} parent=27 // pred_fallthru
        _
    $region28: #{pcb_test_forward.56} parent=5 // pred_fallthru
      _
    %p261 = scmp.le.s32.totalorder 1, %s11
    %p262 = scmp.lt.s32.totalorder %s11, 3
    %p263 = pnand %p261, %p262
    %p264 = pneg %p263
    // Predicated region
    $region37: #{pcb_test_forward.56} parent=5 // pred_check
      _
    $region38: #{pcb_test_forward.56} parent=5 // pred_check_branch
      %266 = sbr.rel (%p263) target = $region40
    $region39: #{pcb_test_forward.56} parent=5 // pred_region
      %s267 = ssub.s32 %s11, 1
      %s268 = smul.u32 6, %s21
      %p269 = scmp.lt.s32.totalorder %s268, 11
      %s270 = scalar_select %p269, %s268, 11
      %p271 = scmp.lt.s32.totalorder %s23, 0
      %s272 = scalar_select %p271, %s23, 0
      %s273 = sadd.s32 %s272, %s270
      %s274 = smul.addr %s273, 4
      %s275 = scalar_lea.vmem %s0, %s274
      %p276 = pneg %p58
      %p277 = pneg %p55
      %s278 = smul.u32 16, %s23
      %p279 = scmp.lt.s32.totalorder %s278, 15
      %s280 = scalar_select %p279, %s278, 15
      %p281 = scmp.lt.s32.totalorder %s22, 0
      %s282 = scalar_select %p281, %s22, 0
      %s283 = sadd.s32 %s282, %s280
      %s284 = smul.addr %s283, 4
      %s285 = scalar_lea.vmem %s1, %s284
      %p286 = pneg %p86
      %p287 = pneg %p83
      %p288 = scmp.lt.s32.totalorder %s22, 0
      %s289 = scalar_select %p288, %s22, 0
      %s290 = scalar_lea.vmem %s2, %s289
      %p291 = pneg %p112
      %p292 = pneg %p109
      %p293 = scmp.lt.s32.totalorder %s22, 0
      %s294 = scalar_select %p293, %s22, 0
      %s295 = scalar_lea.vmem %s3, %s294
      %p296 = pneg %p138
      %p297 = pneg %p135
      %s298 = smul.u32 6, %s21
      %p299 = scmp.lt.s32.totalorder %s298, 11
      %s300 = scalar_select %p299, %s298, 11
      %p301 = scmp.lt.s32.totalorder %s22, 0
      %s302 = scalar_select %p301, %s22, 0
      %s303 = sadd.s32 %s302, %s300
      %s304 = smul.addr %s303, 4
      %s305 = scalar_lea.vmem %s4, %s304
      %p306 = pneg %p166
      %p307 = pneg %p163
      %p308 = pneg %p194
      %p309 = pneg %p191
      %s310 = smul.u32 6, %s21
      %p311 = scmp.lt.s32.totalorder %s310, 11
      %s312 = scalar_select %p311, %s310, 11
      %p313 = scmp.lt.s32.totalorder %s22, 0
      %s314 = scalar_select %p313, %s22, 0
      %s315 = sadd.s32 %s314, %s312
      %s316 = smul.addr %s315, 4
      %s317 = scalar_lea.vmem %s5, %s316
      %s318 = smul.u32 6, %s21
      %p319 = scmp.lt.s32.totalorder %s318, 11
      %s320 = scalar_select %p319, %s318, 11
      %p321 = scmp.lt.s32.totalorder %s23, 0
      %s322 = scalar_select %p321, %s23, 0
      %s323 = sadd.s32 %s322, %s320
      %s324 = smul.addr %s323, 4
      %s325 = scalar_lea.vmem %s0, %s324
      %s326 = smul.u32 6, %s21
      %s327 = smul.u32 16, %s23
      %p328 = scmp.lt.s32.totalorder %s327, 15
      %s329 = scalar_select %p328, %s327, 15
      %p330 = scmp.lt.s32.totalorder %s22, 0
      %s331 = scalar_select %p330, %s22, 0
      %s332 = sadd.s32 %s331, %s329
      %s333 = smul.addr %s332, 4
      %s334 = scalar_lea.vmem %s1, %s333
      %s335 = smul.u32 16, %s23
      %p336 = scmp.lt.s32.totalorder %s22, 0
      %s337 = scalar_select %p336, %s22, 0
      %s338 = scalar_lea.vmem %s2, %s337
      %p339 = scmp.lt.s32.totalorder %s22, 0
      %s340 = scalar_select %p339, %s22, 0
      %s341 = scalar_lea.vmem %s3, %s340
      %s342 = smul.u32 6, %s21
      %p343 = scmp.lt.s32.totalorder %s342, 11
      %s344 = scalar_select %p343, %s342, 11
      %p345 = scmp.lt.s32.totalorder %s22, 0
      %s346 = scalar_select %p345, %s22, 0
      %s347 = sadd.s32 %s346, %s344
      %s348 = smul.addr %s347, 4
      %s349 = scalar_lea.vmem %s4, %s348
      %s350 = smul.u32 6, %s21
      %s351 = smul.u32 6, %s21
      %p352 = scmp.lt.s32.totalorder %s351, 11
      %s353 = scalar_select %p352, %s351, 11
      %p354 = scmp.lt.s32.totalorder %s22, 0
      %s355 = scalar_select %p354, %s22, 0
      %s356 = sadd.s32 %s355, %s353
      %s357 = smul.addr %s356, 4
      %s358 = scalar_lea.vmem %s5, %s357
      %s359 = smul.u32 6, %s21
      %p361 = scmp.eq.s32.totalorder %s23, 0
      // Predicated region
      $region41: #{pcb_test_forward.56} parent=39 // pred_check
        %p362 = pneg %p361
      $region42: #{pcb_test_forward.56} parent=39 // pred_check_branch
        %364 = sbr.rel (%p362) target = $region44
      $region43: #{pcb_test_forward.56} parent=39 // pred_region
        %365 = vst [vmem:[#allocation2] sm:$0xff] 0.0
        %366 = vst [vmem:[#allocation2 + $0x8] sm:$0xff] 0.0
        %367 = vst [vmem:[#allocation2 + $0x10] sm:$0xff] 0.0
        %368 = vst [vmem:[#allocation2 + $0x18] sm:$0xff] 0.0
        %369 = vst [vmem:[#allocation2 + $0x20] sm:$0xff] 0.0
        %370 = vst [vmem:[#allocation2 + $0x28] sm:$0xff] 0.0
      $region44: #{pcb_test_forward.56} parent=39 // pred_fallthru
        _
      %v371 = vld [vmem:[#allocation2] sm:$0xff]
      %v372 = vld [vmem:[#allocation2 + $0x8] sm:$0xff]
      %v373 = vld [vmem:[#allocation2 + $0x10] sm:$0xff]
      %v374 = vld [vmem:[#allocation2 + $0x18] sm:$0xff]
      %v375 = vld [vmem:[#allocation2 + $0x20] sm:$0xff]
      %v376 = vld [vmem:[#allocation2 + $0x28] sm:$0xff]
      %v377 = vld [vmem:[%s325] sm:$0xf]
      %v378 = vld [vmem:[%s325 + $0x4] sm:$0xf]
      %v379 = vld [vmem:[%s325 + $0x8] sm:$0xf]
      %v380 = vld [vmem:[%s325 + $0xc] sm:$0xf]
      %v381 = vld [vmem:[%s325 + $0x10] sm:$0xf]
      %v382 = vld [vmem:[%s325 + $0x14] sm:$0xf]
      %v383 = vld [vmem:[%s334] sm:$0xf]
      %v384 = vld [vmem:[%s334 + $0x4] sm:$0xf]
      %v385 = vld [vmem:[%s334 + $0x8] sm:$0xf]
      %v386 = vld [vmem:[%s334 + $0xc] sm:$0xf]
      %v387 = vld [vmem:[%s334 + $0x10] sm:$0xf]
      %v388 = vld [vmem:[%s334 + $0x14] sm:$0xf]
      %v389 = vld [vmem:[%s334 + $0x18] sm:$0xf]
      %v390 = vld [vmem:[%s334 + $0x1c] sm:$0xf]
      %v391 = vld [vmem:[%s334 + $0x20] sm:$0xf]
      %v392 = vld [vmem:[%s334 + $0x24] sm:$0xf]
      %v393 = vld [vmem:[%s334 + $0x28] sm:$0xf]
      %v394 = vld [vmem:[%s334 + $0x2c] sm:$0xf]
      %v395 = vld [vmem:[%s334 + $0x30] sm:$0xf]
      %v396 = vld [vmem:[%s334 + $0x34] sm:$0xf]
      %v397 = vld [vmem:[%s334 + $0x38] sm:$0xf]
      %v398 = vld [vmem:[%s334 + $0x3c] sm:$0xf]
      %v405 = vunpack.c.l.b16 %v377
      %v406 = vunpack.c.l.b16 %v378
      %v407 = vunpack.c.l.b16 %v379
      %v408 = vunpack.c.l.b16 %v380
      %v409 = vunpack.c.l.b16 %v381
      %v410 = vunpack.c.l.b16 %v382
      %v411 = vpack.c.b16 %v406, %v405
      %v412 = vpack.c.b16 %v408, %v407
      %v413 = vpack.c.b16 %v410, %v409
      %v433 = vunpack.c.l.b16 %v383
      %v434 = vunpack.c.l.b16 %v384
      %v435 = vunpack.c.l.b16 %v385
      %v436 = vunpack.c.l.b16 %v386
      %v437 = vunpack.c.l.b16 %v387
      %v438 = vunpack.c.l.b16 %v388
      %v439 = vunpack.c.l.b16 %v389
      %v440 = vunpack.c.l.b16 %v390
      %v441 = vunpack.c.l.b16 %v391
      %v442 = vunpack.c.l.b16 %v392
      %v443 = vunpack.c.l.b16 %v393
      %v444 = vunpack.c.l.b16 %v394
      %v445 = vunpack.c.l.b16 %v395
      %v446 = vunpack.c.l.b16 %v396
      %v447 = vunpack.c.l.b16 %v397
      %v448 = vunpack.c.l.b16 %v398
      %v449 = vpack.c.b16 %v434, %v433
      %v450 = vpack.c.b16 %v436, %v435
      %v451 = vpack.c.b16 %v438, %v437
      %v452 = vpack.c.b16 %v440, %v439
      %v453 = vpack.c.b16 %v442, %v441
      %v454 = vpack.c.b16 %v444, %v443
      %v455 = vpack.c.b16 %v446, %v445
      %v456 = vpack.c.b16 %v448, %v447
      %465 = vmatprep.subr.bf16.mxu0 0
      %466 = vmatpush1.bf16.msra.mxu0 %v449
      %467 = vmatprep.subr.bf16.mxu0 0
      %468 = vmatpush1.bf16.msra.mxu0 %v450
      %469 = vmatprep.subr.bf16.mxu0 0
      %470 = vmatpush1.bf16.msra.mxu0 %v451
      %471 = vmatprep.subr.bf16.mxu0 0
      %472 = vmatpush1.bf16.msra.mxu0 %v452
      %473 = vmatprep.subr.bf16.mxu0 0
      %474 = vmatpush1.bf16.msra.mxu0 %v453
      %475 = vmatprep.subr.bf16.mxu0 0
      %476 = vmatpush1.bf16.msra.mxu0 %v454
      %477 = vmatprep.subr.bf16.mxu0 0
      %478 = vmatpush1.bf16.msra.mxu0 %v455
      %479 = vmatprep.subr.bf16.mxu0 0
      %480 = vmatpush1.bf16.msra.mxu0 %v456
      %481 = vmatprep.subr.bf16.mxu0 0
      %482 = vmatpush1.bf16.msra.mxu0 0
      %483 = vmatprep.subr.bf16.mxu0 0
      %484 = vmatpush1.bf16.msra.mxu0 0
      %485 = vmatprep.subr.bf16.mxu0 0
      %486 = vmatpush1.bf16.msra.mxu0 0
      %487 = vmatprep.subr.bf16.mxu0 0
      %488 = vmatpush1.bf16.msra.mxu0 0
      %489 = vmatprep.subr.bf16.mxu0 0
      %490 = vmatpush1.bf16.msra.mxu0 0
      %491 = vmatprep.subr.bf16.mxu0 0
      %492 = vmatpush1.bf16.msra.mxu0 0
      %493 = vmatprep.subr.bf16.mxu0 0
      %494 = vmatpush1.bf16.msra.mxu0 0
      %495 = vmatprep.subr.bf16.mxu0 0
      %496 = vmatpush1.bf16.msra.mxu0 0
      %497 = vmatprep.mubr.bf16.mxu0 0
      %498 = vmatmul.mubr.bf16.gmra.mrb[0].mxu0 %v411
      %v499 = vpop.f32.mrb[0].mxu0
      %v500 = vadd.f32 0.0, %v499
      %v501 = vpop.f32.mrb[0].mxu0
      %v502 = vpop.f32.mrb[0].mxu0
      %v503 = vadd.f32 0.0, %v502
      %v504 = vpop.f32.mrb[0].mxu0
      %505 = vmatprep.mubr.bf16.mxu0 0
      %506 = vmatmul.mubr.bf16.gmra.mrb[0].mxu0 %v412
      %v507 = vpop.f32.mrb[0].mxu0
      %v508 = vadd.f32 0.0, %v507
      %v509 = vpop.f32.mrb[0].mxu0
      %v510 = vpop.f32.mrb[0].mxu0
      %v511 = vadd.f32 0.0, %v510
      %v512 = vpop.f32.mrb[0].mxu0
      %513 = vmatprep.mubr.bf16.mxu0 0
      %514 = vmatmul.mubr.bf16.gmra.mrb[0].mxu0 %v413
      %v515 = vpop.f32.mrb[0].mxu0
      %v516 = vadd.f32 0.0, %v515
      %v517 = vpop.f32.mrb[0].mxu0
      %v518 = vpop.f32.mrb[0].mxu0
      %v519 = vadd.f32 0.0, %v518
      %v520 = vpop.f32.mrb[0].mxu0
      %521 = vdwg.mxu0
      %v522 = vadd.f32 %v371, %v500
      %v523 = vadd.f32 %v372, %v503
      %v524 = vadd.f32 %v373, %v508
      %v525 = vadd.f32 %v374, %v511
      %v526 = vadd.f32 %v375, %v516
      %v527 = vadd.f32 %v376, %v519
      %528 = vst [vmem:[#allocation2] sm:$0xff] %v522
      %529 = vst [vmem:[#allocation2 + $0x8] sm:$0xff] %v523
      %530 = vst [vmem:[#allocation2 + $0x10] sm:$0xff] %v524
      %531 = vst [vmem:[#allocation2 + $0x18] sm:$0xff] %v525
      %532 = vst [vmem:[#allocation2 + $0x20] sm:$0xff] %v526
      %533 = vst [vmem:[#allocation2 + $0x28] sm:$0xff] %v527
      // Predicated region
      $region45: #{pcb_test_forward.56} parent=39 // pred_check
        %p534 = pneg %p361
      $region46: #{pcb_test_forward.56} parent=39 // pred_check_branch
        %536 = sbr.rel (%p534) target = $region48
      $region47: #{pcb_test_forward.56} parent=39 // pred_region
        %v537 = vld [vmem:[#allocation2] sm:$0xff]
        %v538 = vld [vmem:[#allocation2 + $0x8] sm:$0xff]
        %v539 = vld [vmem:[#allocation2 + $0x10] sm:$0xff]
        %v540 = vld [vmem:[#allocation2 + $0x18] sm:$0xff]
        %v541 = vld [vmem:[#allocation2 + $0x20] sm:$0xff]
        %v542 = vld [vmem:[#allocation2 + $0x28] sm:$0xff]
        %v543 = vld [vmem:[%s338] sm:$0x1]
        %v545 = vlaneseq
        %v546 = vshrl.u32 %v545, 7
        %v547 = vsub.s32 0, %v546
        %v548 = vrot.slane %v543, %v547
        %v550 = vmul.f32 %v537, %v548
        %v551 = vmul.f32 %v538, %v548
        %v552 = vmul.f32 %v539, %v548
        %v553 = vmul.f32 %v540, %v548
        %v554 = vmul.f32 %v541, %v548
        %v555 = vmul.f32 %v542, %v548
        %v556 = vld [vmem:[%s341] sm:$0x1]
        %v558 = vlaneseq
        %v559 = vshrl.u32 %v558, 7
        %v560 = vsub.s32 0, %v559
        %v561 = vrot.slane %v556, %v560
        %v563 = vadd.f32 %v550, %v561
        %v564 = vadd.f32 %v551, %v561
        %v565 = vadd.f32 %v552, %v561
        %v566 = vadd.f32 %v553, %v561
        %v567 = vadd.f32 %v554, %v561
        %v568 = vadd.f32 %v555, %v561
        %v569 = vld [vmem:[%s349] sm:$0xf]
        %v570 = vld [vmem:[%s349 + $0x4] sm:$0xf]
        %v571 = vld [vmem:[%s349 + $0x8] sm:$0xf]
        %v572 = vld [vmem:[%s349 + $0xc] sm:$0xf]
        %v573 = vld [vmem:[%s349 + $0x10] sm:$0xf]
        %v574 = vld [vmem:[%s349 + $0x14] sm:$0xf]
        %v575 = vunpack.c.l.bf16 %v569
        %v576 = vunpack.c.l.bf16 %v570
        %v577 = vunpack.c.l.bf16 %v571
        %v578 = vunpack.c.l.bf16 %v572
        %v579 = vunpack.c.l.bf16 %v573
        %v580 = vunpack.c.l.bf16 %v574
        %v581 = vadd.f32 %v563, %v575
        %v582 = vadd.f32 %v564, %v576
        %v583 = vadd.f32 %v565, %v577
        %v584 = vadd.f32 %v566, %v578
        %v585 = vadd.f32 %v567, %v579
        %v586 = vadd.f32 %v568, %v580
        %v587 = vmax.f32 %v581, 0.0
        %v588 = vmax.f32 %v582, 0.0
        %v589 = vmax.f32 %v583, 0.0
        %v590 = vmax.f32 %v584, 0.0
        %v591 = vmax.f32 %v585, 0.0
        %v592 = vmax.f32 %v586, 0.0
        %v593 = vpack.c.bf16 %v588, %v587
        %v594 = vpack.c.bf16 %v590, %v589
        %v595 = vpack.c.bf16 %v592, %v591
        %v599 = vunpack.c.l.b16 %v593
        %v600 = vunpack.c.h.b16 %v593
        %v601 = vunpack.c.l.b16 %v594
        %v602 = vunpack.c.h.b16 %v594
        %v603 = vunpack.c.l.b16 %v595
        %v604 = vunpack.c.h.b16 %v595
        %v605 = vpack.c.b16 %v599, %v599
        %v606 = vpack.c.b16 %v600, %v600
        %v607 = vpack.c.b16 %v601, %v601
        %v608 = vpack.c.b16 %v602, %v602
        %v609 = vpack.c.b16 %v603, %v603
        %v610 = vpack.c.b16 %v604, %v604
        %617 = vst [vmem:[%s358] sm:$0xf] %v605
        %618 = vst [vmem:[%s358 + $0x4] sm:$0xf] %v606
        %619 = vst [vmem:[%s358 + $0x8] sm:$0xf] %v607
        %620 = vst [vmem:[%s358 + $0xc] sm:$0xf] %v608
        %621 = vst [vmem:[%s358 + $0x10] sm:$0xf] %v609
        %622 = vst [vmem:[%s358 + $0x14] sm:$0xf] %v610
      $region48: #{pcb_test_forward.56} parent=39 // pred_fallthru
        _
      %s623 = smul.u32 6, %s21
      %p624 = scmp.lt.s32.totalorder %s623, 11
      %s625 = scalar_select %p624, %s623, 11
      %p626 = scmp.lt.s32.totalorder %s22, 0
      %s627 = scalar_select %p626, %s22, 0
      %s628 = sadd.s32 %s627, %s625
      %s629 = smul.addr %s628, 4
      %s630 = scalar_lea.vmem %s5, %s629
      // Predicated region
      $region49: #{pcb_test_forward.56} parent=39 // pred_check
        %p631 = pneg %p191
      $region50: #{pcb_test_forward.56} parent=39 // pred_check_branch
        %633 = sbr.rel (%p631) target = $region52
      $region51: #{pcb_test_forward.56} parent=39 // pred_region
        %s634 = smul.u32 6, %s21
      $region52: #{pcb_test_forward.56} parent=39 // pred_fallthru
        _
    $region40: #{pcb_test_forward.56} parent=5 // pred_fallthru
      _
    %p635 = scmp.le.s32.totalorder 2, %s11
    // Predicated region
    $region53: #{pcb_test_forward.56} parent=5 // pred_check
      %p636 = pneg %p635
    $region54: #{pcb_test_forward.56} parent=5 // pred_check_branch
      %638 = sbr.rel (%p636) target = $region56
    $region55: #{pcb_test_forward.56} parent=5 // pred_region
      %s639 = ssub.s32 %s11, 2
      // Predicated region
      $region57: #{pcb_test_forward.56} parent=55 // pred_check
        %p640 = pneg %p197
      $region58: #{pcb_test_forward.56} parent=55 // pred_check_branch
        %642 = sbr.rel (%p640) target = $region60
      $region59: #{pcb_test_forward.56} parent=55 // pred_region
        %s643 = smul.u32 6, %s24
        %p644 = scmp.lt.s32.totalorder %s643, 11
        %s645 = scalar_select %p644, %s643, 11
        %p646 = scmp.lt.s32.totalorder %s25, 0
        %s647 = scalar_select %p646, %s25, 0
        %s648 = sadd.s32 %s647, %s645
        %s649 = smul.addr %s648, 4
        %s650 = scalar_lea.vmem %s5, %s649
      $region60: #{pcb_test_forward.56} parent=55 // pred_fallthru
        _
    $region56: #{pcb_test_forward.56} parent=5 // pred_fallthru
      _
  $region6: #{pcb_test_forward.56} parent=0 // loop_footer
    %s15 = sadd.s32 1, %s11
  $region7: #{pcb_test_forward.56} parent=0 // loop_footer_branch
    %10 = sbr.rel target = $region3
  $region8: #{pcb_test_forward.56} parent=0 // loop_exit
    _

// kernel: pcb_test_forward.57
$region0: #{pcb_test_forward.57}
  #allocation0 [shape = 'u32[]', space=smem, size = 0x4, offset = 0x4, fixed_abs, tag = 'smem constant byte address 0x4 - core index']
  #allocation1 [shape = 'u32[144,128]{1,0:T(1,128)}', space=vmem, size = 0x12000, scoped, tag = 'internal scratch']
  #allocation2 [shape = 'f32[48,128]{1,0:T(8,128)}', space=vmem, size = 0x6000, scoped, tag = 'scratch operand']
  %s0 = inlined_call_operand.vmem [shape: bf16[96,128], index: 0, kind: input, shape index: {}]
  %s1 = inlined_call_operand.vmem [shape: bf16[128,128], index: 1, kind: input, shape index: {}]
  %s2 = inlined_call_operand.vmem [shape: f32[1,128], index: 2, kind: input, shape index: {}]
  %s3 = inlined_call_operand.vmem [shape: f32[1,128], index: 3, kind: input, shape index: {}]
  %s4 = inlined_call_operand.vmem [shape: bf16[96,128], index: 4, kind: output, shape index: {}]
  %s5 = sld [smem:[#allocation0]]
  $region57: #{pcb_test_forward.57} parent=0
    _
  %s7 = ssub.s32 1, %s5
  %s8 = scalar_select 0, %s7, %s5
  loop: start=0, step=1, limit=4
  $region2: #{pcb_test_forward.57} parent=0 // loop_pre_header
    _
  $region3: #{pcb_test_forward.57} parent=0 // loop_header
    %s10 = sphi 0, %s14
    %p11 = scmp.ge.s32.totalorder %s10, 4
    %s17 = sphi 0, %s36
    %s18 = sphi 0, %s32
    %s19 = sphi 0, %s28
    %s20 = sphi 0, %s17
    %s21 = sphi 0, %s18
    %s22 = sphi 0, %s19
    %s23 = sphi 0, %s20
    %s24 = sphi 0, %s21
    %s25 = sphi 0, %s22
    %s41 = sphi 0, %s43
    %s44 = sphi 0, %s41
    %s45 = sphi 0, %s44
    %s61 = sphi 0, %s45
    %s69 = sphi 0, %s71
    %s72 = sphi 0, %s69
    %s73 = sphi 0, %s72
    %s89 = sphi 0, %s73
    %s95 = sphi 0, %s97
    %s98 = sphi 0, %s95
    %s99 = sphi 0, %s98
    %s115 = sphi 0, %s99
    %s121 = sphi 0, %s123
    %s124 = sphi 0, %s121
    %s125 = sphi 0, %s124
    %s141 = sphi 0, %s125
    %s149 = sphi 0, %s151
    %s152 = sphi 0, %s149
    %s153 = sphi 0, %s152
    %s169 = sphi 0, %s153
  $region4: #{pcb_test_forward.57} parent=0 // loop_header_branch
    %13 = sbr.rel (%p11) target = $region8
  $region5: #{pcb_test_forward.57} parent=0 // loop_body
    %s15 = ssub.s32 %s10, 1
    %s16 = ssub.s32 %s10, 2
    %s26 = sadd.s32 1, %s19
    %p27 = scmp.ge.s32.totalorder %s26, 1
    %s28 = scalar_select %p27, 0, %s26
    %s29 = sadd.s32 1, %s18
    %s30 = scalar_select %p27, %s29, %s18
    %p31 = scmp.ge.s32.totalorder %s30, 1
    %s32 = scalar_select %p31, 0, %s30
    %s33 = sadd.s32 1, %s17
    %s34 = scalar_select %p31, %s33, %s17
    %p35 = scmp.ge.s32.totalorder %s34, 2
    %s36 = scalar_select %p35, 0, %s34
    %s37 = ssub.s32 %s17, %s36
    %s38 = ssub.s32 %s19, %s28
    %s39 = sor.u32 %s37, %s38
    %p40 = scmp.eq.s32.totalorder %s39, 0
    %s42 = sadd.s32 %s41, 1
    %s43 = scalar_select %p40, %s41, %s42
    %p46 = pneg %p40
    %p47 = scmp.eq.s32.totalorder %s10, 1
    %p48 = por %p46, %p47
    %p49 = scmp.ne.s32.totalorder %s41, %s44
    %p50 = scmp.eq.s32.totalorder %s10, 0
    %p51 = por %p49, %p50
    %p52 = scmp.ne.s32.totalorder %s41, %s44
    %p53 = scmp.eq.s32.totalorder %s15, 1
    %p54 = por %p52, %p53
    %p55 = scmp.ne.s32.totalorder %s44, %s45
    %p56 = scmp.eq.s32.totalorder %s15, 0
    %p57 = por %p55, %p56
    %p58 = scmp.ne.s32.totalorder %s44, %s45
    %p59 = scmp.eq.s32.totalorder %s16, 1
    %p60 = por %p58, %p59
    %p62 = scmp.ne.s32.totalorder %s45, %s61
    %p63 = scmp.eq.s32.totalorder %s16, 0
    %p64 = por %p62, %p63
    %s65 = ssub.s32 %s19, %s28
    %s66 = ssub.s32 %s18, %s32
    %s67 = sor.u32 %s65, %s66
    %p68 = scmp.eq.s32.totalorder %s67, 0
    %s70 = sadd.s32 %s69, 1
    %s71 = scalar_select %p68, %s69, %s70
    %p74 = pneg %p68
    %p75 = scmp.eq.s32.totalorder %s10, 1
    %p76 = por %p74, %p75
    %p77 = scmp.ne.s32.totalorder %s69, %s72
    %p78 = scmp.eq.s32.totalorder %s10, 0
    %p79 = por %p77, %p78
    %p80 = scmp.ne.s32.totalorder %s69, %s72
    %p81 = scmp.eq.s32.totalorder %s15, 1
    %p82 = por %p80, %p81
    %p83 = scmp.ne.s32.totalorder %s72, %s73
    %p84 = scmp.eq.s32.totalorder %s15, 0
    %p85 = por %p83, %p84
    %p86 = scmp.ne.s32.totalorder %s72, %s73
    %p87 = scmp.eq.s32.totalorder %s16, 1
    %p88 = por %p86, %p87
    %p90 = scmp.ne.s32.totalorder %s73, %s89
    %p91 = scmp.eq.s32.totalorder %s16, 0
    %p92 = por %p90, %p91
    %s93 = ssub.s32 %s18, %s32
    %p94 = scmp.eq.s32.totalorder %s93, 0
    %s96 = sadd.s32 %s95, 1
    %s97 = scalar_select %p94, %s95, %s96
    %p100 = pneg %p94
    %p101 = scmp.eq.s32.totalorder %s10, 1
    %p102 = por %p100, %p101
    %p103 = scmp.ne.s32.totalorder %s95, %s98
    %p104 = scmp.eq.s32.totalorder %s10, 0
    %p105 = por %p103, %p104
    %p106 = scmp.ne.s32.totalorder %s95, %s98
    %p107 = scmp.eq.s32.totalorder %s15, 1
    %p108 = por %p106, %p107
    %p109 = scmp.ne.s32.totalorder %s98, %s99
    %p110 = scmp.eq.s32.totalorder %s15, 0
    %p111 = por %p109, %p110
    %p112 = scmp.ne.s32.totalorder %s98, %s99
    %p113 = scmp.eq.s32.totalorder %s16, 1
    %p114 = por %p112, %p113
    %p116 = scmp.ne.s32.totalorder %s99, %s115
    %p117 = scmp.eq.s32.totalorder %s16, 0
    %p118 = por %p116, %p117
    %s119 = ssub.s32 %s18, %s32
    %p120 = scmp.eq.s32.totalorder %s119, 0
    %s122 = sadd.s32 %s121, 1
    %s123 = scalar_select %p120, %s121, %s122
    %p126 = pneg %p120
    %p127 = scmp.eq.s32.totalorder %s10, 1
    %p128 = por %p126, %p127
    %p129 = scmp.ne.s32.totalorder %s121, %s124
    %p130 = scmp.eq.s32.totalorder %s10, 0
    %p131 = por %p129, %p130
    %p132 = scmp.ne.s32.totalorder %s121, %s124
    %p133 = scmp.eq.s32.totalorder %s15, 1
    %p134 = por %p132, %p133
    %p135 = scmp.ne.s32.totalorder %s124, %s125
    %p136 = scmp.eq.s32.totalorder %s15, 0
    %p137 = por %p135, %p136
    %p138 = scmp.ne.s32.totalorder %s124, %s125
    %p139 = scmp.eq.s32.totalorder %s16, 1
    %p140 = por %p138, %p139
    %p142 = scmp.ne.s32.totalorder %s125, %s141
    %p143 = scmp.eq.s32.totalorder %s16, 0
    %p144 = por %p142, %p143
    %s145 = ssub.s32 %s17, %s36
    %s146 = ssub.s32 %s18, %s32
    %s147 = sor.u32 %s145, %s146
    %p148 = scmp.eq.s32.totalorder %s147, 0
    %s150 = sadd.s32 %s149, 1
    %s151 = scalar_select %p148, %s149, %s150
    %p154 = pneg %p148
    %p155 = scmp.eq.s32.totalorder %s10, 1
    %p156 = por %p154, %p155
    %p157 = scmp.ne.s32.totalorder %s149, %s152
    %p158 = scmp.eq.s32.totalorder %s10, 0
    %p159 = por %p157, %p158
    %p160 = scmp.ne.s32.totalorder %s149, %s152
    %p161 = scmp.eq.s32.totalorder %s15, 1
    %p162 = por %p160, %p161
    %p163 = scmp.ne.s32.totalorder %s152, %s153
    %p164 = scmp.eq.s32.totalorder %s15, 0
    %p165 = por %p163, %p164
    %p166 = scmp.ne.s32.totalorder %s152, %s153
    %p167 = scmp.eq.s32.totalorder %s16, 1
    %p168 = por %p166, %p167
    %p170 = scmp.ne.s32.totalorder %s153, %s169
    %p171 = scmp.eq.s32.totalorder %s16, 0
    %p172 = por %p170, %p171
    %p173 = scmp.le.s32.totalorder 1, %s10
    %p174 = scmp.lt.s32.totalorder %s10, 3
    %p175 = pnand %p173, %p174
    %p176 = pneg %p175
    // Predicated region
    $region9: #{pcb_test_forward.57} parent=5 // pred_check
      _
    $region10: #{pcb_test_forward.57} parent=5 // pred_check_branch
      %178 = sbr.rel (%p175) target = $region12
    $region11: #{pcb_test_forward.57} parent=5 // pred_region
      %s179 = ssub.s32 %s10, 1
      // Predicated region
      $region13: #{pcb_test_forward.57} parent=11 // pred_check
        %p180 = pneg %p85
      $region14: #{pcb_test_forward.57} parent=11 // pred_check_branch
        %182 = sbr.rel (%p180) target = $region16
      $region15: #{pcb_test_forward.57} parent=11 // pred_region
        %s183 = smul.u32 16, %s22
        %p184 = scmp.lt.s32.totalorder %s183, 15
        %s185 = scalar_select %p184, %s183, 15
        %p186 = scmp.lt.s32.totalorder %s21, 0
        %s187 = scalar_select %p186, %s21, 0
        %s188 = sadd.s32 %s187, %s185
        %s189 = smul.addr %s188, 4
        %s190 = scalar_lea.vmem %s1, %s189
        %s191 = smul.u32 16, %s22
      $region16: #{pcb_test_forward.57} parent=11 // pred_fallthru
        _
      // Predicated region
      $region17: #{pcb_test_forward.57} parent=11 // pred_check
        %p192 = pneg %p111
      $region18: #{pcb_test_forward.57} parent=11 // pred_check_branch
        %194 = sbr.rel (%p192) target = $region20
      $region19: #{pcb_test_forward.57} parent=11 // pred_region
        %p195 = scmp.lt.s32.totalorder %s21, 0
        %s196 = scalar_select %p195, %s21, 0
        %s197 = scalar_lea.vmem %s2, %s196
      $region20: #{pcb_test_forward.57} parent=11 // pred_fallthru
        _
      // Predicated region
      $region21: #{pcb_test_forward.57} parent=11 // pred_check
        %p198 = pneg %p137
      $region22: #{pcb_test_forward.57} parent=11 // pred_check_branch
        %200 = sbr.rel (%p198) target = $region24
      $region23: #{pcb_test_forward.57} parent=11 // pred_region
        %p201 = scmp.lt.s32.totalorder %s21, 0
        %s202 = scalar_select %p201, %s21, 0
        %s203 = scalar_lea.vmem %s3, %s202
      $region24: #{pcb_test_forward.57} parent=11 // pred_fallthru
        _
    $region12: #{pcb_test_forward.57} parent=5 // pred_fallthru
      _
    %p204 = scmp.lt.s32.totalorder %s10, 2
    // Predicated region
    $region25: #{pcb_test_forward.57} parent=5 // pred_check
      %p205 = pneg %p204
    $region26: #{pcb_test_forward.57} parent=5 // pred_check_branch
      %207 = sbr.rel (%p205) target = $region28
    $region27: #{pcb_test_forward.57} parent=5 // pred_region
      // Predicated region
      $region29: #{pcb_test_forward.57} parent=27 // pred_check
        %p208 = pneg %p51
      $region30: #{pcb_test_forward.57} parent=27 // pred_check_branch
        %210 = sbr.rel (%p208) target = $region32
      $region31: #{pcb_test_forward.57} parent=27 // pred_region
        %s211 = smul.u32 6, %s17
        %p212 = scmp.lt.s32.totalorder %s211, 11
        %s213 = scalar_select %p212, %s211, 11
        %p214 = scmp.lt.s32.totalorder %s19, 0
        %s215 = scalar_select %p214, %s19, 0
        %s216 = sadd.s32 %s215, %s213
        %s217 = smul.addr %s216, 4
        %s218 = scalar_lea.vmem %s0, %s217
        %s219 = smul.u32 6, %s17
      $region32: #{pcb_test_forward.57} parent=27 // pred_fallthru
        _
    $region28: #{pcb_test_forward.57} parent=5 // pred_fallthru
      _
    %p220 = scmp.le.s32.totalorder 1, %s10
    %p221 = scmp.lt.s32.totalorder %s10, 3
    %p222 = pnand %p220, %p221
    %p223 = pneg %p222
    // Predicated region
    $region33: #{pcb_test_forward.57} parent=5 // pred_check
      _
    $region34: #{pcb_test_forward.57} parent=5 // pred_check_branch
      %225 = sbr.rel (%p222) target = $region36
    $region35: #{pcb_test_forward.57} parent=5 // pred_region
      %s226 = ssub.s32 %s10, 1
      %s227 = smul.u32 6, %s20
      %p228 = scmp.lt.s32.totalorder %s227, 11
      %s229 = scalar_select %p228, %s227, 11
      %p230 = scmp.lt.s32.totalorder %s22, 0
      %s231 = scalar_select %p230, %s22, 0
      %s232 = sadd.s32 %s231, %s229
      %s233 = smul.addr %s232, 4
      %s234 = scalar_lea.vmem %s0, %s233
      %p235 = pneg %p57
      %p236 = pneg %p54
      %s237 = smul.u32 16, %s22
      %p238 = scmp.lt.s32.totalorder %s237, 15
      %s239 = scalar_select %p238, %s237, 15
      %p240 = scmp.lt.s32.totalorder %s21, 0
      %s241 = scalar_select %p240, %s21, 0
      %s242 = sadd.s32 %s241, %s239
      %s243 = smul.addr %s242, 4
      %s244 = scalar_lea.vmem %s1, %s243
      %p245 = pneg %p85
      %p246 = pneg %p82
      %p247 = scmp.lt.s32.totalorder %s21, 0
      %s248 = scalar_select %p247, %s21, 0
      %s249 = scalar_lea.vmem %s2, %s248
      %p250 = pneg %p111
      %p251 = pneg %p108
      %p252 = scmp.lt.s32.totalorder %s21, 0
      %s253 = scalar_select %p252, %s21, 0
      %s254 = scalar_lea.vmem %s3, %s253
      %p255 = pneg %p137
      %p256 = pneg %p134
      %p257 = pneg %p165
      %p258 = pneg %p162
      %s259 = smul.u32 6, %s20
      %p260 = scmp.lt.s32.totalorder %s259, 11
      %s261 = scalar_select %p260, %s259, 11
      %p262 = scmp.lt.s32.totalorder %s21, 0
      %s263 = scalar_select %p262, %s21, 0
      %s264 = sadd.s32 %s263, %s261
      %s265 = smul.addr %s264, 4
      %s266 = scalar_lea.vmem %s4, %s265
      %s267 = smul.u32 6, %s20
      %p268 = scmp.lt.s32.totalorder %s267, 11
      %s269 = scalar_select %p268, %s267, 11
      %p270 = scmp.lt.s32.totalorder %s22, 0
      %s271 = scalar_select %p270, %s22, 0
      %s272 = sadd.s32 %s271, %s269
      %s273 = smul.addr %s272, 4
      %s274 = scalar_lea.vmem %s0, %s273
      %s275 = smul.u32 6, %s20
      %s276 = smul.u32 16, %s22
      %p277 = scmp.lt.s32.totalorder %s276, 15
      %s278 = scalar_select %p277, %s276, 15
      %p279 = scmp.lt.s32.totalorder %s21, 0
      %s280 = scalar_select %p279, %s21, 0
      %s281 = sadd.s32 %s280, %s278
      %s282 = smul.addr %s281, 4
      %s283 = scalar_lea.vmem %s1, %s282
      %s284 = smul.u32 16, %s22
      %p285 = scmp.lt.s32.totalorder %s21, 0
      %s286 = scalar_select %p285, %s21, 0
      %s287 = scalar_lea.vmem %s2, %s286
      %p288 = scmp.lt.s32.totalorder %s21, 0
      %s289 = scalar_select %p288, %s21, 0
      %s290 = scalar_lea.vmem %s3, %s289
      %s291 = smul.u32 6, %s20
      %p292 = scmp.lt.s32.totalorder %s291, 11
      %s293 = scalar_select %p292, %s291, 11
      %p294 = scmp.lt.s32.totalorder %s21, 0
      %s295 = scalar_select %p294, %s21, 0
      %s296 = sadd.s32 %s295, %s293
      %s297 = smul.addr %s296, 4
      %s298 = scalar_lea.vmem %s4, %s297
      %s299 = smul.u32 6, %s20
      %p301 = scmp.eq.s32.totalorder %s22, 0
      // Predicated region
      $region37: #{pcb_test_forward.57} parent=35 // pred_check
        %p302 = pneg %p301
      $region38: #{pcb_test_forward.57} parent=35 // pred_check_branch
        %304 = sbr.rel (%p302) target = $region40
      $region39: #{pcb_test_forward.57} parent=35 // pred_region
        %305 = vst [vmem:[#allocation2] sm:$0xff] 0.0
        %306 = vst [vmem:[#allocation2 + $0x8] sm:$0xff] 0.0
        %307 = vst [vmem:[#allocation2 + $0x10] sm:$0xff] 0.0
        %308 = vst [vmem:[#allocation2 + $0x18] sm:$0xff] 0.0
        %309 = vst [vmem:[#allocation2 + $0x20] sm:$0xff] 0.0
        %310 = vst [vmem:[#allocation2 + $0x28] sm:$0xff] 0.0
      $region40: #{pcb_test_forward.57} parent=35 // pred_fallthru
        _
      %v311 = vld [vmem:[#allocation2] sm:$0xff]
      %v312 = vld [vmem:[#allocation2 + $0x8] sm:$0xff]
      %v313 = vld [vmem:[#allocation2 + $0x10] sm:$0xff]
      %v314 = vld [vmem:[#allocation2 + $0x18] sm:$0xff]
      %v315 = vld [vmem:[#allocation2 + $0x20] sm:$0xff]
      %v316 = vld [vmem:[#allocation2 + $0x28] sm:$0xff]
      %v317 = vld [vmem:[%s274] sm:$0xf]
      %v318 = vld [vmem:[%s274 + $0x4] sm:$0xf]
      %v319 = vld [vmem:[%s274 + $0x8] sm:$0xf]
      %v320 = vld [vmem:[%s274 + $0xc] sm:$0xf]
      %v321 = vld [vmem:[%s274 + $0x10] sm:$0xf]
      %v322 = vld [vmem:[%s274 + $0x14] sm:$0xf]
      %v323 = vld [vmem:[%s283] sm:$0xf]
      %v324 = vld [vmem:[%s283 + $0x4] sm:$0xf]
      %v325 = vld [vmem:[%s283 + $0x8] sm:$0xf]
      %v326 = vld [vmem:[%s283 + $0xc] sm:$0xf]
      %v327 = vld [vmem:[%s283 + $0x10] sm:$0xf]
      %v328 = vld [vmem:[%s283 + $0x14] sm:$0xf]
      %v329 = vld [vmem:[%s283 + $0x18] sm:$0xf]
      %v330 = vld [vmem:[%s283 + $0x1c] sm:$0xf]
      %v331 = vld [vmem:[%s283 + $0x20] sm:$0xf]
      %v332 = vld [vmem:[%s283 + $0x24] sm:$0xf]
      %v333 = vld [vmem:[%s283 + $0x28] sm:$0xf]
      %v334 = vld [vmem:[%s283 + $0x2c] sm:$0xf]
      %v335 = vld [vmem:[%s283 + $0x30] sm:$0xf]
      %v336 = vld [vmem:[%s283 + $0x34] sm:$0xf]
      %v337 = vld [vmem:[%s283 + $0x38] sm:$0xf]
      %v338 = vld [vmem:[%s283 + $0x3c] sm:$0xf]
      %v345 = vunpack.c.l.b16 %v317
      %v346 = vunpack.c.l.b16 %v318
      %v347 = vunpack.c.l.b16 %v319
      %v348 = vunpack.c.l.b16 %v320
      %v349 = vunpack.c.l.b16 %v321
      %v350 = vunpack.c.l.b16 %v322
      %v351 = vpack.c.b16 %v346, %v345
      %v352 = vpack.c.b16 %v348, %v347
      %v353 = vpack.c.b16 %v350, %v349
      %v373 = vunpack.c.l.b16 %v323
      %v374 = vunpack.c.l.b16 %v324
      %v375 = vunpack.c.l.b16 %v325
      %v376 = vunpack.c.l.b16 %v326
      %v377 = vunpack.c.l.b16 %v327
      %v378 = vunpack.c.l.b16 %v328
      %v379 = vunpack.c.l.b16 %v329
      %v380 = vunpack.c.l.b16 %v330
      %v381 = vunpack.c.l.b16 %v331
      %v382 = vunpack.c.l.b16 %v332
      %v383 = vunpack.c.l.b16 %v333
      %v384 = vunpack.c.l.b16 %v334
      %v385 = vunpack.c.l.b16 %v335
      %v386 = vunpack.c.l.b16 %v336
      %v387 = vunpack.c.l.b16 %v337
      %v388 = vunpack.c.l.b16 %v338
      %v389 = vpack.c.b16 %v374, %v373
      %v390 = vpack.c.b16 %v376, %v375
      %v391 = vpack.c.b16 %v378, %v377
      %v392 = vpack.c.b16 %v380, %v379
      %v393 = vpack.c.b16 %v382, %v381
      %v394 = vpack.c.b16 %v384, %v383
      %v395 = vpack.c.b16 %v386, %v385
      %v396 = vpack.c.b16 %v388, %v387
      %405 = vmatprep.subr.bf16.mxu0 0
      %406 = vmatpush1.bf16.msra.mxu0 %v389
      %407 = vmatprep.subr.bf16.mxu0 0
      %408 = vmatpush1.bf16.msra.mxu0 %v390
      %409 = vmatprep.subr.bf16.mxu0 0
      %410 = vmatpush1.bf16.msra.mxu0 %v391
      %411 = vmatprep.subr.bf16.mxu0 0
      %412 = vmatpush1.bf16.msra.mxu0 %v392
      %413 = vmatprep.subr.bf16.mxu0 0
      %414 = vmatpush1.bf16.msra.mxu0 %v393
      %415 = vmatprep.subr.bf16.mxu0 0
      %416 = vmatpush1.bf16.msra.mxu0 %v394
      %417 = vmatprep.subr.bf16.mxu0 0
      %418 = vmatpush1.bf16.msra.mxu0 %v395
      %419 = vmatprep.subr.bf16.mxu0 0
      %420 = vmatpush1.bf16.msra.mxu0 %v396
      %421 = vmatprep.subr.bf16.mxu0 0
      %422 = vmatpush1.bf16.msra.mxu0 0
      %423 = vmatprep.subr.bf16.mxu0 0
      %424 = vmatpush1.bf16.msra.mxu0 0
      %425 = vmatprep.subr.bf16.mxu0 0
      %426 = vmatpush1.bf16.msra.mxu0 0
      %427 = vmatprep.subr.bf16.mxu0 0
      %428 = vmatpush1.bf16.msra.mxu0 0
      %429 = vmatprep.subr.bf16.mxu0 0
      %430 = vmatpush1.bf16.msra.mxu0 0
      %431 = vmatprep.subr.bf16.mxu0 0
      %432 = vmatpush1.bf16.msra.mxu0 0
      %433 = vmatprep.subr.bf16.mxu0 0
      %434 = vmatpush1.bf16.msra.mxu0 0
      %435 = vmatprep.subr.bf16.mxu0 0
      %436 = vmatpush1.bf16.msra.mxu0 0
      %437 = vmatprep.mubr.bf16.mxu0 0
      %438 = vmatmul.mubr.bf16.gmra.mrb[0].mxu0 %v351
      %v439 = vpop.f32.mrb[0].mxu0
      %v440 = vadd.f32 0.0, %v439
      %v441 = vpop.f32.mrb[0].mxu0
      %v442 = vpop.f32.mrb[0].mxu0
      %v443 = vadd.f32 0.0, %v442
      %v444 = vpop.f32.mrb[0].mxu0
      %445 = vmatprep.mubr.bf16.mxu0 0
      %446 = vmatmul.mubr.bf16.gmra.mrb[0].mxu0 %v352
      %v447 = vpop.f32.mrb[0].mxu0
      %v448 = vadd.f32 0.0, %v447
      %v449 = vpop.f32.mrb[0].mxu0
      %v450 = vpop.f32.mrb[0].mxu0
      %v451 = vadd.f32 0.0, %v450
      %v452 = vpop.f32.mrb[0].mxu0
      %453 = vmatprep.mubr.bf16.mxu0 0
      %454 = vmatmul.mubr.bf16.gmra.mrb[0].mxu0 %v353
      %v455 = vpop.f32.mrb[0].mxu0
      %v456 = vadd.f32 0.0, %v455
      %v457 = vpop.f32.mrb[0].mxu0
      %v458 = vpop.f32.mrb[0].mxu0
      %v459 = vadd.f32 0.0, %v458
      %v460 = vpop.f32.mrb[0].mxu0
      %461 = vdwg.mxu0
      %v462 = vadd.f32 %v311, %v440
      %v463 = vadd.f32 %v312, %v443
      %v464 = vadd.f32 %v313, %v448
      %v465 = vadd.f32 %v314, %v451
      %v466 = vadd.f32 %v315, %v456
      %v467 = vadd.f32 %v316, %v459
      %468 = vst [vmem:[#allocation2] sm:$0xff] %v462
      %469 = vst [vmem:[#allocation2 + $0x8] sm:$0xff] %v463
      %470 = vst [vmem:[#allocation2 + $0x10] sm:$0xff] %v464
      %471 = vst [vmem:[#allocation2 + $0x18] sm:$0xff] %v465
      %472 = vst [vmem:[#allocation2 + $0x20] sm:$0xff] %v466
      %473 = vst [vmem:[#allocation2 + $0x28] sm:$0xff] %v467
      // Predicated region
      $region41: #{pcb_test_forward.57} parent=35 // pred_check
        %p474 = pneg %p301
      $region42: #{pcb_test_forward.57} parent=35 // pred_check_branch
        %476 = sbr.rel (%p474) target = $region44
      $region43: #{pcb_test_forward.57} parent=35 // pred_region
        %v477 = vld [vmem:[#allocation2] sm:$0xff]
        %v478 = vld [vmem:[#allocation2 + $0x8] sm:$0xff]
        %v479 = vld [vmem:[#allocation2 + $0x10] sm:$0xff]
        %v480 = vld [vmem:[#allocation2 + $0x18] sm:$0xff]
        %v481 = vld [vmem:[#allocation2 + $0x20] sm:$0xff]
        %v482 = vld [vmem:[#allocation2 + $0x28] sm:$0xff]
        %v483 = vld [vmem:[%s287] sm:$0x1]
        %v485 = vlaneseq
        %v486 = vshrl.u32 %v485, 7
        %v487 = vsub.s32 0, %v486
        %v488 = vrot.slane %v483, %v487
        %v490 = vmul.f32 %v477, %v488
        %v491 = vmul.f32 %v478, %v488
        %v492 = vmul.f32 %v479, %v488
        %v493 = vmul.f32 %v480, %v488
        %v494 = vmul.f32 %v481, %v488
        %v495 = vmul.f32 %v482, %v488
        %v496 = vld [vmem:[%s290] sm:$0x1]
        %v498 = vlaneseq
        %v499 = vshrl.u32 %v498, 7
        %v500 = vsub.s32 0, %v499
        %v501 = vrot.slane %v496, %v500
        %v503 = vadd.f32 %v490, %v501
        %v504 = vadd.f32 %v491, %v501
        %v505 = vadd.f32 %v492, %v501
        %v506 = vadd.f32 %v493, %v501
        %v507 = vadd.f32 %v494, %v501
        %v508 = vadd.f32 %v495, %v501
        %v509 = vmax.f32 %v503, 0.0
        %v510 = vmax.f32 %v504, 0.0
        %v511 = vmax.f32 %v505, 0.0
        %v512 = vmax.f32 %v506, 0.0
        %v513 = vmax.f32 %v507, 0.0
        %v514 = vmax.f32 %v508, 0.0
        %v515 = vpack.c.bf16 %v510, %v509
        %v516 = vpack.c.bf16 %v512, %v511
        %v517 = vpack.c.bf16 %v514, %v513
        %v521 = vunpack.c.l.b16 %v515
        %v522 = vunpack.c.h.b16 %v515
        %v523 = vunpack.c.l.b16 %v516
        %v524 = vunpack.c.h.b16 %v516
        %v525 = vunpack.c.l.b16 %v517
        %v526 = vunpack.c.h.b16 %v517
        %v527 = vpack.c.b16 %v521, %v521
        %v528 = vpack.c.b16 %v522, %v522
        %v529 = vpack.c.b16 %v523, %v523
        %v530 = vpack.c.b16 %v524, %v524
        %v531 = vpack.c.b16 %v525, %v525
        %v532 = vpack.c.b16 %v526, %v526
        %539 = vst [vmem:[%s298] sm:$0xf] %v527
        %540 = vst [vmem:[%s298 + $0x4] sm:$0xf] %v528
        %541 = vst [vmem:[%s298 + $0x8] sm:$0xf] %v529
        %542 = vst [vmem:[%s298 + $0xc] sm:$0xf] %v530
        %543 = vst [vmem:[%s298 + $0x10] sm:$0xf] %v531
        %544 = vst [vmem:[%s298 + $0x14] sm:$0xf] %v532
      $region44: #{pcb_test_forward.57} parent=35 // pred_fallthru
        _
      %s545 = smul.u32 6, %s20
      %p546 = scmp.lt.s32.totalorder %s545, 11
      %s547 = scalar_select %p546, %s545, 11
      %p548 = scmp.lt.s32.totalorder %s21, 0
      %s549 = scalar_select %p548, %s21, 0
      %s550 = sadd.s32 %s549, %s547
      %s551 = smul.addr %s550, 4
      %s552 = scalar_lea.vmem %s4, %s551
      // Predicated region
      $region45: #{pcb_test_forward.57} parent=35 // pred_check
        %p553 = pneg %p162
      $region46: #{pcb_test_forward.57} parent=35 // pred_check_branch
        %555 = sbr.rel (%p553) target = $region48
      $region47: #{pcb_test_forward.57} parent=35 // pred_region
        %s556 = smul.u32 6, %s20
      $region48: #{pcb_test_forward.57} parent=35 // pred_fallthru
        _
    $region36: #{pcb_test_forward.57} parent=5 // pred_fallthru
      _
    %p557 = scmp.le.s32.totalorder 2, %s10
    // Predicated region
    $region49: #{pcb_test_forward.57} parent=5 // pred_check
      %p558 = pneg %p557
    $region50: #{pcb_test_forward.57} parent=5 // pred_check_branch
      %560 = sbr.rel (%p558) target = $region52
    $region51: #{pcb_test_forward.57} parent=5 // pred_region
      %s561 = ssub.s32 %s10, 2
      // Predicated region
      $region53: #{pcb_test_forward.57} parent=51 // pred_check
        %p562 = pneg %p168
      $region54: #{pcb_test_forward.57} parent=51 // pred_check_branch
        %564 = sbr.rel (%p562) target = $region56
      $region55: #{pcb_test_forward.57} parent=51 // pred_region
        %s565 = smul.u32 6, %s23
        %p566 = scmp.lt.s32.totalorder %s565, 11
        %s567 = scalar_select %p566, %s565, 11
        %p568 = scmp.lt.s32.totalorder %s24, 0
        %s569 = scalar_select %p568, %s24, 0
        %s570 = sadd.s32 %s569, %s567
        %s571 = smul.addr %s570, 4
        %s572 = scalar_lea.vmem %s4, %s571
      $region56: #{pcb_test_forward.57} parent=51 // pred_fallthru
        _
    $region52: #{pcb_test_forward.57} parent=5 // pred_fallthru
      _
  $region6: #{pcb_test_forward.57} parent=0 // loop_footer
    %s14 = sadd.s32 1, %s10
  $region7: #{pcb_test_forward.57} parent=0 // loop_footer_branch
    %9 = sbr.rel target = $region3
  $region8: #{pcb_test_forward.57} parent=0 // loop_exit
    _

// kernel: pcb_test_forward.55
$region0: #{pcb_test_forward.55}
  #allocation0 [shape = 'u32[]', space=smem, size = 0x4, offset = 0x4, fixed_abs, tag = 'smem constant byte address 0x4 - core index']
  #allocation1 [shape = 'u32[144,128]{1,0:T(1,128)}', space=vmem, size = 0x12000, scoped, tag = 'internal scratch']
  #allocation2 [shape = 'f32[48,128]{1,0:T(8,128)}', space=vmem, size = 0x6000, scoped, tag = 'scratch operand']
  %s0 = inlined_call_operand.vmem [shape: bf16[96,1152], index: 0, kind: input, shape index: {}]
  %s1 = inlined_call_operand.vmem [shape: bf16[1152,128], index: 1, kind: input, shape index: {}]
  %s2 = inlined_call_operand.vmem [shape: f32[1,128], index: 2, kind: input, shape index: {}]
  %s3 = inlined_call_operand.vmem [shape: f32[1,128], index: 3, kind: input, shape index: {}]
  %s4 = inlined_call_operand.vmem [shape: bf16[96,128], index: 4, kind: output, shape index: {}]
  %s5 = sld [smem:[#allocation0]]
  $region83: #{pcb_test_forward.55} parent=0
    _
  %s7 = ssub.s32 1, %s5
  %s8 = scalar_select 0, %s7, %s5
  $region1: #{pcb_test_forward.55} parent=0
    #allocation3 [shape = 'u8[73728]{0}', space=vmem, size = 0x12000, scoped, tag = 'input window, operand 0']
    loop: start=0, step=1, limit=8
    $region2: #{pcb_test_forward.55} parent=1 // loop_pre_header
      _
    $region3: #{pcb_test_forward.55} parent=1 // loop_header
      %s10 = sphi 0, %s14
      %p11 = scmp.ge.s32.totalorder %s10, 8
      %s17 = sphi 0, %s36
      %s18 = sphi 0, %s32
      %s19 = sphi 0, %s28
      %s20 = sphi 0, %s17
      %s21 = sphi 0, %s18
      %s22 = sphi 0, %s19
      %s23 = sphi 0, %s20
      %s24 = sphi 0, %s21
      %s25 = sphi 0, %s22
      %s41 = sphi 0, %s43
      %s44 = sphi 0, %s41
      %s45 = sphi 0, %s44
      %s61 = sphi 0, %s45
      %s69 = sphi 0, %s71
      %s72 = sphi 0, %s69
      %s73 = sphi 0, %s72
      %s89 = sphi 0, %s73
      %s95 = sphi 0, %s97
      %s98 = sphi 0, %s95
      %s99 = sphi 0, %s98
      %s115 = sphi 0, %s99
      %s121 = sphi 0, %s123
      %s124 = sphi 0, %s121
      %s125 = sphi 0, %s124
      %s141 = sphi 0, %s125
      %s149 = sphi 0, %s151
      %s152 = sphi 0, %s149
      %s153 = sphi 0, %s152
      %s169 = sphi 0, %s153
    $region4: #{pcb_test_forward.55} parent=1 // loop_header_branch
      %13 = sbr.rel (%p11) target = $region8
    $region5: #{pcb_test_forward.55} parent=1 // loop_body
      %s15 = ssub.s32 %s10, 1
      %s16 = ssub.s32 %s10, 2
      %s26 = sadd.s32 1, %s19
      %p27 = scmp.ge.s32.totalorder %s26, 3
      %s28 = scalar_select %p27, 0, %s26
      %s29 = sadd.s32 1, %s18
      %s30 = scalar_select %p27, %s29, %s18
      %p31 = scmp.ge.s32.totalorder %s30, 1
      %s32 = scalar_select %p31, 0, %s30
      %s33 = sadd.s32 1, %s17
      %s34 = scalar_select %p31, %s33, %s17
      %p35 = scmp.ge.s32.totalorder %s34, 2
      %s36 = scalar_select %p35, 0, %s34
      %s37 = ssub.s32 %s17, %s36
      %s38 = ssub.s32 %s19, %s28
      %s39 = sor.u32 %s37, %s38
      %p40 = scmp.eq.s32.totalorder %s39, 0
      %s42 = sadd.s32 %s41, 1
      %s43 = scalar_select %p40, %s41, %s42
      %p46 = pneg %p40
      %p47 = scmp.eq.s32.totalorder %s10, 5
      %p48 = por %p46, %p47
      %p49 = scmp.ne.s32.totalorder %s41, %s44
      %p50 = scmp.eq.s32.totalorder %s10, 0
      %p51 = por %p49, %p50
      %p52 = scmp.ne.s32.totalorder %s41, %s44
      %p53 = scmp.eq.s32.totalorder %s15, 5
      %p54 = por %p52, %p53
      %p55 = scmp.ne.s32.totalorder %s44, %s45
      %p56 = scmp.eq.s32.totalorder %s15, 0
      %p57 = por %p55, %p56
      %p58 = scmp.ne.s32.totalorder %s44, %s45
      %p59 = scmp.eq.s32.totalorder %s16, 5
      %p60 = por %p58, %p59
      %p62 = scmp.ne.s32.totalorder %s45, %s61
      %p63 = scmp.eq.s32.totalorder %s16, 0
      %p64 = por %p62, %p63
      %s65 = ssub.s32 %s19, %s28
      %s66 = ssub.s32 %s18, %s32
      %s67 = sor.u32 %s65, %s66
      %p68 = scmp.eq.s32.totalorder %s67, 0
      %s70 = sadd.s32 %s69, 1
      %s71 = scalar_select %p68, %s69, %s70
      %p74 = pneg %p68
      %p75 = scmp.eq.s32.totalorder %s10, 5
      %p76 = por %p74, %p75
      %p77 = scmp.ne.s32.totalorder %s69, %s72
      %p78 = scmp.eq.s32.totalorder %s10, 0
      %p79 = por %p77, %p78
      %p80 = scmp.ne.s32.totalorder %s69, %s72
      %p81 = scmp.eq.s32.totalorder %s15, 5
      %p82 = por %p80, %p81
      %p83 = scmp.ne.s32.totalorder %s72, %s73
      %p84 = scmp.eq.s32.totalorder %s15, 0
      %p85 = por %p83, %p84
      %p86 = scmp.ne.s32.totalorder %s72, %s73
      %p87 = scmp.eq.s32.totalorder %s16, 5
      %p88 = por %p86, %p87
      %p90 = scmp.ne.s32.totalorder %s73, %s89
      %p91 = scmp.eq.s32.totalorder %s16, 0
      %p92 = por %p90, %p91
      %s93 = ssub.s32 %s18, %s32
      %p94 = scmp.eq.s32.totalorder %s93, 0
      %s96 = sadd.s32 %s95, 1
      %s97 = scalar_select %p94, %s95, %s96
      %p100 = pneg %p94
      %p101 = scmp.eq.s32.totalorder %s10, 5
      %p102 = por %p100, %p101
      %p103 = scmp.ne.s32.totalorder %s95, %s98
      %p104 = scmp.eq.s32.totalorder %s10, 0
      %p105 = por %p103, %p104
      %p106 = scmp.ne.s32.totalorder %s95, %s98
      %p107 = scmp.eq.s32.totalorder %s15, 5
      %p108 = por %p106, %p107
      %p109 = scmp.ne.s32.totalorder %s98, %s99
      %p110 = scmp.eq.s32.totalorder %s15, 0
      %p111 = por %p109, %p110
      %p112 = scmp.ne.s32.totalorder %s98, %s99
      %p113 = scmp.eq.s32.totalorder %s16, 5
      %p114 = por %p112, %p113
      %p116 = scmp.ne.s32.totalorder %s99, %s115
      %p117 = scmp.eq.s32.totalorder %s16, 0
      %p118 = por %p116, %p117
      %s119 = ssub.s32 %s18, %s32
      %p120 = scmp.eq.s32.totalorder %s119, 0
      %s122 = sadd.s32 %s121, 1
      %s123 = scalar_select %p120, %s121, %s122
      %p126 = pneg %p120
      %p127 = scmp.eq.s32.totalorder %s10, 5
      %p128 = por %p126, %p127
      %p129 = scmp.ne.s32.totalorder %s121, %s124
      %p130 = scmp.eq.s32.totalorder %s10, 0
      %p131 = por %p129, %p130
      %p132 = scmp.ne.s32.totalorder %s121, %s124
      %p133 = scmp.eq.s32.totalorder %s15, 5
      %p134 = por %p132, %p133
      %p135 = scmp.ne.s32.totalorder %s124, %s125
      %p136 = scmp.eq.s32.totalorder %s15, 0
      %p137 = por %p135, %p136
      %p138 = scmp.ne.s32.totalorder %s124, %s125
      %p139 = scmp.eq.s32.totalorder %s16, 5
      %p140 = por %p138, %p139
      %p142 = scmp.ne.s32.totalorder %s125, %s141
      %p143 = scmp.eq.s32.totalorder %s16, 0
      %p144 = por %p142, %p143
      %s145 = ssub.s32 %s17, %s36
      %s146 = ssub.s32 %s18, %s32
      %s147 = sor.u32 %s145, %s146
      %p148 = scmp.eq.s32.totalorder %s147, 0
      %s150 = sadd.s32 %s149, 1
      %s151 = scalar_select %p148, %s149, %s150
      %p154 = pneg %p148
      %p155 = scmp.eq.s32.totalorder %s10, 5
      %p156 = por %p154, %p155
      %p157 = scmp.ne.s32.totalorder %s149, %s152
      %p158 = scmp.eq.s32.totalorder %s10, 0
      %p159 = por %p157, %p158
      %p160 = scmp.ne.s32.totalorder %s149, %s152
      %p161 = scmp.eq.s32.totalorder %s15, 5
      %p162 = por %p160, %p161
      %p163 = scmp.ne.s32.totalorder %s152, %s153
      %p164 = scmp.eq.s32.totalorder %s15, 0
      %p165 = por %p163, %p164
      %p166 = scmp.ne.s32.totalorder %s152, %s153
      %p167 = scmp.eq.s32.totalorder %s16, 5
      %p168 = por %p166, %p167
      %p170 = scmp.ne.s32.totalorder %s153, %s169
      %p171 = scmp.eq.s32.totalorder %s16, 0
      %p172 = por %p170, %p171
      %p173 = scmp.le.s32.totalorder 1, %s10
      %p174 = scmp.lt.s32.totalorder %s10, 7
      %p175 = pnand %p173, %p174
      %p176 = pneg %p175
      // Predicated region
      $region9: #{pcb_test_forward.55} parent=5 // pred_check
        _
      $region10: #{pcb_test_forward.55} parent=5 // pred_check_branch
        %178 = sbr.rel (%p175) target = $region12
      $region11: #{pcb_test_forward.55} parent=5 // pred_region
        %s179 = ssub.s32 %s10, 1
        // Predicated region
        $region13: #{pcb_test_forward.55} parent=11 // pred_check
          %p180 = pneg %p111
        $region14: #{pcb_test_forward.55} parent=11 // pred_check_branch
          %182 = sbr.rel (%p180) target = $region16
        $region15: #{pcb_test_forward.55} parent=11 // pred_region
          %p183 = scmp.lt.s32.totalorder %s21, 0
          %s184 = scalar_select %p183, %s21, 0
          %s185 = scalar_lea.vmem %s2, %s184
        $region16: #{pcb_test_forward.55} parent=11 // pred_fallthru
          _
        // Predicated region
        $region17: #{pcb_test_forward.55} parent=11 // pred_check
          %p186 = pneg %p137
        $region18: #{pcb_test_forward.55} parent=11 // pred_check_branch
          %188 = sbr.rel (%p186) target = $region20
        $region19: #{pcb_test_forward.55} parent=11 // pred_region
          %p189 = scmp.lt.s32.totalorder %s21, 0
          %s190 = scalar_select %p189, %s21, 0
          %s191 = scalar_lea.vmem %s3, %s190
        $region20: #{pcb_test_forward.55} parent=11 // pred_fallthru
          _
      $region12: #{pcb_test_forward.55} parent=5 // pred_fallthru
        _
      %p192 = scmp.lt.s32.totalorder %s10, 6
      // Predicated region
      $region21: #{pcb_test_forward.55} parent=5 // pred_check
        %p193 = pneg %p192
      $region22: #{pcb_test_forward.55} parent=5 // pred_check_branch
        %195 = sbr.rel (%p193) target = $region24
      $region23: #{pcb_test_forward.55} parent=5 // pred_region
        // Predicated region
        $region25: #{pcb_test_forward.55} parent=23 // pred_check
          %p196 = pneg %p51
        $region26: #{pcb_test_forward.55} parent=23 // pred_check_branch
          %198 = sbr.rel (%p196) target = $region28
        $region27: #{pcb_test_forward.55} parent=23 // pred_region
          %s199 = sand.u32 %s41, 1
          %s200 = sand.u32 %s41, 1
          %s201 = smul.addr %s200, 72
          %s202 = scalar_lea.vmem [#allocation3], %s201
          %s203 = smul.u32 6, %s17
          %s204 = smul.u32 3, %s19
          %s205 = smul.addr %s203, 9
          %s206 = sadd.s32 %s204, %s205
          %s207 = smul.addr %s206, 4
          %s208 = scalar_lea.vmem %s0, %s207
          // Predicated region
          $region29: #{pcb_test_forward.55} parent=27 // pred_check
            _
          $region30: #{pcb_test_forward.55} parent=27 // pred_check_branch
            %210 = sbr.rel (0) target = $region32
          $region31: #{pcb_test_forward.55} parent=27 // pred_region
            // Predicated region
            $region33: #{pcb_test_forward.55} parent=31 // pred_check
              _
            $region34: #{pcb_test_forward.55} parent=31 // pred_check_branch
              %212 = sbr.rel (0) target = $region36
            $region35: #{pcb_test_forward.55} parent=31 // pred_region
              %s213 = scalar_lea.vmem %s208, 8
              %s214 = scalar_lea.vmem %s202, 8 [#allocation3]
              loop: start=0, step=1, limit=1
              $region37: #{pcb_test_forward.55} parent=35 // loop_pre_header
                _
              $region38: #{pcb_test_forward.55} parent=35 // loop_header
                %s216 = sphi 0, %s220
                %p217 = scmp.ge.s32.totalorder %s216, 1
                %s221 = sphi %s208, %s208
                %s222 = sphi %s202, %s202
              $region39: #{pcb_test_forward.55} parent=35 // loop_header_branch
                %219 = sbr.rel (%p217) target = $region43
              $region40: #{pcb_test_forward.55} parent=35 // loop_body
                %v223 = vld [vmem:[%s221] sm:$0xff]
                %224 = vst [vmem:[%s222] sm:$0xff] %v223
                %v225 = vld [vmem:[%s221 + $0x24] sm:$0xff]
                %226 = vst [vmem:[%s222 + $0xc] sm:$0xff] %v225
                %v227 = vld [vmem:[%s221 + $0x48] sm:$0xff]
                %228 = vst [vmem:[%s222 + $0x18] sm:$0xff] %v227
                %v229 = vld [vmem:[%s221 + $0x6c] sm:$0xff]
                %230 = vst [vmem:[%s222 + $0x24] sm:$0xff] %v229
                %v231 = vld [vmem:[%s221 + $0x90] sm:$0xff]
                %232 = vst [vmem:[%s222 + $0x30] sm:$0xff] %v231
                %v233 = vld [vmem:[%s221 + $0xb4] sm:$0xff]
                %234 = vst [vmem:[%s222 + $0x3c] sm:$0xff] %v233
              $region41: #{pcb_test_forward.55} parent=35 // loop_footer
                %s220 = sadd.s32 1, %s216
              $region42: #{pcb_test_forward.55} parent=35 // loop_footer_branch
                %215 = sbr.rel target = $region38
              $region43: #{pcb_test_forward.55} parent=35 // loop_exit
                _
              loop: start=0, step=1, limit=1
              $region44: #{pcb_test_forward.55} parent=35 // loop_pre_header
                _
              $region45: #{pcb_test_forward.55} parent=35 // loop_header
                %s237 = sphi 0, %s241
                %p238 = scmp.ge.s32.totalorder %s237, 1
                %s242 = sphi %s213, %s213
                %s243 = sphi %s214, %s214
              $region46: #{pcb_test_forward.55} parent=35 // loop_header_branch
                %240 = sbr.rel (%p238) target = $region50
              $region47: #{pcb_test_forward.55} parent=35 // loop_body
                %v244 = vld [vmem:[%s242] sm:$0xf]
                %245 = vst [vmem:[%s243] sm:$0xf] %v244
                %v246 = vld [vmem:[%s242 + $0x24] sm:$0xf]
                %247 = vst [vmem:[%s243 + $0xc] sm:$0xf] %v246
                %v248 = vld [vmem:[%s242 + $0x48] sm:$0xf]
                %249 = vst [vmem:[%s243 + $0x18] sm:$0xf] %v248
                %v250 = vld [vmem:[%s242 + $0x6c] sm:$0xf]
                %251 = vst [vmem:[%s243 + $0x24] sm:$0xf] %v250
                %v252 = vld [vmem:[%s242 + $0x90] sm:$0xf]
                %253 = vst [vmem:[%s243 + $0x30] sm:$0xf] %v252
                %v254 = vld [vmem:[%s242 + $0xb4] sm:$0xf]
                %255 = vst [vmem:[%s243 + $0x3c] sm:$0xf] %v254
              $region48: #{pcb_test_forward.55} parent=35 // loop_footer
                %s241 = sadd.s32 1, %s237
              $region49: #{pcb_test_forward.55} parent=35 // loop_footer_branch
                %236 = sbr.rel target = $region45
              $region50: #{pcb_test_forward.55} parent=35 // loop_exit
                _
            $region36: #{pcb_test_forward.55} parent=31 // pred_fallthru
              _
          $region32: #{pcb_test_forward.55} parent=27 // pred_fallthru
            _
          %256 = vnop
        $region28: #{pcb_test_forward.55} parent=23 // pred_fallthru
          _
        // Predicated region
        $region51: #{pcb_test_forward.55} parent=23 // pred_check
          %p257 = pneg %p79
        $region52: #{pcb_test_forward.55} parent=23 // pred_check_branch
          %259 = sbr.rel (%p257) target = $region54
        $region53: #{pcb_test_forward.55} parent=23 // pred_region
          %s260 = smul.u32 48, %s19
          %p261 = scmp.lt.s32.totalorder %s260, 143
          %s262 = scalar_select %p261, %s260, 143
          %p263 = scmp.lt.s32.totalorder %s18, 0
          %s264 = scalar_select %p263, %s18, 0
          %s265 = sadd.s32 %s264, %s262
          %s266 = smul.addr %s265, 4
          %s267 = scalar_lea.vmem %s1, %s266
          %s268 = smul.u32 48, %s19
        $region54: #{pcb_test_forward.55} parent=23 // pred_fallthru
          _
      $region24: #{pcb_test_forward.55} parent=5 // pred_fallthru
        _
      %p269 = scmp.le.s32.totalorder 1, %s10
      %p270 = scmp.lt.s32.totalorder %s10, 7
      %p271 = pnand %p269, %p270
      %p272 = pneg %p271
      // Predicated region
      $region55: #{pcb_test_forward.55} parent=5 // pred_check
        _
      $region56: #{pcb_test_forward.55} parent=5 // pred_check_branch
        %274 = sbr.rel (%p271) target = $region58
      $region57: #{pcb_test_forward.55} parent=5 // pred_region
        %s275 = ssub.s32 %s10, 1
        %s276 = sand.u32 %s44, 1
        %s277 = sand.u32 %s44, 1
        %s278 = smul.addr %s277, 72
        %s279 = scalar_lea.vmem [#allocation3], %s278
        // Predicated region
        $region59: #{pcb_test_forward.55} parent=57 // pred_check
          %p280 = pneg %p57
        $region60: #{pcb_test_forward.55} parent=57 // pred_check_branch
          %282 = sbr.rel (%p280) target = $region62
        $region61: #{pcb_test_forward.55} parent=57 // pred_region
          _
        $region62: #{pcb_test_forward.55} parent=57 // pred_fallthru
          _
        %s283 = sand.u32 %s44, 1
        %s284 = sand.u32 %s44, 1
        %s285 = smul.addr %s284, 72
        %s286 = scalar_lea.vmem [#allocation3], %s285
        %p287 = pneg %p57
        %p288 = pneg %p54
        %s289 = smul.u32 48, %s22
        %p290 = scmp.lt.s32.totalorder %s289, 143
        %s291 = scalar_select %p290, %s289, 143
        %p292 = scmp.lt.s32.totalorder %s21, 0
        %s293 = scalar_select %p292, %s21, 0
        %s294 = sadd.s32 %s293, %s291
        %s295 = smul.addr %s294, 4
        %s296 = scalar_lea.vmem %s1, %s295
        %p297 = pneg %p85
        %p298 = pneg %p82
        %p299 = scmp.lt.s32.totalorder %s21, 0
        %s300 = scalar_select %p299, %s21, 0
        %s301 = scalar_lea.vmem %s2, %s300
        %p302 = pneg %p111
        %p303 = pneg %p108
        %p304 = scmp.lt.s32.totalorder %s21, 0
        %s305 = scalar_select %p304, %s21, 0
        %s306 = scalar_lea.vmem %s3, %s305
        %p307 = pneg %p137
        %p308 = pneg %p134
        %p309 = pneg %p165
        %p310 = pneg %p162
        %s311 = smul.u32 6, %s20
        %p312 = scmp.lt.s32.totalorder %s311, 11
        %s313 = scalar_select %p312, %s311, 11
        %p314 = scmp.lt.s32.totalorder %s21, 0
        %s315 = scalar_select %p314, %s21, 0
        %s316 = sadd.s32 %s315, %s313
        %s317 = smul.addr %s316, 4
        %s318 = scalar_lea.vmem %s4, %s317
        %s319 = smul.u32 6, %s20
        %s320 = smul.u32 3, %s22
        %s321 = smul.u32 48, %s22
        %p322 = scmp.lt.s32.totalorder %s321, 143
        %s323 = scalar_select %p322, %s321, 143
        %p324 = scmp.lt.s32.totalorder %s21, 0
        %s325 = scalar_select %p324, %s21, 0
        %s326 = sadd.s32 %s325, %s323
        %s327 = smul.addr %s326, 4
        %s328 = scalar_lea.vmem %s1, %s327
        %s329 = smul.u32 48, %s22
        %p330 = scmp.lt.s32.totalorder %s21, 0
        %s331 = scalar_select %p330, %s21, 0
        %s332 = scalar_lea.vmem %s2, %s331
        %p333 = scmp.lt.s32.totalorder %s21, 0
        %s334 = scalar_select %p333, %s21, 0
        %s335 = scalar_lea.vmem %s3, %s334
        %s336 = smul.u32 6, %s20
        %p337 = scmp.lt.s32.totalorder %s336, 11
        %s338 = scalar_select %p337, %s336, 11
        %p339 = scmp.lt.s32.totalorder %s21, 0
        %s340 = scalar_select %p339, %s21, 0
        %s341 = sadd.s32 %s340, %s338
        %s342 = smul.addr %s341, 4
        %s343 = scalar_lea.vmem %s4, %s342
        %s344 = smul.u32 6, %s20
        %p346 = scmp.eq.s32.totalorder %s22, 0
        // Predicated region
        $region63: #{pcb_test_forward.55} parent=57 // pred_check
          %p347 = pneg %p346
        $region64: #{pcb_test_forward.55} parent=57 // pred_check_branch
          %349 = sbr.rel (%p347) target = $region66
        $region65: #{pcb_test_forward.55} parent=57 // pred_region
          %350 = vst [vmem:[#allocation2] sm:$0xff] 0.0
          %351 = vst [vmem:[#allocation2 + $0x8] sm:$0xff] 0.0
          %352 = vst [vmem:[#allocation2 + $0x10] sm:$0xff] 0.0
          %353 = vst [vmem:[#allocation2 + $0x18] sm:$0xff] 0.0
          %354 = vst [vmem:[#allocation2 + $0x20] sm:$0xff] 0.0
          %355 = vst [vmem:[#allocation2 + $0x28] sm:$0xff] 0.0
        $region66: #{pcb_test_forward.55} parent=57 // pred_fallthru
          _
        %v356 = vld [vmem:[#allocation2] sm:$0xff]
        %v357 = vld [vmem:[#allocation2 + $0x8] sm:$0xff]
        %v358 = vld [vmem:[#allocation2 + $0x10] sm:$0xff]
        %v359 = vld [vmem:[#allocation2 + $0x18] sm:$0xff]
        %v360 = vld [vmem:[#allocation2 + $0x20] sm:$0xff]
        %v361 = vld [vmem:[#allocation2 + $0x28] sm:$0xff]
        %v362 = vld [vmem:[%s279] sm:$0xff]
        %v363 = vld [vmem:[%s279 + $0x8] sm:$0xf]
        %v364 = vld [vmem:[%s279 + $0xc] sm:$0xff]
        %v365 = vld [vmem:[%s279 + $0x14] sm:$0xf]
        %v366 = vld [vmem:[%s279 + $0x18] sm:$0xff]
        %v367 = vld [vmem:[%s279 + $0x20] sm:$0xf]
        %v368 = vld [vmem:[%s279 + $0x24] sm:$0xff]
        %v369 = vld [vmem:[%s279 + $0x2c] sm:$0xf]
        %v370 = vld [vmem:[%s279 + $0x30] sm:$0xff]
        %v371 = vld [vmem:[%s279 + $0x38] sm:$0xf]
        %v372 = vld [vmem:[%s279 + $0x3c] sm:$0xff]
        %v373 = vld [vmem:[%s279 + $0x44] sm:$0xf]
        %v374 = vld [vmem:[%s328] sm:$0xf]
        %v375 = vld [vmem:[%s328 + $0x4] sm:$0xf]
        %v376 = vld [vmem:[%s328 + $0x8] sm:$0xf]
        %v377 = vld [vmem:[%s328 + $0xc] sm:$0xf]
        %v378 = vld [vmem:[%s328 + $0x10] sm:$0xf]
        %v379 = vld [vmem:[%s328 + $0x14] sm:$0xf]
        %v380 = vld [vmem:[%s328 + $0x18] sm:$0xf]
        %v381 = vld [vmem:[%s328 + $0x1c] sm:$0xf]
        %v382 = vld [vmem:[%s328 + $0x20] sm:$0xf]
        %v383 = vld [vmem:[%s328 + $0x24] sm:$0xf]
        %v384 = vld [vmem:[%s328 + $0x28] sm:$0xf]
        %v385 = vld [vmem:[%s328 + $0x2c] sm:$0xf]
        %v386 = vld [vmem:[%s328 + $0x30] sm:$0xf]
        %v387 = vld [vmem:[%s328 + $0x34] sm:$0xf]
        %v388 = vld [vmem:[%s328 + $0x38] sm:$0xf]
        %v389 = vld [vmem:[%s328 + $0x3c] sm:$0xf]
        %v390 = vld [vmem:[%s328 + $0x40] sm:$0xf]
        %v391 = vld [vmem:[%s328 + $0x44] sm:$0xf]
        %v392 = vld [vmem:[%s328 + $0x48] sm:$0xf]
        %v393 = vld [vmem:[%s328 + $0x4c] sm:$0xf]
        %v394 = vld [vmem:[%s328 + $0x50] sm:$0xf]
        %v395 = vld [vmem:[%s328 + $0x54] sm:$0xf]
        %v396 = vld [vmem:[%s328 + $0x58] sm:$0xf]
        %v397 = vld [vmem:[%s328 + $0x5c] sm:$0xf]
        %v398 = vld [vmem:[%s328 + $0x60] sm:$0xf]
        %v399 = vld [vmem:[%s328 + $0x64] sm:$0xf]
        %v400 = vld [vmem:[%s328 + $0x68] sm:$0xf]
        %v401 = vld [vmem:[%s328 + $0x6c] sm:$0xf]
        %v402 = vld [vmem:[%s328 + $0x70] sm:$0xf]
        %v403 = vld [vmem:[%s328 + $0x74] sm:$0xf]
        %v404 = vld [vmem:[%s328 + $0x78] sm:$0xf]
        %v405 = vld [vmem:[%s328 + $0x7c] sm:$0xf]
        %v406 = vld [vmem:[%s328 + $0x80] sm:$0xf]
        %v407 = vld [vmem:[%s328 + $0x84] sm:$0xf]
        %v408 = vld [vmem:[%s328 + $0x88] sm:$0xf]
        %v409 = vld [vmem:[%s328 + $0x8c] sm:$0xf]
        %v410 = vld [vmem:[%s328 + $0x90] sm:$0xf]
        %v411 = vld [vmem:[%s328 + $0x94] sm:$0xf]
        %v412 = vld [vmem:[%s328 + $0x98] sm:$0xf]
        %v413 = vld [vmem:[%s328 + $0x9c] sm:$0xf]
        %v414 = vld [vmem:[%s328 + $0xa0] sm:$0xf]
        %v415 = vld [vmem:[%s328 + $0xa4] sm:$0xf]
        %v416 = vld [vmem:[%s328 + $0xa8] sm:$0xf]
        %v417 = vld [vmem:[%s328 + $0xac] sm:$0xf]
        %v418 = vld [vmem:[%s328 + $0xb0] sm:$0xf]
        %v419 = vld [vmem:[%s328 + $0xb4] sm:$0xf]
        %v420 = vld [vmem:[%s328 + $0xb8] sm:$0xf]
        %v421 = vld [vmem:[%s328 + $0xbc] sm:$0xf]
        %v434 = vunpack.c.l.b16 %v362
        %v435 = vunpack.c.h.b16 %v362
        %v436 = vunpack.c.l.b16 %v363
        %v437 = vunpack.c.l.b16 %v364
        %v438 = vunpack.c.h.b16 %v364
        %v439 = vunpack.c.l.b16 %v365
        %v440 = vunpack.c.l.b16 %v366
        %v441 = vunpack.c.h.b16 %v366
        %v442 = vunpack.c.l.b16 %v367
        %v443 = vunpack.c.l.b16 %v368
        %v444 = vunpack.c.h.b16 %v368
        %v445 = vunpack.c.l.b16 %v369
        %v446 = vunpack.c.l.b16 %v370
        %v447 = vunpack.c.h.b16 %v370
        %v448 = vunpack.c.l.b16 %v371
        %v449 = vunpack.c.l.b16 %v372
        %v450 = vunpack.c.h.b16 %v372
        %v451 = vunpack.c.l.b16 %v373
        %v452 = vpack.c.b16 %v437, %v434
        %v453 = vpack.c.b16 %v438, %v435
        %v454 = vpack.c.b16 %v439, %v436
        %v455 = vpack.c.b16 %v443, %v440
        %v456 = vpack.c.b16 %v444, %v441
        %v457 = vpack.c.b16 %v445, %v442
        %v458 = vpack.c.b16 %v449, %v446
        %v459 = vpack.c.b16 %v450, %v447
        %v460 = vpack.c.b16 %v451, %v448
        %v518 = vunpack.c.l.b16 %v374
        %v519 = vunpack.c.l.b16 %v375
        %v520 = vunpack.c.l.b16 %v376
        %v521 = vunpack.c.l.b16 %v377
        %v522 = vunpack.c.l.b16 %v378
        %v523 = vunpack.c.l.b16 %v379
        %v524 = vunpack.c.l.b16 %v380
        %v525 = vunpack.c.l.b16 %v381
        %v526 = vunpack.c.l.b16 %v382
        %v527 = vunpack.c.l.b16 %v383
        %v528 = vunpack.c.l.b16 %v384
        %v529 = vunpack.c.l.b16 %v385
        %v530 = vunpack.c.l.b16 %v386
        %v531 = vunpack.c.l.b16 %v387
        %v532 = vunpack.c.l.b16 %v388
        %v533 = vunpack.c.l.b16 %v389
        %v534 = vunpack.c.l.b16 %v390
        %v535 = vunpack.c.l.b16 %v391
        %v536 = vunpack.c.l.b16 %v392
        %v537 = vunpack.c.l.b16 %v393
        %v538 = vunpack.c.l.b16 %v394
        %v539 = vunpack.c.l.b16 %v395
        %v540 = vunpack.c.l.b16 %v396
        %v541 = vunpack.c.l.b16 %v397
        %v542 = vunpack.c.l.b16 %v398
        %v543 = vunpack.c.l.b16 %v399
        %v544 = vunpack.c.l.b16 %v400
        %v545 = vunpack.c.l.b16 %v401
        %v546 = vunpack.c.l.b16 %v402
        %v547 = vunpack.c.l.b16 %v403
        %v548 = vunpack.c.l.b16 %v404
        %v549 = vunpack.c.l.b16 %v405
        %v550 = vunpack.c.l.b16 %v406
        %v551 = vunpack.c.l.b16 %v407
        %v552 = vunpack.c.l.b16 %v408
        %v553 = vunpack.c.l.b16 %v409
        %v554 = vunpack.c.l.b16 %v410
        %v555 = vunpack.c.l.b16 %v411
        %v556 = vunpack.c.l.b16 %v412
        %v557 = vunpack.c.l.b16 %v413
        %v558 = vunpack.c.l.b16 %v414
        %v559 = vunpack.c.l.b16 %v415
        %v560 = vunpack.c.l.b16 %v416
        %v561 = vunpack.c.l.b16 %v417
        %v562 = vunpack.c.l.b16 %v418
        %v563 = vunpack.c.l.b16 %v419
        %v564 = vunpack.c.l.b16 %v420
        %v565 = vunpack.c.l.b16 %v421
        %v566 = vpack.c.b16 %v519, %v518
        %v567 = vpack.c.b16 %v521, %v520
        %v568 = vpack.c.b16 %v523, %v522
        %v569 = vpack.c.b16 %v525, %v524
        %v570 = vpack.c.b16 %v527, %v526
        %v571 = vpack.c.b16 %v529, %v528
        %v572 = vpack.c.b16 %v531, %v530
        %v573 = vpack.c.b16 %v533, %v532
        %v574 = vpack.c.b16 %v535, %v534
        %v575 = vpack.c.b16 %v537, %v536
        %v576 = vpack.c.b16 %v539, %v538
        %v577 = vpack.c.b16 %v541, %v540
        %v578 = vpack.c.b16 %v543, %v542
        %v579 = vpack.c.b16 %v545, %v544
        %v580 = vpack.c.b16 %v547, %v546
        %v581 = vpack.c.b16 %v549, %v548
        %v582 = vpack.c.b16 %v551, %v550
        %v583 = vpack.c.b16 %v553, %v552
        %v584 = vpack.c.b16 %v555, %v554
        %v585 = vpack.c.b16 %v557, %v556
        %v586 = vpack.c.b16 %v559, %v558
        %v587 = vpack.c.b16 %v561, %v560
        %v588 = vpack.c.b16 %v563, %v562
        %v589 = vpack.c.b16 %v565, %v564
        %614 = vmatprep.subr.bf16.mxu0 0
        %615 = vmatpush1.bf16.msra.mxu0 %v566
        %616 = vmatprep.subr.bf16.mxu0 0
        %617 = vmatpush1.bf16.msra.mxu0 %v567
        %618 = vmatprep.subr.bf16.mxu0 0
        %619 = vmatpush1.bf16.msra.mxu0 %v568
        %620 = vmatprep.subr.bf16.mxu0 0
        %621 = vmatpush1.bf16.msra.mxu0 %v569
        %622 = vmatprep.subr.bf16.mxu0 0
        %623 = vmatpush1.bf16.msra.mxu0 %v570
        %624 = vmatprep.subr.bf16.mxu0 0
        %625 = vmatpush1.bf16.msra.mxu0 %v571
        %626 = vmatprep.subr.bf16.mxu0 0
        %627 = vmatpush1.bf16.msra.mxu0 %v572
        %628 = vmatprep.subr.bf16.mxu0 0
        %629 = vmatpush1.bf16.msra.mxu0 %v573
        %630 = vmatprep.subr.bf16.mxu0 0
        %631 = vmatpush1.bf16.msra.mxu0 %v574
        %632 = vmatprep.subr.bf16.mxu0 0
        %633 = vmatpush1.bf16.msra.mxu0 %v575
        %634 = vmatprep.subr.bf16.mxu0 0
        %635 = vmatpush1.bf16.msra.mxu0 %v576
        %636 = vmatprep.subr.bf16.mxu0 0
        %637 = vmatpush1.bf16.msra.mxu0 %v577
        %638 = vmatprep.subr.bf16.mxu0 0
        %639 = vmatpush1.bf16.msra.mxu0 %v578
        %640 = vmatprep.subr.bf16.mxu0 0
        %641 = vmatpush1.bf16.msra.mxu0 %v579
        %642 = vmatprep.subr.bf16.mxu0 0
        %643 = vmatpush1.bf16.msra.mxu0 %v580
        %644 = vmatprep.subr.bf16.mxu0 0
        %645 = vmatpush1.bf16.msra.mxu0 %v581
        %646 = vmatprep.mubr.bf16.mxu0 %v453
        %647 = vmatmul.mubr.bf16.gmra.mrb[0].mxu0 %v452
        %v648 = vpop.f32.mrb[0].mxu0
        %v649 = vadd.f32 0.0, %v648
        %v650 = vpop.f32.mrb[0].mxu0
        %v651 = vpop.f32.mrb[0].mxu0
        %v652 = vadd.f32 0.0, %v651
        %v653 = vpop.f32.mrb[0].mxu0
        %654 = vmatprep.mubr.bf16.mxu0 %v456
        %655 = vmatmul.mubr.bf16.gmra.mrb[0].mxu0 %v455
        %v656 = vpop.f32.mrb[0].mxu0
        %v657 = vadd.f32 0.0, %v656
        %v658 = vpop.f32.mrb[0].mxu0
        %v659 = vpop.f32.mrb[0].mxu0
        %v660 = vadd.f32 0.0, %v659
        %v661 = vpop.f32.mrb[0].mxu0
        %662 = vmatprep.mubr.bf16.mxu0 %v459
        %663 = vmatmul.mubr.bf16.gmra.mrb[0].mxu0 %v458
        %v664 = vpop.f32.mrb[0].mxu0
        %v665 = vadd.f32 0.0, %v664
        %v666 = vpop.f32.mrb[0].mxu0
        %v667 = vpop.f32.mrb[0].mxu0
        %v668 = vadd.f32 0.0, %v667
        %v669 = vpop.f32.mrb[0].mxu0
        %670 = vdwg.mxu0
        %671 = vmatprep.subr.bf16.mxu0 0
        %672 = vmatpush1.bf16.msra.mxu0 %v582
        %673 = vmatprep.subr.bf16.mxu0 0
        %674 = vmatpush1.bf16.msra.mxu0 %v583
        %675 = vmatprep.subr.bf16.mxu0 0
        %676 = vmatpush1.bf16.msra.mxu0 %v584
        %677 = vmatprep.subr.bf16.mxu0 0
        %678 = vmatpush1.bf16.msra.mxu0 %v585
        %679 = vmatprep.subr.bf16.mxu0 0
        %680 = vmatpush1.bf16.msra.mxu0 %v586
        %681 = vmatprep.subr.bf16.mxu0 0
        %682 = vmatpush1.bf16.msra.mxu0 %v587
        %683 = vmatprep.subr.bf16.mxu0 0
        %684 = vmatpush1.bf16.msra.mxu0 %v588
        %685 = vmatprep.subr.bf16.mxu0 0
        %686 = vmatpush1.bf16.msra.mxu0 %v589
        %687 = vmatprep.subr.bf16.mxu0 0
        %688 = vmatpush1.bf16.msra.mxu0 0
        %689 = vmatprep.subr.bf16.mxu0 0
        %690 = vmatpush1.bf16.msra.mxu0 0
        %691 = vmatprep.subr.bf16.mxu0 0
        %692 = vmatpush1.bf16.msra.mxu0 0
        %693 = vmatprep.subr.bf16.mxu0 0
        %694 = vmatpush1.bf16.msra.mxu0 0
        %695 = vmatprep.subr.bf16.mxu0 0
        %696 = vmatpush1.bf16.msra.mxu0 0
        %697 = vmatprep.subr.bf16.mxu0 0
        %698 = vmatpush1.bf16.msra.mxu0 0
        %699 = vmatprep.subr.bf16.mxu0 0
        %700 = vmatpush1.bf16.msra.mxu0 0
        %701 = vmatprep.subr.bf16.mxu0 0
        %702 = vmatpush1.bf16.msra.mxu0 0
        %703 = vmatprep.mubr.bf16.mxu0 0
        %704 = vmatmul.mubr.bf16.gmra.mrb[0].mxu0 %v454
        %v705 = vpop.f32.mrb[0].mxu0
        %v706 = vadd.f32 %v649, %v705
        %v707 = vpop.f32.mrb[0].mxu0
        %v708 = vpop.f32.mrb[0].mxu0
        %v709 = vadd.f32 %v652, %v708
        %v710 = vpop.f32.mrb[0].mxu0
        %711 = vmatprep.mubr.bf16.mxu0 0
        %712 = vmatmul.mubr.bf16.gmra.mrb[0].mxu0 %v457
        %v713 = vpop.f32.mrb[0].mxu0
        %v714 = vadd.f32 %v657, %v713
        %v715 = vpop.f32.mrb[0].mxu0
        %v716 = vpop.f32.mrb[0].mxu0
        %v717 = vadd.f32 %v660, %v716
        %v718 = vpop.f32.mrb[0].mxu0
        %719 = vmatprep.mubr.bf16.mxu0 0
        %720 = vmatmul.mubr.bf16.gmra.mrb[0].mxu0 %v460
        %v721 = vpop.f32.mrb[0].mxu0
        %v722 = vadd.f32 %v665, %v721
        %v723 = vpop.f32.mrb[0].mxu0
        %v724 = vpop.f32.mrb[0].mxu0
        %v725 = vadd.f32 %v668, %v724
        %v726 = vpop.f32.mrb[0].mxu0
        %727 = vdwg.mxu0
        %v728 = vadd.f32 %v356, %v706
        %v729 = vadd.f32 %v357, %v709
        %v730 = vadd.f32 %v358, %v714
        %v731 = vadd.f32 %v359, %v717
        %v732 = vadd.f32 %v360, %v722
        %v733 = vadd.f32 %v361, %v725
        %734 = vst [vmem:[#allocation2] sm:$0xff] %v728
        %735 = vst [vmem:[#allocation2 + $0x8] sm:$0xff] %v729
        %736 = vst [vmem:[#allocation2 + $0x10] sm:$0xff] %v730
        %737 = vst [vmem:[#allocation2 + $0x18] sm:$0xff] %v731
        %738 = vst [vmem:[#allocation2 + $0x20] sm:$0xff] %v732
        %739 = vst [vmem:[#allocation2 + $0x28] sm:$0xff] %v733
        %p740 = scmp.eq.s32.totalorder %s22, 2
        // Predicated region
        $region67: #{pcb_test_forward.55} parent=57 // pred_check
          %p741 = pneg %p740
        $region68: #{pcb_test_forward.55} parent=57 // pred_check_branch
          %743 = sbr.rel (%p741) target = $region70
        $region69: #{pcb_test_forward.55} parent=57 // pred_region
          %v744 = vld [vmem:[#allocation2] sm:$0xff]
          %v745 = vld [vmem:[#allocation2 + $0x8] sm:$0xff]
          %v746 = vld [vmem:[#allocation2 + $0x10] sm:$0xff]
          %v747 = vld [vmem:[#allocation2 + $0x18] sm:$0xff]
          %v748 = vld [vmem:[#allocation2 + $0x20] sm:$0xff]
          %v749 = vld [vmem:[#allocation2 + $0x28] sm:$0xff]
          %v750 = vld [vmem:[%s332] sm:$0x1]
          %v752 = vlaneseq
          %v753 = vshrl.u32 %v752, 7
          %v754 = vsub.s32 0, %v753
          %v755 = vrot.slane %v750, %v754
          %v757 = vmul.f32 %v744, %v755
          %v758 = vmul.f32 %v745, %v755
          %v759 = vmul.f32 %v746, %v755
          %v760 = vmul.f32 %v747, %v755
          %v761 = vmul.f32 %v748, %v755
          %v762 = vmul.f32 %v749, %v755
          %v763 = vld [vmem:[%s335] sm:$0x1]
          %v765 = vlaneseq
          %v766 = vshrl.u32 %v765, 7
          %v767 = vsub.s32 0, %v766
          %v768 = vrot.slane %v763, %v767
          %v770 = vadd.f32 %v757, %v768
          %v771 = vadd.f32 %v758, %v768
          %v772 = vadd.f32 %v759, %v768
          %v773 = vadd.f32 %v760, %v768
          %v774 = vadd.f32 %v761, %v768
          %v775 = vadd.f32 %v762, %v768
          %v776 = vmax.f32 %v770, 0.0
          %v777 = vmax.f32 %v771, 0.0
          %v778 = vmax.f32 %v772, 0.0
          %v779 = vmax.f32 %v773, 0.0
          %v780 = vmax.f32 %v774, 0.0
          %v781 = vmax.f32 %v775, 0.0
          %v782 = vpack.c.bf16 %v777, %v776
          %v783 = vpack.c.bf16 %v779, %v778
          %v784 = vpack.c.bf16 %v781, %v780
          %v788 = vunpack.c.l.b16 %v782
          %v789 = vunpack.c.h.b16 %v782
          %v790 = vunpack.c.l.b16 %v783
          %v791 = vunpack.c.h.b16 %v783
          %v792 = vunpack.c.l.b16 %v784
          %v793 = vunpack.c.h.b16 %v784
          %v794 = vpack.c.b16 %v788, %v788
          %v795 = vpack.c.b16 %v789, %v789
          %v796 = vpack.c.b16 %v790, %v790
          %v797 = vpack.c.b16 %v791, %v791
          %v798 = vpack.c.b16 %v792, %v792
          %v799 = vpack.c.b16 %v793, %v793
          %806 = vst [vmem:[%s343] sm:$0xf] %v794
          %807 = vst [vmem:[%s343 + $0x4] sm:$0xf] %v795
          %808 = vst [vmem:[%s343 + $0x8] sm:$0xf] %v796
          %809 = vst [vmem:[%s343 + $0xc] sm:$0xf] %v797
          %810 = vst [vmem:[%s343 + $0x10] sm:$0xf] %v798
          %811 = vst [vmem:[%s343 + $0x14] sm:$0xf] %v799
        $region70: #{pcb_test_forward.55} parent=57 // pred_fallthru
          _
        %s812 = smul.u32 6, %s20
        %p813 = scmp.lt.s32.totalorder %s812, 11
        %s814 = scalar_select %p813, %s812, 11
        %p815 = scmp.lt.s32.totalorder %s21, 0
        %s816 = scalar_select %p815, %s21, 0
        %s817 = sadd.s32 %s816, %s814
        %s818 = smul.addr %s817, 4
        %s819 = scalar_lea.vmem %s4, %s818
        // Predicated region
        $region71: #{pcb_test_forward.55} parent=57 // pred_check
          %p820 = pneg %p162
        $region72: #{pcb_test_forward.55} parent=57 // pred_check_branch
          %822 = sbr.rel (%p820) target = $region74
        $region73: #{pcb_test_forward.55} parent=57 // pred_region
          %s823 = smul.u32 6, %s20
        $region74: #{pcb_test_forward.55} parent=57 // pred_fallthru
          _
      $region58: #{pcb_test_forward.55} parent=5 // pred_fallthru
        _
      %p824 = scmp.le.s32.totalorder 2, %s10
      // Predicated region
      $region75: #{pcb_test_forward.55} parent=5 // pred_check
        %p825 = pneg %p824
      $region76: #{pcb_test_forward.55} parent=5 // pred_check_branch
        %827 = sbr.rel (%p825) target = $region78
      $region77: #{pcb_test_forward.55} parent=5 // pred_region
        %s828 = ssub.s32 %s10, 2
        // Predicated region
        $region79: #{pcb_test_forward.55} parent=77 // pred_check
          %p829 = pneg %p168
        $region80: #{pcb_test_forward.55} parent=77 // pred_check_branch
          %831 = sbr.rel (%p829) target = $region82
        $region81: #{pcb_test_forward.55} parent=77 // pred_region
          %s832 = smul.u32 6, %s23
          %p833 = scmp.lt.s32.totalorder %s832, 11
          %s834 = scalar_select %p833, %s832, 11
          %p835 = scmp.lt.s32.totalorder %s24, 0
          %s836 = scalar_select %p835, %s24, 0
          %s837 = sadd.s32 %s836, %s834
          %s838 = smul.addr %s837, 4
          %s839 = scalar_lea.vmem %s4, %s838
        $region82: #{pcb_test_forward.55} parent=77 // pred_fallthru
          _
      $region78: #{pcb_test_forward.55} parent=5 // pred_fallthru
        _
    $region6: #{pcb_test_forward.55} parent=1 // loop_footer
      %s14 = sadd.s32 1, %s10
    $region7: #{pcb_test_forward.55} parent=1 // loop_footer_branch
      %9 = sbr.rel target = $region3
    $region8: #{pcb_test_forward.55} parent=1 // loop_exit
      _

// kernel: pcb_test_forward.64
$region0: #{pcb_test_forward.64}
  #allocation0 [shape = 'u32[]', space=smem, size = 0x4, offset = 0x4, fixed_abs, tag = 'smem constant byte address 0x4 - core index']
  #allocation1 [shape = 'u32[144,128]{1,0:T(1,128)}', space=vmem, size = 0x12000, scoped, tag = 'internal scratch']
  #allocation2 [shape = 'f32[24,128]{1,0:T(8,128)}', space=vmem, size = 0x3000, scoped, tag = 'scratch operand']
  %s0 = inlined_call_operand.vmem [shape: bf16[24,128], index: 0, kind: input, shape index: {}]
  %s1 = inlined_call_operand.vmem [shape: bf16[128,128], index: 1, kind: input, shape index: {}]
  %s2 = inlined_call_operand.vmem [shape: f32[1,128], index: 2, kind: input, shape index: {}]
  %s3 = inlined_call_operand.vmem [shape: f32[1,128], index: 3, kind: input, shape index: {}]
  %s4 = inlined_call_operand.vmem [shape: bf16[24,128], index: 4, kind: output, shape index: {}]
  %s5 = sld [smem:[#allocation0]]
  $region34: #{pcb_test_forward.64} parent=0
    _
  %s7 = ssub.s32 1, %s5
  %s8 = scalar_select 0, %s7, %s5
  // Predicated region
  $region2: #{pcb_test_forward.64} parent=0 // pred_check
    _
  $region3: #{pcb_test_forward.64} parent=0 // pred_check_branch
    %10 = sbr.rel (0) target = $region5
  $region4: #{pcb_test_forward.64} parent=0 // pred_region
    _
  $region5: #{pcb_test_forward.64} parent=0 // pred_fallthru
    _
  // Predicated region
  $region6: #{pcb_test_forward.64} parent=0 // pred_check
    _
  $region7: #{pcb_test_forward.64} parent=0 // pred_check_branch
    %12 = sbr.rel (0) target = $region9
  $region8: #{pcb_test_forward.64} parent=0 // pred_region
    _
  $region9: #{pcb_test_forward.64} parent=0 // pred_fallthru
    _
  // Predicated region
  $region10: #{pcb_test_forward.64} parent=0 // pred_check
    _
  $region11: #{pcb_test_forward.64} parent=0 // pred_check_branch
    %14 = sbr.rel (0) target = $region13
  $region12: #{pcb_test_forward.64} parent=0 // pred_region
    _
  $region13: #{pcb_test_forward.64} parent=0 // pred_fallthru
    _
  // Predicated region
  $region14: #{pcb_test_forward.64} parent=0 // pred_check
    _
  $region15: #{pcb_test_forward.64} parent=0 // pred_check_branch
    %16 = sbr.rel (0) target = $region17
  $region16: #{pcb_test_forward.64} parent=0 // pred_region
    _
  $region17: #{pcb_test_forward.64} parent=0 // pred_fallthru
    _
  %p18 = scmp.eq.s32.totalorder 0, 0
  // Predicated region
  $region18: #{pcb_test_forward.64} parent=0 // pred_check
    %p19 = pneg %p18
  $region19: #{pcb_test_forward.64} parent=0 // pred_check_branch
    %21 = sbr.rel (%p19) target = $region21
  $region20: #{pcb_test_forward.64} parent=0 // pred_region
    %22 = vst [vmem:[#allocation2] sm:$0xff] 0.0
    %23 = vst [vmem:[#allocation2 + $0x8] sm:$0xff] 0.0
    %24 = vst [vmem:[#allocation2 + $0x10] sm:$0xff] 0.0
  $region21: #{pcb_test_forward.64} parent=0 // pred_fallthru
    _
  %v25 = vld [vmem:[#allocation2] sm:$0xff]
  %v26 = vld [vmem:[#allocation2 + $0x8] sm:$0xff]
  %v27 = vld [vmem:[#allocation2 + $0x10] sm:$0xff]
  %v28 = vld [vmem:[%s0] sm:$0xf]
  %v29 = vld [vmem:[%s0 + $0x4] sm:$0xf]
  %v30 = vld [vmem:[%s0 + $0x8] sm:$0xf]
  %v31 = vld [vmem:[%s1] sm:$0xf]
  %v32 = vld [vmem:[%s1 + $0x4] sm:$0xf]
  %v33 = vld [vmem:[%s1 + $0x8] sm:$0xf]
  %v34 = vld [vmem:[%s1 + $0xc] sm:$0xf]
  %v35 = vld [vmem:[%s1 + $0x10] sm:$0xf]
  %v36 = vld [vmem:[%s1 + $0x14] sm:$0xf]
  %v37 = vld [vmem:[%s1 + $0x18] sm:$0xf]
  %v38 = vld [vmem:[%s1 + $0x1c] sm:$0xf]
  %v39 = vld [vmem:[%s1 + $0x20] sm:$0xf]
  %v40 = vld [vmem:[%s1 + $0x24] sm:$0xf]
  %v41 = vld [vmem:[%s1 + $0x28] sm:$0xf]
  %v42 = vld [vmem:[%s1 + $0x2c] sm:$0xf]
  %v43 = vld [vmem:[%s1 + $0x30] sm:$0xf]
  %v44 = vld [vmem:[%s1 + $0x34] sm:$0xf]
  %v45 = vld [vmem:[%s1 + $0x38] sm:$0xf]
  %v46 = vld [vmem:[%s1 + $0x3c] sm:$0xf]
  %v50 = vunpack.c.l.b16 %v28
  %v51 = vunpack.c.l.b16 %v29
  %v52 = vunpack.c.l.b16 %v30
  %v53 = vpack.c.b16 %v51, %v50
  %v54 = vpack.c.b16 %v52, %v52
  %v73 = vunpack.c.l.b16 %v31
  %v74 = vunpack.c.l.b16 %v32
  %v75 = vunpack.c.l.b16 %v33
  %v76 = vunpack.c.l.b16 %v34
  %v77 = vunpack.c.l.b16 %v35
  %v78 = vunpack.c.l.b16 %v36
  %v79 = vunpack.c.l.b16 %v37
  %v80 = vunpack.c.l.b16 %v38
  %v81 = vunpack.c.l.b16 %v39
  %v82 = vunpack.c.l.b16 %v40
  %v83 = vunpack.c.l.b16 %v41
  %v84 = vunpack.c.l.b16 %v42
  %v85 = vunpack.c.l.b16 %v43
  %v86 = vunpack.c.l.b16 %v44
  %v87 = vunpack.c.l.b16 %v45
  %v88 = vunpack.c.l.b16 %v46
  %v89 = vpack.c.b16 %v74, %v73
  %v90 = vpack.c.b16 %v76, %v75
  %v91 = vpack.c.b16 %v78, %v77
  %v92 = vpack.c.b16 %v80, %v79
  %v93 = vpack.c.b16 %v82, %v81
  %v94 = vpack.c.b16 %v84, %v83
  %v95 = vpack.c.b16 %v86, %v85
  %v96 = vpack.c.b16 %v88, %v87
  %105 = vmatprep.subr.bf16.mxu0 0
  %106 = vmatpush1.bf16.msra.mxu0 %v89
  %107 = vmatprep.subr.bf16.mxu0 0
  %108 = vmatpush1.bf16.msra.mxu0 %v90
  %109 = vmatprep.subr.bf16.mxu0 0
  %110 = vmatpush1.bf16.msra.mxu0 %v91
  %111 = vmatprep.subr.bf16.mxu0 0
  %112 = vmatpush1.bf16.msra.mxu0 %v92
  %113 = vmatprep.subr.bf16.mxu0 0
  %114 = vmatpush1.bf16.msra.mxu0 %v93
  %115 = vmatprep.subr.bf16.mxu0 0
  %116 = vmatpush1.bf16.msra.mxu0 %v94
  %117 = vmatprep.subr.bf16.mxu0 0
  %118 = vmatpush1.bf16.msra.mxu0 %v95
  %119 = vmatprep.subr.bf16.mxu0 0
  %120 = vmatpush1.bf16.msra.mxu0 %v96
  %121 = vmatprep.subr.bf16.mxu0 0
  %122 = vmatpush1.bf16.msra.mxu0 0
  %123 = vmatprep.subr.bf16.mxu0 0
  %124 = vmatpush1.bf16.msra.mxu0 0
  %125 = vmatprep.subr.bf16.mxu0 0
  %126 = vmatpush1.bf16.msra.mxu0 0
  %127 = vmatprep.subr.bf16.mxu0 0
  %128 = vmatpush1.bf16.msra.mxu0 0
  %129 = vmatprep.subr.bf16.mxu0 0
  %130 = vmatpush1.bf16.msra.mxu0 0
  %131 = vmatprep.subr.bf16.mxu0 0
  %132 = vmatpush1.bf16.msra.mxu0 0
  %133 = vmatprep.subr.bf16.mxu0 0
  %134 = vmatpush1.bf16.msra.mxu0 0
  %135 = vmatprep.subr.bf16.mxu0 0
  %136 = vmatpush1.bf16.msra.mxu0 0
  %137 = vmatprep.mubr.bf16.mxu0 0
  %138 = vmatmul.mubr.bf16.gmra.mrb[0].mxu0 %v53
  %v139 = vpop.f32.mrb[0].mxu0
  %v140 = vadd.f32 0.0, %v139
  %v141 = vpop.f32.mrb[0].mxu0
  %v142 = vpop.f32.mrb[0].mxu0
  %v143 = vadd.f32 0.0, %v142
  %v144 = vpop.f32.mrb[0].mxu0
  %145 = vmatprep.mubr.bf16.mxu0 0
  %146 = vmatmul.mubr.bf16.gmra.mrb[0].mxu0 %v54
  %v147 = vpop.f32.mrb[0].mxu0
  %v148 = vadd.f32 0.0, %v147
  %v149 = vpop.f32.mrb[0].mxu0
  %v150 = vpop.f32.mrb[0].mxu0
  %v151 = vpop.f32.mrb[0].mxu0
  %152 = vdwg.mxu0
  %v153 = vadd.f32 %v25, %v140
  %v154 = vadd.f32 %v26, %v143
  %v155 = vadd.f32 %v27, %v148
  %156 = vst [vmem:[#allocation2] sm:$0xff] %v153
  %157 = vst [vmem:[#allocation2 + $0x8] sm:$0xff] %v154
  %158 = vst [vmem:[#allocation2 + $0x10] sm:$0xff] %v155
  // Predicated region
  $region22: #{pcb_test_forward.64} parent=0 // pred_check
    %p159 = pneg %p18
  $region23: #{pcb_test_forward.64} parent=0 // pred_check_branch
    %161 = sbr.rel (%p159) target = $region25
  $region24: #{pcb_test_forward.64} parent=0 // pred_region
    %v162 = vld [vmem:[#allocation2] sm:$0xff]
    %v163 = vld [vmem:[#allocation2 + $0x8] sm:$0xff]
    %v164 = vld [vmem:[#allocation2 + $0x10] sm:$0xff]
    %v165 = vld [vmem:[%s2] sm:$0x1]
    %v167 = vlaneseq
    %v168 = vshrl.u32 %v167, 7
    %v169 = vsub.s32 0, %v168
    %v170 = vrot.slane %v165, %v169
    %v172 = vmul.f32 %v162, %v170
    %v173 = vmul.f32 %v163, %v170
    %v174 = vmul.f32 %v164, %v170
    %v175 = vld [vmem:[%s3] sm:$0x1]
    %v177 = vlaneseq
    %v178 = vshrl.u32 %v177, 7
    %v179 = vsub.s32 0, %v178
    %v180 = vrot.slane %v175, %v179
    %v182 = vadd.f32 %v172, %v180
    %v183 = vadd.f32 %v173, %v180
    %v184 = vadd.f32 %v174, %v180
    %v185 = vpack.c.bf16 %v183, %v182
    %v186 = vpack.c.bf16 %v184, %v184
    %v189 = vunpack.c.l.b16 %v185
    %v190 = vunpack.c.h.b16 %v185
    %v191 = vunpack.c.l.b16 %v186
    %v192 = vpack.c.b16 %v189, %v189
    %v193 = vpack.c.b16 %v190, %v190
    %v194 = vpack.c.b16 %v191, %v191
    %198 = vst [vmem:[%s4] sm:$0xf] %v192
    %199 = vst [vmem:[%s4 + $0x4] sm:$0xf] %v193
    %200 = vst [vmem:[%s4 + $0x8] sm:$0xf] %v194
  $region25: #{pcb_test_forward.64} parent=0 // pred_fallthru
    _
  // Predicated region
  $region26: #{pcb_test_forward.64} parent=0 // pred_check
    _
  $region27: #{pcb_test_forward.64} parent=0 // pred_check_branch
    %202 = sbr.rel (0) target = $region29
  $region28: #{pcb_test_forward.64} parent=0 // pred_region
    _
  $region29: #{pcb_test_forward.64} parent=0 // pred_fallthru
    _
  // Predicated region
  $region30: #{pcb_test_forward.64} parent=0 // pred_check
    _
  $region31: #{pcb_test_forward.64} parent=0 // pred_check_branch
    %204 = sbr.rel (0) target = $region33
  $region32: #{pcb_test_forward.64} parent=0 // pred_region
    _
  $region33: #{pcb_test_forward.64} parent=0 // pred_fallthru
    _

// kernel: pcb_test_forward.66
$region0: #{pcb_test_forward.66}
  #allocation0 [shape = 'u32[]', space=smem, size = 0x4, offset = 0x4, fixed_abs, tag = 'smem constant byte address 0x4 - core index']
  #allocation1 [shape = 'u32[144,128]{1,0:T(1,128)}', space=vmem, size = 0x12000, scoped, tag = 'internal scratch']
  #allocation2 [shape = 'f32[24,128]{1,0:T(8,128)}', space=vmem, size = 0x3000, scoped, tag = 'scratch operand']
  %s0 = inlined_call_operand.vmem [shape: bf16[24,128], index: 0, kind: input, shape index: {}]
  %s1 = inlined_call_operand.vmem [shape: bf16[128,128], index: 1, kind: input, shape index: {}]
  %s2 = inlined_call_operand.vmem [shape: f32[1,128], index: 2, kind: input, shape index: {}]
  %s3 = inlined_call_operand.vmem [shape: f32[1,128], index: 3, kind: input, shape index: {}]
  %s4 = inlined_call_operand.vmem [shape: bf16[24,128], index: 4, kind: input, shape index: {}]
  %s5 = inlined_call_operand.vmem [shape: bf16[24,128], index: 5, kind: output, shape index: {}]
  %s6 = sld [smem:[#allocation0]]
  $region38: #{pcb_test_forward.66} parent=0
    _
  %s8 = ssub.s32 1, %s6
  %s9 = scalar_select 0, %s8, %s6
  // Predicated region
  $region2: #{pcb_test_forward.66} parent=0 // pred_check
    _
  $region3: #{pcb_test_forward.66} parent=0 // pred_check_branch
    %11 = sbr.rel (0) target = $region5
  $region4: #{pcb_test_forward.66} parent=0 // pred_region
    _
  $region5: #{pcb_test_forward.66} parent=0 // pred_fallthru
    _
  // Predicated region
  $region6: #{pcb_test_forward.66} parent=0 // pred_check
    _
  $region7: #{pcb_test_forward.66} parent=0 // pred_check_branch
    %13 = sbr.rel (0) target = $region9
  $region8: #{pcb_test_forward.66} parent=0 // pred_region
    _
  $region9: #{pcb_test_forward.66} parent=0 // pred_fallthru
    _
  // Predicated region
  $region10: #{pcb_test_forward.66} parent=0 // pred_check
    _
  $region11: #{pcb_test_forward.66} parent=0 // pred_check_branch
    %15 = sbr.rel (0) target = $region13
  $region12: #{pcb_test_forward.66} parent=0 // pred_region
    _
  $region13: #{pcb_test_forward.66} parent=0 // pred_fallthru
    _
  // Predicated region
  $region14: #{pcb_test_forward.66} parent=0 // pred_check
    _
  $region15: #{pcb_test_forward.66} parent=0 // pred_check_branch
    %17 = sbr.rel (0) target = $region17
  $region16: #{pcb_test_forward.66} parent=0 // pred_region
    _
  $region17: #{pcb_test_forward.66} parent=0 // pred_fallthru
    _
  // Predicated region
  $region18: #{pcb_test_forward.66} parent=0 // pred_check
    _
  $region19: #{pcb_test_forward.66} parent=0 // pred_check_branch
    %19 = sbr.rel (0) target = $region21
  $region20: #{pcb_test_forward.66} parent=0 // pred_region
    _
  $region21: #{pcb_test_forward.66} parent=0 // pred_fallthru
    _
  %p21 = scmp.eq.s32.totalorder 0, 0
  // Predicated region
  $region22: #{pcb_test_forward.66} parent=0 // pred_check
    %p22 = pneg %p21
  $region23: #{pcb_test_forward.66} parent=0 // pred_check_branch
    %24 = sbr.rel (%p22) target = $region25
  $region24: #{pcb_test_forward.66} parent=0 // pred_region
    %25 = vst [vmem:[#allocation2] sm:$0xff] 0.0
    %26 = vst [vmem:[#allocation2 + $0x8] sm:$0xff] 0.0
    %27 = vst [vmem:[#allocation2 + $0x10] sm:$0xff] 0.0
  $region25: #{pcb_test_forward.66} parent=0 // pred_fallthru
    _
  %v28 = vld [vmem:[#allocation2] sm:$0xff]
  %v29 = vld [vmem:[#allocation2 + $0x8] sm:$0xff]
  %v30 = vld [vmem:[#allocation2 + $0x10] sm:$0xff]
  %v31 = vld [vmem:[%s0] sm:$0xf]
  %v32 = vld [vmem:[%s0 + $0x4] sm:$0xf]
  %v33 = vld [vmem:[%s0 + $0x8] sm:$0xf]
  %v34 = vld [vmem:[%s1] sm:$0xf]
  %v35 = vld [vmem:[%s1 + $0x4] sm:$0xf]
  %v36 = vld [vmem:[%s1 + $0x8] sm:$0xf]
  %v37 = vld [vmem:[%s1 + $0xc] sm:$0xf]
  %v38 = vld [vmem:[%s1 + $0x10] sm:$0xf]
  %v39 = vld [vmem:[%s1 + $0x14] sm:$0xf]
  %v40 = vld [vmem:[%s1 + $0x18] sm:$0xf]
  %v41 = vld [vmem:[%s1 + $0x1c] sm:$0xf]
  %v42 = vld [vmem:[%s1 + $0x20] sm:$0xf]
  %v43 = vld [vmem:[%s1 + $0x24] sm:$0xf]
  %v44 = vld [vmem:[%s1 + $0x28] sm:$0xf]
  %v45 = vld [vmem:[%s1 + $0x2c] sm:$0xf]
  %v46 = vld [vmem:[%s1 + $0x30] sm:$0xf]
  %v47 = vld [vmem:[%s1 + $0x34] sm:$0xf]
  %v48 = vld [vmem:[%s1 + $0x38] sm:$0xf]
  %v49 = vld [vmem:[%s1 + $0x3c] sm:$0xf]
  %v53 = vunpack.c.l.b16 %v31
  %v54 = vunpack.c.l.b16 %v32
  %v55 = vunpack.c.l.b16 %v33
  %v56 = vpack.c.b16 %v54, %v53
  %v57 = vpack.c.b16 %v55, %v55
  %v76 = vunpack.c.l.b16 %v34
  %v77 = vunpack.c.l.b16 %v35
  %v78 = vunpack.c.l.b16 %v36
  %v79 = vunpack.c.l.b16 %v37
  %v80 = vunpack.c.l.b16 %v38
  %v81 = vunpack.c.l.b16 %v39
  %v82 = vunpack.c.l.b16 %v40
  %v83 = vunpack.c.l.b16 %v41
  %v84 = vunpack.c.l.b16 %v42
  %v85 = vunpack.c.l.b16 %v43
  %v86 = vunpack.c.l.b16 %v44
  %v87 = vunpack.c.l.b16 %v45
  %v88 = vunpack.c.l.b16 %v46
  %v89 = vunpack.c.l.b16 %v47
  %v90 = vunpack.c.l.b16 %v48
  %v91 = vunpack.c.l.b16 %v49
  %v92 = vpack.c.b16 %v77, %v76
  %v93 = vpack.c.b16 %v79, %v78
  %v94 = vpack.c.b16 %v81, %v80
  %v95 = vpack.c.b16 %v83, %v82
  %v96 = vpack.c.b16 %v85, %v84
  %v97 = vpack.c.b16 %v87, %v86
  %v98 = vpack.c.b16 %v89, %v88
  %v99 = vpack.c.b16 %v91, %v90
  %108 = vmatprep.subr.bf16.mxu0 0
  %109 = vmatpush1.bf16.msra.mxu0 %v92
  %110 = vmatprep.subr.bf16.mxu0 0
  %111 = vmatpush1.bf16.msra.mxu0 %v93
  %112 = vmatprep.subr.bf16.mxu0 0
  %113 = vmatpush1.bf16.msra.mxu0 %v94
  %114 = vmatprep.subr.bf16.mxu0 0
  %115 = vmatpush1.bf16.msra.mxu0 %v95
  %116 = vmatprep.subr.bf16.mxu0 0
  %117 = vmatpush1.bf16.msra.mxu0 %v96
  %118 = vmatprep.subr.bf16.mxu0 0
  %119 = vmatpush1.bf16.msra.mxu0 %v97
  %120 = vmatprep.subr.bf16.mxu0 0
  %121 = vmatpush1.bf16.msra.mxu0 %v98
  %122 = vmatprep.subr.bf16.mxu0 0
  %123 = vmatpush1.bf16.msra.mxu0 %v99
  %124 = vmatprep.subr.bf16.mxu0 0
  %125 = vmatpush1.bf16.msra.mxu0 0
  %126 = vmatprep.subr.bf16.mxu0 0
  %127 = vmatpush1.bf16.msra.mxu0 0
  %128 = vmatprep.subr.bf16.mxu0 0
  %129 = vmatpush1.bf16.msra.mxu0 0
  %130 = vmatprep.subr.bf16.mxu0 0
  %131 = vmatpush1.bf16.msra.mxu0 0
  %132 = vmatprep.subr.bf16.mxu0 0
  %133 = vmatpush1.bf16.msra.mxu0 0
  %134 = vmatprep.subr.bf16.mxu0 0
  %135 = vmatpush1.bf16.msra.mxu0 0
  %136 = vmatprep.subr.bf16.mxu0 0
  %137 = vmatpush1.bf16.msra.mxu0 0
  %138 = vmatprep.subr.bf16.mxu0 0
  %139 = vmatpush1.bf16.msra.mxu0 0
  %140 = vmatprep.mubr.bf16.mxu0 0
  %141 = vmatmul.mubr.bf16.gmra.mrb[0].mxu0 %v56
  %v142 = vpop.f32.mrb[0].mxu0
  %v143 = vadd.f32 0.0, %v142
  %v144 = vpop.f32.mrb[0].mxu0
  %v145 = vpop.f32.mrb[0].mxu0
  %v146 = vadd.f32 0.0, %v145
  %v147 = vpop.f32.mrb[0].mxu0
  %148 = vmatprep.mubr.bf16.mxu0 0
  %149 = vmatmul.mubr.bf16.gmra.mrb[0].mxu0 %v57
  %v150 = vpop.f32.mrb[0].mxu0
  %v151 = vadd.f32 0.0, %v150
  %v152 = vpop.f32.mrb[0].mxu0
  %v153 = vpop.f32.mrb[0].mxu0
  %v154 = vpop.f32.mrb[0].mxu0
  %155 = vdwg.mxu0
  %v156 = vadd.f32 %v28, %v143
  %v157 = vadd.f32 %v29, %v146
  %v158 = vadd.f32 %v30, %v151
  %159 = vst [vmem:[#allocation2] sm:$0xff] %v156
  %160 = vst [vmem:[#allocation2 + $0x8] sm:$0xff] %v157
  %161 = vst [vmem:[#allocation2 + $0x10] sm:$0xff] %v158
  // Predicated region
  $region26: #{pcb_test_forward.66} parent=0 // pred_check
    %p162 = pneg %p21
  $region27: #{pcb_test_forward.66} parent=0 // pred_check_branch
    %164 = sbr.rel (%p162) target = $region29
  $region28: #{pcb_test_forward.66} parent=0 // pred_region
    %v165 = vld [vmem:[#allocation2] sm:$0xff]
    %v166 = vld [vmem:[#allocation2 + $0x8] sm:$0xff]
    %v167 = vld [vmem:[#allocation2 + $0x10] sm:$0xff]
    %v168 = vld [vmem:[%s2] sm:$0x1]
    %v170 = vlaneseq
    %v171 = vshrl.u32 %v170, 7
    %v172 = vsub.s32 0, %v171
    %v173 = vrot.slane %v168, %v172
    %v175 = vmul.f32 %v165, %v173
    %v176 = vmul.f32 %v166, %v173
    %v177 = vmul.f32 %v167, %v173
    %v178 = vld [vmem:[%s3] sm:$0x1]
    %v180 = vlaneseq
    %v181 = vshrl.u32 %v180, 7
    %v182 = vsub.s32 0, %v181
    %v183 = vrot.slane %v178, %v182
    %v185 = vadd.f32 %v175, %v183
    %v186 = vadd.f32 %v176, %v183
    %v187 = vadd.f32 %v177, %v183
    %v188 = vld [vmem:[%s4] sm:$0xf]
    %v189 = vld [vmem:[%s4 + $0x4] sm:$0xf]
    %v190 = vld [vmem:[%s4 + $0x8] sm:$0xf]
    %v191 = vunpack.c.l.bf16 %v188
    %v192 = vunpack.c.l.bf16 %v189
    %v193 = vunpack.c.l.bf16 %v190
    %v194 = vadd.f32 %v185, %v191
    %v195 = vadd.f32 %v186, %v192
    %v196 = vadd.f32 %v187, %v193
    %v197 = vmax.f32 %v194, 0.0
    %v198 = vmax.f32 %v195, 0.0
    %v199 = vmax.f32 %v196, 0.0
    %v200 = vpack.c.bf16 %v198, %v197
    %v201 = vpack.c.bf16 %v199, %v199
    %v204 = vunpack.c.l.b16 %v200
    %v205 = vunpack.c.h.b16 %v200
    %v206 = vunpack.c.l.b16 %v201
    %v207 = vpack.c.b16 %v204, %v204
    %v208 = vpack.c.b16 %v205, %v205
    %v209 = vpack.c.b16 %v206, %v206
    %213 = vst [vmem:[%s5] sm:$0xf] %v207
    %214 = vst [vmem:[%s5 + $0x4] sm:$0xf] %v208
    %215 = vst [vmem:[%s5 + $0x8] sm:$0xf] %v209
  $region29: #{pcb_test_forward.66} parent=0 // pred_fallthru
    _
  // Predicated region
  $region30: #{pcb_test_forward.66} parent=0 // pred_check
    _
  $region31: #{pcb_test_forward.66} parent=0 // pred_check_branch
    %217 = sbr.rel (0) target = $region33
  $region32: #{pcb_test_forward.66} parent=0 // pred_region
    _
  $region33: #{pcb_test_forward.66} parent=0 // pred_fallthru
    _
  // Predicated region
  $region34: #{pcb_test_forward.66} parent=0 // pred_check
    _
  $region35: #{pcb_test_forward.66} parent=0 // pred_check_branch
    %219 = sbr.rel (0) target = $region37
  $region36: #{pcb_test_forward.66} parent=0 // pred_region
    _
  $region37: #{pcb_test_forward.66} parent=0 // pred_fallthru
    _

// kernel: pcb_test_forward.65
$region0: #{pcb_test_forward.65}
  #allocation0 [shape = 'u32[]', space=smem, size = 0x4, offset = 0x4, fixed_abs, tag = 'smem constant byte address 0x4 - core index']
  #allocation1 [shape = 'u32[144,128]{1,0:T(1,128)}', space=vmem, size = 0x12000, scoped, tag = 'internal scratch']
  #allocation2 [shape = 'f32[24,128]{1,0:T(8,128)}', space=vmem, size = 0x3000, scoped, tag = 'scratch operand']
  %s0 = inlined_call_operand.vmem [shape: bf16[24,1152], index: 0, kind: input, shape index: {}]
  %s1 = inlined_call_operand.vmem [shape: bf16[1152,128], index: 1, kind: input, shape index: {}]
  %s2 = inlined_call_operand.vmem [shape: f32[1,128], index: 2, kind: input, shape index: {}]
  %s3 = inlined_call_operand.vmem [shape: f32[1,128], index: 3, kind: input, shape index: {}]
  %s4 = inlined_call_operand.vmem [shape: bf16[24,128], index: 4, kind: output, shape index: {}]
  %s5 = sld [smem:[#allocation0]]
  $region83: #{pcb_test_forward.65} parent=0
    _
  %s7 = ssub.s32 1, %s5
  %s8 = scalar_select 0, %s7, %s5
  $region1: #{pcb_test_forward.65} parent=0
    #allocation3 [shape = 'u8[36864]{0}', space=vmem, size = 0x9000, scoped, tag = 'input window, operand 0']
    loop: start=0, step=1, limit=5
    $region2: #{pcb_test_forward.65} parent=1 // loop_pre_header
      _
    $region3: #{pcb_test_forward.65} parent=1 // loop_header
      %s10 = sphi 0, %s14
      %p11 = scmp.ge.s32.totalorder %s10, 5
      %s17 = sphi 0, %s36
      %s18 = sphi 0, %s32
      %s19 = sphi 0, %s28
      %s20 = sphi 0, %s17
      %s21 = sphi 0, %s18
      %s22 = sphi 0, %s19
      %s23 = sphi 0, %s20
      %s24 = sphi 0, %s21
      %s25 = sphi 0, %s22
      %s41 = sphi 0, %s43
      %s44 = sphi 0, %s41
      %s45 = sphi 0, %s44
      %s61 = sphi 0, %s45
      %s69 = sphi 0, %s71
      %s72 = sphi 0, %s69
      %s73 = sphi 0, %s72
      %s89 = sphi 0, %s73
      %s95 = sphi 0, %s97
      %s98 = sphi 0, %s95
      %s99 = sphi 0, %s98
      %s115 = sphi 0, %s99
      %s121 = sphi 0, %s123
      %s124 = sphi 0, %s121
      %s125 = sphi 0, %s124
      %s141 = sphi 0, %s125
      %s149 = sphi 0, %s151
      %s152 = sphi 0, %s149
      %s153 = sphi 0, %s152
      %s169 = sphi 0, %s153
    $region4: #{pcb_test_forward.65} parent=1 // loop_header_branch
      %13 = sbr.rel (%p11) target = $region8
    $region5: #{pcb_test_forward.65} parent=1 // loop_body
      %s15 = ssub.s32 %s10, 1
      %s16 = ssub.s32 %s10, 2
      %s26 = sadd.s32 1, %s19
      %p27 = scmp.ge.s32.totalorder %s26, 3
      %s28 = scalar_select %p27, 0, %s26
      %s29 = sadd.s32 1, %s18
      %s30 = scalar_select %p27, %s29, %s18
      %p31 = scmp.ge.s32.totalorder %s30, 1
      %s32 = scalar_select %p31, 0, %s30
      %s33 = sadd.s32 1, %s17
      %s34 = scalar_select %p31, %s33, %s17
      %p35 = scmp.ge.s32.totalorder %s34, 1
      %s36 = scalar_select %p35, 0, %s34
      %s37 = ssub.s32 %s17, %s36
      %s38 = ssub.s32 %s19, %s28
      %s39 = sor.u32 %s37, %s38
      %p40 = scmp.eq.s32.totalorder %s39, 0
      %s42 = sadd.s32 %s41, 1
      %s43 = scalar_select %p40, %s41, %s42
      %p46 = pneg %p40
      %p47 = scmp.eq.s32.totalorder %s10, 2
      %p48 = por %p46, %p47
      %p49 = scmp.ne.s32.totalorder %s41, %s44
      %p50 = scmp.eq.s32.totalorder %s10, 0
      %p51 = por %p49, %p50
      %p52 = scmp.ne.s32.totalorder %s41, %s44
      %p53 = scmp.eq.s32.totalorder %s15, 2
      %p54 = por %p52, %p53
      %p55 = scmp.ne.s32.totalorder %s44, %s45
      %p56 = scmp.eq.s32.totalorder %s15, 0
      %p57 = por %p55, %p56
      %p58 = scmp.ne.s32.totalorder %s44, %s45
      %p59 = scmp.eq.s32.totalorder %s16, 2
      %p60 = por %p58, %p59
      %p62 = scmp.ne.s32.totalorder %s45, %s61
      %p63 = scmp.eq.s32.totalorder %s16, 0
      %p64 = por %p62, %p63
      %s65 = ssub.s32 %s19, %s28
      %s66 = ssub.s32 %s18, %s32
      %s67 = sor.u32 %s65, %s66
      %p68 = scmp.eq.s32.totalorder %s67, 0
      %s70 = sadd.s32 %s69, 1
      %s71 = scalar_select %p68, %s69, %s70
      %p74 = pneg %p68
      %p75 = scmp.eq.s32.totalorder %s10, 2
      %p76 = por %p74, %p75
      %p77 = scmp.ne.s32.totalorder %s69, %s72
      %p78 = scmp.eq.s32.totalorder %s10, 0
      %p79 = por %p77, %p78
      %p80 = scmp.ne.s32.totalorder %s69, %s72
      %p81 = scmp.eq.s32.totalorder %s15, 2
      %p82 = por %p80, %p81
      %p83 = scmp.ne.s32.totalorder %s72, %s73
      %p84 = scmp.eq.s32.totalorder %s15, 0
      %p85 = por %p83, %p84
      %p86 = scmp.ne.s32.totalorder %s72, %s73
      %p87 = scmp.eq.s32.totalorder %s16, 2
      %p88 = por %p86, %p87
      %p90 = scmp.ne.s32.totalorder %s73, %s89
      %p91 = scmp.eq.s32.totalorder %s16, 0
      %p92 = por %p90, %p91
      %s93 = ssub.s32 %s18, %s32
      %p94 = scmp.eq.s32.totalorder %s93, 0
      %s96 = sadd.s32 %s95, 1
      %s97 = scalar_select %p94, %s95, %s96
      %p100 = pneg %p94
      %p101 = scmp.eq.s32.totalorder %s10, 2
      %p102 = por %p100, %p101
      %p103 = scmp.ne.s32.totalorder %s95, %s98
      %p104 = scmp.eq.s32.totalorder %s10, 0
      %p105 = por %p103, %p104
      %p106 = scmp.ne.s32.totalorder %s95, %s98
      %p107 = scmp.eq.s32.totalorder %s15, 2
      %p108 = por %p106, %p107
      %p109 = scmp.ne.s32.totalorder %s98, %s99
      %p110 = scmp.eq.s32.totalorder %s15, 0
      %p111 = por %p109, %p110
      %p112 = scmp.ne.s32.totalorder %s98, %s99
      %p113 = scmp.eq.s32.totalorder %s16, 2
      %p114 = por %p112, %p113
      %p116 = scmp.ne.s32.totalorder %s99, %s115
      %p117 = scmp.eq.s32.totalorder %s16, 0
      %p118 = por %p116, %p117
      %s119 = ssub.s32 %s18, %s32
      %p120 = scmp.eq.s32.totalorder %s119, 0
      %s122 = sadd.s32 %s121, 1
      %s123 = scalar_select %p120, %s121, %s122
      %p126 = pneg %p120
      %p127 = scmp.eq.s32.totalorder %s10, 2
      %p128 = por %p126, %p127
      %p129 = scmp.ne.s32.totalorder %s121, %s124
      %p130 = scmp.eq.s32.totalorder %s10, 0
      %p131 = por %p129, %p130
      %p132 = scmp.ne.s32.totalorder %s121, %s124
      %p133 = scmp.eq.s32.totalorder %s15, 2
      %p134 = por %p132, %p133
      %p135 = scmp.ne.s32.totalorder %s124, %s125
      %p136 = scmp.eq.s32.totalorder %s15, 0
      %p137 = por %p135, %p136
      %p138 = scmp.ne.s32.totalorder %s124, %s125
      %p139 = scmp.eq.s32.totalorder %s16, 2
      %p140 = por %p138, %p139
      %p142 = scmp.ne.s32.totalorder %s125, %s141
      %p143 = scmp.eq.s32.totalorder %s16, 0
      %p144 = por %p142, %p143
      %s145 = ssub.s32 %s17, %s36
      %s146 = ssub.s32 %s18, %s32
      %s147 = sor.u32 %s145, %s146
      %p148 = scmp.eq.s32.totalorder %s147, 0
      %s150 = sadd.s32 %s149, 1
      %s151 = scalar_select %p148, %s149, %s150
      %p154 = pneg %p148
      %p155 = scmp.eq.s32.totalorder %s10, 2
      %p156 = por %p154, %p155
      %p157 = scmp.ne.s32.totalorder %s149, %s152
      %p158 = scmp.eq.s32.totalorder %s10, 0
      %p159 = por %p157, %p158
      %p160 = scmp.ne.s32.totalorder %s149, %s152
      %p161 = scmp.eq.s32.totalorder %s15, 2
      %p162 = por %p160, %p161
      %p163 = scmp.ne.s32.totalorder %s152, %s153
      %p164 = scmp.eq.s32.totalorder %s15, 0
      %p165 = por %p163, %p164
      %p166 = scmp.ne.s32.totalorder %s152, %s153
      %p167 = scmp.eq.s32.totalorder %s16, 2
      %p168 = por %p166, %p167
      %p170 = scmp.ne.s32.totalorder %s153, %s169
      %p171 = scmp.eq.s32.totalorder %s16, 0
      %p172 = por %p170, %p171
      %p173 = scmp.le.s32.totalorder 1, %s10
      %p174 = scmp.lt.s32.totalorder %s10, 4
      %p175 = pnand %p173, %p174
      %p176 = pneg %p175
      // Predicated region
      $region9: #{pcb_test_forward.65} parent=5 // pred_check
        _
      $region10: #{pcb_test_forward.65} parent=5 // pred_check_branch
        %178 = sbr.rel (%p175) target = $region12
      $region11: #{pcb_test_forward.65} parent=5 // pred_region
        %s179 = ssub.s32 %s10, 1
        // Predicated region
        $region13: #{pcb_test_forward.65} parent=11 // pred_check
          %p180 = pneg %p111
        $region14: #{pcb_test_forward.65} parent=11 // pred_check_branch
          %182 = sbr.rel (%p180) target = $region16
        $region15: #{pcb_test_forward.65} parent=11 // pred_region
          %p183 = scmp.lt.s32.totalorder %s21, 0
          %s184 = scalar_select %p183, %s21, 0
          %s185 = scalar_lea.vmem %s2, %s184
        $region16: #{pcb_test_forward.65} parent=11 // pred_fallthru
          _
        // Predicated region
        $region17: #{pcb_test_forward.65} parent=11 // pred_check
          %p186 = pneg %p137
        $region18: #{pcb_test_forward.65} parent=11 // pred_check_branch
          %188 = sbr.rel (%p186) target = $region20
        $region19: #{pcb_test_forward.65} parent=11 // pred_region
          %p189 = scmp.lt.s32.totalorder %s21, 0
          %s190 = scalar_select %p189, %s21, 0
          %s191 = scalar_lea.vmem %s3, %s190
        $region20: #{pcb_test_forward.65} parent=11 // pred_fallthru
          _
      $region12: #{pcb_test_forward.65} parent=5 // pred_fallthru
        _
      %p192 = scmp.lt.s32.totalorder %s10, 3
      // Predicated region
      $region21: #{pcb_test_forward.65} parent=5 // pred_check
        %p193 = pneg %p192
      $region22: #{pcb_test_forward.65} parent=5 // pred_check_branch
        %195 = sbr.rel (%p193) target = $region24
      $region23: #{pcb_test_forward.65} parent=5 // pred_region
        // Predicated region
        $region25: #{pcb_test_forward.65} parent=23 // pred_check
          %p196 = pneg %p51
        $region26: #{pcb_test_forward.65} parent=23 // pred_check_branch
          %198 = sbr.rel (%p196) target = $region28
        $region27: #{pcb_test_forward.65} parent=23 // pred_region
          %s199 = sand.u32 %s41, 1
          %s200 = sand.u32 %s41, 1
          %s201 = smul.addr %s200, 36
          %s202 = scalar_lea.vmem [#allocation3], %s201
          %s203 = smul.u32 3, %s17
          %s204 = smul.u32 3, %s19
          %s205 = smul.addr %s203, 9
          %s206 = sadd.s32 %s204, %s205
          %s207 = smul.addr %s206, 4
          %s208 = scalar_lea.vmem %s0, %s207
          // Predicated region
          $region29: #{pcb_test_forward.65} parent=27 // pred_check
            _
          $region30: #{pcb_test_forward.65} parent=27 // pred_check_branch
            %210 = sbr.rel (0) target = $region32
          $region31: #{pcb_test_forward.65} parent=27 // pred_region
            // Predicated region
            $region33: #{pcb_test_forward.65} parent=31 // pred_check
              _
            $region34: #{pcb_test_forward.65} parent=31 // pred_check_branch
              %212 = sbr.rel (0) target = $region36
            $region35: #{pcb_test_forward.65} parent=31 // pred_region
              %s213 = scalar_lea.vmem %s208, 8
              %s214 = scalar_lea.vmem %s202, 8 [#allocation3]
              loop: start=0, step=1, limit=1
              $region37: #{pcb_test_forward.65} parent=35 // loop_pre_header
                _
              $region38: #{pcb_test_forward.65} parent=35 // loop_header
                %s216 = sphi 0, %s220
                %p217 = scmp.ge.s32.totalorder %s216, 1
                %s221 = sphi %s208, %s208
                %s222 = sphi %s202, %s202
              $region39: #{pcb_test_forward.65} parent=35 // loop_header_branch
                %219 = sbr.rel (%p217) target = $region43
              $region40: #{pcb_test_forward.65} parent=35 // loop_body
                %v223 = vld [vmem:[%s221] sm:$0xff]
                %224 = vst [vmem:[%s222] sm:$0xff] %v223
                %v225 = vld [vmem:[%s221 + $0x24] sm:$0xff]
                %226 = vst [vmem:[%s222 + $0xc] sm:$0xff] %v225
                %v227 = vld [vmem:[%s221 + $0x48] sm:$0xff]
                %228 = vst [vmem:[%s222 + $0x18] sm:$0xff] %v227
              $region41: #{pcb_test_forward.65} parent=35 // loop_footer
                %s220 = sadd.s32 1, %s216
              $region42: #{pcb_test_forward.65} parent=35 // loop_footer_branch
                %215 = sbr.rel target = $region38
              $region43: #{pcb_test_forward.65} parent=35 // loop_exit
                _
              loop: start=0, step=1, limit=1
              $region44: #{pcb_test_forward.65} parent=35 // loop_pre_header
                _
              $region45: #{pcb_test_forward.65} parent=35 // loop_header
                %s231 = sphi 0, %s235
                %p232 = scmp.ge.s32.totalorder %s231, 1
                %s236 = sphi %s213, %s213
                %s237 = sphi %s214, %s214
              $region46: #{pcb_test_forward.65} parent=35 // loop_header_branch
                %234 = sbr.rel (%p232) target = $region50
              $region47: #{pcb_test_forward.65} parent=35 // loop_body
                %v238 = vld [vmem:[%s236] sm:$0xf]
                %239 = vst [vmem:[%s237] sm:$0xf] %v238
                %v240 = vld [vmem:[%s236 + $0x24] sm:$0xf]
                %241 = vst [vmem:[%s237 + $0xc] sm:$0xf] %v240
                %v242 = vld [vmem:[%s236 + $0x48] sm:$0xf]
                %243 = vst [vmem:[%s237 + $0x18] sm:$0xf] %v242
              $region48: #{pcb_test_forward.65} parent=35 // loop_footer
                %s235 = sadd.s32 1, %s231
              $region49: #{pcb_test_forward.65} parent=35 // loop_footer_branch
                %230 = sbr.rel target = $region45
              $region50: #{pcb_test_forward.65} parent=35 // loop_exit
                _
            $region36: #{pcb_test_forward.65} parent=31 // pred_fallthru
              _
          $region32: #{pcb_test_forward.65} parent=27 // pred_fallthru
            _
          %244 = vnop
        $region28: #{pcb_test_forward.65} parent=23 // pred_fallthru
          _
        // Predicated region
        $region51: #{pcb_test_forward.65} parent=23 // pred_check
          %p245 = pneg %p79
        $region52: #{pcb_test_forward.65} parent=23 // pred_check_branch
          %247 = sbr.rel (%p245) target = $region54
        $region53: #{pcb_test_forward.65} parent=23 // pred_region
          %s248 = smul.u32 48, %s19
          %p249 = scmp.lt.s32.totalorder %s248, 143
          %s250 = scalar_select %p249, %s248, 143
          %p251 = scmp.lt.s32.totalorder %s18, 0
          %s252 = scalar_select %p251, %s18, 0
          %s253 = sadd.s32 %s252, %s250
          %s254 = smul.addr %s253, 4
          %s255 = scalar_lea.vmem %s1, %s254
          %s256 = smul.u32 48, %s19
        $region54: #{pcb_test_forward.65} parent=23 // pred_fallthru
          _
      $region24: #{pcb_test_forward.65} parent=5 // pred_fallthru
        _
      %p257 = scmp.le.s32.totalorder 1, %s10
      %p258 = scmp.lt.s32.totalorder %s10, 4
      %p259 = pnand %p257, %p258
      %p260 = pneg %p259
      // Predicated region
      $region55: #{pcb_test_forward.65} parent=5 // pred_check
        _
      $region56: #{pcb_test_forward.65} parent=5 // pred_check_branch
        %262 = sbr.rel (%p259) target = $region58
      $region57: #{pcb_test_forward.65} parent=5 // pred_region
        %s263 = ssub.s32 %s10, 1
        %s264 = sand.u32 %s44, 1
        %s265 = sand.u32 %s44, 1
        %s266 = smul.addr %s265, 36
        %s267 = scalar_lea.vmem [#allocation3], %s266
        // Predicated region
        $region59: #{pcb_test_forward.65} parent=57 // pred_check
          %p268 = pneg %p57
        $region60: #{pcb_test_forward.65} parent=57 // pred_check_branch
          %270 = sbr.rel (%p268) target = $region62
        $region61: #{pcb_test_forward.65} parent=57 // pred_region
          _
        $region62: #{pcb_test_forward.65} parent=57 // pred_fallthru
          _
        %s271 = sand.u32 %s44, 1
        %s272 = sand.u32 %s44, 1
        %s273 = smul.addr %s272, 36
        %s274 = scalar_lea.vmem [#allocation3], %s273
        %p275 = pneg %p57
        %p276 = pneg %p54
        %s277 = smul.u32 48, %s22
        %p278 = scmp.lt.s32.totalorder %s277, 143
        %s279 = scalar_select %p278, %s277, 143
        %p280 = scmp.lt.s32.totalorder %s21, 0
        %s281 = scalar_select %p280, %s21, 0
        %s282 = sadd.s32 %s281, %s279
        %s283 = smul.addr %s282, 4
        %s284 = scalar_lea.vmem %s1, %s283
        %p285 = pneg %p85
        %p286 = pneg %p82
        %p287 = scmp.lt.s32.totalorder %s21, 0
        %s288 = scalar_select %p287, %s21, 0
        %s289 = scalar_lea.vmem %s2, %s288
        %p290 = pneg %p111
        %p291 = pneg %p108
        %p292 = scmp.lt.s32.totalorder %s21, 0
        %s293 = scalar_select %p292, %s21, 0
        %s294 = scalar_lea.vmem %s3, %s293
        %p295 = pneg %p137
        %p296 = pneg %p134
        %p297 = pneg %p165
        %p298 = pneg %p162
        %s299 = smul.u32 3, %s20
        %p300 = scmp.lt.s32.totalorder %s299, 2
        %s301 = scalar_select %p300, %s299, 2
        %p302 = scmp.lt.s32.totalorder %s21, 0
        %s303 = scalar_select %p302, %s21, 0
        %s304 = sadd.s32 %s303, %s301
        %s305 = smul.addr %s304, 4
        %s306 = scalar_lea.vmem %s4, %s305
        %s307 = smul.u32 3, %s20
        %s308 = smul.u32 3, %s22
        %s309 = smul.u32 48, %s22
        %p310 = scmp.lt.s32.totalorder %s309, 143
        %s311 = scalar_select %p310, %s309, 143
        %p312 = scmp.lt.s32.totalorder %s21, 0
        %s313 = scalar_select %p312, %s21, 0
        %s314 = sadd.s32 %s313, %s311
        %s315 = smul.addr %s314, 4
        %s316 = scalar_lea.vmem %s1, %s315
        %s317 = smul.u32 48, %s22
        %p318 = scmp.lt.s32.totalorder %s21, 0
        %s319 = scalar_select %p318, %s21, 0
        %s320 = scalar_lea.vmem %s2, %s319
        %p321 = scmp.lt.s32.totalorder %s21, 0
        %s322 = scalar_select %p321, %s21, 0
        %s323 = scalar_lea.vmem %s3, %s322
        %s324 = smul.u32 3, %s20
        %p325 = scmp.lt.s32.totalorder %s324, 2
        %s326 = scalar_select %p325, %s324, 2
        %p327 = scmp.lt.s32.totalorder %s21, 0
        %s328 = scalar_select %p327, %s21, 0
        %s329 = sadd.s32 %s328, %s326
        %s330 = smul.addr %s329, 4
        %s331 = scalar_lea.vmem %s4, %s330
        %s332 = smul.u32 3, %s20
        %p334 = scmp.eq.s32.totalorder %s22, 0
        // Predicated region
        $region63: #{pcb_test_forward.65} parent=57 // pred_check
          %p335 = pneg %p334
        $region64: #{pcb_test_forward.65} parent=57 // pred_check_branch
          %337 = sbr.rel (%p335) target = $region66
        $region65: #{pcb_test_forward.65} parent=57 // pred_region
          %338 = vst [vmem:[#allocation2] sm:$0xff] 0.0
          %339 = vst [vmem:[#allocation2 + $0x8] sm:$0xff] 0.0
          %340 = vst [vmem:[#allocation2 + $0x10] sm:$0xff] 0.0
        $region66: #{pcb_test_forward.65} parent=57 // pred_fallthru
          _
        %v341 = vld [vmem:[#allocation2] sm:$0xff]
        %v342 = vld [vmem:[#allocation2 + $0x8] sm:$0xff]
        %v343 = vld [vmem:[#allocation2 + $0x10] sm:$0xff]
        %v344 = vld [vmem:[%s267] sm:$0xff]
        %v345 = vld [vmem:[%s267 + $0x8] sm:$0xf]
        %v346 = vld [vmem:[%s267 + $0xc] sm:$0xff]
        %v347 = vld [vmem:[%s267 + $0x14] sm:$0xf]
        %v348 = vld [vmem:[%s267 + $0x18] sm:$0xff]
        %v349 = vld [vmem:[%s267 + $0x20] sm:$0xf]
        %v350 = vld [vmem:[%s316] sm:$0xf]
        %v351 = vld [vmem:[%s316 + $0x4] sm:$0xf]
        %v352 = vld [vmem:[%s316 + $0x8] sm:$0xf]
        %v353 = vld [vmem:[%s316 + $0xc] sm:$0xf]
        %v354 = vld [vmem:[%s316 + $0x10] sm:$0xf]
        %v355 = vld [vmem:[%s316 + $0x14] sm:$0xf]
        %v356 = vld [vmem:[%s316 + $0x18] sm:$0xf]
        %v357 = vld [vmem:[%s316 + $0x1c] sm:$0xf]
        %v358 = vld [vmem:[%s316 + $0x20] sm:$0xf]
        %v359 = vld [vmem:[%s316 + $0x24] sm:$0xf]
        %v360 = vld [vmem:[%s316 + $0x28] sm:$0xf]
        %v361 = vld [vmem:[%s316 + $0x2c] sm:$0xf]
        %v362 = vld [vmem:[%s316 + $0x30] sm:$0xf]
        %v363 = vld [vmem:[%s316 + $0x34] sm:$0xf]
        %v364 = vld [vmem:[%s316 + $0x38] sm:$0xf]
        %v365 = vld [vmem:[%s316 + $0x3c] sm:$0xf]
        %v366 = vld [vmem:[%s316 + $0x40] sm:$0xf]
        %v367 = vld [vmem:[%s316 + $0x44] sm:$0xf]
        %v368 = vld [vmem:[%s316 + $0x48] sm:$0xf]
        %v369 = vld [vmem:[%s316 + $0x4c] sm:$0xf]
        %v370 = vld [vmem:[%s316 + $0x50] sm:$0xf]
        %v371 = vld [vmem:[%s316 + $0x54] sm:$0xf]
        %v372 = vld [vmem:[%s316 + $0x58] sm:$0xf]
        %v373 = vld [vmem:[%s316 + $0x5c] sm:$0xf]
        %v374 = vld [vmem:[%s316 + $0x60] sm:$0xf]
        %v375 = vld [vmem:[%s316 + $0x64] sm:$0xf]
        %v376 = vld [vmem:[%s316 + $0x68] sm:$0xf]
        %v377 = vld [vmem:[%s316 + $0x6c] sm:$0xf]
        %v378 = vld [vmem:[%s316 + $0x70] sm:$0xf]
        %v379 = vld [vmem:[%s316 + $0x74] sm:$0xf]
        %v380 = vld [vmem:[%s316 + $0x78] sm:$0xf]
        %v381 = vld [vmem:[%s316 + $0x7c] sm:$0xf]
        %v382 = vld [vmem:[%s316 + $0x80] sm:$0xf]
        %v383 = vld [vmem:[%s316 + $0x84] sm:$0xf]
        %v384 = vld [vmem:[%s316 + $0x88] sm:$0xf]
        %v385 = vld [vmem:[%s316 + $0x8c] sm:$0xf]
        %v386 = vld [vmem:[%s316 + $0x90] sm:$0xf]
        %v387 = vld [vmem:[%s316 + $0x94] sm:$0xf]
        %v388 = vld [vmem:[%s316 + $0x98] sm:$0xf]
        %v389 = vld [vmem:[%s316 + $0x9c] sm:$0xf]
        %v390 = vld [vmem:[%s316 + $0xa0] sm:$0xf]
        %v391 = vld [vmem:[%s316 + $0xa4] sm:$0xf]
        %v392 = vld [vmem:[%s316 + $0xa8] sm:$0xf]
        %v393 = vld [vmem:[%s316 + $0xac] sm:$0xf]
        %v394 = vld [vmem:[%s316 + $0xb0] sm:$0xf]
        %v395 = vld [vmem:[%s316 + $0xb4] sm:$0xf]
        %v396 = vld [vmem:[%s316 + $0xb8] sm:$0xf]
        %v397 = vld [vmem:[%s316 + $0xbc] sm:$0xf]
        %v404 = vunpack.c.l.b16 %v344
        %v405 = vunpack.c.h.b16 %v344
        %v406 = vunpack.c.l.b16 %v345
        %v407 = vunpack.c.l.b16 %v346
        %v408 = vunpack.c.h.b16 %v346
        %v409 = vunpack.c.l.b16 %v347
        %v410 = vunpack.c.l.b16 %v348
        %v411 = vunpack.c.h.b16 %v348
        %v412 = vunpack.c.l.b16 %v349
        %v413 = vpack.c.b16 %v407, %v404
        %v414 = vpack.c.b16 %v408, %v405
        %v415 = vpack.c.b16 %v409, %v406
        %v416 = vpack.c.b16 %v410, %v410
        %v417 = vpack.c.b16 %v411, %v411
        %v418 = vpack.c.b16 %v412, %v412
        %v473 = vunpack.c.l.b16 %v350
        %v474 = vunpack.c.l.b16 %v351
        %v475 = vunpack.c.l.b16 %v352
        %v476 = vunpack.c.l.b16 %v353
        %v477 = vunpack.c.l.b16 %v354
        %v478 = vunpack.c.l.b16 %v355
        %v479 = vunpack.c.l.b16 %v356
        %v480 = vunpack.c.l.b16 %v357
        %v481 = vunpack.c.l.b16 %v358
        %v482 = vunpack.c.l.b16 %v359
        %v483 = vunpack.c.l.b16 %v360
        %v484 = vunpack.c.l.b16 %v361
        %v485 = vunpack.c.l.b16 %v362
        %v486 = vunpack.c.l.b16 %v363
        %v487 = vunpack.c.l.b16 %v364
        %v488 = vunpack.c.l.b16 %v365
        %v489 = vunpack.c.l.b16 %v366
        %v490 = vunpack.c.l.b16 %v367
        %v491 = vunpack.c.l.b16 %v368
        %v492 = vunpack.c.l.b16 %v369
        %v493 = vunpack.c.l.b16 %v370
        %v494 = vunpack.c.l.b16 %v371
        %v495 = vunpack.c.l.b16 %v372
        %v496 = vunpack.c.l.b16 %v373
        %v497 = vunpack.c.l.b16 %v374
        %v498 = vunpack.c.l.b16 %v375
        %v499 = vunpack.c.l.b16 %v376
        %v500 = vunpack.c.l.b16 %v377
        %v501 = vunpack.c.l.b16 %v378
        %v502 = vunpack.c.l.b16 %v379
        %v503 = vunpack.c.l.b16 %v380
        %v504 = vunpack.c.l.b16 %v381
        %v505 = vunpack.c.l.b16 %v382
        %v506 = vunpack.c.l.b16 %v383
        %v507 = vunpack.c.l.b16 %v384
        %v508 = vunpack.c.l.b16 %v385
        %v509 = vunpack.c.l.b16 %v386
        %v510 = vunpack.c.l.b16 %v387
        %v511 = vunpack.c.l.b16 %v388
        %v512 = vunpack.c.l.b16 %v389
        %v513 = vunpack.c.l.b16 %v390
        %v514 = vunpack.c.l.b16 %v391
        %v515 = vunpack.c.l.b16 %v392
        %v516 = vunpack.c.l.b16 %v393
        %v517 = vunpack.c.l.b16 %v394
        %v518 = vunpack.c.l.b16 %v395
        %v519 = vunpack.c.l.b16 %v396
        %v520 = vunpack.c.l.b16 %v397
        %v521 = vpack.c.b16 %v474, %v473
        %v522 = vpack.c.b16 %v476, %v475
        %v523 = vpack.c.b16 %v478, %v477
        %v524 = vpack.c.b16 %v480, %v479
        %v525 = vpack.c.b16 %v482, %v481
        %v526 = vpack.c.b16 %v484, %v483
        %v527 = vpack.c.b16 %v486, %v485
        %v528 = vpack.c.b16 %v488, %v487
        %v529 = vpack.c.b16 %v490, %v489
        %v530 = vpack.c.b16 %v492, %v491
        %v531 = vpack.c.b16 %v494, %v493
        %v532 = vpack.c.b16 %v496, %v495
        %v533 = vpack.c.b16 %v498, %v497
        %v534 = vpack.c.b16 %v500, %v499
        %v535 = vpack.c.b16 %v502, %v501
        %v536 = vpack.c.b16 %v504, %v503
        %v537 = vpack.c.b16 %v506, %v505
        %v538 = vpack.c.b16 %v508, %v507
        %v539 = vpack.c.b16 %v510, %v509
        %v540 = vpack.c.b16 %v512, %v511
        %v541 = vpack.c.b16 %v514, %v513
        %v542 = vpack.c.b16 %v516, %v515
        %v543 = vpack.c.b16 %v518, %v517
        %v544 = vpack.c.b16 %v520, %v519
        %569 = vmatprep.subr.bf16.mxu0 0
        %570 = vmatpush1.bf16.msra.mxu0 %v521
        %571 = vmatprep.subr.bf16.mxu0 0
        %572 = vmatpush1.bf16.msra.mxu0 %v522
        %573 = vmatprep.subr.bf16.mxu0 0
        %574 = vmatpush1.bf16.msra.mxu0 %v523
        %575 = vmatprep.subr.bf16.mxu0 0
        %576 = vmatpush1.bf16.msra.mxu0 %v524
        %577 = vmatprep.subr.bf16.mxu0 0
        %578 = vmatpush1.bf16.msra.mxu0 %v525
        %579 = vmatprep.subr.bf16.mxu0 0
        %580 = vmatpush1.bf16.msra.mxu0 %v526
        %581 = vmatprep.subr.bf16.mxu0 0
        %582 = vmatpush1.bf16.msra.mxu0 %v527
        %583 = vmatprep.subr.bf16.mxu0 0
        %584 = vmatpush1.bf16.msra.mxu0 %v528
        %585 = vmatprep.subr.bf16.mxu0 0
        %586 = vmatpush1.bf16.msra.mxu0 %v529
        %587 = vmatprep.subr.bf16.mxu0 0
        %588 = vmatpush1.bf16.msra.mxu0 %v530
        %589 = vmatprep.subr.bf16.mxu0 0
        %590 = vmatpush1.bf16.msra.mxu0 %v531
        %591 = vmatprep.subr.bf16.mxu0 0
        %592 = vmatpush1.bf16.msra.mxu0 %v532
        %593 = vmatprep.subr.bf16.mxu0 0
        %594 = vmatpush1.bf16.msra.mxu0 %v533
        %595 = vmatprep.subr.bf16.mxu0 0
        %596 = vmatpush1.bf16.msra.mxu0 %v534
        %597 = vmatprep.subr.bf16.mxu0 0
        %598 = vmatpush1.bf16.msra.mxu0 %v535
        %599 = vmatprep.subr.bf16.mxu0 0
        %600 = vmatpush1.bf16.msra.mxu0 %v536
        %601 = vmatprep.mubr.bf16.mxu0 %v414
        %602 = vmatmul.mubr.bf16.gmra.mrb[0].mxu0 %v413
        %v603 = vpop.f32.mrb[0].mxu0
        %v604 = vadd.f32 0.0, %v603
        %v605 = vpop.f32.mrb[0].mxu0
        %v606 = vpop.f32.mrb[0].mxu0
        %v607 = vadd.f32 0.0, %v606
        %v608 = vpop.f32.mrb[0].mxu0
        %609 = vmatprep.mubr.bf16.mxu0 %v417
        %610 = vmatmul.mubr.bf16.gmra.mrb[0].mxu0 %v416
        %v611 = vpop.f32.mrb[0].mxu0
        %v612 = vadd.f32 0.0, %v611
        %v613 = vpop.f32.mrb[0].mxu0
        %v614 = vpop.f32.mrb[0].mxu0
        %v615 = vpop.f32.mrb[0].mxu0
        %616 = vdwg.mxu0
        %617 = vmatprep.subr.bf16.mxu0 0
        %618 = vmatpush1.bf16.msra.mxu0 %v537
        %619 = vmatprep.subr.bf16.mxu0 0
        %620 = vmatpush1.bf16.msra.mxu0 %v538
        %621 = vmatprep.subr.bf16.mxu0 0
        %622 = vmatpush1.bf16.msra.mxu0 %v539
        %623 = vmatprep.subr.bf16.mxu0 0
        %624 = vmatpush1.bf16.msra.mxu0 %v540
        %625 = vmatprep.subr.bf16.mxu0 0
        %626 = vmatpush1.bf16.msra.mxu0 %v541
        %627 = vmatprep.subr.bf16.mxu0 0
        %628 = vmatpush1.bf16.msra.mxu0 %v542
        %629 = vmatprep.subr.bf16.mxu0 0
        %630 = vmatpush1.bf16.msra.mxu0 %v543
        %631 = vmatprep.subr.bf16.mxu0 0
        %632 = vmatpush1.bf16.msra.mxu0 %v544
        %633 = vmatprep.subr.bf16.mxu0 0
        %634 = vmatpush1.bf16.msra.mxu0 0
        %635 = vmatprep.subr.bf16.mxu0 0
        %636 = vmatpush1.bf16.msra.mxu0 0
        %637 = vmatprep.subr.bf16.mxu0 0
        %638 = vmatpush1.bf16.msra.mxu0 0
        %639 = vmatprep.subr.bf16.mxu0 0
        %640 = vmatpush1.bf16.msra.mxu0 0
        %641 = vmatprep.subr.bf16.mxu0 0
        %642 = vmatpush1.bf16.msra.mxu0 0
        %643 = vmatprep.subr.bf16.mxu0 0
        %644 = vmatpush1.bf16.msra.mxu0 0
        %645 = vmatprep.subr.bf16.mxu0 0
        %646 = vmatpush1.bf16.msra.mxu0 0
        %647 = vmatprep.subr.bf16.mxu0 0
        %648 = vmatpush1.bf16.msra.mxu0 0
        %649 = vmatprep.mubr.bf16.mxu0 0
        %650 = vmatmul.mubr.bf16.gmra.mrb[0].mxu0 %v415
        %v651 = vpop.f32.mrb[0].mxu0
        %v652 = vadd.f32 %v604, %v651
        %v653 = vpop.f32.mrb[0].mxu0
        %v654 = vpop.f32.mrb[0].mxu0
        %v655 = vadd.f32 %v607, %v654
        %v656 = vpop.f32.mrb[0].mxu0
        %657 = vmatprep.mubr.bf16.mxu0 0
        %658 = vmatmul.mubr.bf16.gmra.mrb[0].mxu0 %v418
        %v659 = vpop.f32.mrb[0].mxu0
        %v660 = vadd.f32 %v612, %v659
        %v661 = vpop.f32.mrb[0].mxu0
        %v662 = vpop.f32.mrb[0].mxu0
        %v663 = vpop.f32.mrb[0].mxu0
        %664 = vdwg.mxu0
        %v665 = vadd.f32 %v341, %v652
        %v666 = vadd.f32 %v342, %v655
        %v667 = vadd.f32 %v343, %v660
        %668 = vst [vmem:[#allocation2] sm:$0xff] %v665
        %669 = vst [vmem:[#allocation2 + $0x8] sm:$0xff] %v666
        %670 = vst [vmem:[#allocation2 + $0x10] sm:$0xff] %v667
        %p671 = scmp.eq.s32.totalorder %s22, 2
        // Predicated region
        $region67: #{pcb_test_forward.65} parent=57 // pred_check
          %p672 = pneg %p671
        $region68: #{pcb_test_forward.65} parent=57 // pred_check_branch
          %674 = sbr.rel (%p672) target = $region70
        $region69: #{pcb_test_forward.65} parent=57 // pred_region
          %v675 = vld [vmem:[#allocation2] sm:$0xff]
          %v676 = vld [vmem:[#allocation2 + $0x8] sm:$0xff]
          %v677 = vld [vmem:[#allocation2 + $0x10] sm:$0xff]
          %v678 = vld [vmem:[%s320] sm:$0x1]
          %v680 = vlaneseq
          %v681 = vshrl.u32 %v680, 7
          %v682 = vsub.s32 0, %v681
          %v683 = vrot.slane %v678, %v682
          %v685 = vmul.f32 %v675, %v683
          %v686 = vmul.f32 %v676, %v683
          %v687 = vmul.f32 %v677, %v683
          %v688 = vld [vmem:[%s323] sm:$0x1]
          %v690 = vlaneseq
          %v691 = vshrl.u32 %v690, 7
          %v692 = vsub.s32 0, %v691
          %v693 = vrot.slane %v688, %v692
          %v695 = vadd.f32 %v685, %v693
          %v696 = vadd.f32 %v686, %v693
          %v697 = vadd.f32 %v687, %v693
          %v698 = vmax.f32 %v695, 0.0
          %v699 = vmax.f32 %v696, 0.0
          %v700 = vmax.f32 %v697, 0.0
          %v701 = vpack.c.bf16 %v699, %v698
          %v702 = vpack.c.bf16 %v700, %v700
          %v705 = vunpack.c.l.b16 %v701
          %v706 = vunpack.c.h.b16 %v701
          %v707 = vunpack.c.l.b16 %v702
          %v708 = vpack.c.b16 %v705, %v705
          %v709 = vpack.c.b16 %v706, %v706
          %v710 = vpack.c.b16 %v707, %v707
          %714 = vst [vmem:[%s331] sm:$0xf] %v708
          %715 = vst [vmem:[%s331 + $0x4] sm:$0xf] %v709
          %716 = vst [vmem:[%s331 + $0x8] sm:$0xf] %v710
        $region70: #{pcb_test_forward.65} parent=57 // pred_fallthru
          _
        %s717 = smul.u32 3, %s20
        %p718 = scmp.lt.s32.totalorder %s717, 2
        %s719 = scalar_select %p718, %s717, 2
        %p720 = scmp.lt.s32.totalorder %s21, 0
        %s721 = scalar_select %p720, %s21, 0
        %s722 = sadd.s32 %s721, %s719
        %s723 = smul.addr %s722, 4
        %s724 = scalar_lea.vmem %s4, %s723
        // Predicated region
        $region71: #{pcb_test_forward.65} parent=57 // pred_check
          %p725 = pneg %p162
        $region72: #{pcb_test_forward.65} parent=57 // pred_check_branch
          %727 = sbr.rel (%p725) target = $region74
        $region73: #{pcb_test_forward.65} parent=57 // pred_region
          %s728 = smul.u32 3, %s20
        $region74: #{pcb_test_forward.65} parent=57 // pred_fallthru
          _
        // Predicated region
        $region75: #{pcb_test_forward.65} parent=57 // pred_check
          %p729 = pneg %p162
        $region76: #{pcb_test_forward.65} parent=57 // pred_check_branch
          %731 = sbr.rel (%p729) target = $region78
        $region77: #{pcb_test_forward.65} parent=57 // pred_region
          %s732 = smul.u32 3, %s20
          %p733 = scmp.lt.s32.totalorder %s732, 2
          %s734 = scalar_select %p733, %s732, 2
          %p735 = scmp.lt.s32.totalorder %s21, 0
          %s736 = scalar_select %p735, %s21, 0
          %s737 = sadd.s32 %s736, %s734
          %s738 = smul.addr %s737, 4
          %s739 = scalar_lea.vmem %s4, %s738
        $region78: #{pcb_test_forward.65} parent=57 // pred_fallthru
          _
      $region58: #{pcb_test_forward.65} parent=5 // pred_fallthru
        _
      %p740 = scmp.le.s32.totalorder 2, %s10
      // Predicated region
      $region79: #{pcb_test_forward.65} parent=5 // pred_check
        %p741 = pneg %p740
      $region80: #{pcb_test_forward.65} parent=5 // pred_check_branch
        %743 = sbr.rel (%p741) target = $region82
      $region81: #{pcb_test_forward.65} parent=5 // pred_region
        %s744 = ssub.s32 %s10, 2
      $region82: #{pcb_test_forward.65} parent=5 // pred_fallthru
        _
    $region6: #{pcb_test_forward.65} parent=1 // loop_footer
      %s14 = sadd.s32 1, %s10
    $region7: #{pcb_test_forward.65} parent=1 // loop_footer_branch
      %9 = sbr.rel target = $region3
    $region8: #{pcb_test_forward.65} parent=1 // loop_exit
      _

// kernel: pcb_test_forward.67
$region0: #{pcb_test_forward.67}
  #allocation0 [shape = 'u32[]', space=smem, size = 0x4, offset = 0x4, fixed_abs, tag = 'smem constant byte address 0x4 - core index']
  #allocation1 [shape = 'u32[144,128]{1,0:T(1,128)}', space=vmem, size = 0x12000, scoped, tag = 'internal scratch']
  #allocation2 [shape = 'f32[24,128]{1,0:T(8,128)}', space=vmem, size = 0x3000, scoped, tag = 'scratch operand']
  %s0 = inlined_call_operand.vmem [shape: bf16[24,128], index: 0, kind: input, shape index: {}]
  %s1 = inlined_call_operand.vmem [shape: bf16[128,128], index: 1, kind: input, shape index: {}]
  %s2 = inlined_call_operand.vmem [shape: f32[1,128], index: 2, kind: input, shape index: {}]
  %s3 = inlined_call_operand.vmem [shape: f32[1,128], index: 3, kind: input, shape index: {}]
  %s4 = inlined_call_operand.vmem [shape: bf16[24,128], index: 4, kind: output, shape index: {}]
  %s5 = sld [smem:[#allocation0]]
  $region34: #{pcb_test_forward.67} parent=0
    _
  %s7 = ssub.s32 1, %s5
  %s8 = scalar_select 0, %s7, %s5
  // Predicated region
  $region2: #{pcb_test_forward.67} parent=0 // pred_check
    _
  $region3: #{pcb_test_forward.67} parent=0 // pred_check_branch
    %10 = sbr.rel (0) target = $region5
  $region4: #{pcb_test_forward.67} parent=0 // pred_region
    _
  $region5: #{pcb_test_forward.67} parent=0 // pred_fallthru
    _
  // Predicated region
  $region6: #{pcb_test_forward.67} parent=0 // pred_check
    _
  $region7: #{pcb_test_forward.67} parent=0 // pred_check_branch
    %12 = sbr.rel (0) target = $region9
  $region8: #{pcb_test_forward.67} parent=0 // pred_region
    _
  $region9: #{pcb_test_forward.67} parent=0 // pred_fallthru
    _
  // Predicated region
  $region10: #{pcb_test_forward.67} parent=0 // pred_check
    _
  $region11: #{pcb_test_forward.67} parent=0 // pred_check_branch
    %14 = sbr.rel (0) target = $region13
  $region12: #{pcb_test_forward.67} parent=0 // pred_region
    _
  $region13: #{pcb_test_forward.67} parent=0 // pred_fallthru
    _
  // Predicated region
  $region14: #{pcb_test_forward.67} parent=0 // pred_check
    _
  $region15: #{pcb_test_forward.67} parent=0 // pred_check_branch
    %16 = sbr.rel (0) target = $region17
  $region16: #{pcb_test_forward.67} parent=0 // pred_region
    _
  $region17: #{pcb_test_forward.67} parent=0 // pred_fallthru
    _
  %p18 = scmp.eq.s32.totalorder 0, 0
  // Predicated region
  $region18: #{pcb_test_forward.67} parent=0 // pred_check
    %p19 = pneg %p18
  $region19: #{pcb_test_forward.67} parent=0 // pred_check_branch
    %21 = sbr.rel (%p19) target = $region21
  $region20: #{pcb_test_forward.67} parent=0 // pred_region
    %22 = vst [vmem:[#allocation2] sm:$0xff] 0.0
    %23 = vst [vmem:[#allocation2 + $0x8] sm:$0xff] 0.0
    %24 = vst [vmem:[#allocation2 + $0x10] sm:$0xff] 0.0
  $region21: #{pcb_test_forward.67} parent=0 // pred_fallthru
    _
  %v25 = vld [vmem:[#allocation2] sm:$0xff]
  %v26 = vld [vmem:[#allocation2 + $0x8] sm:$0xff]
  %v27 = vld [vmem:[#allocation2 + $0x10] sm:$0xff]
  %v28 = vld [vmem:[%s0] sm:$0xf]
  %v29 = vld [vmem:[%s0 + $0x4] sm:$0xf]
  %v30 = vld [vmem:[%s0 + $0x8] sm:$0xf]
  %v31 = vld [vmem:[%s1] sm:$0xf]
  %v32 = vld [vmem:[%s1 + $0x4] sm:$0xf]
  %v33 = vld [vmem:[%s1 + $0x8] sm:$0xf]
  %v34 = vld [vmem:[%s1 + $0xc] sm:$0xf]
  %v35 = vld [vmem:[%s1 + $0x10] sm:$0xf]
  %v36 = vld [vmem:[%s1 + $0x14] sm:$0xf]
  %v37 = vld [vmem:[%s1 + $0x18] sm:$0xf]
  %v38 = vld [vmem:[%s1 + $0x1c] sm:$0xf]
  %v39 = vld [vmem:[%s1 + $0x20] sm:$0xf]
  %v40 = vld [vmem:[%s1 + $0x24] sm:$0xf]
  %v41 = vld [vmem:[%s1 + $0x28] sm:$0xf]
  %v42 = vld [vmem:[%s1 + $0x2c] sm:$0xf]
  %v43 = vld [vmem:[%s1 + $0x30] sm:$0xf]
  %v44 = vld [vmem:[%s1 + $0x34] sm:$0xf]
  %v45 = vld [vmem:[%s1 + $0x38] sm:$0xf]
  %v46 = vld [vmem:[%s1 + $0x3c] sm:$0xf]
  %v50 = vunpack.c.l.b16 %v28
  %v51 = vunpack.c.l.b16 %v29
  %v52 = vunpack.c.l.b16 %v30
  %v53 = vpack.c.b16 %v51, %v50
  %v54 = vpack.c.b16 %v52, %v52
  %v73 = vunpack.c.l.b16 %v31
  %v74 = vunpack.c.l.b16 %v32
  %v75 = vunpack.c.l.b16 %v33
  %v76 = vunpack.c.l.b16 %v34
  %v77 = vunpack.c.l.b16 %v35
  %v78 = vunpack.c.l.b16 %v36
  %v79 = vunpack.c.l.b16 %v37
  %v80 = vunpack.c.l.b16 %v38
  %v81 = vunpack.c.l.b16 %v39
  %v82 = vunpack.c.l.b16 %v40
  %v83 = vunpack.c.l.b16 %v41
  %v84 = vunpack.c.l.b16 %v42
  %v85 = vunpack.c.l.b16 %v43
  %v86 = vunpack.c.l.b16 %v44
  %v87 = vunpack.c.l.b16 %v45
  %v88 = vunpack.c.l.b16 %v46
  %v89 = vpack.c.b16 %v74, %v73
  %v90 = vpack.c.b16 %v76, %v75
  %v91 = vpack.c.b16 %v78, %v77
  %v92 = vpack.c.b16 %v80, %v79
  %v93 = vpack.c.b16 %v82, %v81
  %v94 = vpack.c.b16 %v84, %v83
  %v95 = vpack.c.b16 %v86, %v85
  %v96 = vpack.c.b16 %v88, %v87
  %105 = vmatprep.subr.bf16.mxu0 0
  %106 = vmatpush1.bf16.msra.mxu0 %v89
  %107 = vmatprep.subr.bf16.mxu0 0
  %108 = vmatpush1.bf16.msra.mxu0 %v90
  %109 = vmatprep.subr.bf16.mxu0 0
  %110 = vmatpush1.bf16.msra.mxu0 %v91
  %111 = vmatprep.subr.bf16.mxu0 0
  %112 = vmatpush1.bf16.msra.mxu0 %v92
  %113 = vmatprep.subr.bf16.mxu0 0
  %114 = vmatpush1.bf16.msra.mxu0 %v93
  %115 = vmatprep.subr.bf16.mxu0 0
  %116 = vmatpush1.bf16.msra.mxu0 %v94
  %117 = vmatprep.subr.bf16.mxu0 0
  %118 = vmatpush1.bf16.msra.mxu0 %v95
  %119 = vmatprep.subr.bf16.mxu0 0
  %120 = vmatpush1.bf16.msra.mxu0 %v96
  %121 = vmatprep.subr.bf16.mxu0 0
  %122 = vmatpush1.bf16.msra.mxu0 0
  %123 = vmatprep.subr.bf16.mxu0 0
  %124 = vmatpush1.bf16.msra.mxu0 0
  %125 = vmatprep.subr.bf16.mxu0 0
  %126 = vmatpush1.bf16.msra.mxu0 0
  %127 = vmatprep.subr.bf16.mxu0 0
  %128 = vmatpush1.bf16.msra.mxu0 0
  %129 = vmatprep.subr.bf16.mxu0 0
  %130 = vmatpush1.bf16.msra.mxu0 0
  %131 = vmatprep.subr.bf16.mxu0 0
  %132 = vmatpush1.bf16.msra.mxu0 0
  %133 = vmatprep.subr.bf16.mxu0 0
  %134 = vmatpush1.bf16.msra.mxu0 0
  %135 = vmatprep.subr.bf16.mxu0 0
  %136 = vmatpush1.bf16.msra.mxu0 0
  %137 = vmatprep.mubr.bf16.mxu0 0
  %138 = vmatmul.mubr.bf16.gmra.mrb[0].mxu0 %v53
  %v139 = vpop.f32.mrb[0].mxu0
  %v140 = vadd.f32 0.0, %v139
  %v141 = vpop.f32.mrb[0].mxu0
  %v142 = vpop.f32.mrb[0].mxu0
  %v143 = vadd.f32 0.0, %v142
  %v144 = vpop.f32.mrb[0].mxu0
  %145 = vmatprep.mubr.bf16.mxu0 0
  %146 = vmatmul.mubr.bf16.gmra.mrb[0].mxu0 %v54
  %v147 = vpop.f32.mrb[0].mxu0
  %v148 = vadd.f32 0.0, %v147
  %v149 = vpop.f32.mrb[0].mxu0
  %v150 = vpop.f32.mrb[0].mxu0
  %v151 = vpop.f32.mrb[0].mxu0
  %152 = vdwg.mxu0
  %v153 = vadd.f32 %v25, %v140
  %v154 = vadd.f32 %v26, %v143
  %v155 = vadd.f32 %v27, %v148
  %156 = vst [vmem:[#allocation2] sm:$0xff] %v153
  %157 = vst [vmem:[#allocation2 + $0x8] sm:$0xff] %v154
  %158 = vst [vmem:[#allocation2 + $0x10] sm:$0xff] %v155
  // Predicated region
  $region22: #{pcb_test_forward.67} parent=0 // pred_check
    %p159 = pneg %p18
  $region23: #{pcb_test_forward.67} parent=0 // pred_check_branch
    %161 = sbr.rel (%p159) target = $region25
  $region24: #{pcb_test_forward.67} parent=0 // pred_region
    %v162 = vld [vmem:[#allocation2] sm:$0xff]
    %v163 = vld [vmem:[#allocation2 + $0x8] sm:$0xff]
    %v164 = vld [vmem:[#allocation2 + $0x10] sm:$0xff]
    %v165 = vld [vmem:[%s2] sm:$0x1]
    %v167 = vlaneseq
    %v168 = vshrl.u32 %v167, 7
    %v169 = vsub.s32 0, %v168
    %v170 = vrot.slane %v165, %v169
    %v172 = vmul.f32 %v162, %v170
    %v173 = vmul.f32 %v163, %v170
    %v174 = vmul.f32 %v164, %v170
    %v175 = vld [vmem:[%s3] sm:$0x1]
    %v177 = vlaneseq
    %v178 = vshrl.u32 %v177, 7
    %v179 = vsub.s32 0, %v178
    %v180 = vrot.slane %v175, %v179
    %v182 = vadd.f32 %v172, %v180
    %v183 = vadd.f32 %v173, %v180
    %v184 = vadd.f32 %v174, %v180
    %v185 = vmax.f32 %v182, 0.0
    %v186 = vmax.f32 %v183, 0.0
    %v187 = vmax.f32 %v184, 0.0
    %v188 = vpack.c.bf16 %v186, %v185
    %v189 = vpack.c.bf16 %v187, %v187
    %v192 = vunpack.c.l.b16 %v188
    %v193 = vunpack.c.h.b16 %v188
    %v194 = vunpack.c.l.b16 %v189
    %v195 = vpack.c.b16 %v192, %v192
    %v196 = vpack.c.b16 %v193, %v193
    %v197 = vpack.c.b16 %v194, %v194
    %201 = vst [vmem:[%s4] sm:$0xf] %v195
    %202 = vst [vmem:[%s4 + $0x4] sm:$0xf] %v196
    %203 = vst [vmem:[%s4 + $0x8] sm:$0xf] %v197
  $region25: #{pcb_test_forward.67} parent=0 // pred_fallthru
    _
  // Predicated region
  $region26: #{pcb_test_forward.67} parent=0 // pred_check
    _
  $region27: #{pcb_test_forward.67} parent=0 // pred_check_branch
    %205 = sbr.rel (0) target = $region29
  $region28: #{pcb_test_forward.67} parent=0 // pred_region
    _
  $region29: #{pcb_test_forward.67} parent=0 // pred_fallthru
    _
  // Predicated region
  $region30: #{pcb_test_forward.67} parent=0 // pred_check
    _
  $region31: #{pcb_test_forward.67} parent=0 // pred_check_branch
    %207 = sbr.rel (0) target = $region33
  $region32: #{pcb_test_forward.67} parent=0 // pred_region
    _
  $region33: #{pcb_test_forward.67} parent=0 // pred_fallthru
    _

// kernel: pcb_test_forward.76
$region0: #{pcb_test_forward.76}
  #allocation0 [shape = 'u32[]', space=smem, size = 0x4, offset = 0x4, fixed_abs, tag = 'smem constant byte address 0x4 - core index']
  #allocation1 [shape = 'u32[144,128]{1,0:T(1,128)}', space=vmem, size = 0x12000, scoped, tag = 'internal scratch']
  #allocation2 [shape = 'f32[24,256]{1,0:T(8,128)}', space=vmem, size = 0x6000, scoped, tag = 'scratch operand']
  %s0 = inlined_call_operand.vmem [shape: bf16[24,128], index: 0, kind: input, shape index: {}]
  %s1 = inlined_call_operand.vmem [shape: bf16[128,256], index: 1, kind: input, shape index: {}]
  %s2 = inlined_call_operand.vmem [shape: f32[1,256], index: 2, kind: input, shape index: {}]
  %s3 = inlined_call_operand.vmem [shape: f32[1,256], index: 3, kind: input, shape index: {}]
  %s4 = inlined_call_operand.vmem [shape: f32[1,256], index: 4, kind: input, shape index: {}]
  %s5 = inlined_call_operand.vmem [shape: bf16[24,256], index: 5, kind: output, shape index: {}]
  %s6 = sld [smem:[#allocation0]]
  $region38: #{pcb_test_forward.76} parent=0
    _
  %s8 = ssub.s32 1, %s6
  %s9 = scalar_select 0, %s8, %s6
  // Predicated region
  $region2: #{pcb_test_forward.76} parent=0 // pred_check
    _
  $region3: #{pcb_test_forward.76} parent=0 // pred_check_branch
    %11 = sbr.rel (0) target = $region5
  $region4: #{pcb_test_forward.76} parent=0 // pred_region
    _
  $region5: #{pcb_test_forward.76} parent=0 // pred_fallthru
    _
  // Predicated region
  $region6: #{pcb_test_forward.76} parent=0 // pred_check
    _
  $region7: #{pcb_test_forward.76} parent=0 // pred_check_branch
    %13 = sbr.rel (0) target = $region9
  $region8: #{pcb_test_forward.76} parent=0 // pred_region
    _
  $region9: #{pcb_test_forward.76} parent=0 // pred_fallthru
    _
  // Predicated region
  $region10: #{pcb_test_forward.76} parent=0 // pred_check
    _
  $region11: #{pcb_test_forward.76} parent=0 // pred_check_branch
    %15 = sbr.rel (0) target = $region13
  $region12: #{pcb_test_forward.76} parent=0 // pred_region
    _
  $region13: #{pcb_test_forward.76} parent=0 // pred_fallthru
    _
  // Predicated region
  $region14: #{pcb_test_forward.76} parent=0 // pred_check
    _
  $region15: #{pcb_test_forward.76} parent=0 // pred_check_branch
    %17 = sbr.rel (0) target = $region17
  $region16: #{pcb_test_forward.76} parent=0 // pred_region
    _
  $region17: #{pcb_test_forward.76} parent=0 // pred_fallthru
    _
  // Predicated region
  $region18: #{pcb_test_forward.76} parent=0 // pred_check
    _
  $region19: #{pcb_test_forward.76} parent=0 // pred_check_branch
    %19 = sbr.rel (0) target = $region21
  $region20: #{pcb_test_forward.76} parent=0 // pred_region
    _
  $region21: #{pcb_test_forward.76} parent=0 // pred_fallthru
    _
  %p21 = scmp.eq.s32.totalorder 0, 0
  // Predicated region
  $region22: #{pcb_test_forward.76} parent=0 // pred_check
    %p22 = pneg %p21
  $region23: #{pcb_test_forward.76} parent=0 // pred_check_branch
    %24 = sbr.rel (%p22) target = $region25
  $region24: #{pcb_test_forward.76} parent=0 // pred_region
    %25 = vst [vmem:[#allocation2] sm:$0xff] 0.0
    %26 = vst [vmem:[#allocation2 + $0x8] sm:$0xff] 0.0
    %27 = vst [vmem:[#allocation2 + $0x10] sm:$0xff] 0.0
    %28 = vst [vmem:[#allocation2 + $0x18] sm:$0xff] 0.0
    %29 = vst [vmem:[#allocation2 + $0x20] sm:$0xff] 0.0
    %30 = vst [vmem:[#allocation2 + $0x28] sm:$0xff] 0.0
  $region25: #{pcb_test_forward.76} parent=0 // pred_fallthru
    _
  %v31 = vld [vmem:[#allocation2] sm:$0xff]
  %v32 = vld [vmem:[#allocation2 + $0x8] sm:$0xff]
  %v33 = vld [vmem:[#allocation2 + $0x10] sm:$0xff]
  %v34 = vld [vmem:[#allocation2 + $0x18] sm:$0xff]
  %v35 = vld [vmem:[#allocation2 + $0x20] sm:$0xff]
  %v36 = vld [vmem:[#allocation2 + $0x28] sm:$0xff]
  %v37 = vld [vmem:[%s0] sm:$0xf]
  %v38 = vld [vmem:[%s0 + $0x4] sm:$0xf]
  %v39 = vld [vmem:[%s0 + $0x8] sm:$0xf]
  %v40 = vld [vmem:[%s1] sm:$0xff]
  %v41 = vld [vmem:[%s1 + $0x8] sm:$0xff]
  %v42 = vld [vmem:[%s1 + $0x10] sm:$0xff]
  %v43 = vld [vmem:[%s1 + $0x18] sm:$0xff]
  %v44 = vld [vmem:[%s1 + $0x20] sm:$0xff]
  %v45 = vld [vmem:[%s1 + $0x28] sm:$0xff]
  %v46 = vld [vmem:[%s1 + $0x30] sm:$0xff]
  %v47 = vld [vmem:[%s1 + $0x38] sm:$0xff]
  %v48 = vld [vmem:[%s1 + $0x40] sm:$0xff]
  %v49 = vld [vmem:[%s1 + $0x48] sm:$0xff]
  %v50 = vld [vmem:[%s1 + $0x50] sm:$0xff]
  %v51 = vld [vmem:[%s1 + $0x58] sm:$0xff]
  %v52 = vld [vmem:[%s1 + $0x60] sm:$0xff]
  %v53 = vld [vmem:[%s1 + $0x68] sm:$0xff]
  %v54 = vld [vmem:[%s1 + $0x70] sm:$0xff]
  %v55 = vld [vmem:[%s1 + $0x78] sm:$0xff]
  %v59 = vunpack.c.l.b16 %v37
  %v60 = vunpack.c.l.b16 %v38
  %v61 = vunpack.c.l.b16 %v39
  %v62 = vpack.c.b16 %v60, %v59
  %v63 = vpack.c.b16 %v61, %v61
  %v82 = vunpack.c.l.b16 %v40
  %v83 = vunpack.c.h.b16 %v40
  %v84 = vunpack.c.l.b16 %v41
  %v85 = vunpack.c.h.b16 %v41
  %v86 = vunpack.c.l.b16 %v42
  %v87 = vunpack.c.h.b16 %v42
  %v88 = vunpack.c.l.b16 %v43
  %v89 = vunpack.c.h.b16 %v43
  %v90 = vunpack.c.l.b16 %v44
  %v91 = vunpack.c.h.b16 %v44
  %v92 = vunpack.c.l.b16 %v45
  %v93 = vunpack.c.h.b16 %v45
  %v94 = vunpack.c.l.b16 %v46
  %v95 = vunpack.c.h.b16 %v46
  %v96 = vunpack.c.l.b16 %v47
  %v97 = vunpack.c.h.b16 %v47
  %v98 = vunpack.c.l.b16 %v48
  %v99 = vunpack.c.h.b16 %v48
  %v100 = vunpack.c.l.b16 %v49
  %v101 = vunpack.c.h.b16 %v49
  %v102 = vunpack.c.l.b16 %v50
  %v103 = vunpack.c.h.b16 %v50
  %v104 = vunpack.c.l.b16 %v51
  %v105 = vunpack.c.h.b16 %v51
  %v106 = vunpack.c.l.b16 %v52
  %v107 = vunpack.c.h.b16 %v52
  %v108 = vunpack.c.l.b16 %v53
  %v109 = vunpack.c.h.b16 %v53
  %v110 = vunpack.c.l.b16 %v54
  %v111 = vunpack.c.h.b16 %v54
  %v112 = vunpack.c.l.b16 %v55
  %v113 = vunpack.c.h.b16 %v55
  %v114 = vpack.c.b16 %v84, %v82
  %v115 = vpack.c.b16 %v85, %v83
  %v116 = vpack.c.b16 %v88, %v86
  %v117 = vpack.c.b16 %v89, %v87
  %v118 = vpack.c.b16 %v92, %v90
  %v119 = vpack.c.b16 %v93, %v91
  %v120 = vpack.c.b16 %v96, %v94
  %v121 = vpack.c.b16 %v97, %v95
  %v122 = vpack.c.b16 %v100, %v98
  %v123 = vpack.c.b16 %v101, %v99
  %v124 = vpack.c.b16 %v104, %v102
  %v125 = vpack.c.b16 %v105, %v103
  %v126 = vpack.c.b16 %v108, %v106
  %v127 = vpack.c.b16 %v109, %v107
  %v128 = vpack.c.b16 %v112, %v110
  %v129 = vpack.c.b16 %v113, %v111
  %146 = vmatprep.subr.bf16.mxu0 %v115
  %147 = vmatpush1.bf16.msra.mxu0 %v114
  %148 = vmatprep.subr.bf16.mxu0 %v117
  %149 = vmatpush1.bf16.msra.mxu0 %v116
  %150 = vmatprep.subr.bf16.mxu0 %v119
  %151 = vmatpush1.bf16.msra.mxu0 %v118
  %152 = vmatprep.subr.bf16.mxu0 %v121
  %153 = vmatpush1.bf16.msra.mxu0 %v120
  %154 = vmatprep.subr.bf16.mxu0 %v123
  %155 = vmatpush1.bf16.msra.mxu0 %v122
  %156 = vmatprep.subr.bf16.mxu0 %v125
  %157 = vmatpush1.bf16.msra.mxu0 %v124
  %158 = vmatprep.subr.bf16.mxu0 %v127
  %159 = vmatpush1.bf16.msra.mxu0 %v126
  %160 = vmatprep.subr.bf16.mxu0 %v129
  %161 = vmatpush1.bf16.msra.mxu0 %v128
  %162 = vmatprep.subr.bf16.mxu0 0
  %163 = vmatpush1.bf16.msra.mxu0 0
  %164 = vmatprep.subr.bf16.mxu0 0
  %165 = vmatpush1.bf16.msra.mxu0 0
  %166 = vmatprep.subr.bf16.mxu0 0
  %167 = vmatpush1.bf16.msra.mxu0 0
  %168 = vmatprep.subr.bf16.mxu0 0
  %169 = vmatpush1.bf16.msra.mxu0 0
  %170 = vmatprep.subr.bf16.mxu0 0
  %171 = vmatpush1.bf16.msra.mxu0 0
  %172 = vmatprep.subr.bf16.mxu0 0
  %173 = vmatpush1.bf16.msra.mxu0 0
  %174 = vmatprep.subr.bf16.mxu0 0
  %175 = vmatpush1.bf16.msra.mxu0 0
  %176 = vmatprep.subr.bf16.mxu0 0
  %177 = vmatpush1.bf16.msra.mxu0 0
  %178 = vmatprep.mubr.bf16.mxu0 0
  %179 = vmatmul.mubr.bf16.gmra.mrb[0].mxu0 %v62
  %v180 = vpop.f32.mrb[0].mxu0
  %v181 = vadd.f32 0.0, %v180
  %v182 = vpop.f32.mrb[0].mxu0
  %v183 = vadd.f32 0.0, %v182
  %v184 = vpop.f32.mrb[0].mxu0
  %v185 = vadd.f32 0.0, %v184
  %v186 = vpop.f32.mrb[0].mxu0
  %v187 = vadd.f32 0.0, %v186
  %188 = vmatprep.mubr.bf16.mxu0 0
  %189 = vmatmul.mubr.bf16.gmra.mrb[0].mxu0 %v63
  %v190 = vpop.f32.mrb[0].mxu0
  %v191 = vadd.f32 0.0, %v190
  %v192 = vpop.f32.mrb[0].mxu0
  %v193 = vadd.f32 0.0, %v192
  %v194 = vpop.f32.mrb[0].mxu0
  %v195 = vpop.f32.mrb[0].mxu0
  %196 = vdwg.mxu0
  %v197 = vadd.f32 %v31, %v181
  %v198 = vadd.f32 %v32, %v183
  %v199 = vadd.f32 %v33, %v185
  %v200 = vadd.f32 %v34, %v187
  %v201 = vadd.f32 %v35, %v191
  %v202 = vadd.f32 %v36, %v193
  %203 = vst [vmem:[#allocation2] sm:$0xff] %v197
  %204 = vst [vmem:[#allocation2 + $0x8] sm:$0xff] %v198
  %205 = vst [vmem:[#allocation2 + $0x10] sm:$0xff] %v199
  %206 = vst [vmem:[#allocation2 + $0x18] sm:$0xff] %v200
  %207 = vst [vmem:[#allocation2 + $0x20] sm:$0xff] %v201
  %208 = vst [vmem:[#allocation2 + $0x28] sm:$0xff] %v202
  // Predicated region
  $region26: #{pcb_test_forward.76} parent=0 // pred_check
    %p209 = pneg %p21
  $region27: #{pcb_test_forward.76} parent=0 // pred_check_branch
    %211 = sbr.rel (%p209) target = $region29
  $region28: #{pcb_test_forward.76} parent=0 // pred_region
    %v212 = vld [vmem:[#allocation2] sm:$0xff]
    %v213 = vld [vmem:[#allocation2 + $0x8] sm:$0xff]
    %v214 = vld [vmem:[#allocation2 + $0x10] sm:$0xff]
    %v215 = vld [vmem:[#allocation2 + $0x18] sm:$0xff]
    %v216 = vld [vmem:[#allocation2 + $0x20] sm:$0xff]
    %v217 = vld [vmem:[#allocation2 + $0x28] sm:$0xff]
    %v218 = vld [vmem:[%s2] sm:$0x3]
    %v220 = vlaneseq
    %v221 = vshrl.u32 %v220, 7
    %v222 = vsub.s32 0, %v221
    %v223 = vrot.slane %v218, %v222
    %v224 = vlaneseq
    %v225 = vshrl.u32 %v224, 7
    %v226 = vsub.s32 1, %v225
    %v227 = vrot.slane %v218, %v226
    %v230 = vmul.f32 %v212, %v223
    %v231 = vmul.f32 %v213, %v227
    %v232 = vmul.f32 %v214, %v223
    %v233 = vmul.f32 %v215, %v227
    %v234 = vmul.f32 %v216, %v223
    %v235 = vmul.f32 %v217, %v227
    %v236 = vld [vmem:[%s3] sm:$0x3]
    %v238 = vlaneseq
    %v239 = vshrl.u32 %v238, 7
    %v240 = vsub.s32 0, %v239
    %v241 = vrot.slane %v236, %v240
    %v242 = vlaneseq
    %v243 = vshrl.u32 %v242, 7
    %v244 = vsub.s32 1, %v243
    %v245 = vrot.slane %v236, %v244
    %v248 = vadd.f32 %v230, %v241
    %v249 = vadd.f32 %v231, %v245
    %v250 = vadd.f32 %v232, %v241
    %v251 = vadd.f32 %v233, %v245
    %v252 = vadd.f32 %v234, %v241
    %v253 = vadd.f32 %v235, %v245
    %v254 = vld [vmem:[%s4] sm:$0x3]
    %vm255 = vcmp.gt.f32.partialorder %v254, 0.5
    %v256 = vmax.f32 %v248, 0.0
    %v257 = vmax.f32 %v249, 0.0
    %v258 = vmax.f32 %v250, 0.0
    %v259 = vmax.f32 %v251, 0.0
    %v260 = vmax.f32 %v252, 0.0
    %v261 = vmax.f32 %v253, 0.0
    %v262 = vsel %vm255, 1, 0
    %v263 = vlaneseq
    %v264 = vshrl.u32 %v263, 7
    %v265 = vsub.s32 0, %v264
    %v266 = vrot.slane %v262, %v265
    %v267 = vlaneseq
    %v268 = vshrl.u32 %v267, 7
    %v269 = vsub.s32 1, %v268
    %v270 = vrot.slane %v262, %v269
    %vm271 = vcmp.eq.s32.totalorder %v266, 1
    %vm272 = vcmp.eq.s32.totalorder %v270, 1
    %v273 = vsel %vm271, %v256, %v248
    %v274 = vsel %vm272, %v257, %v249
    %v275 = vsel %vm271, %v258, %v250
    %v276 = vsel %vm272, %v259, %v251
    %v277 = vsel %vm271, %v260, %v252
    %v278 = vsel %vm272, %v261, %v253
    %v279 = vpack.c.bf16 %v275, %v273
    %v280 = vpack.c.bf16 %v276, %v274
    %v281 = vpack.c.bf16 %v277, %v277
    %v282 = vpack.c.bf16 %v278, %v278
    %v287 = vunpack.c.l.b16 %v279
    %v288 = vunpack.c.l.b16 %v280
    %v289 = vunpack.c.h.b16 %v279
    %v290 = vunpack.c.h.b16 %v280
    %v291 = vunpack.c.l.b16 %v281
    %v292 = vunpack.c.l.b16 %v282
    %v293 = vpack.c.b16 %v288, %v287
    %v294 = vpack.c.b16 %v290, %v289
    %v295 = vpack.c.b16 %v292, %v291
    %299 = vst [vmem:[%s5] sm:$0xff] %v293
    %300 = vst [vmem:[%s5 + $0x8] sm:$0xff] %v294
    %301 = vst [vmem:[%s5 + $0x10] sm:$0xff] %v295
  $region29: #{pcb_test_forward.76} parent=0 // pred_fallthru
    _
  // Predicated region
  $region30: #{pcb_test_forward.76} parent=0 // pred_check
    _
  $region31: #{pcb_test_forward.76} parent=0 // pred_check_branch
    %303 = sbr.rel (0) target = $region33
  $region32: #{pcb_test_forward.76} parent=0 // pred_region
    _
  $region33: #{pcb_test_forward.76} parent=0 // pred_fallthru
    _
  // Predicated region
  $region34: #{pcb_test_forward.76} parent=0 // pred_check
    _
  $region35: #{pcb_test_forward.76} parent=0 // pred_check_branch
    %305 = sbr.rel (0) target = $region37
  $region36: #{pcb_test_forward.76} parent=0 // pred_region
    _
  $region37: #{pcb_test_forward.76} parent=0 // pred_fallthru
    _

// kernel: pcb_test_forward.94
$region0: #{pcb_test_forward.94}
  #allocation0 [shape = 'u32[]', space=smem, size = 0x4, offset = 0x4, fixed_abs, tag = 'smem constant byte address 0x4 - core index']
  #allocation1 [shape = 'u32[144,128]{1,0:T(1,128)}', space=vmem, size = 0x12000, scoped, tag = 'internal scratch']
  #allocation2 [shape = 'f32[24,384]{1,0:T(8,128)}', space=vmem, size = 0x9000, scoped, tag = 'scratch operand']
  %s0 = inlined_call_operand.vmem [shape: bf16[24,128], index: 0, kind: input, shape index: {}]
  %s1 = inlined_call_operand.vmem [shape: bf16[128,384], index: 1, kind: input, shape index: {}]
  %s2 = inlined_call_operand.vmem [shape: f32[1,384], index: 2, kind: input, shape index: {}]
  %s3 = inlined_call_operand.vmem [shape: f32[1,384], index: 3, kind: input, shape index: {}]
  %s4 = inlined_call_operand.vmem [shape: f32[1,384], index: 4, kind: input, shape index: {}]
  %s5 = inlined_call_operand.vmem [shape: bf16[24,384], index: 5, kind: output, shape index: {}]
  %s6 = sld [smem:[#allocation0]]
  $region38: #{pcb_test_forward.94} parent=0
    _
  %s8 = ssub.s32 1, %s6
  %s9 = scalar_select 0, %s8, %s6
  // Predicated region
  $region2: #{pcb_test_forward.94} parent=0 // pred_check
    _
  $region3: #{pcb_test_forward.94} parent=0 // pred_check_branch
    %11 = sbr.rel (0) target = $region5
  $region4: #{pcb_test_forward.94} parent=0 // pred_region
    _
  $region5: #{pcb_test_forward.94} parent=0 // pred_fallthru
    _
  // Predicated region
  $region6: #{pcb_test_forward.94} parent=0 // pred_check
    _
  $region7: #{pcb_test_forward.94} parent=0 // pred_check_branch
    %13 = sbr.rel (0) target = $region9
  $region8: #{pcb_test_forward.94} parent=0 // pred_region
    _
  $region9: #{pcb_test_forward.94} parent=0 // pred_fallthru
    _
  // Predicated region
  $region10: #{pcb_test_forward.94} parent=0 // pred_check
    _
  $region11: #{pcb_test_forward.94} parent=0 // pred_check_branch
    %15 = sbr.rel (0) target = $region13
  $region12: #{pcb_test_forward.94} parent=0 // pred_region
    _
  $region13: #{pcb_test_forward.94} parent=0 // pred_fallthru
    _
  // Predicated region
  $region14: #{pcb_test_forward.94} parent=0 // pred_check
    _
  $region15: #{pcb_test_forward.94} parent=0 // pred_check_branch
    %17 = sbr.rel (0) target = $region17
  $region16: #{pcb_test_forward.94} parent=0 // pred_region
    _
  $region17: #{pcb_test_forward.94} parent=0 // pred_fallthru
    _
  // Predicated region
  $region18: #{pcb_test_forward.94} parent=0 // pred_check
    _
  $region19: #{pcb_test_forward.94} parent=0 // pred_check_branch
    %19 = sbr.rel (0) target = $region21
  $region20: #{pcb_test_forward.94} parent=0 // pred_region
    _
  $region21: #{pcb_test_forward.94} parent=0 // pred_fallthru
    _
  %p21 = scmp.eq.s32.totalorder 0, 0
  // Predicated region
  $region22: #{pcb_test_forward.94} parent=0 // pred_check
    %p22 = pneg %p21
  $region23: #{pcb_test_forward.94} parent=0 // pred_check_branch
    %24 = sbr.rel (%p22) target = $region25
  $region24: #{pcb_test_forward.94} parent=0 // pred_region
    %25 = vst [vmem:[#allocation2] sm:$0xff] 0.0
    %26 = vst [vmem:[#allocation2 + $0x8] sm:$0xff] 0.0
    %27 = vst [vmem:[#allocation2 + $0x10] sm:$0xff] 0.0
    %28 = vst [vmem:[#allocation2 + $0x18] sm:$0xff] 0.0
    %29 = vst [vmem:[#allocation2 + $0x20] sm:$0xff] 0.0
    %30 = vst [vmem:[#allocation2 + $0x28] sm:$0xff] 0.0
    %31 = vst [vmem:[#allocation2 + $0x30] sm:$0xff] 0.0
    %32 = vst [vmem:[#allocation2 + $0x38] sm:$0xff] 0.0
    %33 = vst [vmem:[#allocation2 + $0x40] sm:$0xff] 0.0
  $region25: #{pcb_test_forward.94} parent=0 // pred_fallthru
    _
  %v34 = vld [vmem:[#allocation2] sm:$0xff]
  %v35 = vld [vmem:[#allocation2 + $0x8] sm:$0xff]
  %v36 = vld [vmem:[#allocation2 + $0x10] sm:$0xff]
  %v37 = vld [vmem:[#allocation2 + $0x18] sm:$0xff]
  %v38 = vld [vmem:[#allocation2 + $0x20] sm:$0xff]
  %v39 = vld [vmem:[#allocation2 + $0x28] sm:$0xff]
  %v40 = vld [vmem:[#allocation2 + $0x30] sm:$0xff]
  %v41 = vld [vmem:[#allocation2 + $0x38] sm:$0xff]
  %v42 = vld [vmem:[#allocation2 + $0x40] sm:$0xff]
  %v43 = vld [vmem:[%s0] sm:$0xf]
  %v44 = vld [vmem:[%s0 + $0x4] sm:$0xf]
  %v45 = vld [vmem:[%s0 + $0x8] sm:$0xf]
  %v46 = vld [vmem:[%s1] sm:$0xff]
  %v47 = vld [vmem:[%s1 + $0x8] sm:$0xf]
  %v48 = vld [vmem:[%s1 + $0xc] sm:$0xff]
  %v49 = vld [vmem:[%s1 + $0x14] sm:$0xf]
  %v50 = vld [vmem:[%s1 + $0x18] sm:$0xff]
  %v51 = vld [vmem:[%s1 + $0x20] sm:$0xf]
  %v52 = vld [vmem:[%s1 + $0x24] sm:$0xff]
  %v53 = vld [vmem:[%s1 + $0x2c] sm:$0xf]
  %v54 = vld [vmem:[%s1 + $0x30] sm:$0xff]
  %v55 = vld [vmem:[%s1 + $0x38] sm:$0xf]
  %v56 = vld [vmem:[%s1 + $0x3c] sm:$0xff]
  %v57 = vld [vmem:[%s1 + $0x44] sm:$0xf]
  %v58 = vld [vmem:[%s1 + $0x48] sm:$0xff]
  %v59 = vld [vmem:[%s1 + $0x50] sm:$0xf]
  %v60 = vld [vmem:[%s1 + $0x54] sm:$0xff]
  %v61 = vld [vmem:[%s1 + $0x5c] sm:$0xf]
  %v62 = vld [vmem:[%s1 + $0x60] sm:$0xff]
  %v63 = vld [vmem:[%s1 + $0x68] sm:$0xf]
  %v64 = vld [vmem:[%s1 + $0x6c] sm:$0xff]
  %v65 = vld [vmem:[%s1 + $0x74] sm:$0xf]
  %v66 = vld [vmem:[%s1 + $0x78] sm:$0xff]
  %v67 = vld [vmem:[%s1 + $0x80] sm:$0xf]
  %v68 = vld [vmem:[%s1 + $0x84] sm:$0xff]
  %v69 = vld [vmem:[%s1 + $0x8c] sm:$0xf]
  %v70 = vld [vmem:[%s1 + $0x90] sm:$0xff]
  %v71 = vld [vmem:[%s1 + $0x98] sm:$0xf]
  %v72 = vld [vmem:[%s1 + $0x9c] sm:$0xff]
  %v73 = vld [vmem:[%s1 + $0xa4] sm:$0xf]
  %v74 = vld [vmem:[%s1 + $0xa8] sm:$0xff]
  %v75 = vld [vmem:[%s1 + $0xb0] sm:$0xf]
  %v76 = vld [vmem:[%s1 + $0xb4] sm:$0xff]
  %v77 = vld [vmem:[%s1 + $0xbc] sm:$0xf]
  %v81 = vunpack.c.l.b16 %v43
  %v82 = vunpack.c.l.b16 %v44
  %v83 = vunpack.c.l.b16 %v45
  %v84 = vpack.c.b16 %v82, %v81
  %v85 = vpack.c.b16 %v83, %v83
  %v120 = vunpack.c.l.b16 %v46
  %v121 = vunpack.c.h.b16 %v46
  %v122 = vunpack.c.l.b16 %v47
  %v123 = vunpack.c.l.b16 %v48
  %v124 = vunpack.c.h.b16 %v48
  %v125 = vunpack.c.l.b16 %v49
  %v126 = vunpack.c.l.b16 %v50
  %v127 = vunpack.c.h.b16 %v50
  %v128 = vunpack.c.l.b16 %v51
  %v129 = vunpack.c.l.b16 %v52
  %v130 = vunpack.c.h.b16 %v52
  %v131 = vunpack.c.l.b16 %v53
  %v132 = vunpack.c.l.b16 %v54
  %v133 = vunpack.c.h.b16 %v54
  %v134 = vunpack.c.l.b16 %v55
  %v135 = vunpack.c.l.b16 %v56
  %v136 = vunpack.c.h.b16 %v56
  %v137 = vunpack.c.l.b16 %v57
  %v138 = vunpack.c.l.b16 %v58
  %v139 = vunpack.c.h.b16 %v58
  %v140 = vunpack.c.l.b16 %v59
  %v141 = vunpack.c.l.b16 %v60
  %v142 = vunpack.c.h.b16 %v60
  %v143 = vunpack.c.l.b16 %v61
  %v144 = vunpack.c.l.b16 %v62
  %v145 = vunpack.c.h.b16 %v62
  %v146 = vunpack.c.l.b16 %v63
  %v147 = vunpack.c.l.b16 %v64
  %v148 = vunpack.c.h.b16 %v64
  %v149 = vunpack.c.l.b16 %v65
  %v150 = vunpack.c.l.b16 %v66
  %v151 = vunpack.c.h.b16 %v66
  %v152 = vunpack.c.l.b16 %v67
  %v153 = vunpack.c.l.b16 %v68
  %v154 = vunpack.c.h.b16 %v68
  %v155 = vunpack.c.l.b16 %v69
  %v156 = vunpack.c.l.b16 %v70
  %v157 = vunpack.c.h.b16 %v70
  %v158 = vunpack.c.l.b16 %v71
  %v159 = vunpack.c.l.b16 %v72
  %v160 = vunpack.c.h.b16 %v72
  %v161 = vunpack.c.l.b16 %v73
  %v162 = vunpack.c.l.b16 %v74
  %v163 = vunpack.c.h.b16 %v74
  %v164 = vunpack.c.l.b16 %v75
  %v165 = vunpack.c.l.b16 %v76
  %v166 = vunpack.c.h.b16 %v76
  %v167 = vunpack.c.l.b16 %v77
  %v168 = vpack.c.b16 %v123, %v120
  %v169 = vpack.c.b16 %v124, %v121
  %v170 = vpack.c.b16 %v125, %v122
  %v171 = vpack.c.b16 %v129, %v126
  %v172 = vpack.c.b16 %v130, %v127
  %v173 = vpack.c.b16 %v131, %v128
  %v174 = vpack.c.b16 %v135, %v132
  %v175 = vpack.c.b16 %v136, %v133
  %v176 = vpack.c.b16 %v137, %v134
  %v177 = vpack.c.b16 %v141, %v138
  %v178 = vpack.c.b16 %v142, %v139
  %v179 = vpack.c.b16 %v143, %v140
  %v180 = vpack.c.b16 %v147, %v144
  %v181 = vpack.c.b16 %v148, %v145
  %v182 = vpack.c.b16 %v149, %v146
  %v183 = vpack.c.b16 %v153, %v150
  %v184 = vpack.c.b16 %v154, %v151
  %v185 = vpack.c.b16 %v155, %v152
  %v186 = vpack.c.b16 %v159, %v156
  %v187 = vpack.c.b16 %v160, %v157
  %v188 = vpack.c.b16 %v161, %v158
  %v189 = vpack.c.b16 %v165, %v162
  %v190 = vpack.c.b16 %v166, %v163
  %v191 = vpack.c.b16 %v167, %v164
  %216 = vmatprep.subr.bf16.mxu0 %v169
  %217 = vmatpush1.bf16.msra.mxu0 %v168
  %218 = vmatprep.subr.bf16.mxu0 %v172
  %219 = vmatpush1.bf16.msra.mxu0 %v171
  %220 = vmatprep.subr.bf16.mxu0 %v175
  %221 = vmatpush1.bf16.msra.mxu0 %v174
  %222 = vmatprep.subr.bf16.mxu0 %v178
  %223 = vmatpush1.bf16.msra.mxu0 %v177
  %224 = vmatprep.subr.bf16.mxu0 %v181
  %225 = vmatpush1.bf16.msra.mxu0 %v180
  %226 = vmatprep.subr.bf16.mxu0 %v184
  %227 = vmatpush1.bf16.msra.mxu0 %v183
  %228 = vmatprep.subr.bf16.mxu0 %v187
  %229 = vmatpush1.bf16.msra.mxu0 %v186
  %230 = vmatprep.subr.bf16.mxu0 %v190
  %231 = vmatpush1.bf16.msra.mxu0 %v189
  %232 = vmatprep.subr.bf16.mxu0 0
  %233 = vmatpush1.bf16.msra.mxu0 0
  %234 = vmatprep.subr.bf16.mxu0 0
  %235 = vmatpush1.bf16.msra.mxu0 0
  %236 = vmatprep.subr.bf16.mxu0 0
  %237 = vmatpush1.bf16.msra.mxu0 0
  %238 = vmatprep.subr.bf16.mxu0 0
  %239 = vmatpush1.bf16.msra.mxu0 0
  %240 = vmatprep.subr.bf16.mxu0 0
  %241 = vmatpush1.bf16.msra.mxu0 0
  %242 = vmatprep.subr.bf16.mxu0 0
  %243 = vmatpush1.bf16.msra.mxu0 0
  %244 = vmatprep.subr.bf16.mxu0 0
  %245 = vmatpush1.bf16.msra.mxu0 0
  %246 = vmatprep.subr.bf16.mxu0 0
  %247 = vmatpush1.bf16.msra.mxu0 0
  %248 = vmatprep.mubr.bf16.mxu0 0
  %249 = vmatmul.mubr.bf16.gmra.mrb[0].mxu0 %v84
  %v250 = vpop.f32.mrb[0].mxu0
  %v251 = vadd.f32 0.0, %v250
  %v252 = vpop.f32.mrb[0].mxu0
  %v253 = vadd.f32 0.0, %v252
  %v254 = vpop.f32.mrb[0].mxu0
  %v255 = vadd.f32 0.0, %v254
  %v256 = vpop.f32.mrb[0].mxu0
  %v257 = vadd.f32 0.0, %v256
  %258 = vmatprep.mubr.bf16.mxu0 0
  %259 = vmatmul.mubr.bf16.gmra.mrb[0].mxu0 %v85
  %v260 = vpop.f32.mrb[0].mxu0
  %v261 = vadd.f32 0.0, %v260
  %v262 = vpop.f32.mrb[0].mxu0
  %v263 = vadd.f32 0.0, %v262
  %v264 = vpop.f32.mrb[0].mxu0
  %v265 = vpop.f32.mrb[0].mxu0
  %266 = vdwg.mxu0
  %267 = vmatprep.subr.bf16.mxu0 0
  %268 = vmatpush1.bf16.msra.mxu0 %v170
  %269 = vmatprep.subr.bf16.mxu0 0
  %270 = vmatpush1.bf16.msra.mxu0 %v173
  %271 = vmatprep.subr.bf16.mxu0 0
  %272 = vmatpush1.bf16.msra.mxu0 %v176
  %273 = vmatprep.subr.bf16.mxu0 0
  %274 = vmatpush1.bf16.msra.mxu0 %v179
  %275 = vmatprep.subr.bf16.mxu0 0
  %276 = vmatpush1.bf16.msra.mxu0 %v182
  %277 = vmatprep.subr.bf16.mxu0 0
  %278 = vmatpush1.bf16.msra.mxu0 %v185
  %279 = vmatprep.subr.bf16.mxu0 0
  %280 = vmatpush1.bf16.msra.mxu0 %v188
  %281 = vmatprep.subr.bf16.mxu0 0
  %282 = vmatpush1.bf16.msra.mxu0 %v191
  %283 = vmatprep.subr.bf16.mxu0 0
  %284 = vmatpush1.bf16.msra.mxu0 0
  %285 = vmatprep.subr.bf16.mxu0 0
  %286 = vmatpush1.bf16.msra.mxu0 0
  %287 = vmatprep.subr.bf16.mxu0 0
  %288 = vmatpush1.bf16.msra.mxu0 0
  %289 = vmatprep.subr.bf16.mxu0 0
  %290 = vmatpush1.bf16.msra.mxu0 0
  %291 = vmatprep.subr.bf16.mxu0 0
  %292 = vmatpush1.bf16.msra.mxu0 0
  %293 = vmatprep.subr.bf16.mxu0 0
  %294 = vmatpush1.bf16.msra.mxu0 0
  %295 = vmatprep.subr.bf16.mxu0 0
  %296 = vmatpush1.bf16.msra.mxu0 0
  %297 = vmatprep.subr.bf16.mxu0 0
  %298 = vmatpush1.bf16.msra.mxu0 0
  %299 = vmatprep.mubr.bf16.mxu0 0
  %300 = vmatmul.mubr.bf16.gmra.mrb[0].mxu0 %v84
  %v301 = vpop.f32.mrb[0].mxu0
  %v302 = vadd.f32 0.0, %v301
  %v303 = vpop.f32.mrb[0].mxu0
  %v304 = vpop.f32.mrb[0].mxu0
  %v305 = vadd.f32 0.0, %v304
  %v306 = vpop.f32.mrb[0].mxu0
  %307 = vmatprep.mubr.bf16.mxu0 0
  %308 = vmatmul.mubr.bf16.gmra.mrb[0].mxu0 %v85
  %v309 = vpop.f32.mrb[0].mxu0
  %v310 = vadd.f32 0.0, %v309
  %v311 = vpop.f32.mrb[0].mxu0
  %v312 = vpop.f32.mrb[0].mxu0
  %v313 = vpop.f32.mrb[0].mxu0
  %314 = vdwg.mxu0
  %v315 = vadd.f32 %v34, %v251
  %v316 = vadd.f32 %v35, %v253
  %v317 = vadd.f32 %v36, %v302
  %v318 = vadd.f32 %v37, %v255
  %v319 = vadd.f32 %v38, %v257
  %v320 = vadd.f32 %v39, %v305
  %v321 = vadd.f32 %v40, %v261
  %v322 = vadd.f32 %v41, %v263
  %v323 = vadd.f32 %v42, %v310
  %324 = vst [vmem:[#allocation2] sm:$0xff] %v315
  %325 = vst [vmem:[#allocation2 + $0x8] sm:$0xff] %v316
  %326 = vst [vmem:[#allocation2 + $0x10] sm:$0xff] %v317
  %327 = vst [vmem:[#allocation2 + $0x18] sm:$0xff] %v318
  %328 = vst [vmem:[#allocation2 + $0x20] sm:$0xff] %v319
  %329 = vst [vmem:[#allocation2 + $0x28] sm:$0xff] %v320
  %330 = vst [vmem:[#allocation2 + $0x30] sm:$0xff] %v321
  %331 = vst [vmem:[#allocation2 + $0x38] sm:$0xff] %v322
  %332 = vst [vmem:[#allocation2 + $0x40] sm:$0xff] %v323
  // Predicated region
  $region26: #{pcb_test_forward.94} parent=0 // pred_check
    %p333 = pneg %p21
  $region27: #{pcb_test_forward.94} parent=0 // pred_check_branch
    %335 = sbr.rel (%p333) target = $region29
  $region28: #{pcb_test_forward.94} parent=0 // pred_region
    %v336 = vld [vmem:[#allocation2] sm:$0xff]
    %v337 = vld [vmem:[#allocation2 + $0x8] sm:$0xff]
    %v338 = vld [vmem:[#allocation2 + $0x10] sm:$0xff]
    %v339 = vld [vmem:[#allocation2 + $0x18] sm:$0xff]
    %v340 = vld [vmem:[#allocation2 + $0x20] sm:$0xff]
    %v341 = vld [vmem:[#allocation2 + $0x28] sm:$0xff]
    %v342 = vld [vmem:[#allocation2 + $0x30] sm:$0xff]
    %v343 = vld [vmem:[#allocation2 + $0x38] sm:$0xff]
    %v344 = vld [vmem:[#allocation2 + $0x40] sm:$0xff]
    %v345 = vld [vmem:[%s2] sm:$0x7]
    %v347 = vlaneseq
    %v348 = vshrl.u32 %v347, 7
    %v349 = vsub.s32 0, %v348
    %v350 = vrot.slane %v345, %v349
    %v351 = vlaneseq
    %v352 = vshrl.u32 %v351, 7
    %v353 = vsub.s32 1, %v352
    %v354 = vrot.slane %v345, %v353
    %v355 = vlaneseq
    %v356 = vshrl.u32 %v355, 7
    %v357 = vsub.s32 2, %v356
    %v358 = vrot.slane %v345, %v357
    %v362 = vmul.f32 %v336, %v350
    %v363 = vmul.f32 %v337, %v354
    %v364 = vmul.f32 %v338, %v358
    %v365 = vmul.f32 %v339, %v350
    %v366 = vmul.f32 %v340, %v354
    %v367 = vmul.f32 %v341, %v358
    %v368 = vmul.f32 %v342, %v350
    %v369 = vmul.f32 %v343, %v354
    %v370 = vmul.f32 %v344, %v358
    %v371 = vld [vmem:[%s3] sm:$0x7]
    %v373 = vlaneseq
    %v374 = vshrl.u32 %v373, 7
    %v375 = vsub.s32 0, %v374
    %v376 = vrot.slane %v371, %v375
    %v377 = vlaneseq
    %v378 = vshrl.u32 %v377, 7
    %v379 = vsub.s32 1, %v378
    %v380 = vrot.slane %v371, %v379
    %v381 = vlaneseq
    %v382 = vshrl.u32 %v381, 7
    %v383 = vsub.s32 2, %v382
    %v384 = vrot.slane %v371, %v383
    %v388 = vadd.f32 %v362, %v376
    %v389 = vadd.f32 %v363, %v380
    %v390 = vadd.f32 %v364, %v384
    %v391 = vadd.f32 %v365, %v376
    %v392 = vadd.f32 %v366, %v380
    %v393 = vadd.f32 %v367, %v384
    %v394 = vadd.f32 %v368, %v376
    %v395 = vadd.f32 %v369, %v380
    %v396 = vadd.f32 %v370, %v384
    %v397 = vld [vmem:[%s4] sm:$0x7]
    %vm398 = vcmp.gt.f32.partialorder %v397, 0.5
    %v399 = vmax.f32 %v388, 0.0
    %v400 = vmax.f32 %v389, 0.0
    %v401 = vmax.f32 %v390, 0.0
    %v402 = vmax.f32 %v391, 0.0
    %v403 = vmax.f32 %v392, 0.0
    %v404 = vmax.f32 %v393, 0.0
    %v405 = vmax.f32 %v394, 0.0
    %v406 = vmax.f32 %v395, 0.0
    %v407 = vmax.f32 %v396, 0.0
    %v408 = vsel %vm398, 1, 0
    %v409 = vlaneseq
    %v410 = vshrl.u32 %v409, 7
    %v411 = vsub.s32 0, %v410
    %v412 = vrot.slane %v408, %v411
    %v413 = vlaneseq
    %v414 = vshrl.u32 %v413, 7
    %v415 = vsub.s32 1, %v414
    %v416 = vrot.slane %v408, %v415
    %v417 = vlaneseq
    %v418 = vshrl.u32 %v417, 7
    %v419 = vsub.s32 2, %v418
    %v420 = vrot.slane %v408, %v419
    %vm421 = vcmp.eq.s32.totalorder %v412, 1
    %vm422 = vcmp.eq.s32.totalorder %v416, 1
    %vm423 = vcmp.eq.s32.totalorder %v420, 1
    %v424 = vsel %vm421, %v399, %v388
    %v425 = vsel %vm422, %v400, %v389
    %v426 = vsel %vm423, %v401, %v390
    %v427 = vsel %vm421, %v402, %v391
    %v428 = vsel %vm422, %v403, %v392
    %v429 = vsel %vm423, %v404, %v393
    %v430 = vsel %vm421, %v405, %v394
    %v431 = vsel %vm422, %v406, %v395
    %v432 = vsel %vm423, %v407, %v396
    %v433 = vpack.c.bf16 %v427, %v424
    %v434 = vpack.c.bf16 %v428, %v425
    %v435 = vpack.c.bf16 %v429, %v426
    %v436 = vpack.c.bf16 %v430, %v430
    %v437 = vpack.c.bf16 %v431, %v431
    %v438 = vpack.c.bf16 %v432, %v432
    %v445 = vunpack.c.l.b16 %v433
    %v446 = vunpack.c.l.b16 %v434
    %v447 = vunpack.c.l.b16 %v435
    %v448 = vunpack.c.h.b16 %v433
    %v449 = vunpack.c.h.b16 %v434
    %v450 = vunpack.c.h.b16 %v435
    %v451 = vunpack.c.l.b16 %v436
    %v452 = vunpack.c.l.b16 %v437
    %v453 = vunpack.c.l.b16 %v438
    %v454 = vpack.c.b16 %v446, %v445
    %v455 = vpack.c.b16 %v447, %v447
    %v456 = vpack.c.b16 %v449, %v448
    %v457 = vpack.c.b16 %v450, %v450
    %v458 = vpack.c.b16 %v452, %v451
    %v459 = vpack.c.b16 %v453, %v453
    %466 = vst [vmem:[%s5] sm:$0xff] %v454
    %467 = vst [vmem:[%s5 + $0x8] sm:$0xf] %v455
    %468 = vst [vmem:[%s5 + $0xc] sm:$0xff] %v456
    %469 = vst [vmem:[%s5 + $0x14] sm:$0xf] %v457
    %470 = vst [vmem:[%s5 + $0x18] sm:$0xff] %v458
    %471 = vst [vmem:[%s5 + $0x20] sm:$0xf] %v459
  $region29: #{pcb_test_forward.94} parent=0 // pred_fallthru
    _
  // Predicated region
  $region30: #{pcb_test_forward.94} parent=0 // pred_check
    _
  $region31: #{pcb_test_forward.94} parent=0 // pred_check_branch
    %473 = sbr.rel (0) target = $region33
  $region32: #{pcb_test_forward.94} parent=0 // pred_region
    _
  $region33: #{pcb_test_forward.94} parent=0 // pred_fallthru
    _
  // Predicated region
  $region34: #{pcb_test_forward.94} parent=0 // pred_check
    _
  $region35: #{pcb_test_forward.94} parent=0 // pred_check_branch
    %475 = sbr.rel (0) target = $region37
  $region36: #{pcb_test_forward.94} parent=0 // pred_region
    _
  $region37: #{pcb_test_forward.94} parent=0 // pred_fallthru
    _

// kernel: pcb_test_forward.96
$region0: #{pcb_test_forward.96}
  #allocation0 [shape = 'u32[]', space=smem, size = 0x4, offset = 0x4, fixed_abs, tag = 'smem constant byte address 0x4 - core index']
  #allocation1 [shape = 'u32[144,128]{1,0:T(1,128)}', space=vmem, size = 0x12000, scoped, tag = 'internal scratch']
  #allocation2 [shape = 'f32[24,256]{1,0:T(8,128)}', space=vmem, size = 0x6000, scoped, tag = 'scratch operand']
  %s0 = inlined_call_operand.vmem [shape: bf16[24,128], index: 0, kind: input, shape index: {}]
  %s1 = inlined_call_operand.vmem [shape: bf16[128,256], index: 1, kind: input, shape index: {}]
  %s2 = inlined_call_operand.vmem [shape: f32[1,256], index: 2, kind: input, shape index: {}]
  %s3 = inlined_call_operand.vmem [shape: f32[1,256], index: 3, kind: input, shape index: {}]
  %s4 = inlined_call_operand.vmem [shape: bf16[24,256], index: 4, kind: input, shape index: {}]
  %s5 = inlined_call_operand.vmem [shape: bf16[24,256], index: 5, kind: output, shape index: {}]
  %s6 = sld [smem:[#allocation0]]
  $region38: #{pcb_test_forward.96} parent=0
    _
  %s8 = ssub.s32 1, %s6
  %s9 = scalar_select 0, %s8, %s6
  // Predicated region
  $region2: #{pcb_test_forward.96} parent=0 // pred_check
    _
  $region3: #{pcb_test_forward.96} parent=0 // pred_check_branch
    %11 = sbr.rel (0) target = $region5
  $region4: #{pcb_test_forward.96} parent=0 // pred_region
    _
  $region5: #{pcb_test_forward.96} parent=0 // pred_fallthru
    _
  // Predicated region
  $region6: #{pcb_test_forward.96} parent=0 // pred_check
    _
  $region7: #{pcb_test_forward.96} parent=0 // pred_check_branch
    %13 = sbr.rel (0) target = $region9
  $region8: #{pcb_test_forward.96} parent=0 // pred_region
    _
  $region9: #{pcb_test_forward.96} parent=0 // pred_fallthru
    _
  // Predicated region
  $region10: #{pcb_test_forward.96} parent=0 // pred_check
    _
  $region11: #{pcb_test_forward.96} parent=0 // pred_check_branch
    %15 = sbr.rel (0) target = $region13
  $region12: #{pcb_test_forward.96} parent=0 // pred_region
    _
  $region13: #{pcb_test_forward.96} parent=0 // pred_fallthru
    _
  // Predicated region
  $region14: #{pcb_test_forward.96} parent=0 // pred_check
    _
  $region15: #{pcb_test_forward.96} parent=0 // pred_check_branch
    %17 = sbr.rel (0) target = $region17
  $region16: #{pcb_test_forward.96} parent=0 // pred_region
    _
  $region17: #{pcb_test_forward.96} parent=0 // pred_fallthru
    _
  // Predicated region
  $region18: #{pcb_test_forward.96} parent=0 // pred_check
    _
  $region19: #{pcb_test_forward.96} parent=0 // pred_check_branch
    %19 = sbr.rel (0) target = $region21
  $region20: #{pcb_test_forward.96} parent=0 // pred_region
    _
  $region21: #{pcb_test_forward.96} parent=0 // pred_fallthru
    _
  %p21 = scmp.eq.s32.totalorder 0, 0
  // Predicated region
  $region22: #{pcb_test_forward.96} parent=0 // pred_check
    %p22 = pneg %p21
  $region23: #{pcb_test_forward.96} parent=0 // pred_check_branch
    %24 = sbr.rel (%p22) target = $region25
  $region24: #{pcb_test_forward.96} parent=0 // pred_region
    %25 = vst [vmem:[#allocation2] sm:$0xff] 0.0
    %26 = vst [vmem:[#allocation2 + $0x8] sm:$0xff] 0.0
    %27 = vst [vmem:[#allocation2 + $0x10] sm:$0xff] 0.0
    %28 = vst [vmem:[#allocation2 + $0x18] sm:$0xff] 0.0
    %29 = vst [vmem:[#allocation2 + $0x20] sm:$0xff] 0.0
    %30 = vst [vmem:[#allocation2 + $0x28] sm:$0xff] 0.0
  $region25: #{pcb_test_forward.96} parent=0 // pred_fallthru
    _
  %v31 = vld [vmem:[#allocation2] sm:$0xff]
  %v32 = vld [vmem:[#allocation2 + $0x8] sm:$0xff]
  %v33 = vld [vmem:[#allocation2 + $0x10] sm:$0xff]
  %v34 = vld [vmem:[#allocation2 + $0x18] sm:$0xff]
  %v35 = vld [vmem:[#allocation2 + $0x20] sm:$0xff]
  %v36 = vld [vmem:[#allocation2 + $0x28] sm:$0xff]
  %v37 = vld [vmem:[%s0] sm:$0xf]
  %v38 = vld [vmem:[%s0 + $0x4] sm:$0xf]
  %v39 = vld [vmem:[%s0 + $0x8] sm:$0xf]
  %v40 = vld [vmem:[%s1] sm:$0xff]
  %v41 = vld [vmem:[%s1 + $0x8] sm:$0xff]
  %v42 = vld [vmem:[%s1 + $0x10] sm:$0xff]
  %v43 = vld [vmem:[%s1 + $0x18] sm:$0xff]
  %v44 = vld [vmem:[%s1 + $0x20] sm:$0xff]
  %v45 = vld [vmem:[%s1 + $0x28] sm:$0xff]
  %v46 = vld [vmem:[%s1 + $0x30] sm:$0xff]
  %v47 = vld [vmem:[%s1 + $0x38] sm:$0xff]
  %v48 = vld [vmem:[%s1 + $0x40] sm:$0xff]
  %v49 = vld [vmem:[%s1 + $0x48] sm:$0xff]
  %v50 = vld [vmem:[%s1 + $0x50] sm:$0xff]
  %v51 = vld [vmem:[%s1 + $0x58] sm:$0xff]
  %v52 = vld [vmem:[%s1 + $0x60] sm:$0xff]
  %v53 = vld [vmem:[%s1 + $0x68] sm:$0xff]
  %v54 = vld [vmem:[%s1 + $0x70] sm:$0xff]
  %v55 = vld [vmem:[%s1 + $0x78] sm:$0xff]
  %v59 = vunpack.c.l.b16 %v37
  %v60 = vunpack.c.l.b16 %v38
  %v61 = vunpack.c.l.b16 %v39
  %v62 = vpack.c.b16 %v60, %v59
  %v63 = vpack.c.b16 %v61, %v61
  %v82 = vunpack.c.l.b16 %v40
  %v83 = vunpack.c.h.b16 %v40
  %v84 = vunpack.c.l.b16 %v41
  %v85 = vunpack.c.h.b16 %v41
  %v86 = vunpack.c.l.b16 %v42
  %v87 = vunpack.c.h.b16 %v42
  %v88 = vunpack.c.l.b16 %v43
  %v89 = vunpack.c.h.b16 %v43
  %v90 = vunpack.c.l.b16 %v44
  %v91 = vunpack.c.h.b16 %v44
  %v92 = vunpack.c.l.b16 %v45
  %v93 = vunpack.c.h.b16 %v45
  %v94 = vunpack.c.l.b16 %v46
  %v95 = vunpack.c.h.b16 %v46
  %v96 = vunpack.c.l.b16 %v47
  %v97 = vunpack.c.h.b16 %v47
  %v98 = vunpack.c.l.b16 %v48
  %v99 = vunpack.c.h.b16 %v48
  %v100 = vunpack.c.l.b16 %v49
  %v101 = vunpack.c.h.b16 %v49
  %v102 = vunpack.c.l.b16 %v50
  %v103 = vunpack.c.h.b16 %v50
  %v104 = vunpack.c.l.b16 %v51
  %v105 = vunpack.c.h.b16 %v51
  %v106 = vunpack.c.l.b16 %v52
  %v107 = vunpack.c.h.b16 %v52
  %v108 = vunpack.c.l.b16 %v53
  %v109 = vunpack.c.h.b16 %v53
  %v110 = vunpack.c.l.b16 %v54
  %v111 = vunpack.c.h.b16 %v54
  %v112 = vunpack.c.l.b16 %v55
  %v113 = vunpack.c.h.b16 %v55
  %v114 = vpack.c.b16 %v84, %v82
  %v115 = vpack.c.b16 %v85, %v83
  %v116 = vpack.c.b16 %v88, %v86
  %v117 = vpack.c.b16 %v89, %v87
  %v118 = vpack.c.b16 %v92, %v90
  %v119 = vpack.c.b16 %v93, %v91
  %v120 = vpack.c.b16 %v96, %v94
  %v121 = vpack.c.b16 %v97, %v95
  %v122 = vpack.c.b16 %v100, %v98
  %v123 = vpack.c.b16 %v101, %v99
  %v124 = vpack.c.b16 %v104, %v102
  %v125 = vpack.c.b16 %v105, %v103
  %v126 = vpack.c.b16 %v108, %v106
  %v127 = vpack.c.b16 %v109, %v107
  %v128 = vpack.c.b16 %v112, %v110
  %v129 = vpack.c.b16 %v113, %v111
  %146 = vmatprep.subr.bf16.mxu0 %v115
  %147 = vmatpush1.bf16.msra.mxu0 %v114
  %148 = vmatprep.subr.bf16.mxu0 %v117
  %149 = vmatpush1.bf16.msra.mxu0 %v116
  %150 = vmatprep.subr.bf16.mxu0 %v119
  %151 = vmatpush1.bf16.msra.mxu0 %v118
  %152 = vmatprep.subr.bf16.mxu0 %v121
  %153 = vmatpush1.bf16.msra.mxu0 %v120
  %154 = vmatprep.subr.bf16.mxu0 %v123
  %155 = vmatpush1.bf16.msra.mxu0 %v122
  %156 = vmatprep.subr.bf16.mxu0 %v125
  %157 = vmatpush1.bf16.msra.mxu0 %v124
  %158 = vmatprep.subr.bf16.mxu0 %v127
  %159 = vmatpush1.bf16.msra.mxu0 %v126
  %160 = vmatprep.subr.bf16.mxu0 %v129
  %161 = vmatpush1.bf16.msra.mxu0 %v128
  %162 = vmatprep.subr.bf16.mxu0 0
  %163 = vmatpush1.bf16.msra.mxu0 0
  %164 = vmatprep.subr.bf16.mxu0 0
  %165 = vmatpush1.bf16.msra.mxu0 0
  %166 = vmatprep.subr.bf16.mxu0 0
  %167 = vmatpush1.bf16.msra.mxu0 0
  %168 = vmatprep.subr.bf16.mxu0 0
  %169 = vmatpush1.bf16.msra.mxu0 0
  %170 = vmatprep.subr.bf16.mxu0 0
  %171 = vmatpush1.bf16.msra.mxu0 0
  %172 = vmatprep.subr.bf16.mxu0 0
  %173 = vmatpush1.bf16.msra.mxu0 0
  %174 = vmatprep.subr.bf16.mxu0 0
  %175 = vmatpush1.bf16.msra.mxu0 0
  %176 = vmatprep.subr.bf16.mxu0 0
  %177 = vmatpush1.bf16.msra.mxu0 0
  %178 = vmatprep.mubr.bf16.mxu0 0
  %179 = vmatmul.mubr.bf16.gmra.mrb[0].mxu0 %v62
  %v180 = vpop.f32.mrb[0].mxu0
  %v181 = vadd.f32 0.0, %v180
  %v182 = vpop.f32.mrb[0].mxu0
  %v183 = vadd.f32 0.0, %v182
  %v184 = vpop.f32.mrb[0].mxu0
  %v185 = vadd.f32 0.0, %v184
  %v186 = vpop.f32.mrb[0].mxu0
  %v187 = vadd.f32 0.0, %v186
  %188 = vmatprep.mubr.bf16.mxu0 0
  %189 = vmatmul.mubr.bf16.gmra.mrb[0].mxu0 %v63
  %v190 = vpop.f32.mrb[0].mxu0
  %v191 = vadd.f32 0.0, %v190
  %v192 = vpop.f32.mrb[0].mxu0
  %v193 = vadd.f32 0.0, %v192
  %v194 = vpop.f32.mrb[0].mxu0
  %v195 = vpop.f32.mrb[0].mxu0
  %196 = vdwg.mxu0
  %v197 = vadd.f32 %v31, %v181
  %v198 = vadd.f32 %v32, %v183
  %v199 = vadd.f32 %v33, %v185
  %v200 = vadd.f32 %v34, %v187
  %v201 = vadd.f32 %v35, %v191
  %v202 = vadd.f32 %v36, %v193
  %203 = vst [vmem:[#allocation2] sm:$0xff] %v197
  %204 = vst [vmem:[#allocation2 + $0x8] sm:$0xff] %v198
  %205 = vst [vmem:[#allocation2 + $0x10] sm:$0xff] %v199
  %206 = vst [vmem:[#allocation2 + $0x18] sm:$0xff] %v200
  %207 = vst [vmem:[#allocation2 + $0x20] sm:$0xff] %v201
  %208 = vst [vmem:[#allocation2 + $0x28] sm:$0xff] %v202
  // Predicated region
  $region26: #{pcb_test_forward.96} parent=0 // pred_check
    %p209 = pneg %p21
  $region27: #{pcb_test_forward.96} parent=0 // pred_check_branch
    %211 = sbr.rel (%p209) target = $region29
  $region28: #{pcb_test_forward.96} parent=0 // pred_region
    %v212 = vld [vmem:[#allocation2] sm:$0xff]
    %v213 = vld [vmem:[#allocation2 + $0x8] sm:$0xff]
    %v214 = vld [vmem:[#allocation2 + $0x10] sm:$0xff]
    %v215 = vld [vmem:[#allocation2 + $0x18] sm:$0xff]
    %v216 = vld [vmem:[#allocation2 + $0x20] sm:$0xff]
    %v217 = vld [vmem:[#allocation2 + $0x28] sm:$0xff]
    %v218 = vld [vmem:[%s2] sm:$0x3]
    %v220 = vlaneseq
    %v221 = vshrl.u32 %v220, 7
    %v222 = vsub.s32 0, %v221
    %v223 = vrot.slane %v218, %v222
    %v224 = vlaneseq
    %v225 = vshrl.u32 %v224, 7
    %v226 = vsub.s32 1, %v225
    %v227 = vrot.slane %v218, %v226
    %v230 = vmul.f32 %v212, %v223
    %v231 = vmul.f32 %v213, %v227
    %v232 = vmul.f32 %v214, %v223
    %v233 = vmul.f32 %v215, %v227
    %v234 = vmul.f32 %v216, %v223
    %v235 = vmul.f32 %v217, %v227
    %v236 = vld [vmem:[%s3] sm:$0x3]
    %v238 = vlaneseq
    %v239 = vshrl.u32 %v238, 7
    %v240 = vsub.s32 0, %v239
    %v241 = vrot.slane %v236, %v240
    %v242 = vlaneseq
    %v243 = vshrl.u32 %v242, 7
    %v244 = vsub.s32 1, %v243
    %v245 = vrot.slane %v236, %v244
    %v248 = vadd.f32 %v230, %v241
    %v249 = vadd.f32 %v231, %v245
    %v250 = vadd.f32 %v232, %v241
    %v251 = vadd.f32 %v233, %v245
    %v252 = vadd.f32 %v234, %v241
    %v253 = vadd.f32 %v235, %v245
    %v254 = vld [vmem:[%s4] sm:$0xff]
    %v255 = vld [vmem:[%s4 + $0x8] sm:$0xff]
    %v256 = vld [vmem:[%s4 + $0x10] sm:$0xff]
    %v257 = vunpack.c.l.bf16 %v254
    %v258 = vunpack.c.h.bf16 %v254
    %v259 = vunpack.c.l.bf16 %v255
    %v260 = vunpack.c.h.bf16 %v255
    %v261 = vunpack.c.l.bf16 %v256
    %v262 = vunpack.c.h.bf16 %v256
    %v263 = vadd.f32 %v248, %v257
    %v264 = vadd.f32 %v249, %v258
    %v265 = vadd.f32 %v250, %v259
    %v266 = vadd.f32 %v251, %v260
    %v267 = vadd.f32 %v252, %v261
    %v268 = vadd.f32 %v253, %v262
    %v269 = vmax.f32 %v263, 0.0
    %v270 = vmax.f32 %v264, 0.0
    %v271 = vmax.f32 %v265, 0.0
    %v272 = vmax.f32 %v266, 0.0
    %v273 = vmax.f32 %v267, 0.0
    %v274 = vmax.f32 %v268, 0.0
    %v275 = vpack.c.bf16 %v271, %v269
    %v276 = vpack.c.bf16 %v272, %v270
    %v277 = vpack.c.bf16 %v273, %v273
    %v278 = vpack.c.bf16 %v274, %v274
    %v283 = vunpack.c.l.b16 %v275
    %v284 = vunpack.c.l.b16 %v276
    %v285 = vunpack.c.h.b16 %v275
    %v286 = vunpack.c.h.b16 %v276
    %v287 = vunpack.c.l.b16 %v277
    %v288 = vunpack.c.l.b16 %v278
    %v289 = vpack.c.b16 %v284, %v283
    %v290 = vpack.c.b16 %v286, %v285
    %v291 = vpack.c.b16 %v288, %v287
    %295 = vst [vmem:[%s5] sm:$0xff] %v289
    %296 = vst [vmem:[%s5 + $0x8] sm:$0xff] %v290
    %297 = vst [vmem:[%s5 + $0x10] sm:$0xff] %v291
  $region29: #{pcb_test_forward.96} parent=0 // pred_fallthru
    _
  // Predicated region
  $region30: #{pcb_test_forward.96} parent=0 // pred_check
    _
  $region31: #{pcb_test_forward.96} parent=0 // pred_check_branch
    %299 = sbr.rel (0) target = $region33
  $region32: #{pcb_test_forward.96} parent=0 // pred_region
    _
  $region33: #{pcb_test_forward.96} parent=0 // pred_fallthru
    _
  // Predicated region
  $region34: #{pcb_test_forward.96} parent=0 // pred_check
    _
  $region35: #{pcb_test_forward.96} parent=0 // pred_check_branch
    %301 = sbr.rel (0) target = $region37
  $region36: #{pcb_test_forward.96} parent=0 // pred_region
    _
  $region37: #{pcb_test_forward.96} parent=0 // pred_fallthru
    _

// kernel: pcb_test_forward.103
$region0: #{pcb_test_forward.103}
  #allocation0 [shape = 'u32[]', space=smem, size = 0x4, offset = 0x4, fixed_abs, tag = 'smem constant byte address 0x4 - core index']
  #allocation1 [shape = 'u32[144,128]{1,0:T(1,128)}', space=vmem, size = 0x12000, scoped, tag = 'internal scratch']
  %s0 = inlined_call_operand.vmem [shape: bf16[12,2,256], index: 0, kind: input, shape index: {}]
  %s1 = inlined_call_operand.vmem [shape: f32[12,256], index: 1, kind: output, shape index: {}]
  %s2 = sld [smem:[#allocation0]]
  $region14: #{pcb_test_forward.103} parent=0
    _
  %s4 = ssub.s32 1, %s2
  %s5 = scalar_select 0, %s4, %s2
  // Predicated region
  $region2: #{pcb_test_forward.103} parent=0 // pred_check
    _
  $region3: #{pcb_test_forward.103} parent=0 // pred_check_branch
    %7 = sbr.rel (0) target = $region5
  $region4: #{pcb_test_forward.103} parent=0 // pred_region
    _
  $region5: #{pcb_test_forward.103} parent=0 // pred_fallthru
    _
  %v8 = vld [vmem:[%s0] sm:$0x3]
  %v9 = vld [vmem:[%s0 + $0x2] sm:$0x3]
  %v10 = vld [vmem:[%s0 + $0x4] sm:$0x3]
  %v11 = vld [vmem:[%s0 + $0x6] sm:$0x3]
  %v12 = vld [vmem:[%s0 + $0x8] sm:$0x3]
  %v13 = vld [vmem:[%s0 + $0xa] sm:$0x3]
  %v14 = vld [vmem:[%s0 + $0xc] sm:$0x3]
  %v15 = vld [vmem:[%s0 + $0xe] sm:$0x3]
  %v16 = vld [vmem:[%s0 + $0x10] sm:$0x3]
  %v17 = vld [vmem:[%s0 + $0x12] sm:$0x3]
  %v18 = vld [vmem:[%s0 + $0x14] sm:$0x3]
  %v19 = vld [vmem:[%s0 + $0x16] sm:$0x3]
  %v20 = vunpack.c.l.bf16 %v8
  %v21 = vunpack.c.l.bf16 %v9
  %v22 = vunpack.c.l.bf16 %v10
  %v23 = vunpack.c.l.bf16 %v11
  %v24 = vunpack.c.l.bf16 %v12
  %v25 = vunpack.c.l.bf16 %v13
  %v26 = vunpack.c.l.bf16 %v14
  %v27 = vunpack.c.l.bf16 %v15
  %v28 = vunpack.c.l.bf16 %v16
  %v29 = vunpack.c.l.bf16 %v17
  %v30 = vunpack.c.l.bf16 %v18
  %v31 = vunpack.c.l.bf16 %v19
  %v45 = vunpack.c.l.s4 1983009808
  %v46 = vunpack.c.0.s8 %v45
  %v47 = vlaneseq
  %v48 = vshrl.u32 %v47, 7
  %v49 = vsub.s32 %v46, %v48
  %v50 = vrot.slane %v20, %v49
  %v51 = vcombine.high %v50, %v50
  %v53 = vunpack.c.l.s4 1983009808
  %v54 = vunpack.c.0.s8 %v53
  %v55 = vlaneseq
  %v56 = vshrl.u32 %v55, 7
  %v57 = vsub.s32 %v54, %v56
  %v58 = vrot.slane %v21, %v57
  %v59 = vcombine.high %v58, %v58
  %v61 = vunpack.c.l.s4 1983009808
  %v62 = vunpack.c.0.s8 %v61
  %v63 = vlaneseq
  %v64 = vshrl.u32 %v63, 7
  %v65 = vsub.s32 %v62, %v64
  %v66 = vrot.slane %v22, %v65
  %v67 = vcombine.high %v66, %v66
  %v69 = vunpack.c.l.s4 1983009808
  %v70 = vunpack.c.0.s8 %v69
  %v71 = vlaneseq
  %v72 = vshrl.u32 %v71, 7
  %v73 = vsub.s32 %v70, %v72
  %v74 = vrot.slane %v23, %v73
  %v75 = vcombine.high %v74, %v74
  %v77 = vunpack.c.l.s4 1983009808
  %v78 = vunpack.c.0.s8 %v77
  %v79 = vlaneseq
  %v80 = vshrl.u32 %v79, 7
  %v81 = vsub.s32 %v78, %v80
  %v82 = vrot.slane %v24, %v81
  %v83 = vcombine.high %v82, %v82
  %v85 = vunpack.c.l.s4 1983009808
  %v86 = vunpack.c.0.s8 %v85
  %v87 = vlaneseq
  %v88 = vshrl.u32 %v87, 7
  %v89 = vsub.s32 %v86, %v88
  %v90 = vrot.slane %v25, %v89
  %v91 = vcombine.high %v90, %v90
  %v93 = vunpack.c.l.s4 1983009808
  %v94 = vunpack.c.0.s8 %v93
  %v95 = vlaneseq
  %v96 = vshrl.u32 %v95, 7
  %v97 = vsub.s32 %v94, %v96
  %v98 = vrot.slane %v26, %v97
  %v99 = vcombine.high %v98, %v98
  %v101 = vunpack.c.l.s4 1983009808
  %v102 = vunpack.c.0.s8 %v101
  %v103 = vlaneseq
  %v104 = vshrl.u32 %v103, 7
  %v105 = vsub.s32 %v102, %v104
  %v106 = vrot.slane %v27, %v105
  %v107 = vcombine.high %v106, %v106
  %v109 = vunpack.c.l.s4 1983009808
  %v110 = vunpack.c.0.s8 %v109
  %v111 = vlaneseq
  %v112 = vshrl.u32 %v111, 7
  %v113 = vsub.s32 %v110, %v112
  %v114 = vrot.slane %v28, %v113
  %v115 = vcombine.high %v114, %v114
  %v117 = vunpack.c.l.s4 1983009808
  %v118 = vunpack.c.0.s8 %v117
  %v119 = vlaneseq
  %v120 = vshrl.u32 %v119, 7
  %v121 = vsub.s32 %v118, %v120
  %v122 = vrot.slane %v29, %v121
  %v123 = vcombine.high %v122, %v122
  %v125 = vunpack.c.l.s4 1983009808
  %v126 = vunpack.c.0.s8 %v125
  %v127 = vlaneseq
  %v128 = vshrl.u32 %v127, 7
  %v129 = vsub.s32 %v126, %v128
  %v130 = vrot.slane %v30, %v129
  %v131 = vcombine.high %v130, %v130
  %v133 = vunpack.c.l.s4 1983009808
  %v134 = vunpack.c.0.s8 %v133
  %v135 = vlaneseq
  %v136 = vshrl.u32 %v135, 7
  %v137 = vsub.s32 %v134, %v136
  %v138 = vrot.slane %v31, %v137
  %v139 = vcombine.high %v138, %v138
  %vm164 = vcmask 1041408
  %v165 = vsel %vm164, %v50, 0.0
  %v166 = vrot.slane %v165, 4
  %v167 = vadd.f32 %v165, %v166
  %v168 = vrot.slane %v167, 2
  %v169 = vadd.f32 %v167, %v168
  %v170 = vrot.slane %v169, 1
  %v171 = vadd.f32 %v169, %v170
  %v172 = vsel %vm164, %v51, 0.0
  %v173 = vrot.slane %v172, 4
  %v174 = vadd.f32 %v172, %v173
  %v175 = vrot.slane %v174, 2
  %v176 = vadd.f32 %v174, %v175
  %v177 = vrot.slane %v176, 1
  %v178 = vadd.f32 %v176, %v177
  %v179 = vsel %vm164, %v58, 0.0
  %v180 = vrot.slane %v179, 4
  %v181 = vadd.f32 %v179, %v180
  %v182 = vrot.slane %v181, 2
  %v183 = vadd.f32 %v181, %v182
  %v184 = vrot.slane %v183, 1
  %v185 = vadd.f32 %v183, %v184
  %v186 = vsel %vm164, %v59, 0.0
  %v187 = vrot.slane %v186, 4
  %v188 = vadd.f32 %v186, %v187
  %v189 = vrot.slane %v188, 2
  %v190 = vadd.f32 %v188, %v189
  %v191 = vrot.slane %v190, 1
  %v192 = vadd.f32 %v190, %v191
  %v193 = vsel %vm164, %v66, 0.0
  %v194 = vrot.slane %v193, 4
  %v195 = vadd.f32 %v193, %v194
  %v196 = vrot.slane %v195, 2
  %v197 = vadd.f32 %v195, %v196
  %v198 = vrot.slane %v197, 1
  %v199 = vadd.f32 %v197, %v198
  %v200 = vsel %vm164, %v67, 0.0
  %v201 = vrot.slane %v200, 4
  %v202 = vadd.f32 %v200, %v201
  %v203 = vrot.slane %v202, 2
  %v204 = vadd.f32 %v202, %v203
  %v205 = vrot.slane %v204, 1
  %v206 = vadd.f32 %v204, %v205
  %v207 = vsel %vm164, %v74, 0.0
  %v208 = vrot.slane %v207, 4
  %v209 = vadd.f32 %v207, %v208
  %v210 = vrot.slane %v209, 2
  %v211 = vadd.f32 %v209, %v210
  %v212 = vrot.slane %v211, 1
  %v213 = vadd.f32 %v211, %v212
  %v214 = vsel %vm164, %v75, 0.0
  %v215 = vrot.slane %v214, 4
  %v216 = vadd.f32 %v214, %v215
  %v217 = vrot.slane %v216, 2
  %v218 = vadd.f32 %v216, %v217
  %v219 = vrot.slane %v218, 1
  %v220 = vadd.f32 %v218, %v219
  %v221 = vsel %vm164, %v82, 0.0
  %v222 = vrot.slane %v221, 4
  %v223 = vadd.f32 %v221, %v222
  %v224 = vrot.slane %v223, 2
  %v225 = vadd.f32 %v223, %v224
  %v226 = vrot.slane %v225, 1
  %v227 = vadd.f32 %v225, %v226
  %v228 = vsel %vm164, %v83, 0.0
  %v229 = vrot.slane %v228, 4
  %v230 = vadd.f32 %v228, %v229
  %v231 = vrot.slane %v230, 2
  %v232 = vadd.f32 %v230, %v231
  %v233 = vrot.slane %v232, 1
  %v234 = vadd.f32 %v232, %v233
  %v235 = vsel %vm164, %v90, 0.0
  %v236 = vrot.slane %v235, 4
  %v237 = vadd.f32 %v235, %v236
  %v238 = vrot.slane %v237, 2
  %v239 = vadd.f32 %v237, %v238
  %v240 = vrot.slane %v239, 1
  %v241 = vadd.f32 %v239, %v240
  %v242 = vsel %vm164, %v91, 0.0
  %v243 = vrot.slane %v242, 4
  %v244 = vadd.f32 %v242, %v243
  %v245 = vrot.slane %v244, 2
  %v246 = vadd.f32 %v244, %v245
  %v247 = vrot.slane %v246, 1
  %v248 = vadd.f32 %v246, %v247
  %v249 = vsel %vm164, %v98, 0.0
  %v250 = vrot.slane %v249, 4
  %v251 = vadd.f32 %v249, %v250
  %v252 = vrot.slane %v251, 2
  %v253 = vadd.f32 %v251, %v252
  %v254 = vrot.slane %v253, 1
  %v255 = vadd.f32 %v253, %v254
  %v256 = vsel %vm164, %v99, 0.0
  %v257 = vrot.slane %v256, 4
  %v258 = vadd.f32 %v256, %v257
  %v259 = vrot.slane %v258, 2
  %v260 = vadd.f32 %v258, %v259
  %v261 = vrot.slane %v260, 1
  %v262 = vadd.f32 %v260, %v261
  %v263 = vsel %vm164, %v106, 0.0
  %v264 = vrot.slane %v263, 4
  %v265 = vadd.f32 %v263, %v264
  %v266 = vrot.slane %v265, 2
  %v267 = vadd.f32 %v265, %v266
  %v268 = vrot.slane %v267, 1
  %v269 = vadd.f32 %v267, %v268
  %v270 = vsel %vm164, %v107, 0.0
  %v271 = vrot.slane %v270, 4
  %v272 = vadd.f32 %v270, %v271
  %v273 = vrot.slane %v272, 2
  %v274 = vadd.f32 %v272, %v273
  %v275 = vrot.slane %v274, 1
  %v276 = vadd.f32 %v274, %v275
  %v277 = vsel %vm164, %v114, 0.0
  %v278 = vrot.slane %v277, 4
  %v279 = vadd.f32 %v277, %v278
  %v280 = vrot.slane %v279, 2
  %v281 = vadd.f32 %v279, %v280
  %v282 = vrot.slane %v281, 1
  %v283 = vadd.f32 %v281, %v282
  %v284 = vsel %vm164, %v115, 0.0
  %v285 = vrot.slane %v284, 4
  %v286 = vadd.f32 %v284, %v285
  %v287 = vrot.slane %v286, 2
  %v288 = vadd.f32 %v286, %v287
  %v289 = vrot.slane %v288, 1
  %v290 = vadd.f32 %v288, %v289
  %v291 = vsel %vm164, %v122, 0.0
  %v292 = vrot.slane %v291, 4
  %v293 = vadd.f32 %v291, %v292
  %v294 = vrot.slane %v293, 2
  %v295 = vadd.f32 %v293, %v294
  %v296 = vrot.slane %v295, 1
  %v297 = vadd.f32 %v295, %v296
  %v298 = vsel %vm164, %v123, 0.0
  %v299 = vrot.slane %v298, 4
  %v300 = vadd.f32 %v298, %v299
  %v301 = vrot.slane %v300, 2
  %v302 = vadd.f32 %v300, %v301
  %v303 = vrot.slane %v302, 1
  %v304 = vadd.f32 %v302, %v303
  %v305 = vsel %vm164, %v130, 0.0
  %v306 = vrot.slane %v305, 4
  %v307 = vadd.f32 %v305, %v306
  %v308 = vrot.slane %v307, 2
  %v309 = vadd.f32 %v307, %v308
  %v310 = vrot.slane %v309, 1
  %v311 = vadd.f32 %v309, %v310
  %v312 = vsel %vm164, %v131, 0.0
  %v313 = vrot.slane %v312, 4
  %v314 = vadd.f32 %v312, %v313
  %v315 = vrot.slane %v314, 2
  %v316 = vadd.f32 %v314, %v315
  %v317 = vrot.slane %v316, 1
  %v318 = vadd.f32 %v316, %v317
  %v319 = vsel %vm164, %v138, 0.0
  %v320 = vrot.slane %v319, 4
  %v321 = vadd.f32 %v319, %v320
  %v322 = vrot.slane %v321, 2
  %v323 = vadd.f32 %v321, %v322
  %v324 = vrot.slane %v323, 1
  %v325 = vadd.f32 %v323, %v324
  %v326 = vsel %vm164, %v139, 0.0
  %v327 = vrot.slane %v326, 4
  %v328 = vadd.f32 %v326, %v327
  %v329 = vrot.slane %v328, 2
  %v330 = vadd.f32 %v328, %v329
  %v331 = vrot.slane %v330, 1
  %v332 = vadd.f32 %v330, %v331
  %v333 = vrcp.pop 2.0
  %v334 = vmul.f32 %v171, %v333
  %v335 = vmul.f32 %v178, %v333
  %v336 = vmul.f32 %v185, %v333
  %v337 = vmul.f32 %v192, %v333
  %v338 = vmul.f32 %v199, %v333
  %v339 = vmul.f32 %v206, %v333
  %v340 = vmul.f32 %v213, %v333
  %v341 = vmul.f32 %v220, %v333
  %v342 = vmul.f32 %v227, %v333
  %v343 = vmul.f32 %v234, %v333
  %v344 = vmul.f32 %v241, %v333
  %v345 = vmul.f32 %v248, %v333
  %v346 = vmul.f32 %v255, %v333
  %v347 = vmul.f32 %v262, %v333
  %v348 = vmul.f32 %v269, %v333
  %v349 = vmul.f32 %v276, %v333
  %v350 = vmul.f32 %v283, %v333
  %v351 = vmul.f32 %v290, %v333
  %v352 = vmul.f32 %v297, %v333
  %v353 = vmul.f32 %v304, %v333
  %v354 = vmul.f32 %v311, %v333
  %v355 = vmul.f32 %v318, %v333
  %v356 = vmul.f32 %v325, %v333
  %v357 = vmul.f32 %v332, %v333
  %vm382 = vcmask 1041409
  %v383 = vsel %vm382, %v336, %v334
  %vm384 = vcmask 1042434
  %v385 = vsel %vm384, %v338, %v383
  %vm386 = vcmask 1043459
  %v387 = vsel %vm386, %v340, %v385
  %vm388 = vcmask 1044484
  %v389 = vsel %vm388, %v342, %v387
  %vm390 = vcmask 1045509
  %v391 = vsel %vm390, %v344, %v389
  %vm392 = vcmask 1046534
  %v393 = vsel %vm392, %v346, %v391
  %vm394 = vcmask 1047559
  %v395 = vsel %vm394, %v348, %v393
  %v396 = vsel %vm382, %v337, %v335
  %v397 = vsel %vm384, %v339, %v396
  %v398 = vsel %vm386, %v341, %v397
  %v399 = vsel %vm388, %v343, %v398
  %v400 = vsel %vm390, %v345, %v399
  %v401 = vsel %vm392, %v347, %v400
  %v402 = vsel %vm394, %v349, %v401
  %v403 = vsel %vm382, %v352, %v350
  %v404 = vsel %vm384, %v354, %v403
  %v405 = vsel %vm386, %v356, %v404
  %v406 = vsel %vm382, %v353, %v351
  %v407 = vsel %vm384, %v355, %v406
  %v408 = vsel %vm386, %v357, %v407
  %413 = vst [vmem:[%s1] sm:$0xff] %v395
  %414 = vst [vmem:[%s1 + $0x8] sm:$0xff] %v402
  %415 = vst [vmem:[%s1 + $0x10] sm:$0xf] %v405
  %416 = vst [vmem:[%s1 + $0x18] sm:$0xf] %v408
  // Predicated region
  $region6: #{pcb_test_forward.103} parent=0 // pred_check
    _
  $region7: #{pcb_test_forward.103} parent=0 // pred_check_branch
    %418 = sbr.rel (0) target = $region9
  $region8: #{pcb_test_forward.103} parent=0 // pred_region
    _
  $region9: #{pcb_test_forward.103} parent=0 // pred_fallthru
    _
  // Predicated region
  $region10: #{pcb_test_forward.103} parent=0 // pred_check
    _
  $region11: #{pcb_test_forward.103} parent=0 // pred_check_branch
    %420 = sbr.rel (0) target = $region13
  $region12: #{pcb_test_forward.103} parent=0 // pred_region
    _
  $region13: #{pcb_test_forward.103} parent=0 // pred_fallthru
    _

// kernel: pcb_test_forward.97
$region0: #{pcb_test_forward.97}
  #allocation0 [shape = 'u32[]', space=smem, size = 0x4, offset = 0x4, fixed_abs, tag = 'smem constant byte address 0x4 - core index']
  #allocation1 [shape = 'u32[144,128]{1,0:T(1,128)}', space=vmem, size = 0x12000, scoped, tag = 'internal scratch']
  #allocation2 [shape = 'f32[24,128]{1,0:T(8,128)}', space=vmem, size = 0x3000, scoped, tag = 'scratch operand']
  %s0 = inlined_call_operand.vmem [shape: bf16[24,256], index: 0, kind: input, shape index: {}]
  %s1 = inlined_call_operand.vmem [shape: bf16[256,128], index: 1, kind: input, shape index: {}]
  %s2 = inlined_call_operand.vmem [shape: f32[1,128], index: 2, kind: input, shape index: {}]
  %s3 = inlined_call_operand.vmem [shape: f32[1,128], index: 3, kind: input, shape index: {}]
  %s4 = inlined_call_operand.vmem [shape: bf16[24,128], index: 4, kind: output, shape index: {}]
  %s5 = sld [smem:[#allocation0]]
  $region34: #{pcb_test_forward.97} parent=0
    _
  %s7 = ssub.s32 1, %s5
  %s8 = scalar_select 0, %s7, %s5
  // Predicated region
  $region2: #{pcb_test_forward.97} parent=0 // pred_check
    _
  $region3: #{pcb_test_forward.97} parent=0 // pred_check_branch
    %10 = sbr.rel (0) target = $region5
  $region4: #{pcb_test_forward.97} parent=0 // pred_region
    _
  $region5: #{pcb_test_forward.97} parent=0 // pred_fallthru
    _
  // Predicated region
  $region6: #{pcb_test_forward.97} parent=0 // pred_check
    _
  $region7: #{pcb_test_forward.97} parent=0 // pred_check_branch
    %12 = sbr.rel (0) target = $region9
  $region8: #{pcb_test_forward.97} parent=0 // pred_region
    _
  $region9: #{pcb_test_forward.97} parent=0 // pred_fallthru
    _
  // Predicated region
  $region10: #{pcb_test_forward.97} parent=0 // pred_check
    _
  $region11: #{pcb_test_forward.97} parent=0 // pred_check_branch
    %14 = sbr.rel (0) target = $region13
  $region12: #{pcb_test_forward.97} parent=0 // pred_region
    _
  $region13: #{pcb_test_forward.97} parent=0 // pred_fallthru
    _
  // Predicated region
  $region14: #{pcb_test_forward.97} parent=0 // pred_check
    _
  $region15: #{pcb_test_forward.97} parent=0 // pred_check_branch
    %16 = sbr.rel (0) target = $region17
  $region16: #{pcb_test_forward.97} parent=0 // pred_region
    _
  $region17: #{pcb_test_forward.97} parent=0 // pred_fallthru
    _
  %p18 = scmp.eq.s32.totalorder 0, 0
  // Predicated region
  $region18: #{pcb_test_forward.97} parent=0 // pred_check
    %p19 = pneg %p18
  $region19: #{pcb_test_forward.97} parent=0 // pred_check_branch
    %21 = sbr.rel (%p19) target = $region21
  $region20: #{pcb_test_forward.97} parent=0 // pred_region
    %22 = vst [vmem:[#allocation2] sm:$0xff] 0.0
    %23 = vst [vmem:[#allocation2 + $0x8] sm:$0xff] 0.0
    %24 = vst [vmem:[#allocation2 + $0x10] sm:$0xff] 0.0
  $region21: #{pcb_test_forward.97} parent=0 // pred_fallthru
    _
  %v25 = vld [vmem:[#allocation2] sm:$0xff]
  %v26 = vld [vmem:[#allocation2 + $0x8] sm:$0xff]
  %v27 = vld [vmem:[#allocation2 + $0x10] sm:$0xff]
  %v28 = vld [vmem:[%s0] sm:$0xff]
  %v29 = vld [vmem:[%s0 + $0x8] sm:$0xff]
  %v30 = vld [vmem:[%s0 + $0x10] sm:$0xff]
  %v31 = vld [vmem:[%s1] sm:$0xf]
  %v32 = vld [vmem:[%s1 + $0x4] sm:$0xf]
  %v33 = vld [vmem:[%s1 + $0x8] sm:$0xf]
  %v34 = vld [vmem:[%s1 + $0xc] sm:$0xf]
  %v35 = vld [vmem:[%s1 + $0x10] sm:$0xf]
  %v36 = vld [vmem:[%s1 + $0x14] sm:$0xf]
  %v37 = vld [vmem:[%s1 + $0x18] sm:$0xf]
  %v38 = vld [vmem:[%s1 + $0x1c] sm:$0xf]
  %v39 = vld [vmem:[%s1 + $0x20] sm:$0xf]
  %v40 = vld [vmem:[%s1 + $0x24] sm:$0xf]
  %v41 = vld [vmem:[%s1 + $0x28] sm:$0xf]
  %v42 = vld [vmem:[%s1 + $0x2c] sm:$0xf]
  %v43 = vld [vmem:[%s1 + $0x30] sm:$0xf]
  %v44 = vld [vmem:[%s1 + $0x34] sm:$0xf]
  %v45 = vld [vmem:[%s1 + $0x38] sm:$0xf]
  %v46 = vld [vmem:[%s1 + $0x3c] sm:$0xf]
  %v47 = vld [vmem:[%s1 + $0x40] sm:$0xf]
  %v48 = vld [vmem:[%s1 + $0x44] sm:$0xf]
  %v49 = vld [vmem:[%s1 + $0x48] sm:$0xf]
  %v50 = vld [vmem:[%s1 + $0x4c] sm:$0xf]
  %v51 = vld [vmem:[%s1 + $0x50] sm:$0xf]
  %v52 = vld [vmem:[%s1 + $0x54] sm:$0xf]
  %v53 = vld [vmem:[%s1 + $0x58] sm:$0xf]
  %v54 = vld [vmem:[%s1 + $0x5c] sm:$0xf]
  %v55 = vld [vmem:[%s1 + $0x60] sm:$0xf]
  %v56 = vld [vmem:[%s1 + $0x64] sm:$0xf]
  %v57 = vld [vmem:[%s1 + $0x68] sm:$0xf]
  %v58 = vld [vmem:[%s1 + $0x6c] sm:$0xf]
  %v59 = vld [vmem:[%s1 + $0x70] sm:$0xf]
  %v60 = vld [vmem:[%s1 + $0x74] sm:$0xf]
  %v61 = vld [vmem:[%s1 + $0x78] sm:$0xf]
  %v62 = vld [vmem:[%s1 + $0x7c] sm:$0xf]
  %v66 = vunpack.c.l.b16 %v28
  %v67 = vunpack.c.h.b16 %v28
  %v68 = vunpack.c.l.b16 %v29
  %v69 = vunpack.c.h.b16 %v29
  %v70 = vunpack.c.l.b16 %v30
  %v71 = vunpack.c.h.b16 %v30
  %v72 = vpack.c.b16 %v68, %v66
  %v73 = vpack.c.b16 %v69, %v67
  %v74 = vpack.c.b16 %v70, %v70
  %v75 = vpack.c.b16 %v71, %v71
  %v112 = vunpack.c.l.b16 %v31
  %v113 = vunpack.c.l.b16 %v32
  %v114 = vunpack.c.l.b16 %v33
  %v115 = vunpack.c.l.b16 %v34
  %v116 = vunpack.c.l.b16 %v35
  %v117 = vunpack.c.l.b16 %v36
  %v118 = vunpack.c.l.b16 %v37
  %v119 = vunpack.c.l.b16 %v38
  %v120 = vunpack.c.l.b16 %v39
  %v121 = vunpack.c.l.b16 %v40
  %v122 = vunpack.c.l.b16 %v41
  %v123 = vunpack.c.l.b16 %v42
  %v124 = vunpack.c.l.b16 %v43
  %v125 = vunpack.c.l.b16 %v44
  %v126 = vunpack.c.l.b16 %v45
  %v127 = vunpack.c.l.b16 %v46
  %v128 = vunpack.c.l.b16 %v47
  %v129 = vunpack.c.l.b16 %v48
  %v130 = vunpack.c.l.b16 %v49
  %v131 = vunpack.c.l.b16 %v50
  %v132 = vunpack.c.l.b16 %v51
  %v133 = vunpack.c.l.b16 %v52
  %v134 = vunpack.c.l.b16 %v53
  %v135 = vunpack.c.l.b16 %v54
  %v136 = vunpack.c.l.b16 %v55
  %v137 = vunpack.c.l.b16 %v56
  %v138 = vunpack.c.l.b16 %v57
  %v139 = vunpack.c.l.b16 %v58
  %v140 = vunpack.c.l.b16 %v59
  %v141 = vunpack.c.l.b16 %v60
  %v142 = vunpack.c.l.b16 %v61
  %v143 = vunpack.c.l.b16 %v62
  %v144 = vpack.c.b16 %v113, %v112
  %v145 = vpack.c.b16 %v115, %v114
  %v146 = vpack.c.b16 %v117, %v116
  %v147 = vpack.c.b16 %v119, %v118
  %v148 = vpack.c.b16 %v121, %v120
  %v149 = vpack.c.b16 %v123, %v122
  %v150 = vpack.c.b16 %v125, %v124
  %v151 = vpack.c.b16 %v127, %v126
  %v152 = vpack.c.b16 %v129, %v128
  %v153 = vpack.c.b16 %v131, %v130
  %v154 = vpack.c.b16 %v133, %v132
  %v155 = vpack.c.b16 %v135, %v134
  %v156 = vpack.c.b16 %v137, %v136
  %v157 = vpack.c.b16 %v139, %v138
  %v158 = vpack.c.b16 %v141, %v140
  %v159 = vpack.c.b16 %v143, %v142
  %176 = vmatprep.subr.bf16.mxu0 0
  %177 = vmatpush1.bf16.msra.mxu0 %v144
  %178 = vmatprep.subr.bf16.mxu0 0
  %179 = vmatpush1.bf16.msra.mxu0 %v145
  %180 = vmatprep.subr.bf16.mxu0 0
  %181 = vmatpush1.bf16.msra.mxu0 %v146
  %182 = vmatprep.subr.bf16.mxu0 0
  %183 = vmatpush1.bf16.msra.mxu0 %v147
  %184 = vmatprep.subr.bf16.mxu0 0
  %185 = vmatpush1.bf16.msra.mxu0 %v148
  %186 = vmatprep.subr.bf16.mxu0 0
  %187 = vmatpush1.bf16.msra.mxu0 %v149
  %188 = vmatprep.subr.bf16.mxu0 0
  %189 = vmatpush1.bf16.msra.mxu0 %v150
  %190 = vmatprep.subr.bf16.mxu0 0
  %191 = vmatpush1.bf16.msra.mxu0 %v151
  %192 = vmatprep.subr.bf16.mxu0 0
  %193 = vmatpush1.bf16.msra.mxu0 %v152
  %194 = vmatprep.subr.bf16.mxu0 0
  %195 = vmatpush1.bf16.msra.mxu0 %v153
  %196 = vmatprep.subr.bf16.mxu0 0
  %197 = vmatpush1.bf16.msra.mxu0 %v154
  %198 = vmatprep.subr.bf16.mxu0 0
  %199 = vmatpush1.bf16.msra.mxu0 %v155
  %200 = vmatprep.subr.bf16.mxu0 0
  %201 = vmatpush1.bf16.msra.mxu0 %v156
  %202 = vmatprep.subr.bf16.mxu0 0
  %203 = vmatpush1.bf16.msra.mxu0 %v157
  %204 = vmatprep.subr.bf16.mxu0 0
  %205 = vmatpush1.bf16.msra.mxu0 %v158
  %206 = vmatprep.subr.bf16.mxu0 0
  %207 = vmatpush1.bf16.msra.mxu0 %v159
  %208 = vmatprep.mubr.bf16.mxu0 %v73
  %209 = vmatmul.mubr.bf16.gmra.mrb[0].mxu0 %v72
  %v210 = vpop.f32.mrb[0].mxu0
  %v211 = vadd.f32 0.0, %v210
  %v212 = vpop.f32.mrb[0].mxu0
  %v213 = vpop.f32.mrb[0].mxu0
  %v214 = vadd.f32 0.0, %v213
  %v215 = vpop.f32.mrb[0].mxu0
  %216 = vmatprep.mubr.bf16.mxu0 %v75
  %217 = vmatmul.mubr.bf16.gmra.mrb[0].mxu0 %v74
  %v218 = vpop.f32.mrb[0].mxu0
  %v219 = vadd.f32 0.0, %v218
  %v220 = vpop.f32.mrb[0].mxu0
  %v221 = vpop.f32.mrb[0].mxu0
  %v222 = vpop.f32.mrb[0].mxu0
  %223 = vdwg.mxu0
  %v224 = vadd.f32 %v25, %v211
  %v225 = vadd.f32 %v26, %v214
  %v226 = vadd.f32 %v27, %v219
  %227 = vst [vmem:[#allocation2] sm:$0xff] %v224
  %228 = vst [vmem:[#allocation2 + $0x8] sm:$0xff] %v225
  %229 = vst [vmem:[#allocation2 + $0x10] sm:$0xff] %v226
  // Predicated region
  $region22: #{pcb_test_forward.97} parent=0 // pred_check
    %p230 = pneg %p18
  $region23: #{pcb_test_forward.97} parent=0 // pred_check_branch
    %232 = sbr.rel (%p230) target = $region25
  $region24: #{pcb_test_forward.97} parent=0 // pred_region
    %v233 = vld [vmem:[#allocation2] sm:$0xff]
    %v234 = vld [vmem:[#allocation2 + $0x8] sm:$0xff]
    %v235 = vld [vmem:[#allocation2 + $0x10] sm:$0xff]
    %v236 = vld [vmem:[%s2] sm:$0x1]
    %v238 = vlaneseq
    %v239 = vshrl.u32 %v238, 7
    %v240 = vsub.s32 0, %v239
    %v241 = vrot.slane %v236, %v240
    %v243 = vmul.f32 %v233, %v241
    %v244 = vmul.f32 %v234, %v241
    %v245 = vmul.f32 %v235, %v241
    %v246 = vld [vmem:[%s3] sm:$0x1]
    %v248 = vlaneseq
    %v249 = vshrl.u32 %v248, 7
    %v250 = vsub.s32 0, %v249
    %v251 = vrot.slane %v246, %v250
    %v253 = vadd.f32 %v243, %v251
    %v254 = vadd.f32 %v244, %v251
    %v255 = vadd.f32 %v245, %v251
    %v256 = vmax.f32 %v253, 0.0
    %v257 = vmax.f32 %v254, 0.0
    %v258 = vmax.f32 %v255, 0.0
    %v259 = vpack.c.bf16 %v257, %v256
    %v260 = vpack.c.bf16 %v258, %v258
    %v263 = vunpack.c.l.b16 %v259
    %v264 = vunpack.c.h.b16 %v259
    %v265 = vunpack.c.l.b16 %v260
    %v266 = vpack.c.b16 %v263, %v263
    %v267 = vpack.c.b16 %v264, %v264
    %v268 = vpack.c.b16 %v265, %v265
    %272 = vst [vmem:[%s4] sm:$0xf] %v266
    %273 = vst [vmem:[%s4 + $0x4] sm:$0xf] %v267
    %274 = vst [vmem:[%s4 + $0x8] sm:$0xf] %v268
  $region25: #{pcb_test_forward.97} parent=0 // pred_fallthru
    _
  // Predicated region
  $region26: #{pcb_test_forward.97} parent=0 // pred_check
    _
  $region27: #{pcb_test_forward.97} parent=0 // pred_check_branch
    %276 = sbr.rel (0) target = $region29
  $region28: #{pcb_test_forward.97} parent=0 // pred_region
    _
  $region29: #{pcb_test_forward.97} parent=0 // pred_fallthru
    _
  // Predicated region
  $region30: #{pcb_test_forward.97} parent=0 // pred_check
    _
  $region31: #{pcb_test_forward.97} parent=0 // pred_check_branch
    %278 = sbr.rel (0) target = $region33
  $region32: #{pcb_test_forward.97} parent=0 // pred_region
    _
  $region33: #{pcb_test_forward.97} parent=0 // pred_fallthru
    _

</llo_original>
